<compile_context>
chip_gen: v7x
topology: tpu7x:2x2x1
jax: 0.10.0
libtpu: 0.0.40
codegen_flags: <defaults>
</compile_context>

<pallas_src>
import math

import jax
import jax.numpy as jnp
from jax.experimental import pallas as pl
from jax.experimental.pallas import tpu as pltpu


# ----------------------------------------------------------------------------
# Single fused kernel: all DenseNet stages + final 1x1 conv + positional enc.
# ----------------------------------------------------------------------------

def make_forward_kernel(stage_cfgs):
    f32, bf16 = jnp.float32, jnp.bfloat16

    def kernel(*refs):
        # ---- unpack (order fixed by make_forward_call) ----
        idx = 0
        x_ref = refs[idx]; idx += 1
        stage_refs = []
        for scfg in stage_cfgs:
            d = {"bones": []}
            for _ in range(scfg["num_bones"]):
                d["bones"].append(refs[idx:idx + 6]); idx += 6
            d["ts"], d["tt"], d["tw"], d["pool"] = refs[idx:idx + 4]; idx += 4
            if scfg["res_type"] == "conv":
                d["sel"], d["rw"] = refs[idx:idx + 2]; idx += 2
            stage_refs.append(d)
        fw_ref, fb_ref, pe_ref = refs[idx:idx + 3]; idx += 3
        out_ref = refs[idx]; idx += 1
        scratch = refs[idx:]

        x = x_ref[...]                                        # (HW0, Cin0) f32

        for si, scfg in enumerate(stage_cfgs):
            H, W = scfg["H"], scfg["W"]
            Cin, growth, inter = scfg["Cin"], scfg["growth"], scfg["inter"]
            nb = scfg["num_bones"]
            HW = H * W
            d = stage_refs[si]
            feat_ref, tpad_ref, patch_ref = scratch[3 * si:3 * si + 3]

            # Zero the halo buffer (gives the 3x3 conv its zero padding); the
            # interior is overwritten every bone.  Cheap (a few KB) and correct
            # under any grid/core sharding.
            tpad_ref[...] = jnp.zeros(tpad_ref.shape, tpad_ref.dtype)

            # Seed the channel-growing feature buffer: the dense "concat"
            # lives entirely in VMEM (no HBM copies).
            feat_ref[:, :Cin] = x

            # ---- dense bones ----
            c = Cin
            for b in range(nb):
                s1, t1, w1, s2, t2, w2 = d["bones"][b]
                xin = feat_ref[:, :c]                         # (HW, c)
                y = jnp.maximum(xin * s1[...] + t1[...], 0.0)       # BN1+ReLU
                y = jnp.dot(y.astype(bf16), w1[...],
                            preferred_element_type=f32)             # 1x1 conv
                y = jnp.maximum(y * s2[...] + t2[...], 0.0)         # BN2+ReLU

                # Activation into the zero-padded halo buffer: data lives at
                # rows [1, H], columns [8, 8+W) -> sublane-aligned store.
                tpad_ref[1:H + 1, 8:8 + W, :] = y.reshape(H, W, inter)

                # In-VMEM im2col: 9 shifted windows -> (HW, 9*inter).
                for k in range(9):
                    dy, dx = k // 3, k % 3
                    win = tpad_ref[dy:dy + H, 7 + dx:7 + dx + W, :]
                    patch_ref[:, k * inter:(k + 1) * inter] = \
                        win.reshape(HW, inter)

                # Whole 3x3 conv = a single K = 9*inter MXU matmul.
                new = jnp.dot(patch_ref[...].astype(bf16), w2[...],
                              preferred_element_type=f32)      # (HW, growth)

                feat_ref[:, c:c + growth] = new                # dense concat
                c += growth

            # ---- transition: BN -> ReLU -> 1x1 conv -> 2x2 avg-pool ----
            yt = jnp.maximum(feat_ref[...] * d["ts"][...] + d["tt"][...], 0.0)
            yt = jnp.dot(yt.astype(bf16), d["tw"][...],
                         preferred_element_type=f32)           # (HW, C/2)
            pooled = jnp.dot(d["pool"][...], yt,
                             preferred_element_type=f32)       # (HW/4, C/2)

            # ---- residual branch + add + ReLU (fused) ----
            if scfg["res_type"] == "conv":
                # 1x1 conv stride 2: constant selection matrix picks (2h, 2w).
                sub = jnp.dot(d["sel"][...], x,
                              preferred_element_type=f32)      # (HW/4, Cin)
                ident = jnp.dot(sub.astype(bf16), d["rw"][...],
                                preferred_element_type=f32)    # (HW/4, C/2)
            else:  # "pool"
                ident = jnp.dot(d["pool"][...], x, preferred_element_type=f32)

            x = jnp.maximum(pooled + ident, 0.0)

        # ---- final 1x1 conv (+bias) fused with the positional-encoding add --
        out_ref[...] = (jnp.dot(x.astype(bf16), fw_ref[...],
                                preferred_element_type=f32)
                        + fb_ref[...] + pe_ref[...])

    return kernel


def make_forward_call(cfg):
    stage_cfgs = cfg["stages"]
    hidden = cfg["hidden"]
    HW0 = stage_cfgs[0]["H"] * stage_cfgs[0]["W"]
    Cin0 = stage_cfgs[0]["Cin"]
    HWf, Cf = cfg["HWf"], cfg["Cf"]

    kernel = make_forward_kernel(stage_cfgs)

    def full_spec(shape):
        return pl.BlockSpec(shape, lambda n: (0,) * len(shape))

    def call(x, params):
        # x: (N, HW0, Cin0) f32 (NHWC with flattened spatial)
        N = x.shape[0]

        args = [x]
        in_specs = [pl.BlockSpec((None, HW0, Cin0), lambda n: (n, 0, 0))]
        scratch_shapes = []

        for scfg, sp in zip(stage_cfgs, params["stages"]):
            H, W = scfg["H"], scfg["W"]
            Cin, growth, inter = scfg["Cin"], scfg["growth"], scfg["inter"]
            nb = scfg["num_bones"]
            HW = H * W
            HW4 = (H // 2) * (W // 2)
            C_total = Cin + nb * growth
            C_half = C_total // 2

            for b in range(nb):
                cb = Cin + b * growth
                bp = sp["bones"][b]
                args += [bp["s1"], bp["t1"], bp["w1"],
                         bp["s2"], bp["t2"], bp["w2"]]
                in_specs += [full_spec((1, cb)), full_spec((1, cb)),
                             full_spec((cb, inter)),
                             full_spec((1, inter)), full_spec((1, inter)),
                             full_spec((9 * inter, growth))]
            args += [sp["trans_s"], sp["trans_t"], sp["trans_w"], sp["pool"]]
            in_specs += [full_spec((1, C_total)), full_spec((1, C_total)),
                         full_spec((C_total, C_half)), full_spec((HW4, HW))]
            if scfg["res_type"] == "conv":
                args += [sp["sel"], sp["res_w"]]
                in_specs += [full_spec((HW4, HW)), full_spec((Cin, C_half))]

            scratch_shapes += [
                pltpu.VMEM((HW, C_total), jnp.float32),          # feat buffer
                pltpu.VMEM((H + 2, W + 9, inter), jnp.float32),  # halo buffer
                pltpu.VMEM((HW, 9 * inter), jnp.float32),        # patch matrix
            ]

        args += [params["final_w"], params["final_b"], params["pe"]]
        in_specs += [full_spec((Cf, hidden)), full_spec((1, hidden)),
                     # PE is shared across the batch: never broadcast in HBM.
                     full_spec((HWf, hidden))]

        return pl.pallas_call(
            kernel,
            out_shape=jax.ShapeDtypeStruct((N, HWf, hidden), jnp.float32),
            grid_spec=pltpu.PrefetchScalarGridSpec(
                num_scalar_prefetch=0,
                grid=(N,),
                in_specs=in_specs,
                out_specs=pl.BlockSpec((None, HWf, hidden),
                                       lambda n: (n, 0, 0)),
                scratch_shapes=scratch_shapes),
            compiler_params=pltpu.CompilerParams(
                dimension_semantics=("parallel",),
                vmem_limit_bytes=32 * 1024 * 1024),
        )(*args)

    return call


# ----------------------------------------------------------------------------
# Parameter construction (deterministic, synthetic) + hoisted folding / tables
# ----------------------------------------------------------------------------

def _init_bn(key, c):
    k1, k2, k3, k4 = jax.random.split(key, 4)
    return {"gamma": jax.random.uniform(k1, (c,), jnp.float32, 0.5, 1.5),
            "beta": 0.1 * jax.random.normal(k2, (c,), jnp.float32),
            "mean": 0.1 * jax.random.normal(k3, (c,), jnp.float32),
            "var": jax.random.uniform(k4, (c,), jnp.float32, 0.5, 1.5)}


def _fold_bn(bn, eps=1e-5):
    scale = bn["gamma"] / jnp.sqrt(bn["var"] + eps)
    shift = bn["beta"] - bn["mean"] * scale
    return scale.reshape(1, -1), shift.reshape(1, -1)


def _pool_matrix(H, W):
    # 2x2 average pool as a (HW/4, HW) constant matrix (4 entries of 0.25/row).
    Ho, Wo = H // 2, W // 2
    r = jnp.arange(Ho * Wo)
    base = (r // Wo) * 2 * W + (r % Wo) * 2
    P = jnp.zeros((Ho * Wo, H * W), jnp.float32)
    for off in (0, 1, W, W + 1):
        P = P.at[r, base + off].set(0.25)
    return P


def _select_matrix(H, W):
    # Stride-2 subsampling (for the 1x1 stride-2 residual conv).
    Ho, Wo = H // 2, W // 2
    r = jnp.arange(Ho * Wo)
    base = (r // Wo) * 2 * W + (r % Wo) * 2
    return jnp.zeros((Ho * Wo, H * W), jnp.float32).at[r, base].set(1.0)


def _positional_encoding_2d(H, W, C):
    # Matches PositionalEncoding2D (pe_y + pe_x), returned as (H*W, C) NHWC.
    assert C % 2 == 0
    y = jnp.broadcast_to(jnp.arange(H, dtype=jnp.float32)[:, None], (H, W))
    x = jnp.broadcast_to(jnp.arange(W, dtype=jnp.float32)[None, :], (H, W))
    div = jnp.exp(jnp.arange(0, C, 2, dtype=jnp.float32)
                  * (-(math.log(10000.0) / C)))

    def interleave(pos):
        s = jnp.sin(pos[..., None] * div)
        c = jnp.cos(pos[..., None] * div)
        return jnp.stack([s, c], axis=-1).reshape(H, W, C)

    return (interleave(y) + interleave(x)).reshape(H * W, C)


def build_model(key, *, num_densenets, num_blocks_per_dense, growth_rate,
                input_channels, hidden_dim, H, W, bottleneck_width=4):
    keys = iter(jax.random.split(key, 256))
    nxt = lambda: next(keys)
    inter = int(growth_rate * bottleneck_width / 4) * 4

    stage_cfgs, stage_params = [], []
    cur, h, w = input_channels, H, W
    for _ in range(num_densenets):
        bones = []
        c = cur
        for _ in range(num_blocks_per_dense):
            s1, t1 = _fold_bn(_init_bn(nxt(), c))
            w1 = jax.random.normal(nxt(), (c, inter), jnp.float32) / math.sqrt(c)
            s2, t2 = _fold_bn(_init_bn(nxt(), inter))
            w2 = (jax.random.normal(nxt(), (3, 3, inter, growth_rate),
                                    jnp.float32) / math.sqrt(9 * inter))
            bones.append({
                "s1": s1, "t1": t1, "w1": w1.astype(jnp.bfloat16),
                "s2": s2, "t2": t2,
                "w2": w2.reshape(9 * inter, growth_rate).astype(jnp.bfloat16),
            })
            c += growth_rate
        ts, tt = _fold_bn(_init_bn(nxt(), c))
        tw = jax.random.normal(nxt(), (c, c // 2), jnp.float32) / math.sqrt(c)
        dn_out = c // 2

        if cur != dn_out:
            res_type = "conv"
        elif num_densenets > 1:
            res_type = "pool"
        else:
            # TODO(synk): residual=None (num_densenets==1 with equal channels)
            # is a shape-mismatching configuration in the reference module.
            raise ValueError("unsupported residual configuration")

        sp = {"bones": bones, "trans_s": ts, "trans_t": tt,
              "trans_w": tw.astype(jnp.bfloat16), "pool": _pool_matrix(h, w)}
        if res_type == "conv":
            sp["sel"] = _select_matrix(h, w)
            sp["res_w"] = (jax.random.normal(nxt(), (cur, dn_out), jnp.float32)
                           / math.sqrt(cur)).astype(jnp.bfloat16)
        stage_params.append(sp)
        stage_cfgs.append({"H": h, "W": w, "Cin": cur, "growth": growth_rate,
                           "inter": inter, "num_bones": num_blocks_per_dense,
                           "res_type": res_type})
        cur, h, w = dn_out, h // 2, w // 2

    final_w = (jax.random.normal(nxt(), (cur, hidden_dim), jnp.float32)
               / math.sqrt(cur)).astype(jnp.bfloat16)
    final_b = 0.1 * jax.random.normal(nxt(), (hidden_dim,), jnp.float32)

    params = {"stages": stage_params,
              "final_w": final_w,
              "final_b": final_b.reshape(1, hidden_dim),
              "pe": _positional_encoding_2d(h, w, hidden_dim)}
    cfg = {"stages": stage_cfgs, "hidden": hidden_dim, "HWf": h * w, "Cf": cur}
    return cfg, params


# ----------------------------------------------------------------------------
# Forward pass: ONE pallas_call inside a single jit.
# ----------------------------------------------------------------------------

def make_forward(cfg):
    call = make_forward_call(cfg)

    def forward(x_nhwc, params):
        N, H, W, Cin = x_nhwc.shape
        x = x_nhwc.reshape(N, H * W, Cin)        # flattened-spatial NHWC
        # Output ordering (n, h*W+w, c) == PyTorch view(B,C,HW).permute(0,2,1).
        return call(x, params)

    return forward


# ----------------------------------------------------------------------------
# Pure-JAX/XLA reference (same bf16 matmul boundaries) for a correctness check.
# ----------------------------------------------------------------------------

def reference_forward(x_nhwc, cfg, params):
    f32, bf16 = jnp.float32, jnp.bfloat16
    x = x_nhwc
    for scfg, sp in zip(cfg["stages"], params["stages"]):
        inter, growth = scfg["inter"], scfg["growth"]
        identity = x
        for bp in sp["bones"]:
            y = jnp.maximum(x * bp["s1"].reshape(1, 1, 1, -1)
                            + bp["t1"].reshape(1, 1, 1, -1), 0.0)
            y = jnp.dot(y.astype(bf16), bp["w1"], preferred_element_type=f32)
            y = jnp.maximum(y * bp["s2"].reshape(1, 1, 1, -1)
                            + bp["t2"].reshape(1, 1, 1, -1), 0.0)
            w2 = bp["w2"].reshape(3, 3, inter, growth)
            new = jax.lax.conv_general_dilated(
                y.astype(bf16), w2, window_strides=(1, 1), padding="SAME",
                dimension_numbers=("NHWC", "HWIO", "NHWC"),
                preferred_element_type=f32)
            x = jnp.concatenate([x, new], axis=-1)
        y = jnp.maximum(x * sp["trans_s"].reshape(1, 1, 1, -1)
                        + sp["trans_t"].reshape(1, 1, 1, -1), 0.0)
        y = jnp.dot(y.astype(bf16), sp["trans_w"], preferred_element_type=f32)
        n, h, w, cc = y.shape
        pooled = y.reshape(n, h // 2, 2, w // 2, 2, cc).mean(axis=(2, 4))
        if scfg["res_type"] == "conv":
            sub = identity[:, ::2, ::2, :]
            ident = jnp.dot(sub.astype(bf16), sp["res_w"],
                            preferred_element_type=f32)
        else:
            ni, hi, wi, ci = identity.shape
            ident = identity.reshape(ni, hi // 2, 2, wi // 2, 2,
                                     ci).mean(axis=(2, 4))
        x = jnp.maximum(pooled + ident, 0.0)
    out = (jnp.dot(x.astype(bf16), params["final_w"],
                   preferred_element_type=f32)
           + params["final_b"].reshape(1, 1, 1, -1))
    n, h, w, cc = out.shape
    out = out + params["pe"].reshape(1, h, w, cc)
    return out.reshape(n, h * w, cc)


# ----------------------------------------------------------------------------
# Driver
# ----------------------------------------------------------------------------

if __name__ == "__main__":
    key = jax.random.PRNGKey(0)
    kx, kp = jax.random.split(key)

    # StackedDenseNetEncoder(num_densenets=2, num_blocks_per_dense=2,
    #   growth_rate=4, input_channels=4, hidden_dim=32, bottleneck_width=4,
    #   dropout_rate=0.4) evaluated in eval() mode.
    B, Cin, H, W = 2, 4, 16, 16
    hidden_dim = 32

    x_nchw = jax.random.normal(kx, (B, Cin, H, W), jnp.float32)   # PyTorch layout
    x_nhwc = jnp.transpose(x_nchw, (0, 2, 3, 1))                  # kernel layout

    cfg, params = build_model(kp, num_densenets=2, num_blocks_per_dense=2,
                              growth_rate=4, input_channels=Cin,
                              hidden_dim=hidden_dim, H=H, W=W,
                              bottleneck_width=4)

    fwd = jax.jit(make_forward(cfg))
    out = jax.block_until_ready(fwd(x_nhwc, params))

    # Two stages, each downsamples spatially by 2 -> (H//4)*(W//4) tokens.
    assert out.shape == (B, (H // 4) * (W // 4), hidden_dim), out.shape
    assert bool(jnp.all(jnp.isfinite(out)))

    # Correctness check against a plain-XLA reference.
    ref = jax.block_until_ready(
        jax.jit(lambda xx, pp: reference_forward(xx, cfg, pp))(x_nhwc, params))
    max_err = float(jnp.max(jnp.abs(out - ref)))
    tol = 2e-2 * (1.0 + float(jnp.max(jnp.abs(ref))))
    assert max_err < tol, (max_err, tol)

    print("KERNEL_OK")
</pallas_src>

<mosaic_0001>
module attributes {stable_mosaic.version = 11 : i64} {
  func.func @kernel(%arg0: i32, %arg1: memref<1x256x4xf32, #tpu.memory_space<vmem>>, %arg2: memref<1x4xf32, #tpu.memory_space<vmem>>, %arg3: memref<1x4xf32, #tpu.memory_space<vmem>>, %arg4: memref<4x16xbf16, #tpu.memory_space<vmem>>, %arg5: memref<1x16xf32, #tpu.memory_space<vmem>>, %arg6: memref<1x16xf32, #tpu.memory_space<vmem>>, %arg7: memref<144x4xbf16, #tpu.memory_space<vmem>>, %arg8: memref<1x8xf32, #tpu.memory_space<vmem>>, %arg9: memref<1x8xf32, #tpu.memory_space<vmem>>, %arg10: memref<8x16xbf16, #tpu.memory_space<vmem>>, %arg11: memref<1x16xf32, #tpu.memory_space<vmem>>, %arg12: memref<1x16xf32, #tpu.memory_space<vmem>>, %arg13: memref<144x4xbf16, #tpu.memory_space<vmem>>, %arg14: memref<1x12xf32, #tpu.memory_space<vmem>>, %arg15: memref<1x12xf32, #tpu.memory_space<vmem>>, %arg16: memref<12x6xbf16, #tpu.memory_space<vmem>>, %arg17: memref<64x256xf32, #tpu.memory_space<vmem>>, %arg18: memref<64x256xf32, #tpu.memory_space<vmem>>, %arg19: memref<4x6xbf16, #tpu.memory_space<vmem>>, %arg20: memref<1x6xf32, #tpu.memory_space<vmem>>, %arg21: memref<1x6xf32, #tpu.memory_space<vmem>>, %arg22: memref<6x16xbf16, #tpu.memory_space<vmem>>, %arg23: memref<1x16xf32, #tpu.memory_space<vmem>>, %arg24: memref<1x16xf32, #tpu.memory_space<vmem>>, %arg25: memref<144x4xbf16, #tpu.memory_space<vmem>>, %arg26: memref<1x10xf32, #tpu.memory_space<vmem>>, %arg27: memref<1x10xf32, #tpu.memory_space<vmem>>, %arg28: memref<10x16xbf16, #tpu.memory_space<vmem>>, %arg29: memref<1x16xf32, #tpu.memory_space<vmem>>, %arg30: memref<1x16xf32, #tpu.memory_space<vmem>>, %arg31: memref<144x4xbf16, #tpu.memory_space<vmem>>, %arg32: memref<1x14xf32, #tpu.memory_space<vmem>>, %arg33: memref<1x14xf32, #tpu.memory_space<vmem>>, %arg34: memref<14x7xbf16, #tpu.memory_space<vmem>>, %arg35: memref<16x64xf32, #tpu.memory_space<vmem>>, %arg36: memref<16x64xf32, #tpu.memory_space<vmem>>, %arg37: memref<6x7xbf16, #tpu.memory_space<vmem>>, %arg38: memref<7x32xbf16, #tpu.memory_space<vmem>>, %arg39: memref<1x32xf32, #tpu.memory_space<vmem>>, %arg40: memref<16x32xf32, #tpu.memory_space<vmem>>, %arg41: memref<1x16x32xf32, #tpu.memory_space<vmem>>, %arg42: memref<256x12xf32, #tpu.memory_space<vmem>>, %arg43: memref<18x25x16xf32, #tpu.memory_space<vmem>>, %arg44: memref<256x144xf32, #tpu.memory_space<vmem>>, %arg45: memref<64x14xf32, #tpu.memory_space<vmem>>, %arg46: memref<10x17x16xf32, #tpu.memory_space<vmem>>, %arg47: memref<64x144xf32, #tpu.memory_space<vmem>>) attributes {dimension_semantics = [#tpu.dimension_semantics<parallel>], iteration_bounds = array<i64: 2>, scalar_prefetch = 0 : i64, scratch_operands = 6 : i64, tpu.core_type = #tpu.core_type<tc>, window_params = [{transform_indices = @transform_0, window_bounds = array<i64: 1, 256, 4>}, {pipeline_mode = #tpu.pipeline_mode<synchronous>, transform_indices = @transform_1, window_bounds = array<i64: 1, 4>}, {pipeline_mode = #tpu.pipeline_mode<synchronous>, transform_indices = @transform_2, window_bounds = array<i64: 1, 4>}, {pipeline_mode = #tpu.pipeline_mode<synchronous>, transform_indices = @transform_3, window_bounds = array<i64: 4, 16>}, {pipeline_mode = #tpu.pipeline_mode<synchronous>, transform_indices = @transform_4, window_bounds = array<i64: 1, 16>}, {pipeline_mode = #tpu.pipeline_mode<synchronous>, transform_indices = @transform_5, window_bounds = array<i64: 1, 16>}, {pipeline_mode = #tpu.pipeline_mode<synchronous>, transform_indices = @transform_6, window_bounds = array<i64: 144, 4>}, {pipeline_mode = #tpu.pipeline_mode<synchronous>, transform_indices = @transform_7, window_bounds = array<i64: 1, 8>}, {pipeline_mode = #tpu.pipeline_mode<synchronous>, transform_indices = @transform_8, window_bounds = array<i64: 1, 8>}, {pipeline_mode = #tpu.pipeline_mode<synchronous>, transform_indices = @transform_9, window_bounds = array<i64: 8, 16>}, {pipeline_mode = #tpu.pipeline_mode<synchronous>, transform_indices = @transform_10, window_bounds = array<i64: 1, 16>}, {pipeline_mode = #tpu.pipeline_mode<synchronous>, transform_indices = @transform_11, window_bounds = array<i64: 1, 16>}, {pipeline_mode = #tpu.pipeline_mode<synchronous>, transform_indices = @transform_12, window_bounds = array<i64: 144, 4>}, {pipeline_mode = #tpu.pipeline_mode<synchronous>, transform_indices = @transform_13, window_bounds = array<i64: 1, 12>}, {pipeline_mode = #tpu.pipeline_mode<synchronous>, transform_indices = @transform_14, window_bounds = array<i64: 1, 12>}, {pipeline_mode = #tpu.pipeline_mode<synchronous>, transform_indices = @transform_15, window_bounds = array<i64: 12, 6>}, {pipeline_mode = #tpu.pipeline_mode<synchronous>, transform_indices = @transform_16, window_bounds = array<i64: 64, 256>}, {pipeline_mode = #tpu.pipeline_mode<synchronous>, transform_indices = @transform_17, window_bounds = array<i64: 64, 256>}, {pipeline_mode = #tpu.pipeline_mode<synchronous>, transform_indices = @transform_18, window_bounds = array<i64: 4, 6>}, {pipeline_mode = #tpu.pipeline_mode<synchronous>, transform_indices = @transform_19, window_bounds = array<i64: 1, 6>}, {pipeline_mode = #tpu.pipeline_mode<synchronous>, transform_indices = @transform_20, window_bounds = array<i64: 1, 6>}, {pipeline_mode = #tpu.pipeline_mode<synchronous>, transform_indices = @transform_21, window_bounds = array<i64: 6, 16>}, {pipeline_mode = #tpu.pipeline_mode<synchronous>, transform_indices = @transform_22, window_bounds = array<i64: 1, 16>}, {pipeline_mode = #tpu.pipeline_mode<synchronous>, transform_indices = @transform_23, window_bounds = array<i64: 1, 16>}, {pipeline_mode = #tpu.pipeline_mode<synchronous>, transform_indices = @transform_24, window_bounds = array<i64: 144, 4>}, {pipeline_mode = #tpu.pipeline_mode<synchronous>, transform_indices = @transform_25, window_bounds = array<i64: 1, 10>}, {pipeline_mode = #tpu.pipeline_mode<synchronous>, transform_indices = @transform_26, window_bounds = array<i64: 1, 10>}, {pipeline_mode = #tpu.pipeline_mode<synchronous>, transform_indices = @transform_27, window_bounds = array<i64: 10, 16>}, {pipeline_mode = #tpu.pipeline_mode<synchronous>, transform_indices = @transform_28, window_bounds = array<i64: 1, 16>}, {pipeline_mode = #tpu.pipeline_mode<synchronous>, transform_indices = @transform_29, window_bounds = array<i64: 1, 16>}, {pipeline_mode = #tpu.pipeline_mode<synchronous>, transform_indices = @transform_30, window_bounds = array<i64: 144, 4>}, {pipeline_mode = #tpu.pipeline_mode<synchronous>, transform_indices = @transform_31, window_bounds = array<i64: 1, 14>}, {pipeline_mode = #tpu.pipeline_mode<synchronous>, transform_indices = @transform_32, window_bounds = array<i64: 1, 14>}, {pipeline_mode = #tpu.pipeline_mode<synchronous>, transform_indices = @transform_33, window_bounds = array<i64: 14, 7>}, {pipeline_mode = #tpu.pipeline_mode<synchronous>, transform_indices = @transform_34, window_bounds = array<i64: 16, 64>}, {pipeline_mode = #tpu.pipeline_mode<synchronous>, transform_indices = @transform_35, window_bounds = array<i64: 16, 64>}, {pipeline_mode = #tpu.pipeline_mode<synchronous>, transform_indices = @transform_36, window_bounds = array<i64: 6, 7>}, {pipeline_mode = #tpu.pipeline_mode<synchronous>, transform_indices = @transform_37, window_bounds = array<i64: 7, 32>}, {pipeline_mode = #tpu.pipeline_mode<synchronous>, transform_indices = @transform_38, window_bounds = array<i64: 1, 32>}, {pipeline_mode = #tpu.pipeline_mode<synchronous>, transform_indices = @transform_39, window_bounds = array<i64: 16, 32>}, {transform_indices = @transform_40, window_bounds = array<i64: 1, 16, 32>}]} {
    %c0 = arith.constant 0 : index
    %c0_0 = arith.constant 0 : index
    %c0_1 = arith.constant 0 : index
    %0 = vector.load %arg1[%c0, %c0_0, %c0_1] : memref<1x256x4xf32, #tpu.memory_space<vmem>>, vector<1x256x4xf32>
    %1 = vector.shape_cast %0 : vector<1x256x4xf32> to vector<256x4xf32>
    %cst = arith.constant 0.000000e+00 : f32
    %2 = vector.broadcast %cst : f32 to vector<18x25x16xf32>
    %c0_2 = arith.constant 0 : index
    %c0_3 = arith.constant 0 : index
    %c0_4 = arith.constant 0 : index
    %3 = vector.load %arg43[%c0_2, %c0_3, %c0_4] : memref<18x25x16xf32, #tpu.memory_space<vmem>>, vector<18x25x16xf32>
    tpu.vector_store %arg43[%c0_2, %c0_3, %c0_4], %2 {strides = array<i32>} : memref<18x25x16xf32, #tpu.memory_space<vmem>>, vector<18x25x16xf32>,
    %c0_5 = arith.constant 0 : index
    %c0_6 = arith.constant 0 : index
    %4 = vector.load %arg42[%c0_5, %c0_6] : memref<256x12xf32, #tpu.memory_space<vmem>>, vector<256x4xf32>
    tpu.vector_store %arg42[%c0_5, %c0_6], %1 {strides = array<i32>} : memref<256x12xf32, #tpu.memory_space<vmem>>, vector<256x4xf32>,
    %c0_7 = arith.constant 0 : index
    %c0_8 = arith.constant 0 : index
    %5 = vector.load %arg42[%c0_7, %c0_8] : memref<256x12xf32, #tpu.memory_space<vmem>>, vector<256x4xf32>
    %c0_9 = arith.constant 0 : index
    %c0_10 = arith.constant 0 : index
    %6 = vector.load %arg2[%c0_9, %c0_10] : memref<1x4xf32, #tpu.memory_space<vmem>>, vector<1x4xf32>
    %7 = vector.broadcast %6 : vector<1x4xf32> to vector<256x4xf32>
    %8 = arith.mulf %5, %7 : vector<256x4xf32>
    %c0_11 = arith.constant 0 : index
    %c0_12 = arith.constant 0 : index
    %9 = vector.load %arg3[%c0_11, %c0_12] : memref<1x4xf32, #tpu.memory_space<vmem>>, vector<1x4xf32>
    %10 = vector.broadcast %9 : vector<1x4xf32> to vector<256x4xf32>
    %11 = arith.addf %8, %10 : vector<256x4xf32>
    %cst_13 = arith.constant 0.000000e+00 : f32
    %12 = vector.broadcast %cst_13 : f32 to vector<256x4xf32>
    %13 = arith.maximumf %11, %12 : vector<256x4xf32>
    %14 = arith.truncf %13 : vector<256x4xf32> to vector<256x4xbf16>
    %c0_14 = arith.constant 0 : index
    %c0_15 = arith.constant 0 : index
    %15 = vector.load %arg4[%c0_14, %c0_15] : memref<4x16xbf16, #tpu.memory_space<vmem>>, vector<4x16xbf16>
    %cst_16 = arith.constant dense<0.000000e+00> : vector<256x16xf32>
    %16 = tpu.matmul %14, %15, %cst_16 {dimension_numbers = #tpu.dot_dimension_numbers<[1], [0], [0], [1], [0, 0, 1, 1], [], []>} : vector<256x4xbf16>, vector<4x16xbf16>, vector<256x16xf32> -> vector<256x16xf32>
    %c0_17 = arith.constant 0 : index
    %c0_18 = arith.constant 0 : index
    %17 = vector.load %arg5[%c0_17, %c0_18] : memref<1x16xf32, #tpu.memory_space<vmem>>, vector<1x16xf32>
    %18 = vector.broadcast %17 : vector<1x16xf32> to vector<256x16xf32>
    %19 = arith.mulf %16, %18 : vector<256x16xf32>
    %c0_19 = arith.constant 0 : index
    %c0_20 = arith.constant 0 : index
    %20 = vector.load %arg6[%c0_19, %c0_20] : memref<1x16xf32, #tpu.memory_space<vmem>>, vector<1x16xf32>
    %21 = vector.broadcast %20 : vector<1x16xf32> to vector<256x16xf32>
    %22 = arith.addf %19, %21 : vector<256x16xf32>
    %cst_21 = arith.constant 0.000000e+00 : f32
    %23 = vector.broadcast %cst_21 : f32 to vector<256x16xf32>
    %24 = arith.maximumf %22, %23 : vector<256x16xf32>
    %25 = vector.shape_cast %24 : vector<256x16xf32> to vector<16x16x16xf32>
    %c1 = arith.constant 1 : index
    %c8 = arith.constant 8 : index
    %c0_22 = arith.constant 0 : index
    %26 = vector.load %arg43[%c1, %c8, %c0_22] : memref<18x25x16xf32, #tpu.memory_space<vmem>>, vector<16x16x16xf32>
    tpu.vector_store %arg43[%c1, %c8, %c0_22], %25 {strides = array<i32>} : memref<18x25x16xf32, #tpu.memory_space<vmem>>, vector<16x16x16xf32>,
    %c0_23 = arith.constant 0 : index
    %c7 = arith.constant 7 : index
    %c0_24 = arith.constant 0 : index
    %27 = vector.load %arg43[%c0_23, %c7, %c0_24] : memref<18x25x16xf32, #tpu.memory_space<vmem>>, vector<16x16x16xf32>
    %28 = vector.shape_cast %27 : vector<16x16x16xf32> to vector<256x16xf32>
    %c0_25 = arith.constant 0 : index
    %c0_26 = arith.constant 0 : index
    %29 = vector.load %arg44[%c0_25, %c0_26] : memref<256x144xf32, #tpu.memory_space<vmem>>, vector<256x16xf32>
    tpu.vector_store %arg44[%c0_25, %c0_26], %28 {strides = array<i32>} : memref<256x144xf32, #tpu.memory_space<vmem>>, vector<256x16xf32>,
    %c0_27 = arith.constant 0 : index
    %c8_28 = arith.constant 8 : index
    %c0_29 = arith.constant 0 : index
    %30 = vector.load %arg43[%c0_27, %c8_28, %c0_29] : memref<18x25x16xf32, #tpu.memory_space<vmem>>, vector<16x16x16xf32>
    %31 = vector.shape_cast %30 : vector<16x16x16xf32> to vector<256x16xf32>
    %c0_30 = arith.constant 0 : index
    %c16 = arith.constant 16 : index
    %32 = vector.load %arg44[%c0_30, %c16] : memref<256x144xf32, #tpu.memory_space<vmem>>, vector<256x16xf32>
    tpu.vector_store %arg44[%c0_30, %c16], %31 {strides = array<i32>} : memref<256x144xf32, #tpu.memory_space<vmem>>, vector<256x16xf32>,
    %c0_31 = arith.constant 0 : index
    %c9 = arith.constant 9 : index
    %c0_32 = arith.constant 0 : index
    %33 = vector.load %arg43[%c0_31, %c9, %c0_32] : memref<18x25x16xf32, #tpu.memory_space<vmem>>, vector<16x16x16xf32>
    %34 = vector.shape_cast %33 : vector<16x16x16xf32> to vector<256x16xf32>
    %c0_33 = arith.constant 0 : index
    %c32 = arith.constant 32 : index
    %35 = vector.load %arg44[%c0_33, %c32] : memref<256x144xf32, #tpu.memory_space<vmem>>, vector<256x16xf32>
    tpu.vector_store %arg44[%c0_33, %c32], %34 {strides = array<i32>} : memref<256x144xf32, #tpu.memory_space<vmem>>, vector<256x16xf32>,
    %c1_34 = arith.constant 1 : index
    %c7_35 = arith.constant 7 : index
    %c0_36 = arith.constant 0 : index
    %36 = vector.load %arg43[%c1_34, %c7_35, %c0_36] : memref<18x25x16xf32, #tpu.memory_space<vmem>>, vector<16x16x16xf32>
    %37 = vector.shape_cast %36 : vector<16x16x16xf32> to vector<256x16xf32>
    %c0_37 = arith.constant 0 : index
    %c48 = arith.constant 48 : index
    %38 = vector.load %arg44[%c0_37, %c48] : memref<256x144xf32, #tpu.memory_space<vmem>>, vector<256x16xf32>
    tpu.vector_store %arg44[%c0_37, %c48], %37 {strides = array<i32>} : memref<256x144xf32, #tpu.memory_space<vmem>>, vector<256x16xf32>,
    %c1_38 = arith.constant 1 : index
    %c8_39 = arith.constant 8 : index
    %c0_40 = arith.constant 0 : index
    %39 = vector.load %arg43[%c1_38, %c8_39, %c0_40] : memref<18x25x16xf32, #tpu.memory_space<vmem>>, vector<16x16x16xf32>
    %40 = vector.shape_cast %39 : vector<16x16x16xf32> to vector<256x16xf32>
    %c0_41 = arith.constant 0 : index
    %c64 = arith.constant 64 : index
    %41 = vector.load %arg44[%c0_41, %c64] : memref<256x144xf32, #tpu.memory_space<vmem>>, vector<256x16xf32>
    tpu.vector_store %arg44[%c0_41, %c64], %40 {strides = array<i32>} : memref<256x144xf32, #tpu.memory_space<vmem>>, vector<256x16xf32>,
    %c1_42 = arith.constant 1 : index
    %c9_43 = arith.constant 9 : index
    %c0_44 = arith.constant 0 : index
    %42 = vector.load %arg43[%c1_42, %c9_43, %c0_44] : memref<18x25x16xf32, #tpu.memory_space<vmem>>, vector<16x16x16xf32>
    %43 = vector.shape_cast %42 : vector<16x16x16xf32> to vector<256x16xf32>
    %c0_45 = arith.constant 0 : index
    %c80 = arith.constant 80 : index
    %44 = vector.load %arg44[%c0_45, %c80] : memref<256x144xf32, #tpu.memory_space<vmem>>, vector<256x16xf32>
    tpu.vector_store %arg44[%c0_45, %c80], %43 {strides = array<i32>} : memref<256x144xf32, #tpu.memory_space<vmem>>, vector<256x16xf32>,
    %c2 = arith.constant 2 : index
    %c7_46 = arith.constant 7 : index
    %c0_47 = arith.constant 0 : index
    %45 = vector.load %arg43[%c2, %c7_46, %c0_47] : memref<18x25x16xf32, #tpu.memory_space<vmem>>, vector<16x16x16xf32>
    %46 = vector.shape_cast %45 : vector<16x16x16xf32> to vector<256x16xf32>
    %c0_48 = arith.constant 0 : index
    %c96 = arith.constant 96 : index
    %47 = vector.load %arg44[%c0_48, %c96] : memref<256x144xf32, #tpu.memory_space<vmem>>, vector<256x16xf32>
    tpu.vector_store %arg44[%c0_48, %c96], %46 {strides = array<i32>} : memref<256x144xf32, #tpu.memory_space<vmem>>, vector<256x16xf32>,
    %c2_49 = arith.constant 2 : index
    %c8_50 = arith.constant 8 : index
    %c0_51 = arith.constant 0 : index
    %48 = vector.load %arg43[%c2_49, %c8_50, %c0_51] : memref<18x25x16xf32, #tpu.memory_space<vmem>>, vector<16x16x16xf32>
    %49 = vector.shape_cast %48 : vector<16x16x16xf32> to vector<256x16xf32>
    %c0_52 = arith.constant 0 : index
    %c112 = arith.constant 112 : index
    %50 = vector.load %arg44[%c0_52, %c112] : memref<256x144xf32, #tpu.memory_space<vmem>>, vector<256x16xf32>
    tpu.vector_store %arg44[%c0_52, %c112], %49 {strides = array<i32>} : memref<256x144xf32, #tpu.memory_space<vmem>>, vector<256x16xf32>,
    %c2_53 = arith.constant 2 : index
    %c9_54 = arith.constant 9 : index
    %c0_55 = arith.constant 0 : index
    %51 = vector.load %arg43[%c2_53, %c9_54, %c0_55] : memref<18x25x16xf32, #tpu.memory_space<vmem>>, vector<16x16x16xf32>
    %52 = vector.shape_cast %51 : vector<16x16x16xf32> to vector<256x16xf32>
    %c0_56 = arith.constant 0 : index
    %c128 = arith.constant 128 : index
    %53 = vector.load %arg44[%c0_56, %c128] : memref<256x144xf32, #tpu.memory_space<vmem>>, vector<256x16xf32>
    tpu.vector_store %arg44[%c0_56, %c128], %52 {strides = array<i32>} : memref<256x144xf32, #tpu.memory_space<vmem>>, vector<256x16xf32>,
    %c0_57 = arith.constant 0 : index
    %c0_58 = arith.constant 0 : index
    %54 = vector.load %arg44[%c0_57, %c0_58] : memref<256x144xf32, #tpu.memory_space<vmem>>, vector<256x144xf32>
    %55 = arith.truncf %54 : vector<256x144xf32> to vector<256x144xbf16>
    %c0_59 = arith.constant 0 : index
    %c0_60 = arith.constant 0 : index
    %56 = vector.load %arg7[%c0_59, %c0_60] : memref<144x4xbf16, #tpu.memory_space<vmem>>, vector<144x4xbf16>
    %cst_61 = arith.constant dense<0.000000e+00> : vector<256x4xf32>
    %57 = tpu.matmul %55, %56, %cst_61 {dimension_numbers = #tpu.dot_dimension_numbers<[1], [0], [0], [1], [0, 0, 1, 1], [], []>} : vector<256x144xbf16>, vector<144x4xbf16>, vector<256x4xf32> -> vector<256x4xf32>
    %c0_62 = arith.constant 0 : index
    %c4 = arith.constant 4 : index
    %58 = vector.load %arg42[%c0_62, %c4] : memref<256x12xf32, #tpu.memory_space<vmem>>, vector<256x4xf32>
    tpu.vector_store %arg42[%c0_62, %c4], %57 {strides = array<i32>} : memref<256x12xf32, #tpu.memory_space<vmem>>, vector<256x4xf32>,
    %c0_63 = arith.constant 0 : index
    %c0_64 = arith.constant 0 : index
    %59 = vector.load %arg42[%c0_63, %c0_64] : memref<256x12xf32, #tpu.memory_space<vmem>>, vector<256x8xf32>
    %c0_65 = arith.constant 0 : index
    %c0_66 = arith.constant 0 : index
    %60 = vector.load %arg8[%c0_65, %c0_66] : memref<1x8xf32, #tpu.memory_space<vmem>>, vector<1x8xf32>
    %61 = vector.broadcast %60 : vector<1x8xf32> to vector<256x8xf32>
    %62 = arith.mulf %59, %61 : vector<256x8xf32>
    %c0_67 = arith.constant 0 : index
    %c0_68 = arith.constant 0 : index
    %63 = vector.load %arg9[%c0_67, %c0_68] : memref<1x8xf32, #tpu.memory_space<vmem>>, vector<1x8xf32>
    %64 = vector.broadcast %63 : vector<1x8xf32> to vector<256x8xf32>
    %65 = arith.addf %62, %64 : vector<256x8xf32>
    %cst_69 = arith.constant 0.000000e+00 : f32
    %66 = vector.broadcast %cst_69 : f32 to vector<256x8xf32>
    %67 = arith.maximumf %65, %66 : vector<256x8xf32>
    %68 = arith.truncf %67 : vector<256x8xf32> to vector<256x8xbf16>
    %c0_70 = arith.constant 0 : index
    %c0_71 = arith.constant 0 : index
    %69 = vector.load %arg10[%c0_70, %c0_71] : memref<8x16xbf16, #tpu.memory_space<vmem>>, vector<8x16xbf16>
    %cst_72 = arith.constant dense<0.000000e+00> : vector<256x16xf32>
    %70 = tpu.matmul %68, %69, %cst_72 {dimension_numbers = #tpu.dot_dimension_numbers<[1], [0], [0], [1], [0, 0, 1, 1], [], []>} : vector<256x8xbf16>, vector<8x16xbf16>, vector<256x16xf32> -> vector<256x16xf32>
    %c0_73 = arith.constant 0 : index
    %c0_74 = arith.constant 0 : index
    %71 = vector.load %arg11[%c0_73, %c0_74] : memref<1x16xf32, #tpu.memory_space<vmem>>, vector<1x16xf32>
    %72 = vector.broadcast %71 : vector<1x16xf32> to vector<256x16xf32>
    %73 = arith.mulf %70, %72 : vector<256x16xf32>
    %c0_75 = arith.constant 0 : index
    %c0_76 = arith.constant 0 : index
    %74 = vector.load %arg12[%c0_75, %c0_76] : memref<1x16xf32, #tpu.memory_space<vmem>>, vector<1x16xf32>
    %75 = vector.broadcast %74 : vector<1x16xf32> to vector<256x16xf32>
    %76 = arith.addf %73, %75 : vector<256x16xf32>
    %cst_77 = arith.constant 0.000000e+00 : f32
    %77 = vector.broadcast %cst_77 : f32 to vector<256x16xf32>
    %78 = arith.maximumf %76, %77 : vector<256x16xf32>
    %79 = vector.shape_cast %78 : vector<256x16xf32> to vector<16x16x16xf32>
    %c1_78 = arith.constant 1 : index
    %c8_79 = arith.constant 8 : index
    %c0_80 = arith.constant 0 : index
    %80 = vector.load %arg43[%c1_78, %c8_79, %c0_80] : memref<18x25x16xf32, #tpu.memory_space<vmem>>, vector<16x16x16xf32>
    tpu.vector_store %arg43[%c1_78, %c8_79, %c0_80], %79 {strides = array<i32>} : memref<18x25x16xf32, #tpu.memory_space<vmem>>, vector<16x16x16xf32>,
    %c0_81 = arith.constant 0 : index
    %c7_82 = arith.constant 7 : index
    %c0_83 = arith.constant 0 : index
    %81 = vector.load %arg43[%c0_81, %c7_82, %c0_83] : memref<18x25x16xf32, #tpu.memory_space<vmem>>, vector<16x16x16xf32>
    %82 = vector.shape_cast %81 : vector<16x16x16xf32> to vector<256x16xf32>
    %c0_84 = arith.constant 0 : index
    %c0_85 = arith.constant 0 : index
    %83 = vector.load %arg44[%c0_84, %c0_85] : memref<256x144xf32, #tpu.memory_space<vmem>>, vector<256x16xf32>
    tpu.vector_store %arg44[%c0_84, %c0_85], %82 {strides = array<i32>} : memref<256x144xf32, #tpu.memory_space<vmem>>, vector<256x16xf32>,
    %c0_86 = arith.constant 0 : index
    %c8_87 = arith.constant 8 : index
    %c0_88 = arith.constant 0 : index
    %84 = vector.load %arg43[%c0_86, %c8_87, %c0_88] : memref<18x25x16xf32, #tpu.memory_space<vmem>>, vector<16x16x16xf32>
    %85 = vector.shape_cast %84 : vector<16x16x16xf32> to vector<256x16xf32>
    %c0_89 = arith.constant 0 : index
    %c16_90 = arith.constant 16 : index
    %86 = vector.load %arg44[%c0_89, %c16_90] : memref<256x144xf32, #tpu.memory_space<vmem>>, vector<256x16xf32>
    tpu.vector_store %arg44[%c0_89, %c16_90], %85 {strides = array<i32>} : memref<256x144xf32, #tpu.memory_space<vmem>>, vector<256x16xf32>,
    %c0_91 = arith.constant 0 : index
    %c9_92 = arith.constant 9 : index
    %c0_93 = arith.constant 0 : index
    %87 = vector.load %arg43[%c0_91, %c9_92, %c0_93] : memref<18x25x16xf32, #tpu.memory_space<vmem>>, vector<16x16x16xf32>
    %88 = vector.shape_cast %87 : vector<16x16x16xf32> to vector<256x16xf32>
    %c0_94 = arith.constant 0 : index
    %c32_95 = arith.constant 32 : index
    %89 = vector.load %arg44[%c0_94, %c32_95] : memref<256x144xf32, #tpu.memory_space<vmem>>, vector<256x16xf32>
    tpu.vector_store %arg44[%c0_94, %c32_95], %88 {strides = array<i32>} : memref<256x144xf32, #tpu.memory_space<vmem>>, vector<256x16xf32>,
    %c1_96 = arith.constant 1 : index
    %c7_97 = arith.constant 7 : index
    %c0_98 = arith.constant 0 : index
    %90 = vector.load %arg43[%c1_96, %c7_97, %c0_98] : memref<18x25x16xf32, #tpu.memory_space<vmem>>, vector<16x16x16xf32>
    %91 = vector.shape_cast %90 : vector<16x16x16xf32> to vector<256x16xf32>
    %c0_99 = arith.constant 0 : index
    %c48_100 = arith.constant 48 : index
    %92 = vector.load %arg44[%c0_99, %c48_100] : memref<256x144xf32, #tpu.memory_space<vmem>>, vector<256x16xf32>
    tpu.vector_store %arg44[%c0_99, %c48_100], %91 {strides = array<i32>} : memref<256x144xf32, #tpu.memory_space<vmem>>, vector<256x16xf32>,
    %c1_101 = arith.constant 1 : index
    %c8_102 = arith.constant 8 : index
    %c0_103 = arith.constant 0 : index
    %93 = vector.load %arg43[%c1_101, %c8_102, %c0_103] : memref<18x25x16xf32, #tpu.memory_space<vmem>>, vector<16x16x16xf32>
    %94 = vector.shape_cast %93 : vector<16x16x16xf32> to vector<256x16xf32>
    %c0_104 = arith.constant 0 : index
    %c64_105 = arith.constant 64 : index
    %95 = vector.load %arg44[%c0_104, %c64_105] : memref<256x144xf32, #tpu.memory_space<vmem>>, vector<256x16xf32>
    tpu.vector_store %arg44[%c0_104, %c64_105], %94 {strides = array<i32>} : memref<256x144xf32, #tpu.memory_space<vmem>>, vector<256x16xf32>,
    %c1_106 = arith.constant 1 : index
    %c9_107 = arith.constant 9 : index
    %c0_108 = arith.constant 0 : index
    %96 = vector.load %arg43[%c1_106, %c9_107, %c0_108] : memref<18x25x16xf32, #tpu.memory_space<vmem>>, vector<16x16x16xf32>
    %97 = vector.shape_cast %96 : vector<16x16x16xf32> to vector<256x16xf32>
    %c0_109 = arith.constant 0 : index
    %c80_110 = arith.constant 80 : index
    %98 = vector.load %arg44[%c0_109, %c80_110] : memref<256x144xf32, #tpu.memory_space<vmem>>, vector<256x16xf32>
    tpu.vector_store %arg44[%c0_109, %c80_110], %97 {strides = array<i32>} : memref<256x144xf32, #tpu.memory_space<vmem>>, vector<256x16xf32>,
    %c2_111 = arith.constant 2 : index
    %c7_112 = arith.constant 7 : index
    %c0_113 = arith.constant 0 : index
    %99 = vector.load %arg43[%c2_111, %c7_112, %c0_113] : memref<18x25x16xf32, #tpu.memory_space<vmem>>, vector<16x16x16xf32>
    %100 = vector.shape_cast %99 : vector<16x16x16xf32> to vector<256x16xf32>
    %c0_114 = arith.constant 0 : index
    %c96_115 = arith.constant 96 : index
    %101 = vector.load %arg44[%c0_114, %c96_115] : memref<256x144xf32, #tpu.memory_space<vmem>>, vector<256x16xf32>
    tpu.vector_store %arg44[%c0_114, %c96_115], %100 {strides = array<i32>} : memref<256x144xf32, #tpu.memory_space<vmem>>, vector<256x16xf32>,
    %c2_116 = arith.constant 2 : index
    %c8_117 = arith.constant 8 : index
    %c0_118 = arith.constant 0 : index
    %102 = vector.load %arg43[%c2_116, %c8_117, %c0_118] : memref<18x25x16xf32, #tpu.memory_space<vmem>>, vector<16x16x16xf32>
    %103 = vector.shape_cast %102 : vector<16x16x16xf32> to vector<256x16xf32>
    %c0_119 = arith.constant 0 : index
    %c112_120 = arith.constant 112 : index
    %104 = vector.load %arg44[%c0_119, %c112_120] : memref<256x144xf32, #tpu.memory_space<vmem>>, vector<256x16xf32>
    tpu.vector_store %arg44[%c0_119, %c112_120], %103 {strides = array<i32>} : memref<256x144xf32, #tpu.memory_space<vmem>>, vector<256x16xf32>,
    %c2_121 = arith.constant 2 : index
    %c9_122 = arith.constant 9 : index
    %c0_123 = arith.constant 0 : index
    %105 = vector.load %arg43[%c2_121, %c9_122, %c0_123] : memref<18x25x16xf32, #tpu.memory_space<vmem>>, vector<16x16x16xf32>
    %106 = vector.shape_cast %105 : vector<16x16x16xf32> to vector<256x16xf32>
    %c0_124 = arith.constant 0 : index
    %c128_125 = arith.constant 128 : index
    %107 = vector.load %arg44[%c0_124, %c128_125] : memref<256x144xf32, #tpu.memory_space<vmem>>, vector<256x16xf32>
    tpu.vector_store %arg44[%c0_124, %c128_125], %106 {strides = array<i32>} : memref<256x144xf32, #tpu.memory_space<vmem>>, vector<256x16xf32>,
    %c0_126 = arith.constant 0 : index
    %c0_127 = arith.constant 0 : index
    %108 = vector.load %arg44[%c0_126, %c0_127] : memref<256x144xf32, #tpu.memory_space<vmem>>, vector<256x144xf32>
    %109 = arith.truncf %108 : vector<256x144xf32> to vector<256x144xbf16>
    %c0_128 = arith.constant 0 : index
    %c0_129 = arith.constant 0 : index
    %110 = vector.load %arg13[%c0_128, %c0_129] : memref<144x4xbf16, #tpu.memory_space<vmem>>, vector<144x4xbf16>
    %cst_130 = arith.constant dense<0.000000e+00> : vector<256x4xf32>
    %111 = tpu.matmul %109, %110, %cst_130 {dimension_numbers = #tpu.dot_dimension_numbers<[1], [0], [0], [1], [0, 0, 1, 1], [], []>} : vector<256x144xbf16>, vector<144x4xbf16>, vector<256x4xf32> -> vector<256x4xf32>
    %c0_131 = arith.constant 0 : index
    %c8_132 = arith.constant 8 : index
    %112 = vector.load %arg42[%c0_131, %c8_132] : memref<256x12xf32, #tpu.memory_space<vmem>>, vector<256x4xf32>
    tpu.vector_store %arg42[%c0_131, %c8_132], %111 {strides = array<i32>} : memref<256x12xf32, #tpu.memory_space<vmem>>, vector<256x4xf32>,
    %c0_133 = arith.constant 0 : index
    %c0_134 = arith.constant 0 : index
    %113 = vector.load %arg42[%c0_133, %c0_134] : memref<256x12xf32, #tpu.memory_space<vmem>>, vector<256x12xf32>
    %c0_135 = arith.constant 0 : index
    %c0_136 = arith.constant 0 : index
    %114 = vector.load %arg14[%c0_135, %c0_136] : memref<1x12xf32, #tpu.memory_space<vmem>>, vector<1x12xf32>
    %115 = vector.broadcast %114 : vector<1x12xf32> to vector<256x12xf32>
    %116 = arith.mulf %113, %115 : vector<256x12xf32>
    %c0_137 = arith.constant 0 : index
    %c0_138 = arith.constant 0 : index
    %117 = vector.load %arg15[%c0_137, %c0_138] : memref<1x12xf32, #tpu.memory_space<vmem>>, vector<1x12xf32>
    %118 = vector.broadcast %117 : vector<1x12xf32> to vector<256x12xf32>
    %119 = arith.addf %116, %118 : vector<256x12xf32>
    %cst_139 = arith.constant 0.000000e+00 : f32
    %120 = vector.broadcast %cst_139 : f32 to vector<256x12xf32>
    %121 = arith.maximumf %119, %120 : vector<256x12xf32>
    %122 = arith.truncf %121 : vector<256x12xf32> to vector<256x12xbf16>
    %c0_140 = arith.constant 0 : index
    %c0_141 = arith.constant 0 : index
    %123 = vector.load %arg16[%c0_140, %c0_141] : memref<12x6xbf16, #tpu.memory_space<vmem>>, vector<12x6xbf16>
    %cst_142 = arith.constant dense<0.000000e+00> : vector<256x6xf32>
    %124 = tpu.matmul %122, %123, %cst_142 {dimension_numbers = #tpu.dot_dimension_numbers<[1], [0], [0], [1], [0, 0, 1, 1], [], []>} : vector<256x12xbf16>, vector<12x6xbf16>, vector<256x6xf32> -> vector<256x6xf32>
    %c0_143 = arith.constant 0 : index
    %c0_144 = arith.constant 0 : index
    %125 = vector.load %arg17[%c0_143, %c0_144] : memref<64x256xf32, #tpu.memory_space<vmem>>, vector<64x256xf32>
    %cst_145 = arith.constant dense<0.000000e+00> : vector<64x6xf32>
    %126 = tpu.matmul %125, %124, %cst_145 {dimension_numbers = #tpu.dot_dimension_numbers<[1], [0], [0], [1], [0, 0, 1, 1], [], []>} : vector<64x256xf32>, vector<256x6xf32>, vector<64x6xf32> -> vector<64x6xf32>
    %c0_146 = arith.constant 0 : index
    %c0_147 = arith.constant 0 : index
    %127 = vector.load %arg18[%c0_146, %c0_147] : memref<64x256xf32, #tpu.memory_space<vmem>>, vector<64x256xf32>
    %cst_148 = arith.constant dense<0.000000e+00> : vector<64x4xf32>
    %128 = tpu.matmul %127, %1, %cst_148 {dimension_numbers = #tpu.dot_dimension_numbers<[1], [0], [0], [1], [0, 0, 1, 1], [], []>} : vector<64x256xf32>, vector<256x4xf32>, vector<64x4xf32> -> vector<64x4xf32>
    %129 = arith.truncf %128 : vector<64x4xf32> to vector<64x4xbf16>
    %c0_149 = arith.constant 0 : index
    %c0_150 = arith.constant 0 : index
    %130 = vector.load %arg19[%c0_149, %c0_150] : memref<4x6xbf16, #tpu.memory_space<vmem>>, vector<4x6xbf16>
    %cst_151 = arith.constant dense<0.000000e+00> : vector<64x6xf32>
    %131 = tpu.matmul %129, %130, %cst_151 {dimension_numbers = #tpu.dot_dimension_numbers<[1], [0], [0], [1], [0, 0, 1, 1], [], []>} : vector<64x4xbf16>, vector<4x6xbf16>, vector<64x6xf32> -> vector<64x6xf32>
    %132 = arith.addf %126, %131 : vector<64x6xf32>
    %cst_152 = arith.constant 0.000000e+00 : f32
    %133 = vector.broadcast %cst_152 : f32 to vector<64x6xf32>
    %134 = arith.maximumf %132, %133 : vector<64x6xf32>
    %cst_153 = arith.constant 0.000000e+00 : f32
    %135 = vector.broadcast %cst_153 : f32 to vector<10x17x16xf32>
    %c0_154 = arith.constant 0 : index
    %c0_155 = arith.constant 0 : index
    %c0_156 = arith.constant 0 : index
    %136 = vector.load %arg46[%c0_154, %c0_155, %c0_156] : memref<10x17x16xf32, #tpu.memory_space<vmem>>, vector<10x17x16xf32>
    tpu.vector_store %arg46[%c0_154, %c0_155, %c0_156], %135 {strides = array<i32>} : memref<10x17x16xf32, #tpu.memory_space<vmem>>, vector<10x17x16xf32>,
    %c0_157 = arith.constant 0 : index
    %c0_158 = arith.constant 0 : index
    %137 = vector.load %arg45[%c0_157, %c0_158] : memref<64x14xf32, #tpu.memory_space<vmem>>, vector<64x6xf32>
    tpu.vector_store %arg45[%c0_157, %c0_158], %134 {strides = array<i32>} : memref<64x14xf32, #tpu.memory_space<vmem>>, vector<64x6xf32>,
    %c0_159 = arith.constant 0 : index
    %c0_160 = arith.constant 0 : index
    %138 = vector.load %arg45[%c0_159, %c0_160] : memref<64x14xf32, #tpu.memory_space<vmem>>, vector<64x6xf32>
    %c0_161 = arith.constant 0 : index
    %c0_162 = arith.constant 0 : index
    %139 = vector.load %arg20[%c0_161, %c0_162] : memref<1x6xf32, #tpu.memory_space<vmem>>, vector<1x6xf32>
    %140 = vector.broadcast %139 : vector<1x6xf32> to vector<64x6xf32>
    %141 = arith.mulf %138, %140 : vector<64x6xf32>
    %c0_163 = arith.constant 0 : index
    %c0_164 = arith.constant 0 : index
    %142 = vector.load %arg21[%c0_163, %c0_164] : memref<1x6xf32, #tpu.memory_space<vmem>>, vector<1x6xf32>
    %143 = vector.broadcast %142 : vector<1x6xf32> to vector<64x6xf32>
    %144 = arith.addf %141, %143 : vector<64x6xf32>
    %cst_165 = arith.constant 0.000000e+00 : f32
    %145 = vector.broadcast %cst_165 : f32 to vector<64x6xf32>
    %146 = arith.maximumf %144, %145 : vector<64x6xf32>
    %147 = arith.truncf %146 : vector<64x6xf32> to vector<64x6xbf16>
    %c0_166 = arith.constant 0 : index
    %c0_167 = arith.constant 0 : index
    %148 = vector.load %arg22[%c0_166, %c0_167] : memref<6x16xbf16, #tpu.memory_space<vmem>>, vector<6x16xbf16>
    %cst_168 = arith.constant dense<0.000000e+00> : vector<64x16xf32>
    %149 = tpu.matmul %147, %148, %cst_168 {dimension_numbers = #tpu.dot_dimension_numbers<[1], [0], [0], [1], [0, 0, 1, 1], [], []>} : vector<64x6xbf16>, vector<6x16xbf16>, vector<64x16xf32> -> vector<64x16xf32>
    %c0_169 = arith.constant 0 : index
    %c0_170 = arith.constant 0 : index
    %150 = vector.load %arg23[%c0_169, %c0_170] : memref<1x16xf32, #tpu.memory_space<vmem>>, vector<1x16xf32>
    %151 = vector.broadcast %150 : vector<1x16xf32> to vector<64x16xf32>
    %152 = arith.mulf %149, %151 : vector<64x16xf32>
    %c0_171 = arith.constant 0 : index
    %c0_172 = arith.constant 0 : index
    %153 = vector.load %arg24[%c0_171, %c0_172] : memref<1x16xf32, #tpu.memory_space<vmem>>, vector<1x16xf32>
    %154 = vector.broadcast %153 : vector<1x16xf32> to vector<64x16xf32>
    %155 = arith.addf %152, %154 : vector<64x16xf32>
    %cst_173 = arith.constant 0.000000e+00 : f32
    %156 = vector.broadcast %cst_173 : f32 to vector<64x16xf32>
    %157 = arith.maximumf %155, %156 : vector<64x16xf32>
    %158 = vector.shape_cast %157 : vector<64x16xf32> to vector<8x8x16xf32>
    %c1_174 = arith.constant 1 : index
    %c8_175 = arith.constant 8 : index
    %c0_176 = arith.constant 0 : index
    %159 = vector.load %arg46[%c1_174, %c8_175, %c0_176] : memref<10x17x16xf32, #tpu.memory_space<vmem>>, vector<8x8x16xf32>
    tpu.vector_store %arg46[%c1_174, %c8_175, %c0_176], %158 {strides = array<i32>} : memref<10x17x16xf32, #tpu.memory_space<vmem>>, vector<8x8x16xf32>,
    %c0_177 = arith.constant 0 : index
    %c7_178 = arith.constant 7 : index
    %c0_179 = arith.constant 0 : index
    %160 = vector.load %arg46[%c0_177, %c7_178, %c0_179] : memref<10x17x16xf32, #tpu.memory_space<vmem>>, vector<8x8x16xf32>
    %161 = vector.shape_cast %160 : vector<8x8x16xf32> to vector<64x16xf32>
    %c0_180 = arith.constant 0 : index
    %c0_181 = arith.constant 0 : index
    %162 = vector.load %arg47[%c0_180, %c0_181] : memref<64x144xf32, #tpu.memory_space<vmem>>, vector<64x16xf32>
    tpu.vector_store %arg47[%c0_180, %c0_181], %161 {strides = array<i32>} : memref<64x144xf32, #tpu.memory_space<vmem>>, vector<64x16xf32>,
    %c0_182 = arith.constant 0 : index
    %c8_183 = arith.constant 8 : index
    %c0_184 = arith.constant 0 : index
    %163 = vector.load %arg46[%c0_182, %c8_183, %c0_184] : memref<10x17x16xf32, #tpu.memory_space<vmem>>, vector<8x8x16xf32>
    %164 = vector.shape_cast %163 : vector<8x8x16xf32> to vector<64x16xf32>
    %c0_185 = arith.constant 0 : index
    %c16_186 = arith.constant 16 : index
    %165 = vector.load %arg47[%c0_185, %c16_186] : memref<64x144xf32, #tpu.memory_space<vmem>>, vector<64x16xf32>
    tpu.vector_store %arg47[%c0_185, %c16_186], %164 {strides = array<i32>} : memref<64x144xf32, #tpu.memory_space<vmem>>, vector<64x16xf32>,
    %c0_187 = arith.constant 0 : index
    %c9_188 = arith.constant 9 : index
    %c0_189 = arith.constant 0 : index
    %166 = vector.load %arg46[%c0_187, %c9_188, %c0_189] : memref<10x17x16xf32, #tpu.memory_space<vmem>>, vector<8x8x16xf32>
    %167 = vector.shape_cast %166 : vector<8x8x16xf32> to vector<64x16xf32>
    %c0_190 = arith.constant 0 : index
    %c32_191 = arith.constant 32 : index
    %168 = vector.load %arg47[%c0_190, %c32_191] : memref<64x144xf32, #tpu.memory_space<vmem>>, vector<64x16xf32>
    tpu.vector_store %arg47[%c0_190, %c32_191], %167 {strides = array<i32>} : memref<64x144xf32, #tpu.memory_space<vmem>>, vector<64x16xf32>,
    %c1_192 = arith.constant 1 : index
    %c7_193 = arith.constant 7 : index
    %c0_194 = arith.constant 0 : index
    %169 = vector.load %arg46[%c1_192, %c7_193, %c0_194] : memref<10x17x16xf32, #tpu.memory_space<vmem>>, vector<8x8x16xf32>
    %170 = vector.shape_cast %169 : vector<8x8x16xf32> to vector<64x16xf32>
    %c0_195 = arith.constant 0 : index
    %c48_196 = arith.constant 48 : index
    %171 = vector.load %arg47[%c0_195, %c48_196] : memref<64x144xf32, #tpu.memory_space<vmem>>, vector<64x16xf32>
    tpu.vector_store %arg47[%c0_195, %c48_196], %170 {strides = array<i32>} : memref<64x144xf32, #tpu.memory_space<vmem>>, vector<64x16xf32>,
    %c1_197 = arith.constant 1 : index
    %c8_198 = arith.constant 8 : index
    %c0_199 = arith.constant 0 : index
    %172 = vector.load %arg46[%c1_197, %c8_198, %c0_199] : memref<10x17x16xf32, #tpu.memory_space<vmem>>, vector<8x8x16xf32>
    %173 = vector.shape_cast %172 : vector<8x8x16xf32> to vector<64x16xf32>
    %c0_200 = arith.constant 0 : index
    %c64_201 = arith.constant 64 : index
    %174 = vector.load %arg47[%c0_200, %c64_201] : memref<64x144xf32, #tpu.memory_space<vmem>>, vector<64x16xf32>
    tpu.vector_store %arg47[%c0_200, %c64_201], %173 {strides = array<i32>} : memref<64x144xf32, #tpu.memory_space<vmem>>, vector<64x16xf32>,
    %c1_202 = arith.constant 1 : index
    %c9_203 = arith.constant 9 : index
    %c0_204 = arith.constant 0 : index
    %175 = vector.load %arg46[%c1_202, %c9_203, %c0_204] : memref<10x17x16xf32, #tpu.memory_space<vmem>>, vector<8x8x16xf32>
    %176 = vector.shape_cast %175 : vector<8x8x16xf32> to vector<64x16xf32>
    %c0_205 = arith.constant 0 : index
    %c80_206 = arith.constant 80 : index
    %177 = vector.load %arg47[%c0_205, %c80_206] : memref<64x144xf32, #tpu.memory_space<vmem>>, vector<64x16xf32>
    tpu.vector_store %arg47[%c0_205, %c80_206], %176 {strides = array<i32>} : memref<64x144xf32, #tpu.memory_space<vmem>>, vector<64x16xf32>,
    %c2_207 = arith.constant 2 : index
    %c7_208 = arith.constant 7 : index
    %c0_209 = arith.constant 0 : index
    %178 = vector.load %arg46[%c2_207, %c7_208, %c0_209] : memref<10x17x16xf32, #tpu.memory_space<vmem>>, vector<8x8x16xf32>
    %179 = vector.shape_cast %178 : vector<8x8x16xf32> to vector<64x16xf32>
    %c0_210 = arith.constant 0 : index
    %c96_211 = arith.constant 96 : index
    %180 = vector.load %arg47[%c0_210, %c96_211] : memref<64x144xf32, #tpu.memory_space<vmem>>, vector<64x16xf32>
    tpu.vector_store %arg47[%c0_210, %c96_211], %179 {strides = array<i32>} : memref<64x144xf32, #tpu.memory_space<vmem>>, vector<64x16xf32>,
    %c2_212 = arith.constant 2 : index
    %c8_213 = arith.constant 8 : index
    %c0_214 = arith.constant 0 : index
    %181 = vector.load %arg46[%c2_212, %c8_213, %c0_214] : memref<10x17x16xf32, #tpu.memory_space<vmem>>, vector<8x8x16xf32>
    %182 = vector.shape_cast %181 : vector<8x8x16xf32> to vector<64x16xf32>
    %c0_215 = arith.constant 0 : index
    %c112_216 = arith.constant 112 : index
    %183 = vector.load %arg47[%c0_215, %c112_216] : memref<64x144xf32, #tpu.memory_space<vmem>>, vector<64x16xf32>
    tpu.vector_store %arg47[%c0_215, %c112_216], %182 {strides = array<i32>} : memref<64x144xf32, #tpu.memory_space<vmem>>, vector<64x16xf32>,
    %c2_217 = arith.constant 2 : index
    %c9_218 = arith.constant 9 : index
    %c0_219 = arith.constant 0 : index
    %184 = vector.load %arg46[%c2_217, %c9_218, %c0_219] : memref<10x17x16xf32, #tpu.memory_space<vmem>>, vector<8x8x16xf32>
    %185 = vector.shape_cast %184 : vector<8x8x16xf32> to vector<64x16xf32>
    %c0_220 = arith.constant 0 : index
    %c128_221 = arith.constant 128 : index
    %186 = vector.load %arg47[%c0_220, %c128_221] : memref<64x144xf32, #tpu.memory_space<vmem>>, vector<64x16xf32>
    tpu.vector_store %arg47[%c0_220, %c128_221], %185 {strides = array<i32>} : memref<64x144xf32, #tpu.memory_space<vmem>>, vector<64x16xf32>,
    %c0_222 = arith.constant 0 : index
    %c0_223 = arith.constant 0 : index
    %187 = vector.load %arg47[%c0_222, %c0_223] : memref<64x144xf32, #tpu.memory_space<vmem>>, vector<64x144xf32>
    %188 = arith.truncf %187 : vector<64x144xf32> to vector<64x144xbf16>
    %c0_224 = arith.constant 0 : index
    %c0_225 = arith.constant 0 : index
    %189 = vector.load %arg25[%c0_224, %c0_225] : memref<144x4xbf16, #tpu.memory_space<vmem>>, vector<144x4xbf16>
    %cst_226 = arith.constant dense<0.000000e+00> : vector<64x4xf32>
    %190 = tpu.matmul %188, %189, %cst_226 {dimension_numbers = #tpu.dot_dimension_numbers<[1], [0], [0], [1], [0, 0, 1, 1], [], []>} : vector<64x144xbf16>, vector<144x4xbf16>, vector<64x4xf32> -> vector<64x4xf32>
    %c0_227 = arith.constant 0 : index
    %c6 = arith.constant 6 : index
    %191 = vector.load %arg45[%c0_227, %c6] : memref<64x14xf32, #tpu.memory_space<vmem>>, vector<64x4xf32>
    tpu.vector_store %arg45[%c0_227, %c6], %190 {strides = array<i32>} : memref<64x14xf32, #tpu.memory_space<vmem>>, vector<64x4xf32>,
    %c0_228 = arith.constant 0 : index
    %c0_229 = arith.constant 0 : index
    %192 = vector.load %arg45[%c0_228, %c0_229] : memref<64x14xf32, #tpu.memory_space<vmem>>, vector<64x10xf32>
    %c0_230 = arith.constant 0 : index
    %c0_231 = arith.constant 0 : index
    %193 = vector.load %arg26[%c0_230, %c0_231] : memref<1x10xf32, #tpu.memory_space<vmem>>, vector<1x10xf32>
    %194 = vector.broadcast %193 : vector<1x10xf32> to vector<64x10xf32>
    %195 = arith.mulf %192, %194 : vector<64x10xf32>
    %c0_232 = arith.constant 0 : index
    %c0_233 = arith.constant 0 : index
    %196 = vector.load %arg27[%c0_232, %c0_233] : memref<1x10xf32, #tpu.memory_space<vmem>>, vector<1x10xf32>
    %197 = vector.broadcast %196 : vector<1x10xf32> to vector<64x10xf32>
    %198 = arith.addf %195, %197 : vector<64x10xf32>
    %cst_234 = arith.constant 0.000000e+00 : f32
    %199 = vector.broadcast %cst_234 : f32 to vector<64x10xf32>
    %200 = arith.maximumf %198, %199 : vector<64x10xf32>
    %201 = arith.truncf %200 : vector<64x10xf32> to vector<64x10xbf16>
    %c0_235 = arith.constant 0 : index
    %c0_236 = arith.constant 0 : index
    %202 = vector.load %arg28[%c0_235, %c0_236] : memref<10x16xbf16, #tpu.memory_space<vmem>>, vector<10x16xbf16>
    %cst_237 = arith.constant dense<0.000000e+00> : vector<64x16xf32>
    %203 = tpu.matmul %201, %202, %cst_237 {dimension_numbers = #tpu.dot_dimension_numbers<[1], [0], [0], [1], [0, 0, 1, 1], [], []>} : vector<64x10xbf16>, vector<10x16xbf16>, vector<64x16xf32> -> vector<64x16xf32>
    %c0_238 = arith.constant 0 : index
    %c0_239 = arith.constant 0 : index
    %204 = vector.load %arg29[%c0_238, %c0_239] : memref<1x16xf32, #tpu.memory_space<vmem>>, vector<1x16xf32>
    %205 = vector.broadcast %204 : vector<1x16xf32> to vector<64x16xf32>
    %206 = arith.mulf %203, %205 : vector<64x16xf32>
    %c0_240 = arith.constant 0 : index
    %c0_241 = arith.constant 0 : index
    %207 = vector.load %arg30[%c0_240, %c0_241] : memref<1x16xf32, #tpu.memory_space<vmem>>, vector<1x16xf32>
    %208 = vector.broadcast %207 : vector<1x16xf32> to vector<64x16xf32>
    %209 = arith.addf %206, %208 : vector<64x16xf32>
    %cst_242 = arith.constant 0.000000e+00 : f32
    %210 = vector.broadcast %cst_242 : f32 to vector<64x16xf32>
    %211 = arith.maximumf %209, %210 : vector<64x16xf32>
    %212 = vector.shape_cast %211 : vector<64x16xf32> to vector<8x8x16xf32>
    %c1_243 = arith.constant 1 : index
    %c8_244 = arith.constant 8 : index
    %c0_245 = arith.constant 0 : index
    %213 = vector.load %arg46[%c1_243, %c8_244, %c0_245] : memref<10x17x16xf32, #tpu.memory_space<vmem>>, vector<8x8x16xf32>
    tpu.vector_store %arg46[%c1_243, %c8_244, %c0_245], %212 {strides = array<i32>} : memref<10x17x16xf32, #tpu.memory_space<vmem>>, vector<8x8x16xf32>,
    %c0_246 = arith.constant 0 : index
    %c7_247 = arith.constant 7 : index
    %c0_248 = arith.constant 0 : index
    %214 = vector.load %arg46[%c0_246, %c7_247, %c0_248] : memref<10x17x16xf32, #tpu.memory_space<vmem>>, vector<8x8x16xf32>
    %215 = vector.shape_cast %214 : vector<8x8x16xf32> to vector<64x16xf32>
    %c0_249 = arith.constant 0 : index
    %c0_250 = arith.constant 0 : index
    %216 = vector.load %arg47[%c0_249, %c0_250] : memref<64x144xf32, #tpu.memory_space<vmem>>, vector<64x16xf32>
    tpu.vector_store %arg47[%c0_249, %c0_250], %215 {strides = array<i32>} : memref<64x144xf32, #tpu.memory_space<vmem>>, vector<64x16xf32>,
    %c0_251 = arith.constant 0 : index
    %c8_252 = arith.constant 8 : index
    %c0_253 = arith.constant 0 : index
    %217 = vector.load %arg46[%c0_251, %c8_252, %c0_253] : memref<10x17x16xf32, #tpu.memory_space<vmem>>, vector<8x8x16xf32>
    %218 = vector.shape_cast %217 : vector<8x8x16xf32> to vector<64x16xf32>
    %c0_254 = arith.constant 0 : index
    %c16_255 = arith.constant 16 : index
    %219 = vector.load %arg47[%c0_254, %c16_255] : memref<64x144xf32, #tpu.memory_space<vmem>>, vector<64x16xf32>
    tpu.vector_store %arg47[%c0_254, %c16_255], %218 {strides = array<i32>} : memref<64x144xf32, #tpu.memory_space<vmem>>, vector<64x16xf32>,
    %c0_256 = arith.constant 0 : index
    %c9_257 = arith.constant 9 : index
    %c0_258 = arith.constant 0 : index
    %220 = vector.load %arg46[%c0_256, %c9_257, %c0_258] : memref<10x17x16xf32, #tpu.memory_space<vmem>>, vector<8x8x16xf32>
    %221 = vector.shape_cast %220 : vector<8x8x16xf32> to vector<64x16xf32>
    %c0_259 = arith.constant 0 : index
    %c32_260 = arith.constant 32 : index
    %222 = vector.load %arg47[%c0_259, %c32_260] : memref<64x144xf32, #tpu.memory_space<vmem>>, vector<64x16xf32>
    tpu.vector_store %arg47[%c0_259, %c32_260], %221 {strides = array<i32>} : memref<64x144xf32, #tpu.memory_space<vmem>>, vector<64x16xf32>,
    %c1_261 = arith.constant 1 : index
    %c7_262 = arith.constant 7 : index
    %c0_263 = arith.constant 0 : index
    %223 = vector.load %arg46[%c1_261, %c7_262, %c0_263] : memref<10x17x16xf32, #tpu.memory_space<vmem>>, vector<8x8x16xf32>
    %224 = vector.shape_cast %223 : vector<8x8x16xf32> to vector<64x16xf32>
    %c0_264 = arith.constant 0 : index
    %c48_265 = arith.constant 48 : index
    %225 = vector.load %arg47[%c0_264, %c48_265] : memref<64x144xf32, #tpu.memory_space<vmem>>, vector<64x16xf32>
    tpu.vector_store %arg47[%c0_264, %c48_265], %224 {strides = array<i32>} : memref<64x144xf32, #tpu.memory_space<vmem>>, vector<64x16xf32>,
    %c1_266 = arith.constant 1 : index
    %c8_267 = arith.constant 8 : index
    %c0_268 = arith.constant 0 : index
    %226 = vector.load %arg46[%c1_266, %c8_267, %c0_268] : memref<10x17x16xf32, #tpu.memory_space<vmem>>, vector<8x8x16xf32>
    %227 = vector.shape_cast %226 : vector<8x8x16xf32> to vector<64x16xf32>
    %c0_269 = arith.constant 0 : index
    %c64_270 = arith.constant 64 : index
    %228 = vector.load %arg47[%c0_269, %c64_270] : memref<64x144xf32, #tpu.memory_space<vmem>>, vector<64x16xf32>
    tpu.vector_store %arg47[%c0_269, %c64_270], %227 {strides = array<i32>} : memref<64x144xf32, #tpu.memory_space<vmem>>, vector<64x16xf32>,
    %c1_271 = arith.constant 1 : index
    %c9_272 = arith.constant 9 : index
    %c0_273 = arith.constant 0 : index
    %229 = vector.load %arg46[%c1_271, %c9_272, %c0_273] : memref<10x17x16xf32, #tpu.memory_space<vmem>>, vector<8x8x16xf32>
    %230 = vector.shape_cast %229 : vector<8x8x16xf32> to vector<64x16xf32>
    %c0_274 = arith.constant 0 : index
    %c80_275 = arith.constant 80 : index
    %231 = vector.load %arg47[%c0_274, %c80_275] : memref<64x144xf32, #tpu.memory_space<vmem>>, vector<64x16xf32>
    tpu.vector_store %arg47[%c0_274, %c80_275], %230 {strides = array<i32>} : memref<64x144xf32, #tpu.memory_space<vmem>>, vector<64x16xf32>,
    %c2_276 = arith.constant 2 : index
    %c7_277 = arith.constant 7 : index
    %c0_278 = arith.constant 0 : index
    %232 = vector.load %arg46[%c2_276, %c7_277, %c0_278] : memref<10x17x16xf32, #tpu.memory_space<vmem>>, vector<8x8x16xf32>
    %233 = vector.shape_cast %232 : vector<8x8x16xf32> to vector<64x16xf32>
    %c0_279 = arith.constant 0 : index
    %c96_280 = arith.constant 96 : index
    %234 = vector.load %arg47[%c0_279, %c96_280] : memref<64x144xf32, #tpu.memory_space<vmem>>, vector<64x16xf32>
    tpu.vector_store %arg47[%c0_279, %c96_280], %233 {strides = array<i32>} : memref<64x144xf32, #tpu.memory_space<vmem>>, vector<64x16xf32>,
    %c2_281 = arith.constant 2 : index
    %c8_282 = arith.constant 8 : index
    %c0_283 = arith.constant 0 : index
    %235 = vector.load %arg46[%c2_281, %c8_282, %c0_283] : memref<10x17x16xf32, #tpu.memory_space<vmem>>, vector<8x8x16xf32>
    %236 = vector.shape_cast %235 : vector<8x8x16xf32> to vector<64x16xf32>
    %c0_284 = arith.constant 0 : index
    %c112_285 = arith.constant 112 : index
    %237 = vector.load %arg47[%c0_284, %c112_285] : memref<64x144xf32, #tpu.memory_space<vmem>>, vector<64x16xf32>
    tpu.vector_store %arg47[%c0_284, %c112_285], %236 {strides = array<i32>} : memref<64x144xf32, #tpu.memory_space<vmem>>, vector<64x16xf32>,
    %c2_286 = arith.constant 2 : index
    %c9_287 = arith.constant 9 : index
    %c0_288 = arith.constant 0 : index
    %238 = vector.load %arg46[%c2_286, %c9_287, %c0_288] : memref<10x17x16xf32, #tpu.memory_space<vmem>>, vector<8x8x16xf32>
    %239 = vector.shape_cast %238 : vector<8x8x16xf32> to vector<64x16xf32>
    %c0_289 = arith.constant 0 : index
    %c128_290 = arith.constant 128 : index
    %240 = vector.load %arg47[%c0_289, %c128_290] : memref<64x144xf32, #tpu.memory_space<vmem>>, vector<64x16xf32>
    tpu.vector_store %arg47[%c0_289, %c128_290], %239 {strides = array<i32>} : memref<64x144xf32, #tpu.memory_space<vmem>>, vector<64x16xf32>,
    %c0_291 = arith.constant 0 : index
    %c0_292 = arith.constant 0 : index
    %241 = vector.load %arg47[%c0_291, %c0_292] : memref<64x144xf32, #tpu.memory_space<vmem>>, vector<64x144xf32>
    %242 = arith.truncf %241 : vector<64x144xf32> to vector<64x144xbf16>
    %c0_293 = arith.constant 0 : index
    %c0_294 = arith.constant 0 : index
    %243 = vector.load %arg31[%c0_293, %c0_294] : memref<144x4xbf16, #tpu.memory_space<vmem>>, vector<144x4xbf16>
    %cst_295 = arith.constant dense<0.000000e+00> : vector<64x4xf32>
    %244 = tpu.matmul %242, %243, %cst_295 {dimension_numbers = #tpu.dot_dimension_numbers<[1], [0], [0], [1], [0, 0, 1, 1], [], []>} : vector<64x144xbf16>, vector<144x4xbf16>, vector<64x4xf32> -> vector<64x4xf32>
    %c0_296 = arith.constant 0 : index
    %c10 = arith.constant 10 : index
    %245 = vector.load %arg45[%c0_296, %c10] : memref<64x14xf32, #tpu.memory_space<vmem>>, vector<64x4xf32>
    tpu.vector_store %arg45[%c0_296, %c10], %244 {strides = array<i32>} : memref<64x14xf32, #tpu.memory_space<vmem>>, vector<64x4xf32>,
    %c0_297 = arith.constant 0 : index
    %c0_298 = arith.constant 0 : index
    %246 = vector.load %arg45[%c0_297, %c0_298] : memref<64x14xf32, #tpu.memory_space<vmem>>, vector<64x14xf32>
    %c0_299 = arith.constant 0 : index
    %c0_300 = arith.constant 0 : index
    %247 = vector.load %arg32[%c0_299, %c0_300] : memref<1x14xf32, #tpu.memory_space<vmem>>, vector<1x14xf32>
    %248 = vector.broadcast %247 : vector<1x14xf32> to vector<64x14xf32>
    %249 = arith.mulf %246, %248 : vector<64x14xf32>
    %c0_301 = arith.constant 0 : index
    %c0_302 = arith.constant 0 : index
    %250 = vector.load %arg33[%c0_301, %c0_302] : memref<1x14xf32, #tpu.memory_space<vmem>>, vector<1x14xf32>
    %251 = vector.broadcast %250 : vector<1x14xf32> to vector<64x14xf32>
    %252 = arith.addf %249, %251 : vector<64x14xf32>
    %cst_303 = arith.constant 0.000000e+00 : f32
    %253 = vector.broadcast %cst_303 : f32 to vector<64x14xf32>
    %254 = arith.maximumf %252, %253 : vector<64x14xf32>
    %255 = arith.truncf %254 : vector<64x14xf32> to vector<64x14xbf16>
    %c0_304 = arith.constant 0 : index
    %c0_305 = arith.constant 0 : index
    %256 = vector.load %arg34[%c0_304, %c0_305] : memref<14x7xbf16, #tpu.memory_space<vmem>>, vector<14x7xbf16>
    %cst_306 = arith.constant dense<0.000000e+00> : vector<64x7xf32>
    %257 = tpu.matmul %255, %256, %cst_306 {dimension_numbers = #tpu.dot_dimension_numbers<[1], [0], [0], [1], [0, 0, 1, 1], [], []>} : vector<64x14xbf16>, vector<14x7xbf16>, vector<64x7xf32> -> vector<64x7xf32>
    %c0_307 = arith.constant 0 : index
    %c0_308 = arith.constant 0 : index
    %258 = vector.load %arg35[%c0_307, %c0_308] : memref<16x64xf32, #tpu.memory_space<vmem>>, vector<16x64xf32>
    %cst_309 = arith.constant dense<0.000000e+00> : vector<16x7xf32>
    %259 = tpu.matmul %258, %257, %cst_309 {dimension_numbers = #tpu.dot_dimension_numbers<[1], [0], [0], [1], [0, 0, 1, 1], [], []>} : vector<16x64xf32>, vector<64x7xf32>, vector<16x7xf32> -> vector<16x7xf32>
    %c0_310 = arith.constant 0 : index
    %c0_311 = arith.constant 0 : index
    %260 = vector.load %arg36[%c0_310, %c0_311] : memref<16x64xf32, #tpu.memory_space<vmem>>, vector<16x64xf32>
    %cst_312 = arith.constant dense<0.000000e+00> : vector<16x6xf32>
    %261 = tpu.matmul %260, %134, %cst_312 {dimension_numbers = #tpu.dot_dimension_numbers<[1], [0], [0], [1], [0, 0, 1, 1], [], []>} : vector<16x64xf32>, vector<64x6xf32>, vector<16x6xf32> -> vector<16x6xf32>
    %262 = arith.truncf %261 : vector<16x6xf32> to vector<16x6xbf16>
    %c0_313 = arith.constant 0 : index
    %c0_314 = arith.constant 0 : index
    %263 = vector.load %arg37[%c0_313, %c0_314] : memref<6x7xbf16, #tpu.memory_space<vmem>>, vector<6x7xbf16>
    %cst_315 = arith.constant dense<0.000000e+00> : vector<16x7xf32>
    %264 = tpu.matmul %262, %263, %cst_315 {dimension_numbers = #tpu.dot_dimension_numbers<[1], [0], [0], [1], [0, 0, 1, 1], [], []>} : vector<16x6xbf16>, vector<6x7xbf16>, vector<16x7xf32> -> vector<16x7xf32>
    %265 = arith.addf %259, %264 : vector<16x7xf32>
    %cst_316 = arith.constant 0.000000e+00 : f32
    %266 = vector.broadcast %cst_316 : f32 to vector<16x7xf32>
    %267 = arith.maximumf %265, %266 : vector<16x7xf32>
    %268 = arith.truncf %267 : vector<16x7xf32> to vector<16x7xbf16>
    %c0_317 = arith.constant 0 : index
    %c0_318 = arith.constant 0 : index
    %269 = vector.load %arg38[%c0_317, %c0_318] : memref<7x32xbf16, #tpu.memory_space<vmem>>, vector<7x32xbf16>
    %cst_319 = arith.constant dense<0.000000e+00> : vector<16x32xf32>
    %270 = tpu.matmul %268, %269, %cst_319 {dimension_numbers = #tpu.dot_dimension_numbers<[1], [0], [0], [1], [0, 0, 1, 1], [], []>} : vector<16x7xbf16>, vector<7x32xbf16>, vector<16x32xf32> -> vector<16x32xf32>
    %c0_320 = arith.constant 0 : index
    %c0_321 = arith.constant 0 : index
    %271 = vector.load %arg39[%c0_320, %c0_321] : memref<1x32xf32, #tpu.memory_space<vmem>>, vector<1x32xf32>
    %272 = vector.broadcast %271 : vector<1x32xf32> to vector<16x32xf32>
    %273 = arith.addf %270, %272 : vector<16x32xf32>
    %c0_322 = arith.constant 0 : index
    %c0_323 = arith.constant 0 : index
    %274 = vector.load %arg40[%c0_322, %c0_323] : memref<16x32xf32, #tpu.memory_space<vmem>>, vector<16x32xf32>
    %275 = arith.addf %273, %274 : vector<16x32xf32>
    %c0_324 = arith.constant 0 : index
    %c0_325 = arith.constant 0 : index
    %c0_326 = arith.constant 0 : index
    %276 = vector.load %arg41[%c0_324, %c0_325, %c0_326] : memref<1x16x32xf32, #tpu.memory_space<vmem>>, vector<1x16x32xf32>
    %277 = vector.shape_cast %276 : vector<1x16x32xf32> to vector<16x32xf32>
    %278 = vector.shape_cast %275 : vector<16x32xf32> to vector<1x16x32xf32>
    tpu.vector_store %arg41[%c0_324, %c0_325, %c0_326], %278 {strides = array<i32>} : memref<1x16x32xf32, #tpu.memory_space<vmem>>, vector<1x16x32xf32>,
    return
  }
  func.func @transform_0(%arg0: i32) -> (i32, i32, i32) {
    %c0_i32 = arith.constant 0 : i32
    %c0_i32_0 = arith.constant 0 : i32
    %c0_i32_1 = arith.constant 0 : i32
    return %arg0, %c0_i32, %c0_i32_0 : i32, i32, i32
  }
  func.func @transform_1(%arg0: i32) -> (i32, i32) {
    %c0_i32 = arith.constant 0 : i32
    %c0_i32_0 = arith.constant 0 : i32
    %c0_i32_1 = arith.constant 0 : i32
    return %c0_i32, %c0_i32_0 : i32, i32
  }
  func.func @transform_2(%arg0: i32) -> (i32, i32) {
    %c0_i32 = arith.constant 0 : i32
    %c0_i32_0 = arith.constant 0 : i32
    %c0_i32_1 = arith.constant 0 : i32
    return %c0_i32, %c0_i32_0 : i32, i32
  }
  func.func @transform_3(%arg0: i32) -> (i32, i32) {
    %c0_i32 = arith.constant 0 : i32
    %c0_i32_0 = arith.constant 0 : i32
    %c0_i32_1 = arith.constant 0 : i32
    return %c0_i32, %c0_i32_0 : i32, i32
  }
  func.func @transform_4(%arg0: i32) -> (i32, i32) {
    %c0_i32 = arith.constant 0 : i32
    %c0_i32_0 = arith.constant 0 : i32
    %c0_i32_1 = arith.constant 0 : i32
    return %c0_i32, %c0_i32_0 : i32, i32
  }
  func.func @transform_5(%arg0: i32) -> (i32, i32) {
    %c0_i32 = arith.constant 0 : i32
    %c0_i32_0 = arith.constant 0 : i32
    %c0_i32_1 = arith.constant 0 : i32
    return %c0_i32, %c0_i32_0 : i32, i32
  }
  func.func @transform_6(%arg0: i32) -> (i32, i32) {
    %c0_i32 = arith.constant 0 : i32
    %c0_i32_0 = arith.constant 0 : i32
    %c0_i32_1 = arith.constant 0 : i32
    return %c0_i32, %c0_i32_0 : i32, i32
  }
  func.func @transform_7(%arg0: i32) -> (i32, i32) {
    %c0_i32 = arith.constant 0 : i32
    %c0_i32_0 = arith.constant 0 : i32
    %c0_i32_1 = arith.constant 0 : i32
    return %c0_i32, %c0_i32_0 : i32, i32
  }
  func.func @transform_8(%arg0: i32) -> (i32, i32) {
    %c0_i32 = arith.constant 0 : i32
    %c0_i32_0 = arith.constant 0 : i32
    %c0_i32_1 = arith.constant 0 : i32
    return %c0_i32, %c0_i32_0 : i32, i32
  }
  func.func @transform_9(%arg0: i32) -> (i32, i32) {
    %c0_i32 = arith.constant 0 : i32
    %c0_i32_0 = arith.constant 0 : i32
    %c0_i32_1 = arith.constant 0 : i32
    return %c0_i32, %c0_i32_0 : i32, i32
  }
  func.func @transform_10(%arg0: i32) -> (i32, i32) {
    %c0_i32 = arith.constant 0 : i32
    %c0_i32_0 = arith.constant 0 : i32
    %c0_i32_1 = arith.constant 0 : i32
    return %c0_i32, %c0_i32_0 : i32, i32
  }
  func.func @transform_11(%arg0: i32) -> (i32, i32) {
    %c0_i32 = arith.constant 0 : i32
    %c0_i32_0 = arith.constant 0 : i32
    %c0_i32_1 = arith.constant 0 : i32
    return %c0_i32, %c0_i32_0 : i32, i32
  }
  func.func @transform_12(%arg0: i32) -> (i32, i32) {
    %c0_i32 = arith.constant 0 : i32
    %c0_i32_0 = arith.constant 0 : i32
    %c0_i32_1 = arith.constant 0 : i32
    return %c0_i32, %c0_i32_0 : i32, i32
  }
  func.func @transform_13(%arg0: i32) -> (i32, i32) {
    %c0_i32 = arith.constant 0 : i32
    %c0_i32_0 = arith.constant 0 : i32
    %c0_i32_1 = arith.constant 0 : i32
    return %c0_i32, %c0_i32_0 : i32, i32
  }
  func.func @transform_14(%arg0: i32) -> (i32, i32) {
    %c0_i32 = arith.constant 0 : i32
    %c0_i32_0 = arith.constant 0 : i32
    %c0_i32_1 = arith.constant 0 : i32
    return %c0_i32, %c0_i32_0 : i32, i32
  }
  func.func @transform_15(%arg0: i32) -> (i32, i32) {
    %c0_i32 = arith.constant 0 : i32
    %c0_i32_0 = arith.constant 0 : i32
    %c0_i32_1 = arith.constant 0 : i32
    return %c0_i32, %c0_i32_0 : i32, i32
  }
  func.func @transform_16(%arg0: i32) -> (i32, i32) {
    %c0_i32 = arith.constant 0 : i32
    %c0_i32_0 = arith.constant 0 : i32
    %c0_i32_1 = arith.constant 0 : i32
    return %c0_i32, %c0_i32_0 : i32, i32
  }
  func.func @transform_17(%arg0: i32) -> (i32, i32) {
    %c0_i32 = arith.constant 0 : i32
    %c0_i32_0 = arith.constant 0 : i32
    %c0_i32_1 = arith.constant 0 : i32
    return %c0_i32, %c0_i32_0 : i32, i32
  }
  func.func @transform_18(%arg0: i32) -> (i32, i32) {
    %c0_i32 = arith.constant 0 : i32
    %c0_i32_0 = arith.constant 0 : i32
    %c0_i32_1 = arith.constant 0 : i32
    return %c0_i32, %c0_i32_0 : i32, i32
  }
  func.func @transform_19(%arg0: i32) -> (i32, i32) {
    %c0_i32 = arith.constant 0 : i32
    %c0_i32_0 = arith.constant 0 : i32
    %c0_i32_1 = arith.constant 0 : i32
    return %c0_i32, %c0_i32_0 : i32, i32
  }
  func.func @transform_20(%arg0: i32) -> (i32, i32) {
    %c0_i32 = arith.constant 0 : i32
    %c0_i32_0 = arith.constant 0 : i32
    %c0_i32_1 = arith.constant 0 : i32
    return %c0_i32, %c0_i32_0 : i32, i32
  }
  func.func @transform_21(%arg0: i32) -> (i32, i32) {
    %c0_i32 = arith.constant 0 : i32
    %c0_i32_0 = arith.constant 0 : i32
    %c0_i32_1 = arith.constant 0 : i32
    return %c0_i32, %c0_i32_0 : i32, i32
  }
  func.func @transform_22(%arg0: i32) -> (i32, i32) {
    %c0_i32 = arith.constant 0 : i32
    %c0_i32_0 = arith.constant 0 : i32
    %c0_i32_1 = arith.constant 0 : i32
    return %c0_i32, %c0_i32_0 : i32, i32
  }
  func.func @transform_23(%arg0: i32) -> (i32, i32) {
    %c0_i32 = arith.constant 0 : i32
    %c0_i32_0 = arith.constant 0 : i32
    %c0_i32_1 = arith.constant 0 : i32
    return %c0_i32, %c0_i32_0 : i32, i32
  }
  func.func @transform_24(%arg0: i32) -> (i32, i32) {
    %c0_i32 = arith.constant 0 : i32
    %c0_i32_0 = arith.constant 0 : i32
    %c0_i32_1 = arith.constant 0 : i32
    return %c0_i32, %c0_i32_0 : i32, i32
  }
  func.func @transform_25(%arg0: i32) -> (i32, i32) {
    %c0_i32 = arith.constant 0 : i32
    %c0_i32_0 = arith.constant 0 : i32
    %c0_i32_1 = arith.constant 0 : i32
    return %c0_i32, %c0_i32_0 : i32, i32
  }
  func.func @transform_26(%arg0: i32) -> (i32, i32) {
    %c0_i32 = arith.constant 0 : i32
    %c0_i32_0 = arith.constant 0 : i32
    %c0_i32_1 = arith.constant 0 : i32
    return %c0_i32, %c0_i32_0 : i32, i32
  }
  func.func @transform_27(%arg0: i32) -> (i32, i32) {
    %c0_i32 = arith.constant 0 : i32
    %c0_i32_0 = arith.constant 0 : i32
    %c0_i32_1 = arith.constant 0 : i32
    return %c0_i32, %c0_i32_0 : i32, i32
  }
  func.func @transform_28(%arg0: i32) -> (i32, i32) {
    %c0_i32 = arith.constant 0 : i32
    %c0_i32_0 = arith.constant 0 : i32
    %c0_i32_1 = arith.constant 0 : i32
    return %c0_i32, %c0_i32_0 : i32, i32
  }
  func.func @transform_29(%arg0: i32) -> (i32, i32) {
    %c0_i32 = arith.constant 0 : i32
    %c0_i32_0 = arith.constant 0 : i32
    %c0_i32_1 = arith.constant 0 : i32
    return %c0_i32, %c0_i32_0 : i32, i32
  }
  func.func @transform_30(%arg0: i32) -> (i32, i32) {
    %c0_i32 = arith.constant 0 : i32
    %c0_i32_0 = arith.constant 0 : i32
    %c0_i32_1 = arith.constant 0 : i32
    return %c0_i32, %c0_i32_0 : i32, i32
  }
  func.func @transform_31(%arg0: i32) -> (i32, i32) {
    %c0_i32 = arith.constant 0 : i32
    %c0_i32_0 = arith.constant 0 : i32
    %c0_i32_1 = arith.constant 0 : i32
    return %c0_i32, %c0_i32_0 : i32, i32
  }
  func.func @transform_32(%arg0: i32) -> (i32, i32) {
    %c0_i32 = arith.constant 0 : i32
    %c0_i32_0 = arith.constant 0 : i32
    %c0_i32_1 = arith.constant 0 : i32
    return %c0_i32, %c0_i32_0 : i32, i32
  }
  func.func @transform_33(%arg0: i32) -> (i32, i32) {
    %c0_i32 = arith.constant 0 : i32
    %c0_i32_0 = arith.constant 0 : i32
    %c0_i32_1 = arith.constant 0 : i32
    return %c0_i32, %c0_i32_0 : i32, i32
  }
  func.func @transform_34(%arg0: i32) -> (i32, i32) {
    %c0_i32 = arith.constant 0 : i32
    %c0_i32_0 = arith.constant 0 : i32
    %c0_i32_1 = arith.constant 0 : i32
    return %c0_i32, %c0_i32_0 : i32, i32
  }
  func.func @transform_35(%arg0: i32) -> (i32, i32) {
    %c0_i32 = arith.constant 0 : i32
    %c0_i32_0 = arith.constant 0 : i32
    %c0_i32_1 = arith.constant 0 : i32
    return %c0_i32, %c0_i32_0 : i32, i32
  }
  func.func @transform_36(%arg0: i32) -> (i32, i32) {
    %c0_i32 = arith.constant 0 : i32
    %c0_i32_0 = arith.constant 0 : i32
    %c0_i32_1 = arith.constant 0 : i32
    return %c0_i32, %c0_i32_0 : i32, i32
  }
  func.func @transform_37(%arg0: i32) -> (i32, i32) {
    %c0_i32 = arith.constant 0 : i32
    %c0_i32_0 = arith.constant 0 : i32
    %c0_i32_1 = arith.constant 0 : i32
    return %c0_i32, %c0_i32_0 : i32, i32
  }
  func.func @transform_38(%arg0: i32) -> (i32, i32) {
    %c0_i32 = arith.constant 0 : i32
    %c0_i32_0 = arith.constant 0 : i32
    %c0_i32_1 = arith.constant 0 : i32
    return %c0_i32, %c0_i32_0 : i32, i32
  }
  func.func @transform_39(%arg0: i32) -> (i32, i32) {
    %c0_i32 = arith.constant 0 : i32
    %c0_i32_0 = arith.constant 0 : i32
    %c0_i32_1 = arith.constant 0 : i32
    return %c0_i32, %c0_i32_0 : i32, i32
  }
  func.func @transform_40(%arg0: i32) -> (i32, i32, i32) {
    %c0_i32 = arith.constant 0 : i32
    %c0_i32_0 = arith.constant 0 : i32
    %c0_i32_1 = arith.constant 0 : i32
    return %arg0, %c0_i32, %c0_i32_0 : i32, i32, i32
  }
}

</mosaic_0001>

<llo_original>
// kernel: forward.1
$region0: #{forward.1}
  #allocation0 [shape = 'u32[]', space=smem, size = 0x4, offset = 0x4, fixed_abs, tag = 'smem constant byte address 0x4 - core index']
  #allocation1 [shape = 'u32[144,128]{1,0:T(1,128)}', space=vmem, size = 0x12000, scoped, tag = 'internal scratch']
  #allocation2 [shape = 'f32[256,12]{1,0:T(8,128)}', space=vmem, size = 0x20000, scoped, tag = 'scratch operand']
  #allocation3 [shape = 'f32[18,25,16]{2,1,0:T(8,128)}', space=vmem, size = 0x48000, scoped, tag = 'scratch operand']
  #allocation4 [shape = 'f32[256,144]{1,0:T(8,128)}', space=vmem, size = 0x40000, scoped, tag = 'scratch operand']
  #allocation5 [shape = 'f32[64,14]{1,0:T(8,128)}', space=vmem, size = 0x8000, scoped, tag = 'scratch operand']
  #allocation6 [shape = 'f32[10,17,16]{2,1,0:T(8,128)}', space=vmem, size = 0x1e000, scoped, tag = 'scratch operand']
  #allocation7 [shape = 'f32[64,144]{1,0:T(8,128)}', space=vmem, size = 0x10000, scoped, tag = 'scratch operand']
  %s0 = inlined_call_operand.smem [shape: u32[41], index: -1, kind: input, shape index: {}]
  %s1 = sld [smem:[%s0]]
  %s2 = scalar_lea.smem %s0, 1
  %s3 = sld [smem:[%s2]]
  %s4 = scalar_lea.smem %s0, 2
  %s5 = sld [smem:[%s4]]
  %s6 = scalar_lea.smem %s0, 3
  %s7 = sld [smem:[%s6]]
  %s8 = scalar_lea.smem %s0, 4
  %s9 = sld [smem:[%s8]]
  %s10 = scalar_lea.smem %s0, 5
  %s11 = sld [smem:[%s10]]
  %s12 = scalar_lea.smem %s0, 6
  %s13 = sld [smem:[%s12]]
  %s14 = scalar_lea.smem %s0, 7
  %s15 = sld [smem:[%s14]]
  %s16 = scalar_lea.smem %s0, 8
  %s17 = sld [smem:[%s16]]
  %s18 = scalar_lea.smem %s0, 9
  %s19 = sld [smem:[%s18]]
  %s20 = scalar_lea.smem %s0, 10
  %s21 = sld [smem:[%s20]]
  %s22 = scalar_lea.smem %s0, 11
  %s23 = sld [smem:[%s22]]
  %s24 = scalar_lea.smem %s0, 12
  %s25 = sld [smem:[%s24]]
  %s26 = scalar_lea.smem %s0, 13
  %s27 = sld [smem:[%s26]]
  %s28 = scalar_lea.smem %s0, 14
  %s29 = sld [smem:[%s28]]
  %s30 = scalar_lea.smem %s0, 15
  %s31 = sld [smem:[%s30]]
  %s32 = scalar_lea.smem %s0, 16
  %s33 = sld [smem:[%s32]]
  %s34 = scalar_lea.smem %s0, 17
  %s35 = sld [smem:[%s34]]
  %s36 = scalar_lea.smem %s0, 18
  %s37 = sld [smem:[%s36]]
  %s38 = scalar_lea.smem %s0, 19
  %s39 = sld [smem:[%s38]]
  %s40 = scalar_lea.smem %s0, 20
  %s41 = sld [smem:[%s40]]
  %s42 = scalar_lea.smem %s0, 21
  %s43 = sld [smem:[%s42]]
  %s44 = scalar_lea.smem %s0, 22
  %s45 = sld [smem:[%s44]]
  %s46 = scalar_lea.smem %s0, 23
  %s47 = sld [smem:[%s46]]
  %s48 = scalar_lea.smem %s0, 24
  %s49 = sld [smem:[%s48]]
  %s50 = scalar_lea.smem %s0, 25
  %s51 = sld [smem:[%s50]]
  %s52 = scalar_lea.smem %s0, 26
  %s53 = sld [smem:[%s52]]
  %s54 = scalar_lea.smem %s0, 27
  %s55 = sld [smem:[%s54]]
  %s56 = scalar_lea.smem %s0, 28
  %s57 = sld [smem:[%s56]]
  %s58 = scalar_lea.smem %s0, 29
  %s59 = sld [smem:[%s58]]
  %s60 = scalar_lea.smem %s0, 30
  %s61 = sld [smem:[%s60]]
  %s62 = scalar_lea.smem %s0, 31
  %s63 = sld [smem:[%s62]]
  %s64 = scalar_lea.smem %s0, 32
  %s65 = sld [smem:[%s64]]
  %s66 = scalar_lea.smem %s0, 33
  %s67 = sld [smem:[%s66]]
  %s68 = scalar_lea.smem %s0, 34
  %s69 = sld [smem:[%s68]]
  %s70 = scalar_lea.smem %s0, 35
  %s71 = sld [smem:[%s70]]
  %s72 = scalar_lea.smem %s0, 36
  %s73 = sld [smem:[%s72]]
  %s74 = scalar_lea.smem %s0, 37
  %s75 = sld [smem:[%s74]]
  %s76 = scalar_lea.smem %s0, 38
  %s77 = sld [smem:[%s76]]
  %s78 = scalar_lea.smem %s0, 39
  %s79 = sld [smem:[%s78]]
  %s80 = scalar_lea.smem %s0, 40
  %s81 = sld [smem:[%s80]]
  %s82 = sld [smem:[#allocation0]]
  $region193: #{forward.1} parent=0
    _
  %s84 = ssub.s32 1, %s82
  %s85 = scalar_select 0, %s84, %s82
  $region1: #{forward.1} parent=0
    #allocation8 [shape = 'u8[16384]{0}', space=vmem, size = 0x4000, scoped, tag = 'output window, operand 0']
    #allocation9 [shape = 's32[2]{0}', space=sflag, size = 0x8, scoped, tag = 'scoped memory for forward.1']
    %86 = vsyncpa [#allocation9], 0
    %s87 = scalar_lea.sflag [#allocation9], 1
    %88 = vsyncpa %s87, 0
    loop: start=0, step=1, limit=4
    $region2: #{forward.1} parent=1 // loop_pre_header
      _
    $region3: #{forward.1} parent=1 // loop_header
      %s90 = sphi 0, %s94
      %p91 = scmp.ge.s32.totalorder %s90, 4
      %s100 = sphi 0, %s102
      %s103 = sphi 0, %s100
      %s104 = sphi 0, %s103
      %s120 = sphi 0, %s104
      %s124 = sphi 0, %s124
      %s126 = sphi 0, %s124
      %s127 = sphi 0, %s126
      %s141 = sphi 0, %s127
      %s145 = sphi 0, %s145
      %s147 = sphi 0, %s145
      %s148 = sphi 0, %s147
      %s162 = sphi 0, %s148
      %s166 = sphi 0, %s166
      %s168 = sphi 0, %s166
      %s169 = sphi 0, %s168
      %s183 = sphi 0, %s169
      %s187 = sphi 0, %s187
      %s189 = sphi 0, %s187
      %s190 = sphi 0, %s189
      %s204 = sphi 0, %s190
      %s208 = sphi 0, %s208
      %s210 = sphi 0, %s208
      %s211 = sphi 0, %s210
      %s225 = sphi 0, %s211
      %s229 = sphi 0, %s229
      %s231 = sphi 0, %s229
      %s232 = sphi 0, %s231
      %s246 = sphi 0, %s232
      %s250 = sphi 0, %s250
      %s252 = sphi 0, %s250
      %s253 = sphi 0, %s252
      %s267 = sphi 0, %s253
      %s271 = sphi 0, %s271
      %s273 = sphi 0, %s271
      %s274 = sphi 0, %s273
      %s288 = sphi 0, %s274
      %s292 = sphi 0, %s292
      %s294 = sphi 0, %s292
      %s295 = sphi 0, %s294
      %s309 = sphi 0, %s295
      %s313 = sphi 0, %s313
      %s315 = sphi 0, %s313
      %s316 = sphi 0, %s315
      %s330 = sphi 0, %s316
      %s334 = sphi 0, %s334
      %s336 = sphi 0, %s334
      %s337 = sphi 0, %s336
      %s351 = sphi 0, %s337
      %s355 = sphi 0, %s355
      %s357 = sphi 0, %s355
      %s358 = sphi 0, %s357
      %s372 = sphi 0, %s358
      %s376 = sphi 0, %s376
      %s378 = sphi 0, %s376
      %s379 = sphi 0, %s378
      %s393 = sphi 0, %s379
      %s397 = sphi 0, %s397
      %s399 = sphi 0, %s397
      %s400 = sphi 0, %s399
      %s414 = sphi 0, %s400
      %s418 = sphi 0, %s418
      %s420 = sphi 0, %s418
      %s421 = sphi 0, %s420
      %s435 = sphi 0, %s421
      %s439 = sphi 0, %s439
      %s441 = sphi 0, %s439
      %s442 = sphi 0, %s441
      %s456 = sphi 0, %s442
      %s460 = sphi 0, %s460
      %s462 = sphi 0, %s460
      %s463 = sphi 0, %s462
      %s477 = sphi 0, %s463
      %s481 = sphi 0, %s481
      %s483 = sphi 0, %s481
      %s484 = sphi 0, %s483
      %s498 = sphi 0, %s484
      %s502 = sphi 0, %s502
      %s504 = sphi 0, %s502
      %s505 = sphi 0, %s504
      %s519 = sphi 0, %s505
      %s523 = sphi 0, %s523
      %s525 = sphi 0, %s523
      %s526 = sphi 0, %s525
      %s540 = sphi 0, %s526
      %s544 = sphi 0, %s544
      %s546 = sphi 0, %s544
      %s547 = sphi 0, %s546
      %s561 = sphi 0, %s547
      %s565 = sphi 0, %s565
      %s567 = sphi 0, %s565
      %s568 = sphi 0, %s567
      %s582 = sphi 0, %s568
      %s586 = sphi 0, %s586
      %s588 = sphi 0, %s586
      %s589 = sphi 0, %s588
      %s603 = sphi 0, %s589
      %s607 = sphi 0, %s607
      %s609 = sphi 0, %s607
      %s610 = sphi 0, %s609
      %s624 = sphi 0, %s610
      %s628 = sphi 0, %s628
      %s630 = sphi 0, %s628
      %s631 = sphi 0, %s630
      %s645 = sphi 0, %s631
      %s649 = sphi 0, %s649
      %s651 = sphi 0, %s649
      %s652 = sphi 0, %s651
      %s666 = sphi 0, %s652
      %s670 = sphi 0, %s670
      %s672 = sphi 0, %s670
      %s673 = sphi 0, %s672
      %s687 = sphi 0, %s673
      %s691 = sphi 0, %s691
      %s693 = sphi 0, %s691
      %s694 = sphi 0, %s693
      %s708 = sphi 0, %s694
      %s712 = sphi 0, %s712
      %s714 = sphi 0, %s712
      %s715 = sphi 0, %s714
      %s729 = sphi 0, %s715
      %s733 = sphi 0, %s733
      %s735 = sphi 0, %s733
      %s736 = sphi 0, %s735
      %s750 = sphi 0, %s736
      %s754 = sphi 0, %s754
      %s756 = sphi 0, %s754
      %s757 = sphi 0, %s756
      %s771 = sphi 0, %s757
      %s775 = sphi 0, %s775
      %s777 = sphi 0, %s775
      %s778 = sphi 0, %s777
      %s792 = sphi 0, %s778
      %s796 = sphi 0, %s796
      %s798 = sphi 0, %s796
      %s799 = sphi 0, %s798
      %s813 = sphi 0, %s799
      %s817 = sphi 0, %s817
      %s819 = sphi 0, %s817
      %s820 = sphi 0, %s819
      %s834 = sphi 0, %s820
      %s838 = sphi 0, %s838
      %s840 = sphi 0, %s838
      %s841 = sphi 0, %s840
      %s855 = sphi 0, %s841
      %s859 = sphi 0, %s859
      %s861 = sphi 0, %s859
      %s862 = sphi 0, %s861
      %s876 = sphi 0, %s862
      %s880 = sphi 0, %s880
      %s882 = sphi 0, %s880
      %s883 = sphi 0, %s882
      %s897 = sphi 0, %s883
      %s901 = sphi 0, %s901
      %s903 = sphi 0, %s901
      %s904 = sphi 0, %s903
      %s918 = sphi 0, %s904
      %s922 = sphi 0, %s922
      %s924 = sphi 0, %s922
      %s925 = sphi 0, %s924
      %s939 = sphi 0, %s925
      %s945 = sphi 0, %s947
      %s948 = sphi 0, %s945
      %s949 = sphi 0, %s948
      %s965 = sphi 0, %s949
    $region4: #{forward.1} parent=1 // loop_header_branch
      %93 = sbr.rel (%p91) target = $region8
    $region5: #{forward.1} parent=1 // loop_body
      %s95 = ssub.s32 %s90, 1
      %s96 = ssub.s32 %s90, 2
      %s97 = sadd.s32 %s90, 1
      %s98 = ssub.s32 %s90, %s97
      %p99 = scmp.eq.s32.totalorder %s98, 0
      %s101 = sadd.s32 %s100, 1
      %s102 = scalar_select %p99, %s100, %s101
      %p105 = pneg %p99
      %p106 = scmp.eq.s32.totalorder %s90, 1
      %p107 = por %p105, %p106
      %p108 = scmp.ne.s32.totalorder %s100, %s103
      %p109 = scmp.eq.s32.totalorder %s90, 0
      %p110 = por %p108, %p109
      %p111 = scmp.ne.s32.totalorder %s100, %s103
      %p112 = scmp.eq.s32.totalorder %s95, 1
      %p113 = por %p111, %p112
      %p114 = scmp.ne.s32.totalorder %s103, %s104
      %p115 = scmp.eq.s32.totalorder %s95, 0
      %p116 = por %p114, %p115
      %p117 = scmp.ne.s32.totalorder %s103, %s104
      %p118 = scmp.eq.s32.totalorder %s96, 1
      %p119 = por %p117, %p118
      %p121 = scmp.ne.s32.totalorder %s104, %s120
      %p122 = scmp.eq.s32.totalorder %s96, 0
      %p123 = por %p121, %p122
      %s125 = sadd.s32 %s124, 1
      %p128 = scmp.eq.s32.totalorder %s90, 1
      %p129 = scmp.ne.s32.totalorder %s124, %s126
      %p130 = scmp.eq.s32.totalorder %s90, 0
      %p131 = por %p129, %p130
      %p132 = scmp.ne.s32.totalorder %s124, %s126
      %p133 = scmp.eq.s32.totalorder %s95, 1
      %p134 = por %p132, %p133
      %p135 = scmp.ne.s32.totalorder %s126, %s127
      %p136 = scmp.eq.s32.totalorder %s95, 0
      %p137 = por %p135, %p136
      %p138 = scmp.ne.s32.totalorder %s126, %s127
      %p139 = scmp.eq.s32.totalorder %s96, 1
      %p140 = por %p138, %p139
      %p142 = scmp.ne.s32.totalorder %s127, %s141
      %p143 = scmp.eq.s32.totalorder %s96, 0
      %p144 = por %p142, %p143
      %s146 = sadd.s32 %s145, 1
      %p149 = scmp.eq.s32.totalorder %s90, 1
      %p150 = scmp.ne.s32.totalorder %s145, %s147
      %p151 = scmp.eq.s32.totalorder %s90, 0
      %p152 = por %p150, %p151
      %p153 = scmp.ne.s32.totalorder %s145, %s147
      %p154 = scmp.eq.s32.totalorder %s95, 1
      %p155 = por %p153, %p154
      %p156 = scmp.ne.s32.totalorder %s147, %s148
      %p157 = scmp.eq.s32.totalorder %s95, 0
      %p158 = por %p156, %p157
      %p159 = scmp.ne.s32.totalorder %s147, %s148
      %p160 = scmp.eq.s32.totalorder %s96, 1
      %p161 = por %p159, %p160
      %p163 = scmp.ne.s32.totalorder %s148, %s162
      %p164 = scmp.eq.s32.totalorder %s96, 0
      %p165 = por %p163, %p164
      %s167 = sadd.s32 %s166, 1
      %p170 = scmp.eq.s32.totalorder %s90, 1
      %p171 = scmp.ne.s32.totalorder %s166, %s168
      %p172 = scmp.eq.s32.totalorder %s90, 0
      %p173 = por %p171, %p172
      %p174 = scmp.ne.s32.totalorder %s166, %s168
      %p175 = scmp.eq.s32.totalorder %s95, 1
      %p176 = por %p174, %p175
      %p177 = scmp.ne.s32.totalorder %s168, %s169
      %p178 = scmp.eq.s32.totalorder %s95, 0
      %p179 = por %p177, %p178
      %p180 = scmp.ne.s32.totalorder %s168, %s169
      %p181 = scmp.eq.s32.totalorder %s96, 1
      %p182 = por %p180, %p181
      %p184 = scmp.ne.s32.totalorder %s169, %s183
      %p185 = scmp.eq.s32.totalorder %s96, 0
      %p186 = por %p184, %p185
      %s188 = sadd.s32 %s187, 1
      %p191 = scmp.eq.s32.totalorder %s90, 1
      %p192 = scmp.ne.s32.totalorder %s187, %s189
      %p193 = scmp.eq.s32.totalorder %s90, 0
      %p194 = por %p192, %p193
      %p195 = scmp.ne.s32.totalorder %s187, %s189
      %p196 = scmp.eq.s32.totalorder %s95, 1
      %p197 = por %p195, %p196
      %p198 = scmp.ne.s32.totalorder %s189, %s190
      %p199 = scmp.eq.s32.totalorder %s95, 0
      %p200 = por %p198, %p199
      %p201 = scmp.ne.s32.totalorder %s189, %s190
      %p202 = scmp.eq.s32.totalorder %s96, 1
      %p203 = por %p201, %p202
      %p205 = scmp.ne.s32.totalorder %s190, %s204
      %p206 = scmp.eq.s32.totalorder %s96, 0
      %p207 = por %p205, %p206
      %s209 = sadd.s32 %s208, 1
      %p212 = scmp.eq.s32.totalorder %s90, 1
      %p213 = scmp.ne.s32.totalorder %s208, %s210
      %p214 = scmp.eq.s32.totalorder %s90, 0
      %p215 = por %p213, %p214
      %p216 = scmp.ne.s32.totalorder %s208, %s210
      %p217 = scmp.eq.s32.totalorder %s95, 1
      %p218 = por %p216, %p217
      %p219 = scmp.ne.s32.totalorder %s210, %s211
      %p220 = scmp.eq.s32.totalorder %s95, 0
      %p221 = por %p219, %p220
      %p222 = scmp.ne.s32.totalorder %s210, %s211
      %p223 = scmp.eq.s32.totalorder %s96, 1
      %p224 = por %p222, %p223
      %p226 = scmp.ne.s32.totalorder %s211, %s225
      %p227 = scmp.eq.s32.totalorder %s96, 0
      %p228 = por %p226, %p227
      %s230 = sadd.s32 %s229, 1
      %p233 = scmp.eq.s32.totalorder %s90, 1
      %p234 = scmp.ne.s32.totalorder %s229, %s231
      %p235 = scmp.eq.s32.totalorder %s90, 0
      %p236 = por %p234, %p235
      %p237 = scmp.ne.s32.totalorder %s229, %s231
      %p238 = scmp.eq.s32.totalorder %s95, 1
      %p239 = por %p237, %p238
      %p240 = scmp.ne.s32.totalorder %s231, %s232
      %p241 = scmp.eq.s32.totalorder %s95, 0
      %p242 = por %p240, %p241
      %p243 = scmp.ne.s32.totalorder %s231, %s232
      %p244 = scmp.eq.s32.totalorder %s96, 1
      %p245 = por %p243, %p244
      %p247 = scmp.ne.s32.totalorder %s232, %s246
      %p248 = scmp.eq.s32.totalorder %s96, 0
      %p249 = por %p247, %p248
      %s251 = sadd.s32 %s250, 1
      %p254 = scmp.eq.s32.totalorder %s90, 1
      %p255 = scmp.ne.s32.totalorder %s250, %s252
      %p256 = scmp.eq.s32.totalorder %s90, 0
      %p257 = por %p255, %p256
      %p258 = scmp.ne.s32.totalorder %s250, %s252
      %p259 = scmp.eq.s32.totalorder %s95, 1
      %p260 = por %p258, %p259
      %p261 = scmp.ne.s32.totalorder %s252, %s253
      %p262 = scmp.eq.s32.totalorder %s95, 0
      %p263 = por %p261, %p262
      %p264 = scmp.ne.s32.totalorder %s252, %s253
      %p265 = scmp.eq.s32.totalorder %s96, 1
      %p266 = por %p264, %p265
      %p268 = scmp.ne.s32.totalorder %s253, %s267
      %p269 = scmp.eq.s32.totalorder %s96, 0
      %p270 = por %p268, %p269
      %s272 = sadd.s32 %s271, 1
      %p275 = scmp.eq.s32.totalorder %s90, 1
      %p276 = scmp.ne.s32.totalorder %s271, %s273
      %p277 = scmp.eq.s32.totalorder %s90, 0
      %p278 = por %p276, %p277
      %p279 = scmp.ne.s32.totalorder %s271, %s273
      %p280 = scmp.eq.s32.totalorder %s95, 1
      %p281 = por %p279, %p280
      %p282 = scmp.ne.s32.totalorder %s273, %s274
      %p283 = scmp.eq.s32.totalorder %s95, 0
      %p284 = por %p282, %p283
      %p285 = scmp.ne.s32.totalorder %s273, %s274
      %p286 = scmp.eq.s32.totalorder %s96, 1
      %p287 = por %p285, %p286
      %p289 = scmp.ne.s32.totalorder %s274, %s288
      %p290 = scmp.eq.s32.totalorder %s96, 0
      %p291 = por %p289, %p290
      %s293 = sadd.s32 %s292, 1
      %p296 = scmp.eq.s32.totalorder %s90, 1
      %p297 = scmp.ne.s32.totalorder %s292, %s294
      %p298 = scmp.eq.s32.totalorder %s90, 0
      %p299 = por %p297, %p298
      %p300 = scmp.ne.s32.totalorder %s292, %s294
      %p301 = scmp.eq.s32.totalorder %s95, 1
      %p302 = por %p300, %p301
      %p303 = scmp.ne.s32.totalorder %s294, %s295
      %p304 = scmp.eq.s32.totalorder %s95, 0
      %p305 = por %p303, %p304
      %p306 = scmp.ne.s32.totalorder %s294, %s295
      %p307 = scmp.eq.s32.totalorder %s96, 1
      %p308 = por %p306, %p307
      %p310 = scmp.ne.s32.totalorder %s295, %s309
      %p311 = scmp.eq.s32.totalorder %s96, 0
      %p312 = por %p310, %p311
      %s314 = sadd.s32 %s313, 1
      %p317 = scmp.eq.s32.totalorder %s90, 1
      %p318 = scmp.ne.s32.totalorder %s313, %s315
      %p319 = scmp.eq.s32.totalorder %s90, 0
      %p320 = por %p318, %p319
      %p321 = scmp.ne.s32.totalorder %s313, %s315
      %p322 = scmp.eq.s32.totalorder %s95, 1
      %p323 = por %p321, %p322
      %p324 = scmp.ne.s32.totalorder %s315, %s316
      %p325 = scmp.eq.s32.totalorder %s95, 0
      %p326 = por %p324, %p325
      %p327 = scmp.ne.s32.totalorder %s315, %s316
      %p328 = scmp.eq.s32.totalorder %s96, 1
      %p329 = por %p327, %p328
      %p331 = scmp.ne.s32.totalorder %s316, %s330
      %p332 = scmp.eq.s32.totalorder %s96, 0
      %p333 = por %p331, %p332
      %s335 = sadd.s32 %s334, 1
      %p338 = scmp.eq.s32.totalorder %s90, 1
      %p339 = scmp.ne.s32.totalorder %s334, %s336
      %p340 = scmp.eq.s32.totalorder %s90, 0
      %p341 = por %p339, %p340
      %p342 = scmp.ne.s32.totalorder %s334, %s336
      %p343 = scmp.eq.s32.totalorder %s95, 1
      %p344 = por %p342, %p343
      %p345 = scmp.ne.s32.totalorder %s336, %s337
      %p346 = scmp.eq.s32.totalorder %s95, 0
      %p347 = por %p345, %p346
      %p348 = scmp.ne.s32.totalorder %s336, %s337
      %p349 = scmp.eq.s32.totalorder %s96, 1
      %p350 = por %p348, %p349
      %p352 = scmp.ne.s32.totalorder %s337, %s351
      %p353 = scmp.eq.s32.totalorder %s96, 0
      %p354 = por %p352, %p353
      %s356 = sadd.s32 %s355, 1
      %p359 = scmp.eq.s32.totalorder %s90, 1
      %p360 = scmp.ne.s32.totalorder %s355, %s357
      %p361 = scmp.eq.s32.totalorder %s90, 0
      %p362 = por %p360, %p361
      %p363 = scmp.ne.s32.totalorder %s355, %s357
      %p364 = scmp.eq.s32.totalorder %s95, 1
      %p365 = por %p363, %p364
      %p366 = scmp.ne.s32.totalorder %s357, %s358
      %p367 = scmp.eq.s32.totalorder %s95, 0
      %p368 = por %p366, %p367
      %p369 = scmp.ne.s32.totalorder %s357, %s358
      %p370 = scmp.eq.s32.totalorder %s96, 1
      %p371 = por %p369, %p370
      %p373 = scmp.ne.s32.totalorder %s358, %s372
      %p374 = scmp.eq.s32.totalorder %s96, 0
      %p375 = por %p373, %p374
      %s377 = sadd.s32 %s376, 1
      %p380 = scmp.eq.s32.totalorder %s90, 1
      %p381 = scmp.ne.s32.totalorder %s376, %s378
      %p382 = scmp.eq.s32.totalorder %s90, 0
      %p383 = por %p381, %p382
      %p384 = scmp.ne.s32.totalorder %s376, %s378
      %p385 = scmp.eq.s32.totalorder %s95, 1
      %p386 = por %p384, %p385
      %p387 = scmp.ne.s32.totalorder %s378, %s379
      %p388 = scmp.eq.s32.totalorder %s95, 0
      %p389 = por %p387, %p388
      %p390 = scmp.ne.s32.totalorder %s378, %s379
      %p391 = scmp.eq.s32.totalorder %s96, 1
      %p392 = por %p390, %p391
      %p394 = scmp.ne.s32.totalorder %s379, %s393
      %p395 = scmp.eq.s32.totalorder %s96, 0
      %p396 = por %p394, %p395
      %s398 = sadd.s32 %s397, 1
      %p401 = scmp.eq.s32.totalorder %s90, 1
      %p402 = scmp.ne.s32.totalorder %s397, %s399
      %p403 = scmp.eq.s32.totalorder %s90, 0
      %p404 = por %p402, %p403
      %p405 = scmp.ne.s32.totalorder %s397, %s399
      %p406 = scmp.eq.s32.totalorder %s95, 1
      %p407 = por %p405, %p406
      %p408 = scmp.ne.s32.totalorder %s399, %s400
      %p409 = scmp.eq.s32.totalorder %s95, 0
      %p410 = por %p408, %p409
      %p411 = scmp.ne.s32.totalorder %s399, %s400
      %p412 = scmp.eq.s32.totalorder %s96, 1
      %p413 = por %p411, %p412
      %p415 = scmp.ne.s32.totalorder %s400, %s414
      %p416 = scmp.eq.s32.totalorder %s96, 0
      %p417 = por %p415, %p416
      %s419 = sadd.s32 %s418, 1
      %p422 = scmp.eq.s32.totalorder %s90, 1
      %p423 = scmp.ne.s32.totalorder %s418, %s420
      %p424 = scmp.eq.s32.totalorder %s90, 0
      %p425 = por %p423, %p424
      %p426 = scmp.ne.s32.totalorder %s418, %s420
      %p427 = scmp.eq.s32.totalorder %s95, 1
      %p428 = por %p426, %p427
      %p429 = scmp.ne.s32.totalorder %s420, %s421
      %p430 = scmp.eq.s32.totalorder %s95, 0
      %p431 = por %p429, %p430
      %p432 = scmp.ne.s32.totalorder %s420, %s421
      %p433 = scmp.eq.s32.totalorder %s96, 1
      %p434 = por %p432, %p433
      %p436 = scmp.ne.s32.totalorder %s421, %s435
      %p437 = scmp.eq.s32.totalorder %s96, 0
      %p438 = por %p436, %p437
      %s440 = sadd.s32 %s439, 1
      %p443 = scmp.eq.s32.totalorder %s90, 1
      %p444 = scmp.ne.s32.totalorder %s439, %s441
      %p445 = scmp.eq.s32.totalorder %s90, 0
      %p446 = por %p444, %p445
      %p447 = scmp.ne.s32.totalorder %s439, %s441
      %p448 = scmp.eq.s32.totalorder %s95, 1
      %p449 = por %p447, %p448
      %p450 = scmp.ne.s32.totalorder %s441, %s442
      %p451 = scmp.eq.s32.totalorder %s95, 0
      %p452 = por %p450, %p451
      %p453 = scmp.ne.s32.totalorder %s441, %s442
      %p454 = scmp.eq.s32.totalorder %s96, 1
      %p455 = por %p453, %p454
      %p457 = scmp.ne.s32.totalorder %s442, %s456
      %p458 = scmp.eq.s32.totalorder %s96, 0
      %p459 = por %p457, %p458
      %s461 = sadd.s32 %s460, 1
      %p464 = scmp.eq.s32.totalorder %s90, 1
      %p465 = scmp.ne.s32.totalorder %s460, %s462
      %p466 = scmp.eq.s32.totalorder %s90, 0
      %p467 = por %p465, %p466
      %p468 = scmp.ne.s32.totalorder %s460, %s462
      %p469 = scmp.eq.s32.totalorder %s95, 1
      %p470 = por %p468, %p469
      %p471 = scmp.ne.s32.totalorder %s462, %s463
      %p472 = scmp.eq.s32.totalorder %s95, 0
      %p473 = por %p471, %p472
      %p474 = scmp.ne.s32.totalorder %s462, %s463
      %p475 = scmp.eq.s32.totalorder %s96, 1
      %p476 = por %p474, %p475
      %p478 = scmp.ne.s32.totalorder %s463, %s477
      %p479 = scmp.eq.s32.totalorder %s96, 0
      %p480 = por %p478, %p479
      %s482 = sadd.s32 %s481, 1
      %p485 = scmp.eq.s32.totalorder %s90, 1
      %p486 = scmp.ne.s32.totalorder %s481, %s483
      %p487 = scmp.eq.s32.totalorder %s90, 0
      %p488 = por %p486, %p487
      %p489 = scmp.ne.s32.totalorder %s481, %s483
      %p490 = scmp.eq.s32.totalorder %s95, 1
      %p491 = por %p489, %p490
      %p492 = scmp.ne.s32.totalorder %s483, %s484
      %p493 = scmp.eq.s32.totalorder %s95, 0
      %p494 = por %p492, %p493
      %p495 = scmp.ne.s32.totalorder %s483, %s484
      %p496 = scmp.eq.s32.totalorder %s96, 1
      %p497 = por %p495, %p496
      %p499 = scmp.ne.s32.totalorder %s484, %s498
      %p500 = scmp.eq.s32.totalorder %s96, 0
      %p501 = por %p499, %p500
      %s503 = sadd.s32 %s502, 1
      %p506 = scmp.eq.s32.totalorder %s90, 1
      %p507 = scmp.ne.s32.totalorder %s502, %s504
      %p508 = scmp.eq.s32.totalorder %s90, 0
      %p509 = por %p507, %p508
      %p510 = scmp.ne.s32.totalorder %s502, %s504
      %p511 = scmp.eq.s32.totalorder %s95, 1
      %p512 = por %p510, %p511
      %p513 = scmp.ne.s32.totalorder %s504, %s505
      %p514 = scmp.eq.s32.totalorder %s95, 0
      %p515 = por %p513, %p514
      %p516 = scmp.ne.s32.totalorder %s504, %s505
      %p517 = scmp.eq.s32.totalorder %s96, 1
      %p518 = por %p516, %p517
      %p520 = scmp.ne.s32.totalorder %s505, %s519
      %p521 = scmp.eq.s32.totalorder %s96, 0
      %p522 = por %p520, %p521
      %s524 = sadd.s32 %s523, 1
      %p527 = scmp.eq.s32.totalorder %s90, 1
      %p528 = scmp.ne.s32.totalorder %s523, %s525
      %p529 = scmp.eq.s32.totalorder %s90, 0
      %p530 = por %p528, %p529
      %p531 = scmp.ne.s32.totalorder %s523, %s525
      %p532 = scmp.eq.s32.totalorder %s95, 1
      %p533 = por %p531, %p532
      %p534 = scmp.ne.s32.totalorder %s525, %s526
      %p535 = scmp.eq.s32.totalorder %s95, 0
      %p536 = por %p534, %p535
      %p537 = scmp.ne.s32.totalorder %s525, %s526
      %p538 = scmp.eq.s32.totalorder %s96, 1
      %p539 = por %p537, %p538
      %p541 = scmp.ne.s32.totalorder %s526, %s540
      %p542 = scmp.eq.s32.totalorder %s96, 0
      %p543 = por %p541, %p542
      %s545 = sadd.s32 %s544, 1
      %p548 = scmp.eq.s32.totalorder %s90, 1
      %p549 = scmp.ne.s32.totalorder %s544, %s546
      %p550 = scmp.eq.s32.totalorder %s90, 0
      %p551 = por %p549, %p550
      %p552 = scmp.ne.s32.totalorder %s544, %s546
      %p553 = scmp.eq.s32.totalorder %s95, 1
      %p554 = por %p552, %p553
      %p555 = scmp.ne.s32.totalorder %s546, %s547
      %p556 = scmp.eq.s32.totalorder %s95, 0
      %p557 = por %p555, %p556
      %p558 = scmp.ne.s32.totalorder %s546, %s547
      %p559 = scmp.eq.s32.totalorder %s96, 1
      %p560 = por %p558, %p559
      %p562 = scmp.ne.s32.totalorder %s547, %s561
      %p563 = scmp.eq.s32.totalorder %s96, 0
      %p564 = por %p562, %p563
      %s566 = sadd.s32 %s565, 1
      %p569 = scmp.eq.s32.totalorder %s90, 1
      %p570 = scmp.ne.s32.totalorder %s565, %s567
      %p571 = scmp.eq.s32.totalorder %s90, 0
      %p572 = por %p570, %p571
      %p573 = scmp.ne.s32.totalorder %s565, %s567
      %p574 = scmp.eq.s32.totalorder %s95, 1
      %p575 = por %p573, %p574
      %p576 = scmp.ne.s32.totalorder %s567, %s568
      %p577 = scmp.eq.s32.totalorder %s95, 0
      %p578 = por %p576, %p577
      %p579 = scmp.ne.s32.totalorder %s567, %s568
      %p580 = scmp.eq.s32.totalorder %s96, 1
      %p581 = por %p579, %p580
      %p583 = scmp.ne.s32.totalorder %s568, %s582
      %p584 = scmp.eq.s32.totalorder %s96, 0
      %p585 = por %p583, %p584
      %s587 = sadd.s32 %s586, 1
      %p590 = scmp.eq.s32.totalorder %s90, 1
      %p591 = scmp.ne.s32.totalorder %s586, %s588
      %p592 = scmp.eq.s32.totalorder %s90, 0
      %p593 = por %p591, %p592
      %p594 = scmp.ne.s32.totalorder %s586, %s588
      %p595 = scmp.eq.s32.totalorder %s95, 1
      %p596 = por %p594, %p595
      %p597 = scmp.ne.s32.totalorder %s588, %s589
      %p598 = scmp.eq.s32.totalorder %s95, 0
      %p599 = por %p597, %p598
      %p600 = scmp.ne.s32.totalorder %s588, %s589
      %p601 = scmp.eq.s32.totalorder %s96, 1
      %p602 = por %p600, %p601
      %p604 = scmp.ne.s32.totalorder %s589, %s603
      %p605 = scmp.eq.s32.totalorder %s96, 0
      %p606 = por %p604, %p605
      %s608 = sadd.s32 %s607, 1
      %p611 = scmp.eq.s32.totalorder %s90, 1
      %p612 = scmp.ne.s32.totalorder %s607, %s609
      %p613 = scmp.eq.s32.totalorder %s90, 0
      %p614 = por %p612, %p613
      %p615 = scmp.ne.s32.totalorder %s607, %s609
      %p616 = scmp.eq.s32.totalorder %s95, 1
      %p617 = por %p615, %p616
      %p618 = scmp.ne.s32.totalorder %s609, %s610
      %p619 = scmp.eq.s32.totalorder %s95, 0
      %p620 = por %p618, %p619
      %p621 = scmp.ne.s32.totalorder %s609, %s610
      %p622 = scmp.eq.s32.totalorder %s96, 1
      %p623 = por %p621, %p622
      %p625 = scmp.ne.s32.totalorder %s610, %s624
      %p626 = scmp.eq.s32.totalorder %s96, 0
      %p627 = por %p625, %p626
      %s629 = sadd.s32 %s628, 1
      %p632 = scmp.eq.s32.totalorder %s90, 1
      %p633 = scmp.ne.s32.totalorder %s628, %s630
      %p634 = scmp.eq.s32.totalorder %s90, 0
      %p635 = por %p633, %p634
      %p636 = scmp.ne.s32.totalorder %s628, %s630
      %p637 = scmp.eq.s32.totalorder %s95, 1
      %p638 = por %p636, %p637
      %p639 = scmp.ne.s32.totalorder %s630, %s631
      %p640 = scmp.eq.s32.totalorder %s95, 0
      %p641 = por %p639, %p640
      %p642 = scmp.ne.s32.totalorder %s630, %s631
      %p643 = scmp.eq.s32.totalorder %s96, 1
      %p644 = por %p642, %p643
      %p646 = scmp.ne.s32.totalorder %s631, %s645
      %p647 = scmp.eq.s32.totalorder %s96, 0
      %p648 = por %p646, %p647
      %s650 = sadd.s32 %s649, 1
      %p653 = scmp.eq.s32.totalorder %s90, 1
      %p654 = scmp.ne.s32.totalorder %s649, %s651
      %p655 = scmp.eq.s32.totalorder %s90, 0
      %p656 = por %p654, %p655
      %p657 = scmp.ne.s32.totalorder %s649, %s651
      %p658 = scmp.eq.s32.totalorder %s95, 1
      %p659 = por %p657, %p658
      %p660 = scmp.ne.s32.totalorder %s651, %s652
      %p661 = scmp.eq.s32.totalorder %s95, 0
      %p662 = por %p660, %p661
      %p663 = scmp.ne.s32.totalorder %s651, %s652
      %p664 = scmp.eq.s32.totalorder %s96, 1
      %p665 = por %p663, %p664
      %p667 = scmp.ne.s32.totalorder %s652, %s666
      %p668 = scmp.eq.s32.totalorder %s96, 0
      %p669 = por %p667, %p668
      %s671 = sadd.s32 %s670, 1
      %p674 = scmp.eq.s32.totalorder %s90, 1
      %p675 = scmp.ne.s32.totalorder %s670, %s672
      %p676 = scmp.eq.s32.totalorder %s90, 0
      %p677 = por %p675, %p676
      %p678 = scmp.ne.s32.totalorder %s670, %s672
      %p679 = scmp.eq.s32.totalorder %s95, 1
      %p680 = por %p678, %p679
      %p681 = scmp.ne.s32.totalorder %s672, %s673
      %p682 = scmp.eq.s32.totalorder %s95, 0
      %p683 = por %p681, %p682
      %p684 = scmp.ne.s32.totalorder %s672, %s673
      %p685 = scmp.eq.s32.totalorder %s96, 1
      %p686 = por %p684, %p685
      %p688 = scmp.ne.s32.totalorder %s673, %s687
      %p689 = scmp.eq.s32.totalorder %s96, 0
      %p690 = por %p688, %p689
      %s692 = sadd.s32 %s691, 1
      %p695 = scmp.eq.s32.totalorder %s90, 1
      %p696 = scmp.ne.s32.totalorder %s691, %s693
      %p697 = scmp.eq.s32.totalorder %s90, 0
      %p698 = por %p696, %p697
      %p699 = scmp.ne.s32.totalorder %s691, %s693
      %p700 = scmp.eq.s32.totalorder %s95, 1
      %p701 = por %p699, %p700
      %p702 = scmp.ne.s32.totalorder %s693, %s694
      %p703 = scmp.eq.s32.totalorder %s95, 0
      %p704 = por %p702, %p703
      %p705 = scmp.ne.s32.totalorder %s693, %s694
      %p706 = scmp.eq.s32.totalorder %s96, 1
      %p707 = por %p705, %p706
      %p709 = scmp.ne.s32.totalorder %s694, %s708
      %p710 = scmp.eq.s32.totalorder %s96, 0
      %p711 = por %p709, %p710
      %s713 = sadd.s32 %s712, 1
      %p716 = scmp.eq.s32.totalorder %s90, 1
      %p717 = scmp.ne.s32.totalorder %s712, %s714
      %p718 = scmp.eq.s32.totalorder %s90, 0
      %p719 = por %p717, %p718
      %p720 = scmp.ne.s32.totalorder %s712, %s714
      %p721 = scmp.eq.s32.totalorder %s95, 1
      %p722 = por %p720, %p721
      %p723 = scmp.ne.s32.totalorder %s714, %s715
      %p724 = scmp.eq.s32.totalorder %s95, 0
      %p725 = por %p723, %p724
      %p726 = scmp.ne.s32.totalorder %s714, %s715
      %p727 = scmp.eq.s32.totalorder %s96, 1
      %p728 = por %p726, %p727
      %p730 = scmp.ne.s32.totalorder %s715, %s729
      %p731 = scmp.eq.s32.totalorder %s96, 0
      %p732 = por %p730, %p731
      %s734 = sadd.s32 %s733, 1
      %p737 = scmp.eq.s32.totalorder %s90, 1
      %p738 = scmp.ne.s32.totalorder %s733, %s735
      %p739 = scmp.eq.s32.totalorder %s90, 0
      %p740 = por %p738, %p739
      %p741 = scmp.ne.s32.totalorder %s733, %s735
      %p742 = scmp.eq.s32.totalorder %s95, 1
      %p743 = por %p741, %p742
      %p744 = scmp.ne.s32.totalorder %s735, %s736
      %p745 = scmp.eq.s32.totalorder %s95, 0
      %p746 = por %p744, %p745
      %p747 = scmp.ne.s32.totalorder %s735, %s736
      %p748 = scmp.eq.s32.totalorder %s96, 1
      %p749 = por %p747, %p748
      %p751 = scmp.ne.s32.totalorder %s736, %s750
      %p752 = scmp.eq.s32.totalorder %s96, 0
      %p753 = por %p751, %p752
      %s755 = sadd.s32 %s754, 1
      %p758 = scmp.eq.s32.totalorder %s90, 1
      %p759 = scmp.ne.s32.totalorder %s754, %s756
      %p760 = scmp.eq.s32.totalorder %s90, 0
      %p761 = por %p759, %p760
      %p762 = scmp.ne.s32.totalorder %s754, %s756
      %p763 = scmp.eq.s32.totalorder %s95, 1
      %p764 = por %p762, %p763
      %p765 = scmp.ne.s32.totalorder %s756, %s757
      %p766 = scmp.eq.s32.totalorder %s95, 0
      %p767 = por %p765, %p766
      %p768 = scmp.ne.s32.totalorder %s756, %s757
      %p769 = scmp.eq.s32.totalorder %s96, 1
      %p770 = por %p768, %p769
      %p772 = scmp.ne.s32.totalorder %s757, %s771
      %p773 = scmp.eq.s32.totalorder %s96, 0
      %p774 = por %p772, %p773
      %s776 = sadd.s32 %s775, 1
      %p779 = scmp.eq.s32.totalorder %s90, 1
      %p780 = scmp.ne.s32.totalorder %s775, %s777
      %p781 = scmp.eq.s32.totalorder %s90, 0
      %p782 = por %p780, %p781
      %p783 = scmp.ne.s32.totalorder %s775, %s777
      %p784 = scmp.eq.s32.totalorder %s95, 1
      %p785 = por %p783, %p784
      %p786 = scmp.ne.s32.totalorder %s777, %s778
      %p787 = scmp.eq.s32.totalorder %s95, 0
      %p788 = por %p786, %p787
      %p789 = scmp.ne.s32.totalorder %s777, %s778
      %p790 = scmp.eq.s32.totalorder %s96, 1
      %p791 = por %p789, %p790
      %p793 = scmp.ne.s32.totalorder %s778, %s792
      %p794 = scmp.eq.s32.totalorder %s96, 0
      %p795 = por %p793, %p794
      %s797 = sadd.s32 %s796, 1
      %p800 = scmp.eq.s32.totalorder %s90, 1
      %p801 = scmp.ne.s32.totalorder %s796, %s798
      %p802 = scmp.eq.s32.totalorder %s90, 0
      %p803 = por %p801, %p802
      %p804 = scmp.ne.s32.totalorder %s796, %s798
      %p805 = scmp.eq.s32.totalorder %s95, 1
      %p806 = por %p804, %p805
      %p807 = scmp.ne.s32.totalorder %s798, %s799
      %p808 = scmp.eq.s32.totalorder %s95, 0
      %p809 = por %p807, %p808
      %p810 = scmp.ne.s32.totalorder %s798, %s799
      %p811 = scmp.eq.s32.totalorder %s96, 1
      %p812 = por %p810, %p811
      %p814 = scmp.ne.s32.totalorder %s799, %s813
      %p815 = scmp.eq.s32.totalorder %s96, 0
      %p816 = por %p814, %p815
      %s818 = sadd.s32 %s817, 1
      %p821 = scmp.eq.s32.totalorder %s90, 1
      %p822 = scmp.ne.s32.totalorder %s817, %s819
      %p823 = scmp.eq.s32.totalorder %s90, 0
      %p824 = por %p822, %p823
      %p825 = scmp.ne.s32.totalorder %s817, %s819
      %p826 = scmp.eq.s32.totalorder %s95, 1
      %p827 = por %p825, %p826
      %p828 = scmp.ne.s32.totalorder %s819, %s820
      %p829 = scmp.eq.s32.totalorder %s95, 0
      %p830 = por %p828, %p829
      %p831 = scmp.ne.s32.totalorder %s819, %s820
      %p832 = scmp.eq.s32.totalorder %s96, 1
      %p833 = por %p831, %p832
      %p835 = scmp.ne.s32.totalorder %s820, %s834
      %p836 = scmp.eq.s32.totalorder %s96, 0
      %p837 = por %p835, %p836
      %s839 = sadd.s32 %s838, 1
      %p842 = scmp.eq.s32.totalorder %s90, 1
      %p843 = scmp.ne.s32.totalorder %s838, %s840
      %p844 = scmp.eq.s32.totalorder %s90, 0
      %p845 = por %p843, %p844
      %p846 = scmp.ne.s32.totalorder %s838, %s840
      %p847 = scmp.eq.s32.totalorder %s95, 1
      %p848 = por %p846, %p847
      %p849 = scmp.ne.s32.totalorder %s840, %s841
      %p850 = scmp.eq.s32.totalorder %s95, 0
      %p851 = por %p849, %p850
      %p852 = scmp.ne.s32.totalorder %s840, %s841
      %p853 = scmp.eq.s32.totalorder %s96, 1
      %p854 = por %p852, %p853
      %p856 = scmp.ne.s32.totalorder %s841, %s855
      %p857 = scmp.eq.s32.totalorder %s96, 0
      %p858 = por %p856, %p857
      %s860 = sadd.s32 %s859, 1
      %p863 = scmp.eq.s32.totalorder %s90, 1
      %p864 = scmp.ne.s32.totalorder %s859, %s861
      %p865 = scmp.eq.s32.totalorder %s90, 0
      %p866 = por %p864, %p865
      %p867 = scmp.ne.s32.totalorder %s859, %s861
      %p868 = scmp.eq.s32.totalorder %s95, 1
      %p869 = por %p867, %p868
      %p870 = scmp.ne.s32.totalorder %s861, %s862
      %p871 = scmp.eq.s32.totalorder %s95, 0
      %p872 = por %p870, %p871
      %p873 = scmp.ne.s32.totalorder %s861, %s862
      %p874 = scmp.eq.s32.totalorder %s96, 1
      %p875 = por %p873, %p874
      %p877 = scmp.ne.s32.totalorder %s862, %s876
      %p878 = scmp.eq.s32.totalorder %s96, 0
      %p879 = por %p877, %p878
      %s881 = sadd.s32 %s880, 1
      %p884 = scmp.eq.s32.totalorder %s90, 1
      %p885 = scmp.ne.s32.totalorder %s880, %s882
      %p886 = scmp.eq.s32.totalorder %s90, 0
      %p887 = por %p885, %p886
      %p888 = scmp.ne.s32.totalorder %s880, %s882
      %p889 = scmp.eq.s32.totalorder %s95, 1
      %p890 = por %p888, %p889
      %p891 = scmp.ne.s32.totalorder %s882, %s883
      %p892 = scmp.eq.s32.totalorder %s95, 0
      %p893 = por %p891, %p892
      %p894 = scmp.ne.s32.totalorder %s882, %s883
      %p895 = scmp.eq.s32.totalorder %s96, 1
      %p896 = por %p894, %p895
      %p898 = scmp.ne.s32.totalorder %s883, %s897
      %p899 = scmp.eq.s32.totalorder %s96, 0
      %p900 = por %p898, %p899
      %s902 = sadd.s32 %s901, 1
      %p905 = scmp.eq.s32.totalorder %s90, 1
      %p906 = scmp.ne.s32.totalorder %s901, %s903
      %p907 = scmp.eq.s32.totalorder %s90, 0
      %p908 = por %p906, %p907
      %p909 = scmp.ne.s32.totalorder %s901, %s903
      %p910 = scmp.eq.s32.totalorder %s95, 1
      %p911 = por %p909, %p910
      %p912 = scmp.ne.s32.totalorder %s903, %s904
      %p913 = scmp.eq.s32.totalorder %s95, 0
      %p914 = por %p912, %p913
      %p915 = scmp.ne.s32.totalorder %s903, %s904
      %p916 = scmp.eq.s32.totalorder %s96, 1
      %p917 = por %p915, %p916
      %p919 = scmp.ne.s32.totalorder %s904, %s918
      %p920 = scmp.eq.s32.totalorder %s96, 0
      %p921 = por %p919, %p920
      %s923 = sadd.s32 %s922, 1
      %p926 = scmp.eq.s32.totalorder %s90, 1
      %p927 = scmp.ne.s32.totalorder %s922, %s924
      %p928 = scmp.eq.s32.totalorder %s90, 0
      %p929 = por %p927, %p928
      %p930 = scmp.ne.s32.totalorder %s922, %s924
      %p931 = scmp.eq.s32.totalorder %s95, 1
      %p932 = por %p930, %p931
      %p933 = scmp.ne.s32.totalorder %s924, %s925
      %p934 = scmp.eq.s32.totalorder %s95, 0
      %p935 = por %p933, %p934
      %p936 = scmp.ne.s32.totalorder %s924, %s925
      %p937 = scmp.eq.s32.totalorder %s96, 1
      %p938 = por %p936, %p937
      %p940 = scmp.ne.s32.totalorder %s925, %s939
      %p941 = scmp.eq.s32.totalorder %s96, 0
      %p942 = por %p940, %p941
      %s943 = ssub.s32 %s90, %s97
      %p944 = scmp.eq.s32.totalorder %s943, 0
      %s946 = sadd.s32 %s945, 1
      %s947 = scalar_select %p944, %s945, %s946
      %p950 = pneg %p944
      %p951 = scmp.eq.s32.totalorder %s90, 1
      %p952 = por %p950, %p951
      %p953 = scmp.ne.s32.totalorder %s945, %s948
      %p954 = scmp.eq.s32.totalorder %s90, 0
      %p955 = por %p953, %p954
      %p956 = scmp.ne.s32.totalorder %s945, %s948
      %p957 = scmp.eq.s32.totalorder %s95, 1
      %p958 = por %p956, %p957
      %p959 = scmp.ne.s32.totalorder %s948, %s949
      %p960 = scmp.eq.s32.totalorder %s95, 0
      %p961 = por %p959, %p960
      %p962 = scmp.ne.s32.totalorder %s948, %s949
      %p963 = scmp.eq.s32.totalorder %s96, 1
      %p964 = por %p962, %p963
      %p966 = scmp.ne.s32.totalorder %s949, %s965
      %p967 = scmp.eq.s32.totalorder %s96, 0
      %p968 = por %p966, %p967
      %p969 = scmp.le.s32.totalorder 1, %s90
      %p970 = scmp.lt.s32.totalorder %s90, 3
      %p971 = pnand %p969, %p970
      %p972 = pneg %p971
      // Predicated region
      $region9: #{forward.1} parent=5 // pred_check
        _
      $region10: #{forward.1} parent=5 // pred_check_branch
        %974 = sbr.rel (%p971) target = $region12
      $region11: #{forward.1} parent=5 // pred_region
        %s975 = ssub.s32 %s90, 1
        // Predicated region
        $region13: #{forward.1} parent=11 // pred_check
          %p976 = pneg %p137
        $region14: #{forward.1} parent=11 // pred_check_branch
          %978 = sbr.rel (%p976) target = $region16
        $region15: #{forward.1} parent=11 // pred_region
          _
        $region16: #{forward.1} parent=11 // pred_fallthru
          _
        // Predicated region
        $region17: #{forward.1} parent=11 // pred_check
          %p979 = pneg %p158
        $region18: #{forward.1} parent=11 // pred_check_branch
          %981 = sbr.rel (%p979) target = $region20
        $region19: #{forward.1} parent=11 // pred_region
          _
        $region20: #{forward.1} parent=11 // pred_fallthru
          _
        // Predicated region
        $region21: #{forward.1} parent=11 // pred_check
          %p982 = pneg %p179
        $region22: #{forward.1} parent=11 // pred_check_branch
          %984 = sbr.rel (%p982) target = $region24
        $region23: #{forward.1} parent=11 // pred_region
          _
        $region24: #{forward.1} parent=11 // pred_fallthru
          _
        // Predicated region
        $region25: #{forward.1} parent=11 // pred_check
          %p985 = pneg %p200
        $region26: #{forward.1} parent=11 // pred_check_branch
          %987 = sbr.rel (%p985) target = $region28
        $region27: #{forward.1} parent=11 // pred_region
          _
        $region28: #{forward.1} parent=11 // pred_fallthru
          _
        // Predicated region
        $region29: #{forward.1} parent=11 // pred_check
          %p988 = pneg %p221
        $region30: #{forward.1} parent=11 // pred_check_branch
          %990 = sbr.rel (%p988) target = $region32
        $region31: #{forward.1} parent=11 // pred_region
          _
        $region32: #{forward.1} parent=11 // pred_fallthru
          _
        // Predicated region
        $region33: #{forward.1} parent=11 // pred_check
          %p991 = pneg %p242
        $region34: #{forward.1} parent=11 // pred_check_branch
          %993 = sbr.rel (%p991) target = $region36
        $region35: #{forward.1} parent=11 // pred_region
          _
        $region36: #{forward.1} parent=11 // pred_fallthru
          _
        // Predicated region
        $region37: #{forward.1} parent=11 // pred_check
          %p994 = pneg %p263
        $region38: #{forward.1} parent=11 // pred_check_branch
          %996 = sbr.rel (%p994) target = $region40
        $region39: #{forward.1} parent=11 // pred_region
          _
        $region40: #{forward.1} parent=11 // pred_fallthru
          _
        // Predicated region
        $region41: #{forward.1} parent=11 // pred_check
          %p997 = pneg %p284
        $region42: #{forward.1} parent=11 // pred_check_branch
          %999 = sbr.rel (%p997) target = $region44
        $region43: #{forward.1} parent=11 // pred_region
          _
        $region44: #{forward.1} parent=11 // pred_fallthru
          _
        // Predicated region
        $region45: #{forward.1} parent=11 // pred_check
          %p1000 = pneg %p305
        $region46: #{forward.1} parent=11 // pred_check_branch
          %1002 = sbr.rel (%p1000) target = $region48
        $region47: #{forward.1} parent=11 // pred_region
          _
        $region48: #{forward.1} parent=11 // pred_fallthru
          _
        // Predicated region
        $region49: #{forward.1} parent=11 // pred_check
          %p1003 = pneg %p326
        $region50: #{forward.1} parent=11 // pred_check_branch
          %1005 = sbr.rel (%p1003) target = $region52
        $region51: #{forward.1} parent=11 // pred_region
          _
        $region52: #{forward.1} parent=11 // pred_fallthru
          _
        // Predicated region
        $region53: #{forward.1} parent=11 // pred_check
          %p1006 = pneg %p347
        $region54: #{forward.1} parent=11 // pred_check_branch
          %1008 = sbr.rel (%p1006) target = $region56
        $region55: #{forward.1} parent=11 // pred_region
          _
        $region56: #{forward.1} parent=11 // pred_fallthru
          _
        // Predicated region
        $region57: #{forward.1} parent=11 // pred_check
          %p1009 = pneg %p368
        $region58: #{forward.1} parent=11 // pred_check_branch
          %1011 = sbr.rel (%p1009) target = $region60
        $region59: #{forward.1} parent=11 // pred_region
          _
        $region60: #{forward.1} parent=11 // pred_fallthru
          _
        // Predicated region
        $region61: #{forward.1} parent=11 // pred_check
          %p1012 = pneg %p389
        $region62: #{forward.1} parent=11 // pred_check_branch
          %1014 = sbr.rel (%p1012) target = $region64
        $region63: #{forward.1} parent=11 // pred_region
          _
        $region64: #{forward.1} parent=11 // pred_fallthru
          _
        // Predicated region
        $region65: #{forward.1} parent=11 // pred_check
          %p1015 = pneg %p410
        $region66: #{forward.1} parent=11 // pred_check_branch
          %1017 = sbr.rel (%p1015) target = $region68
        $region67: #{forward.1} parent=11 // pred_region
          _
        $region68: #{forward.1} parent=11 // pred_fallthru
          _
        // Predicated region
        $region69: #{forward.1} parent=11 // pred_check
          %p1018 = pneg %p431
        $region70: #{forward.1} parent=11 // pred_check_branch
          %1020 = sbr.rel (%p1018) target = $region72
        $region71: #{forward.1} parent=11 // pred_region
          _
        $region72: #{forward.1} parent=11 // pred_fallthru
          _
        // Predicated region
        $region73: #{forward.1} parent=11 // pred_check
          %p1021 = pneg %p452
        $region74: #{forward.1} parent=11 // pred_check_branch
          %1023 = sbr.rel (%p1021) target = $region76
        $region75: #{forward.1} parent=11 // pred_region
          _
        $region76: #{forward.1} parent=11 // pred_fallthru
          _
        // Predicated region
        $region77: #{forward.1} parent=11 // pred_check
          %p1024 = pneg %p473
        $region78: #{forward.1} parent=11 // pred_check_branch
          %1026 = sbr.rel (%p1024) target = $region80
        $region79: #{forward.1} parent=11 // pred_region
          _
        $region80: #{forward.1} parent=11 // pred_fallthru
          _
        // Predicated region
        $region81: #{forward.1} parent=11 // pred_check
          %p1027 = pneg %p494
        $region82: #{forward.1} parent=11 // pred_check_branch
          %1029 = sbr.rel (%p1027) target = $region84
        $region83: #{forward.1} parent=11 // pred_region
          _
        $region84: #{forward.1} parent=11 // pred_fallthru
          _
        // Predicated region
        $region85: #{forward.1} parent=11 // pred_check
          %p1030 = pneg %p515
        $region86: #{forward.1} parent=11 // pred_check_branch
          %1032 = sbr.rel (%p1030) target = $region88
        $region87: #{forward.1} parent=11 // pred_region
          _
        $region88: #{forward.1} parent=11 // pred_fallthru
          _
        // Predicated region
        $region89: #{forward.1} parent=11 // pred_check
          %p1033 = pneg %p536
        $region90: #{forward.1} parent=11 // pred_check_branch
          %1035 = sbr.rel (%p1033) target = $region92
        $region91: #{forward.1} parent=11 // pred_region
          _
        $region92: #{forward.1} parent=11 // pred_fallthru
          _
        // Predicated region
        $region93: #{forward.1} parent=11 // pred_check
          %p1036 = pneg %p557
        $region94: #{forward.1} parent=11 // pred_check_branch
          %1038 = sbr.rel (%p1036) target = $region96
        $region95: #{forward.1} parent=11 // pred_region
          _
        $region96: #{forward.1} parent=11 // pred_fallthru
          _
        // Predicated region
        $region97: #{forward.1} parent=11 // pred_check
          %p1039 = pneg %p578
        $region98: #{forward.1} parent=11 // pred_check_branch
          %1041 = sbr.rel (%p1039) target = $region100
        $region99: #{forward.1} parent=11 // pred_region
          _
        $region100: #{forward.1} parent=11 // pred_fallthru
          _
        // Predicated region
        $region101: #{forward.1} parent=11 // pred_check
          %p1042 = pneg %p599
        $region102: #{forward.1} parent=11 // pred_check_branch
          %1044 = sbr.rel (%p1042) target = $region104
        $region103: #{forward.1} parent=11 // pred_region
          _
        $region104: #{forward.1} parent=11 // pred_fallthru
          _
        // Predicated region
        $region105: #{forward.1} parent=11 // pred_check
          %p1045 = pneg %p620
        $region106: #{forward.1} parent=11 // pred_check_branch
          %1047 = sbr.rel (%p1045) target = $region108
        $region107: #{forward.1} parent=11 // pred_region
          _
        $region108: #{forward.1} parent=11 // pred_fallthru
          _
        // Predicated region
        $region109: #{forward.1} parent=11 // pred_check
          %p1048 = pneg %p641
        $region110: #{forward.1} parent=11 // pred_check_branch
          %1050 = sbr.rel (%p1048) target = $region112
        $region111: #{forward.1} parent=11 // pred_region
          _
        $region112: #{forward.1} parent=11 // pred_fallthru
          _
        // Predicated region
        $region113: #{forward.1} parent=11 // pred_check
          %p1051 = pneg %p662
        $region114: #{forward.1} parent=11 // pred_check_branch
          %1053 = sbr.rel (%p1051) target = $region116
        $region115: #{forward.1} parent=11 // pred_region
          _
        $region116: #{forward.1} parent=11 // pred_fallthru
          _
        // Predicated region
        $region117: #{forward.1} parent=11 // pred_check
          %p1054 = pneg %p683
        $region118: #{forward.1} parent=11 // pred_check_branch
          %1056 = sbr.rel (%p1054) target = $region120
        $region119: #{forward.1} parent=11 // pred_region
          _
        $region120: #{forward.1} parent=11 // pred_fallthru
          _
        // Predicated region
        $region121: #{forward.1} parent=11 // pred_check
          %p1057 = pneg %p704
        $region122: #{forward.1} parent=11 // pred_check_branch
          %1059 = sbr.rel (%p1057) target = $region124
        $region123: #{forward.1} parent=11 // pred_region
          _
        $region124: #{forward.1} parent=11 // pred_fallthru
          _
        // Predicated region
        $region125: #{forward.1} parent=11 // pred_check
          %p1060 = pneg %p725
        $region126: #{forward.1} parent=11 // pred_check_branch
          %1062 = sbr.rel (%p1060) target = $region128
        $region127: #{forward.1} parent=11 // pred_region
          _
        $region128: #{forward.1} parent=11 // pred_fallthru
          _
        // Predicated region
        $region129: #{forward.1} parent=11 // pred_check
          %p1063 = pneg %p746
        $region130: #{forward.1} parent=11 // pred_check_branch
          %1065 = sbr.rel (%p1063) target = $region132
        $region131: #{forward.1} parent=11 // pred_region
          _
        $region132: #{forward.1} parent=11 // pred_fallthru
          _
        // Predicated region
        $region133: #{forward.1} parent=11 // pred_check
          %p1066 = pneg %p767
        $region134: #{forward.1} parent=11 // pred_check_branch
          %1068 = sbr.rel (%p1066) target = $region136
        $region135: #{forward.1} parent=11 // pred_region
          _
        $region136: #{forward.1} parent=11 // pred_fallthru
          _
        // Predicated region
        $region137: #{forward.1} parent=11 // pred_check
          %p1069 = pneg %p788
        $region138: #{forward.1} parent=11 // pred_check_branch
          %1071 = sbr.rel (%p1069) target = $region140
        $region139: #{forward.1} parent=11 // pred_region
          _
        $region140: #{forward.1} parent=11 // pred_fallthru
          _
        // Predicated region
        $region141: #{forward.1} parent=11 // pred_check
          %p1072 = pneg %p809
        $region142: #{forward.1} parent=11 // pred_check_branch
          %1074 = sbr.rel (%p1072) target = $region144
        $region143: #{forward.1} parent=11 // pred_region
          _
        $region144: #{forward.1} parent=11 // pred_fallthru
          _
        // Predicated region
        $region145: #{forward.1} parent=11 // pred_check
          %p1075 = pneg %p830
        $region146: #{forward.1} parent=11 // pred_check_branch
          %1077 = sbr.rel (%p1075) target = $region148
        $region147: #{forward.1} parent=11 // pred_region
          _
        $region148: #{forward.1} parent=11 // pred_fallthru
          _
        // Predicated region
        $region149: #{forward.1} parent=11 // pred_check
          %p1078 = pneg %p851
        $region150: #{forward.1} parent=11 // pred_check_branch
          %1080 = sbr.rel (%p1078) target = $region152
        $region151: #{forward.1} parent=11 // pred_region
          _
        $region152: #{forward.1} parent=11 // pred_fallthru
          _
        // Predicated region
        $region153: #{forward.1} parent=11 // pred_check
          %p1081 = pneg %p872
        $region154: #{forward.1} parent=11 // pred_check_branch
          %1083 = sbr.rel (%p1081) target = $region156
        $region155: #{forward.1} parent=11 // pred_region
          _
        $region156: #{forward.1} parent=11 // pred_fallthru
          _
        // Predicated region
        $region157: #{forward.1} parent=11 // pred_check
          %p1084 = pneg %p893
        $region158: #{forward.1} parent=11 // pred_check_branch
          %1086 = sbr.rel (%p1084) target = $region160
        $region159: #{forward.1} parent=11 // pred_region
          _
        $region160: #{forward.1} parent=11 // pred_fallthru
          _
        // Predicated region
        $region161: #{forward.1} parent=11 // pred_check
          %p1087 = pneg %p914
        $region162: #{forward.1} parent=11 // pred_check_branch
          %1089 = sbr.rel (%p1087) target = $region164
        $region163: #{forward.1} parent=11 // pred_region
          _
        $region164: #{forward.1} parent=11 // pred_fallthru
          _
        // Predicated region
        $region165: #{forward.1} parent=11 // pred_check
          %p1090 = pneg %p935
        $region166: #{forward.1} parent=11 // pred_check_branch
          %1092 = sbr.rel (%p1090) target = $region168
        $region167: #{forward.1} parent=11 // pred_region
          _
        $region168: #{forward.1} parent=11 // pred_fallthru
          _
      $region12: #{forward.1} parent=5 // pred_fallthru
        _
      %p1093 = scmp.lt.s32.totalorder %s90, 2
      // Predicated region
      $region169: #{forward.1} parent=5 // pred_check
        %p1094 = pneg %p1093
      $region170: #{forward.1} parent=5 // pred_check_branch
        %1096 = sbr.rel (%p1094) target = $region172
      $region171: #{forward.1} parent=5 // pred_region
        // Predicated region
        $region173: #{forward.1} parent=171 // pred_check
          %p1097 = pneg %p110
        $region174: #{forward.1} parent=171 // pred_check_branch
          %1099 = sbr.rel (%p1097) target = $region176
        $region175: #{forward.1} parent=171 // pred_region
          %p1100 = scmp.lt.s32.totalorder %s90, 1
          %s1101 = scalar_select %p1100, %s90, 1
          %s1102 = smul.addr %s1101, 32
          %s1103 = smul.addr %s1102, 8
          %s1104 = scalar_lea.vmem %s1, %s1103
        $region176: #{forward.1} parent=171 // pred_fallthru
          _
      $region172: #{forward.1} parent=5 // pred_fallthru
        _
      %p1105 = scmp.le.s32.totalorder 1, %s90
      %p1106 = scmp.lt.s32.totalorder %s90, 3
      %p1107 = pnand %p1105, %p1106
      %p1108 = pneg %p1107
      // Predicated region
      $region177: #{forward.1} parent=5 // pred_check
        _
      $region178: #{forward.1} parent=5 // pred_check_branch
        %1110 = sbr.rel (%p1107) target = $region180
      $region179: #{forward.1} parent=5 // pred_region
        %s1111 = ssub.s32 %s90, 1
        %p1112 = scmp.lt.s32.totalorder %s95, 1
        %s1113 = scalar_select %p1112, %s95, 1
        %s1114 = smul.addr %s1113, 32
        %s1115 = smul.addr %s1114, 8
        %s1116 = scalar_lea.vmem %s1, %s1115
        %p1117 = pneg %p116
        %p1118 = pneg %p113
        %p1119 = pneg %p137
        %p1120 = pneg %p134
        %p1121 = pneg %p158
        %p1122 = pneg %p155
        %p1123 = pneg %p179
        %p1124 = pneg %p176
        %p1125 = pneg %p200
        %p1126 = pneg %p197
        %p1127 = pneg %p221
        %p1128 = pneg %p218
        %p1129 = pneg %p242
        %p1130 = pneg %p239
        %p1131 = pneg %p263
        %p1132 = pneg %p260
        %p1133 = pneg %p284
        %p1134 = pneg %p281
        %p1135 = pneg %p305
        %p1136 = pneg %p302
        %p1137 = pneg %p326
        %p1138 = pneg %p323
        %p1139 = pneg %p347
        %p1140 = pneg %p344
        %p1141 = pneg %p368
        %p1142 = pneg %p365
        %p1143 = pneg %p389
        %p1144 = pneg %p386
        %p1145 = pneg %p410
        %p1146 = pneg %p407
        %p1147 = pneg %p431
        %p1148 = pneg %p428
        %p1149 = pneg %p452
        %p1150 = pneg %p449
        %p1151 = pneg %p473
        %p1152 = pneg %p470
        %p1153 = pneg %p494
        %p1154 = pneg %p491
        %p1155 = pneg %p515
        %p1156 = pneg %p512
        %p1157 = pneg %p536
        %p1158 = pneg %p533
        %p1159 = pneg %p557
        %p1160 = pneg %p554
        %p1161 = pneg %p578
        %p1162 = pneg %p575
        %p1163 = pneg %p599
        %p1164 = pneg %p596
        %p1165 = pneg %p620
        %p1166 = pneg %p617
        %p1167 = pneg %p641
        %p1168 = pneg %p638
        %p1169 = pneg %p662
        %p1170 = pneg %p659
        %p1171 = pneg %p683
        %p1172 = pneg %p680
        %p1173 = pneg %p704
        %p1174 = pneg %p701
        %p1175 = pneg %p725
        %p1176 = pneg %p722
        %p1177 = pneg %p746
        %p1178 = pneg %p743
        %p1179 = pneg %p767
        %p1180 = pneg %p764
        %p1181 = pneg %p788
        %p1182 = pneg %p785
        %p1183 = pneg %p809
        %p1184 = pneg %p806
        %p1185 = pneg %p830
        %p1186 = pneg %p827
        %p1187 = pneg %p851
        %p1188 = pneg %p848
        %p1189 = pneg %p872
        %p1190 = pneg %p869
        %p1191 = pneg %p893
        %p1192 = pneg %p890
        %p1193 = pneg %p914
        %p1194 = pneg %p911
        %p1195 = pneg %p935
        %p1196 = pneg %p932
        %p1197 = pneg %p961
        %p1198 = pneg %p958
        %s1199 = sand.u32 %s948, 1
        %s1200 = scalar_lea.sflag [#allocation9], %s1199
        %s1201 = sand.u32 %s948, 1
        %s1202 = smul.addr %s1201, 16
        %s1203 = scalar_lea.vmem [#allocation8], %s1202
        %p1204 = scmp.lt.s32.totalorder %s95, 1
        %s1205 = scalar_select %p1204, %s95, 1
        %s1206 = smul.addr %s1205, 32
        %s1207 = smul.addr %s1206, 8
        %s1208 = scalar_lea.vmem %s1, %s1207
        %v1210 = vld [vmem:[%s1208] sm:$0xff]
        %v1211 = vld [vmem:[%s1208 + $0x8] sm:$0xff]
        %v1212 = vld [vmem:[%s1208 + $0x10] sm:$0xff]
        %v1213 = vld [vmem:[%s1208 + $0x18] sm:$0xff]
        %v1214 = vld [vmem:[%s1208 + $0x20] sm:$0xff]
        %v1215 = vld [vmem:[%s1208 + $0x28] sm:$0xff]
        %v1216 = vld [vmem:[%s1208 + $0x30] sm:$0xff]
        %v1217 = vld [vmem:[%s1208 + $0x38] sm:$0xff]
        %v1218 = vld [vmem:[%s1208 + $0x40] sm:$0xff]
        %v1219 = vld [vmem:[%s1208 + $0x48] sm:$0xff]
        %v1220 = vld [vmem:[%s1208 + $0x50] sm:$0xff]
        %v1221 = vld [vmem:[%s1208 + $0x58] sm:$0xff]
        %v1222 = vld [vmem:[%s1208 + $0x60] sm:$0xff]
        %v1223 = vld [vmem:[%s1208 + $0x68] sm:$0xff]
        %v1224 = vld [vmem:[%s1208 + $0x70] sm:$0xff]
        %v1225 = vld [vmem:[%s1208 + $0x78] sm:$0xff]
        %v1226 = vld [vmem:[%s1208 + $0x80] sm:$0xff]
        %v1227 = vld [vmem:[%s1208 + $0x88] sm:$0xff]
        %v1228 = vld [vmem:[%s1208 + $0x90] sm:$0xff]
        %v1229 = vld [vmem:[%s1208 + $0x98] sm:$0xff]
        %v1230 = vld [vmem:[%s1208 + $0xa0] sm:$0xff]
        %v1231 = vld [vmem:[%s1208 + $0xa8] sm:$0xff]
        %v1232 = vld [vmem:[%s1208 + $0xb0] sm:$0xff]
        %v1233 = vld [vmem:[%s1208 + $0xb8] sm:$0xff]
        %v1234 = vld [vmem:[%s1208 + $0xc0] sm:$0xff]
        %v1235 = vld [vmem:[%s1208 + $0xc8] sm:$0xff]
        %v1236 = vld [vmem:[%s1208 + $0xd0] sm:$0xff]
        %v1237 = vld [vmem:[%s1208 + $0xd8] sm:$0xff]
        %v1238 = vld [vmem:[%s1208 + $0xe0] sm:$0xff]
        %v1239 = vld [vmem:[%s1208 + $0xe8] sm:$0xff]
        %v1240 = vld [vmem:[%s1208 + $0xf0] sm:$0xff]
        %v1241 = vld [vmem:[%s1208 + $0xf8] sm:$0xff]
        %vm1242 = vcmask 130048
        %1243 = vst.msk [vmem:[#allocation3] sm:$0xff] %vm1242, 0.0
        %1244 = vst.msk [vmem:[#allocation3 + $0x8] sm:$0xff] %vm1242, 0.0
        %1245 = vst.msk [vmem:[#allocation3 + $0x10] sm:$0xff] %vm1242, 0.0
        %vm1246 = vcmask 122880
        %1247 = vst.msk [vmem:[#allocation3 + $0x18] sm:$0x1] %vm1246, 0.0
        %1248 = vst.msk [vmem:[#allocation3 + $0x20] sm:$0xff] %vm1242, 0.0
        %1249 = vst.msk [vmem:[#allocation3 + $0x28] sm:$0xff] %vm1242, 0.0
        %1250 = vst.msk [vmem:[#allocation3 + $0x30] sm:$0xff] %vm1242, 0.0
        %1251 = vst.msk [vmem:[#allocation3 + $0x38] sm:$0x1] %vm1246, 0.0
        %1252 = vst.msk [vmem:[#allocation3 + $0x40] sm:$0xff] %vm1242, 0.0
        %1253 = vst.msk [vmem:[#allocation3 + $0x48] sm:$0xff] %vm1242, 0.0
        %1254 = vst.msk [vmem:[#allocation3 + $0x50] sm:$0xff] %vm1242, 0.0
        %1255 = vst.msk [vmem:[#allocation3 + $0x58] sm:$0x1] %vm1246, 0.0
        %1256 = vst.msk [vmem:[#allocation3 + $0x60] sm:$0xff] %vm1242, 0.0
        %1257 = vst.msk [vmem:[#allocation3 + $0x68] sm:$0xff] %vm1242, 0.0
        %1258 = vst.msk [vmem:[#allocation3 + $0x70] sm:$0xff] %vm1242, 0.0
        %1259 = vst.msk [vmem:[#allocation3 + $0x78] sm:$0x1] %vm1246, 0.0
        %1260 = vst.msk [vmem:[#allocation3 + $0x80] sm:$0xff] %vm1242, 0.0
        %1261 = vst.msk [vmem:[#allocation3 + $0x88] sm:$0xff] %vm1242, 0.0
        %1262 = vst.msk [vmem:[#allocation3 + $0x90] sm:$0xff] %vm1242, 0.0
        %1263 = vst.msk [vmem:[#allocation3 + $0x98] sm:$0x1] %vm1246, 0.0
        %1264 = vst.msk [vmem:[#allocation3 + $0xa0] sm:$0xff] %vm1242, 0.0
        %1265 = vst.msk [vmem:[#allocation3 + $0xa8] sm:$0xff] %vm1242, 0.0
        %1266 = vst.msk [vmem:[#allocation3 + $0xb0] sm:$0xff] %vm1242, 0.0
        %1267 = vst.msk [vmem:[#allocation3 + $0xb8] sm:$0x1] %vm1246, 0.0
        %1268 = vst.msk [vmem:[#allocation3 + $0xc0] sm:$0xff] %vm1242, 0.0
        %1269 = vst.msk [vmem:[#allocation3 + $0xc8] sm:$0xff] %vm1242, 0.0
        %1270 = vst.msk [vmem:[#allocation3 + $0xd0] sm:$0xff] %vm1242, 0.0
        %1271 = vst.msk [vmem:[#allocation3 + $0xd8] sm:$0x1] %vm1246, 0.0
        %1272 = vst.msk [vmem:[#allocation3 + $0xe0] sm:$0xff] %vm1242, 0.0
        %1273 = vst.msk [vmem:[#allocation3 + $0xe8] sm:$0xff] %vm1242, 0.0
        %1274 = vst.msk [vmem:[#allocation3 + $0xf0] sm:$0xff] %vm1242, 0.0
        %1275 = vst.msk [vmem:[#allocation3 + $0xf8] sm:$0x1] %vm1246, 0.0
        %1276 = vst.msk [vmem:[#allocation3 + $0x100] sm:$0xff] %vm1242, 0.0
        %1277 = vst.msk [vmem:[#allocation3 + $0x108] sm:$0xff] %vm1242, 0.0
        %1278 = vst.msk [vmem:[#allocation3 + $0x110] sm:$0xff] %vm1242, 0.0
        %1279 = vst.msk [vmem:[#allocation3 + $0x118] sm:$0x1] %vm1246, 0.0
        %1280 = vst.msk [vmem:[#allocation3 + $0x120] sm:$0xff] %vm1242, 0.0
        %1281 = vst.msk [vmem:[#allocation3 + $0x128] sm:$0xff] %vm1242, 0.0
        %1282 = vst.msk [vmem:[#allocation3 + $0x130] sm:$0xff] %vm1242, 0.0
        %1283 = vst.msk [vmem:[#allocation3 + $0x138] sm:$0x1] %vm1246, 0.0
        %1284 = vst.msk [vmem:[#allocation3 + $0x140] sm:$0xff] %vm1242, 0.0
        %1285 = vst.msk [vmem:[#allocation3 + $0x148] sm:$0xff] %vm1242, 0.0
        %1286 = vst.msk [vmem:[#allocation3 + $0x150] sm:$0xff] %vm1242, 0.0
        %1287 = vst.msk [vmem:[#allocation3 + $0x158] sm:$0x1] %vm1246, 0.0
        %1288 = vst.msk [vmem:[#allocation3 + $0x160] sm:$0xff] %vm1242, 0.0
        %1289 = vst.msk [vmem:[#allocation3 + $0x168] sm:$0xff] %vm1242, 0.0
        %1290 = vst.msk [vmem:[#allocation3 + $0x170] sm:$0xff] %vm1242, 0.0
        %1291 = vst.msk [vmem:[#allocation3 + $0x178] sm:$0x1] %vm1246, 0.0
        %1292 = vst.msk [vmem:[#allocation3 + $0x180] sm:$0xff] %vm1242, 0.0
        %1293 = vst.msk [vmem:[#allocation3 + $0x188] sm:$0xff] %vm1242, 0.0
        %1294 = vst.msk [vmem:[#allocation3 + $0x190] sm:$0xff] %vm1242, 0.0
        %1295 = vst.msk [vmem:[#allocation3 + $0x198] sm:$0x1] %vm1246, 0.0
        %1296 = vst.msk [vmem:[#allocation3 + $0x1a0] sm:$0xff] %vm1242, 0.0
        %1297 = vst.msk [vmem:[#allocation3 + $0x1a8] sm:$0xff] %vm1242, 0.0
        %1298 = vst.msk [vmem:[#allocation3 + $0x1b0] sm:$0xff] %vm1242, 0.0
        %1299 = vst.msk [vmem:[#allocation3 + $0x1b8] sm:$0x1] %vm1246, 0.0
        %1300 = vst.msk [vmem:[#allocation3 + $0x1c0] sm:$0xff] %vm1242, 0.0
        %1301 = vst.msk [vmem:[#allocation3 + $0x1c8] sm:$0xff] %vm1242, 0.0
        %1302 = vst.msk [vmem:[#allocation3 + $0x1d0] sm:$0xff] %vm1242, 0.0
        %1303 = vst.msk [vmem:[#allocation3 + $0x1d8] sm:$0x1] %vm1246, 0.0
        %1304 = vst.msk [vmem:[#allocation3 + $0x1e0] sm:$0xff] %vm1242, 0.0
        %1305 = vst.msk [vmem:[#allocation3 + $0x1e8] sm:$0xff] %vm1242, 0.0
        %1306 = vst.msk [vmem:[#allocation3 + $0x1f0] sm:$0xff] %vm1242, 0.0
        %1307 = vst.msk [vmem:[#allocation3 + $0x1f8] sm:$0x1] %vm1246, 0.0
        %1308 = vst.msk [vmem:[#allocation3 + $0x200] sm:$0xff] %vm1242, 0.0
        %1309 = vst.msk [vmem:[#allocation3 + $0x208] sm:$0xff] %vm1242, 0.0
        %1310 = vst.msk [vmem:[#allocation3 + $0x210] sm:$0xff] %vm1242, 0.0
        %1311 = vst.msk [vmem:[#allocation3 + $0x218] sm:$0x1] %vm1246, 0.0
        %1312 = vst.msk [vmem:[#allocation3 + $0x220] sm:$0xff] %vm1242, 0.0
        %1313 = vst.msk [vmem:[#allocation3 + $0x228] sm:$0xff] %vm1242, 0.0
        %1314 = vst.msk [vmem:[#allocation3 + $0x230] sm:$0xff] %vm1242, 0.0
        %1315 = vst.msk [vmem:[#allocation3 + $0x238] sm:$0x1] %vm1246, 0.0
        %vm1316 = vcmask 31744
        %1317 = vst.msk [vmem:[#allocation2] sm:$0xff] %vm1316, %v1210
        %1318 = vst.msk [vmem:[#allocation2 + $0x8] sm:$0xff] %vm1316, %v1211
        %1319 = vst.msk [vmem:[#allocation2 + $0x10] sm:$0xff] %vm1316, %v1212
        %1320 = vst.msk [vmem:[#allocation2 + $0x18] sm:$0xff] %vm1316, %v1213
        %1321 = vst.msk [vmem:[#allocation2 + $0x20] sm:$0xff] %vm1316, %v1214
        %1322 = vst.msk [vmem:[#allocation2 + $0x28] sm:$0xff] %vm1316, %v1215
        %1323 = vst.msk [vmem:[#allocation2 + $0x30] sm:$0xff] %vm1316, %v1216
        %1324 = vst.msk [vmem:[#allocation2 + $0x38] sm:$0xff] %vm1316, %v1217
        %1325 = vst.msk [vmem:[#allocation2 + $0x40] sm:$0xff] %vm1316, %v1218
        %1326 = vst.msk [vmem:[#allocation2 + $0x48] sm:$0xff] %vm1316, %v1219
        %1327 = vst.msk [vmem:[#allocation2 + $0x50] sm:$0xff] %vm1316, %v1220
        %1328 = vst.msk [vmem:[#allocation2 + $0x58] sm:$0xff] %vm1316, %v1221
        %1329 = vst.msk [vmem:[#allocation2 + $0x60] sm:$0xff] %vm1316, %v1222
        %1330 = vst.msk [vmem:[#allocation2 + $0x68] sm:$0xff] %vm1316, %v1223
        %1331 = vst.msk [vmem:[#allocation2 + $0x70] sm:$0xff] %vm1316, %v1224
        %1332 = vst.msk [vmem:[#allocation2 + $0x78] sm:$0xff] %vm1316, %v1225
        %1333 = vst.msk [vmem:[#allocation2 + $0x80] sm:$0xff] %vm1316, %v1226
        %1334 = vst.msk [vmem:[#allocation2 + $0x88] sm:$0xff] %vm1316, %v1227
        %1335 = vst.msk [vmem:[#allocation2 + $0x90] sm:$0xff] %vm1316, %v1228
        %1336 = vst.msk [vmem:[#allocation2 + $0x98] sm:$0xff] %vm1316, %v1229
        %1337 = vst.msk [vmem:[#allocation2 + $0xa0] sm:$0xff] %vm1316, %v1230
        %1338 = vst.msk [vmem:[#allocation2 + $0xa8] sm:$0xff] %vm1316, %v1231
        %1339 = vst.msk [vmem:[#allocation2 + $0xb0] sm:$0xff] %vm1316, %v1232
        %1340 = vst.msk [vmem:[#allocation2 + $0xb8] sm:$0xff] %vm1316, %v1233
        %1341 = vst.msk [vmem:[#allocation2 + $0xc0] sm:$0xff] %vm1316, %v1234
        %1342 = vst.msk [vmem:[#allocation2 + $0xc8] sm:$0xff] %vm1316, %v1235
        %1343 = vst.msk [vmem:[#allocation2 + $0xd0] sm:$0xff] %vm1316, %v1236
        %1344 = vst.msk [vmem:[#allocation2 + $0xd8] sm:$0xff] %vm1316, %v1237
        %1345 = vst.msk [vmem:[#allocation2 + $0xe0] sm:$0xff] %vm1316, %v1238
        %1346 = vst.msk [vmem:[#allocation2 + $0xe8] sm:$0xff] %vm1316, %v1239
        %1347 = vst.msk [vmem:[#allocation2 + $0xf0] sm:$0xff] %vm1316, %v1240
        %1348 = vst.msk [vmem:[#allocation2 + $0xf8] sm:$0xff] %vm1316, %v1241
        %v1349 = vld [vmem:[#allocation2] sm:$0xff]
        %v1350 = vld [vmem:[#allocation2 + $0x8] sm:$0xff]
        %v1351 = vld [vmem:[#allocation2 + $0x10] sm:$0xff]
        %v1352 = vld [vmem:[#allocation2 + $0x18] sm:$0xff]
        %v1353 = vld [vmem:[#allocation2 + $0x20] sm:$0xff]
        %v1354 = vld [vmem:[#allocation2 + $0x28] sm:$0xff]
        %v1355 = vld [vmem:[#allocation2 + $0x30] sm:$0xff]
        %v1356 = vld [vmem:[#allocation2 + $0x38] sm:$0xff]
        %v1357 = vld [vmem:[#allocation2 + $0x40] sm:$0xff]
        %v1358 = vld [vmem:[#allocation2 + $0x48] sm:$0xff]
        %v1359 = vld [vmem:[#allocation2 + $0x50] sm:$0xff]
        %v1360 = vld [vmem:[#allocation2 + $0x58] sm:$0xff]
        %v1361 = vld [vmem:[#allocation2 + $0x60] sm:$0xff]
        %v1362 = vld [vmem:[#allocation2 + $0x68] sm:$0xff]
        %v1363 = vld [vmem:[#allocation2 + $0x70] sm:$0xff]
        %v1364 = vld [vmem:[#allocation2 + $0x78] sm:$0xff]
        %v1365 = vld [vmem:[#allocation2 + $0x80] sm:$0xff]
        %v1366 = vld [vmem:[#allocation2 + $0x88] sm:$0xff]
        %v1367 = vld [vmem:[#allocation2 + $0x90] sm:$0xff]
        %v1368 = vld [vmem:[#allocation2 + $0x98] sm:$0xff]
        %v1369 = vld [vmem:[#allocation2 + $0xa0] sm:$0xff]
        %v1370 = vld [vmem:[#allocation2 + $0xa8] sm:$0xff]
        %v1371 = vld [vmem:[#allocation2 + $0xb0] sm:$0xff]
        %v1372 = vld [vmem:[#allocation2 + $0xb8] sm:$0xff]
        %v1373 = vld [vmem:[#allocation2 + $0xc0] sm:$0xff]
        %v1374 = vld [vmem:[#allocation2 + $0xc8] sm:$0xff]
        %v1375 = vld [vmem:[#allocation2 + $0xd0] sm:$0xff]
        %v1376 = vld [vmem:[#allocation2 + $0xd8] sm:$0xff]
        %v1377 = vld [vmem:[#allocation2 + $0xe0] sm:$0xff]
        %v1378 = vld [vmem:[#allocation2 + $0xe8] sm:$0xff]
        %v1379 = vld [vmem:[#allocation2 + $0xf0] sm:$0xff]
        %v1380 = vld [vmem:[#allocation2 + $0xf8] sm:$0xff]
        %v1381 = vld [vmem:[%s3] sm:$0x1]
        %v1383 = vlaneseq
        %v1384 = vshrl.u32 %v1383, 7
        %v1385 = vsub.s32 0, %v1384
        %v1386 = vrot.slane %v1381, %v1385
        %v1388 = vmul.f32 %v1349, %v1386
        %v1389 = vmul.f32 %v1350, %v1386
        %v1390 = vmul.f32 %v1351, %v1386
        %v1391 = vmul.f32 %v1352, %v1386
        %v1392 = vmul.f32 %v1353, %v1386
        %v1393 = vmul.f32 %v1354, %v1386
        %v1394 = vmul.f32 %v1355, %v1386
        %v1395 = vmul.f32 %v1356, %v1386
        %v1396 = vmul.f32 %v1357, %v1386
        %v1397 = vmul.f32 %v1358, %v1386
        %v1398 = vmul.f32 %v1359, %v1386
        %v1399 = vmul.f32 %v1360, %v1386
        %v1400 = vmul.f32 %v1361, %v1386
        %v1401 = vmul.f32 %v1362, %v1386
        %v1402 = vmul.f32 %v1363, %v1386
        %v1403 = vmul.f32 %v1364, %v1386
        %v1404 = vmul.f32 %v1365, %v1386
        %v1405 = vmul.f32 %v1366, %v1386
        %v1406 = vmul.f32 %v1367, %v1386
        %v1407 = vmul.f32 %v1368, %v1386
        %v1408 = vmul.f32 %v1369, %v1386
        %v1409 = vmul.f32 %v1370, %v1386
        %v1410 = vmul.f32 %v1371, %v1386
        %v1411 = vmul.f32 %v1372, %v1386
        %v1412 = vmul.f32 %v1373, %v1386
        %v1413 = vmul.f32 %v1374, %v1386
        %v1414 = vmul.f32 %v1375, %v1386
        %v1415 = vmul.f32 %v1376, %v1386
        %v1416 = vmul.f32 %v1377, %v1386
        %v1417 = vmul.f32 %v1378, %v1386
        %v1418 = vmul.f32 %v1379, %v1386
        %v1419 = vmul.f32 %v1380, %v1386
        %v1420 = vld [vmem:[%s5] sm:$0x1]
        %v1422 = vlaneseq
        %v1423 = vshrl.u32 %v1422, 7
        %v1424 = vsub.s32 0, %v1423
        %v1425 = vrot.slane %v1420, %v1424
        %v1427 = vadd.f32 %v1388, %v1425
        %v1428 = vadd.f32 %v1389, %v1425
        %v1429 = vadd.f32 %v1390, %v1425
        %v1430 = vadd.f32 %v1391, %v1425
        %v1431 = vadd.f32 %v1392, %v1425
        %v1432 = vadd.f32 %v1393, %v1425
        %v1433 = vadd.f32 %v1394, %v1425
        %v1434 = vadd.f32 %v1395, %v1425
        %v1435 = vadd.f32 %v1396, %v1425
        %v1436 = vadd.f32 %v1397, %v1425
        %v1437 = vadd.f32 %v1398, %v1425
        %v1438 = vadd.f32 %v1399, %v1425
        %v1439 = vadd.f32 %v1400, %v1425
        %v1440 = vadd.f32 %v1401, %v1425
        %v1441 = vadd.f32 %v1402, %v1425
        %v1442 = vadd.f32 %v1403, %v1425
        %v1443 = vadd.f32 %v1404, %v1425
        %v1444 = vadd.f32 %v1405, %v1425
        %v1445 = vadd.f32 %v1406, %v1425
        %v1446 = vadd.f32 %v1407, %v1425
        %v1447 = vadd.f32 %v1408, %v1425
        %v1448 = vadd.f32 %v1409, %v1425
        %v1449 = vadd.f32 %v1410, %v1425
        %v1450 = vadd.f32 %v1411, %v1425
        %v1451 = vadd.f32 %v1412, %v1425
        %v1452 = vadd.f32 %v1413, %v1425
        %v1453 = vadd.f32 %v1414, %v1425
        %v1454 = vadd.f32 %v1415, %v1425
        %v1455 = vadd.f32 %v1416, %v1425
        %v1456 = vadd.f32 %v1417, %v1425
        %v1457 = vadd.f32 %v1418, %v1425
        %v1458 = vadd.f32 %v1419, %v1425
        %v1459 = vmax.f32 %v1427, 0.0
        %v1460 = vmax.f32 %v1428, 0.0
        %v1461 = vmax.f32 %v1429, 0.0
        %v1462 = vmax.f32 %v1430, 0.0
        %v1463 = vmax.f32 %v1431, 0.0
        %v1464 = vmax.f32 %v1432, 0.0
        %v1465 = vmax.f32 %v1433, 0.0
        %v1466 = vmax.f32 %v1434, 0.0
        %v1467 = vmax.f32 %v1435, 0.0
        %v1468 = vmax.f32 %v1436, 0.0
        %v1469 = vmax.f32 %v1437, 0.0
        %v1470 = vmax.f32 %v1438, 0.0
        %v1471 = vmax.f32 %v1439, 0.0
        %v1472 = vmax.f32 %v1440, 0.0
        %v1473 = vmax.f32 %v1441, 0.0
        %v1474 = vmax.f32 %v1442, 0.0
        %v1475 = vmax.f32 %v1443, 0.0
        %v1476 = vmax.f32 %v1444, 0.0
        %v1477 = vmax.f32 %v1445, 0.0
        %v1478 = vmax.f32 %v1446, 0.0
        %v1479 = vmax.f32 %v1447, 0.0
        %v1480 = vmax.f32 %v1448, 0.0
        %v1481 = vmax.f32 %v1449, 0.0
        %v1482 = vmax.f32 %v1450, 0.0
        %v1483 = vmax.f32 %v1451, 0.0
        %v1484 = vmax.f32 %v1452, 0.0
        %v1485 = vmax.f32 %v1453, 0.0
        %v1486 = vmax.f32 %v1454, 0.0
        %v1487 = vmax.f32 %v1455, 0.0
        %v1488 = vmax.f32 %v1456, 0.0
        %v1489 = vmax.f32 %v1457, 0.0
        %v1490 = vmax.f32 %v1458, 0.0
        %v1491 = vpack.c.bf16 %v1460, %v1459
        %v1492 = vpack.c.bf16 %v1462, %v1461
        %v1493 = vpack.c.bf16 %v1464, %v1463
        %v1494 = vpack.c.bf16 %v1466, %v1465
        %v1495 = vpack.c.bf16 %v1468, %v1467
        %v1496 = vpack.c.bf16 %v1470, %v1469
        %v1497 = vpack.c.bf16 %v1472, %v1471
        %v1498 = vpack.c.bf16 %v1474, %v1473
        %v1499 = vpack.c.bf16 %v1476, %v1475
        %v1500 = vpack.c.bf16 %v1478, %v1477
        %v1501 = vpack.c.bf16 %v1480, %v1479
        %v1502 = vpack.c.bf16 %v1482, %v1481
        %v1503 = vpack.c.bf16 %v1484, %v1483
        %v1504 = vpack.c.bf16 %v1486, %v1485
        %v1505 = vpack.c.bf16 %v1488, %v1487
        %v1506 = vpack.c.bf16 %v1490, %v1489
        %v1507 = vld [vmem:[%s7] sm:$0x3]
        %v1509 = vsel %vm1316, %v1491, 0
        %v1512 = vsel %vm1316, %v1492, 0
        %v1515 = vsel %vm1316, %v1493, 0
        %v1518 = vsel %vm1316, %v1494, 0
        %v1521 = vsel %vm1316, %v1495, 0
        %v1524 = vsel %vm1316, %v1496, 0
        %v1527 = vsel %vm1316, %v1497, 0
        %v1530 = vsel %vm1316, %v1498, 0
        %v1533 = vsel %vm1316, %v1499, 0
        %v1536 = vsel %vm1316, %v1500, 0
        %v1539 = vsel %vm1316, %v1501, 0
        %v1542 = vsel %vm1316, %v1502, 0
        %v1545 = vsel %vm1316, %v1503, 0
        %v1548 = vsel %vm1316, %v1504, 0
        %v1551 = vsel %vm1316, %v1505, 0
        %v1554 = vsel %vm1316, %v1506, 0
        %vm1556 = vcmask 1041408
        %v1558 = vsel %vm1556, %v1507, 0
        %1560 = vmatprep.subr.bf16.mxu0 0
        %1561 = vmatpush1.bf16.msra.mxu0 %v1558
        %1562 = vmatprep.subr.bf16.mxu0 0
        %1563 = vmatpush1.bf16.msra.mxu0 0
        %1564 = vmatprep.subr.bf16.mxu0 0
        %1565 = vmatpush1.bf16.msra.mxu0 0
        %1566 = vmatprep.subr.bf16.mxu0 0
        %1567 = vmatpush1.bf16.msra.mxu0 0
        %1568 = vmatprep.subr.bf16.mxu0 0
        %1569 = vmatpush1.bf16.msra.mxu0 0
        %1570 = vmatprep.subr.bf16.mxu0 0
        %1571 = vmatpush1.bf16.msra.mxu0 0
        %1572 = vmatprep.subr.bf16.mxu0 0
        %1573 = vmatpush1.bf16.msra.mxu0 0
        %1574 = vmatprep.subr.bf16.mxu0 0
        %1575 = vmatpush1.bf16.msra.mxu0 0
        %1576 = vmatprep.subr.bf16.mxu0 0
        %1577 = vmatpush1.bf16.msra.mxu0 0
        %1578 = vmatprep.subr.bf16.mxu0 0
        %1579 = vmatpush1.bf16.msra.mxu0 0
        %1580 = vmatprep.subr.bf16.mxu0 0
        %1581 = vmatpush1.bf16.msra.mxu0 0
        %1582 = vmatprep.subr.bf16.mxu0 0
        %1583 = vmatpush1.bf16.msra.mxu0 0
        %1584 = vmatprep.subr.bf16.mxu0 0
        %1585 = vmatpush1.bf16.msra.mxu0 0
        %1586 = vmatprep.subr.bf16.mxu0 0
        %1587 = vmatpush1.bf16.msra.mxu0 0
        %1588 = vmatprep.subr.bf16.mxu0 0
        %1589 = vmatpush1.bf16.msra.mxu0 0
        %1590 = vmatprep.subr.bf16.mxu0 0
        %1591 = vmatpush1.bf16.msra.mxu0 0
        %1592 = vmatprep.mubr.bf16.mxu0 0
        %1593 = vmatmul.mubr.bf16.gmra.mrb[0].mxu0 %v1509
        %v1594 = vpop.f32.mrb[0].mxu0
        %v1595 = vadd.f32 0.0, %v1594
        %v1596 = vpop.f32.mrb[0].mxu0
        %v1597 = vpop.f32.mrb[0].mxu0
        %v1598 = vadd.f32 0.0, %v1597
        %v1599 = vpop.f32.mrb[0].mxu0
        %1600 = vmatprep.mubr.bf16.mxu0 0
        %1601 = vmatmul.mubr.bf16.gmra.mrb[0].mxu0 %v1512
        %v1602 = vpop.f32.mrb[0].mxu0
        %v1603 = vadd.f32 0.0, %v1602
        %v1604 = vpop.f32.mrb[0].mxu0
        %v1605 = vpop.f32.mrb[0].mxu0
        %v1606 = vadd.f32 0.0, %v1605
        %v1607 = vpop.f32.mrb[0].mxu0
        %1608 = vmatprep.mubr.bf16.mxu0 0
        %1609 = vmatmul.mubr.bf16.gmra.mrb[0].mxu0 %v1515
        %v1610 = vpop.f32.mrb[0].mxu0
        %v1611 = vadd.f32 0.0, %v1610
        %v1612 = vpop.f32.mrb[0].mxu0
        %v1613 = vpop.f32.mrb[0].mxu0
        %v1614 = vadd.f32 0.0, %v1613
        %v1615 = vpop.f32.mrb[0].mxu0
        %1616 = vmatprep.mubr.bf16.mxu0 0
        %1617 = vmatmul.mubr.bf16.gmra.mrb[0].mxu0 %v1518
        %v1618 = vpop.f32.mrb[0].mxu0
        %v1619 = vadd.f32 0.0, %v1618
        %v1620 = vpop.f32.mrb[0].mxu0
        %v1621 = vpop.f32.mrb[0].mxu0
        %v1622 = vadd.f32 0.0, %v1621
        %v1623 = vpop.f32.mrb[0].mxu0
        %1624 = vmatprep.mubr.bf16.mxu0 0
        %1625 = vmatmul.mubr.bf16.gmra.mrb[0].mxu0 %v1521
        %v1626 = vpop.f32.mrb[0].mxu0
        %v1627 = vadd.f32 0.0, %v1626
        %v1628 = vpop.f32.mrb[0].mxu0
        %v1629 = vpop.f32.mrb[0].mxu0
        %v1630 = vadd.f32 0.0, %v1629
        %v1631 = vpop.f32.mrb[0].mxu0
        %1632 = vmatprep.mubr.bf16.mxu0 0
        %1633 = vmatmul.mubr.bf16.gmra.mrb[0].mxu0 %v1524
        %v1634 = vpop.f32.mrb[0].mxu0
        %v1635 = vadd.f32 0.0, %v1634
        %v1636 = vpop.f32.mrb[0].mxu0
        %v1637 = vpop.f32.mrb[0].mxu0
        %v1638 = vadd.f32 0.0, %v1637
        %v1639 = vpop.f32.mrb[0].mxu0
        %1640 = vmatprep.mubr.bf16.mxu0 0
        %1641 = vmatmul.mubr.bf16.gmra.mrb[0].mxu0 %v1527
        %v1642 = vpop.f32.mrb[0].mxu0
        %v1643 = vadd.f32 0.0, %v1642
        %v1644 = vpop.f32.mrb[0].mxu0
        %v1645 = vpop.f32.mrb[0].mxu0
        %v1646 = vadd.f32 0.0, %v1645
        %v1647 = vpop.f32.mrb[0].mxu0
        %1648 = vmatprep.mubr.bf16.mxu0 0
        %1649 = vmatmul.mubr.bf16.gmra.mrb[0].mxu0 %v1530
        %v1650 = vpop.f32.mrb[0].mxu0
        %v1651 = vadd.f32 0.0, %v1650
        %v1652 = vpop.f32.mrb[0].mxu0
        %v1653 = vpop.f32.mrb[0].mxu0
        %v1654 = vadd.f32 0.0, %v1653
        %v1655 = vpop.f32.mrb[0].mxu0
        %1656 = vmatprep.mubr.bf16.mxu0 0
        %1657 = vmatmul.mubr.bf16.gmra.mrb[0].mxu0 %v1533
        %v1658 = vpop.f32.mrb[0].mxu0
        %v1659 = vadd.f32 0.0, %v1658
        %v1660 = vpop.f32.mrb[0].mxu0
        %v1661 = vpop.f32.mrb[0].mxu0
        %v1662 = vadd.f32 0.0, %v1661
        %v1663 = vpop.f32.mrb[0].mxu0
        %1664 = vmatprep.mubr.bf16.mxu0 0
        %1665 = vmatmul.mubr.bf16.gmra.mrb[0].mxu0 %v1536
        %v1666 = vpop.f32.mrb[0].mxu0
        %v1667 = vadd.f32 0.0, %v1666
        %v1668 = vpop.f32.mrb[0].mxu0
        %v1669 = vpop.f32.mrb[0].mxu0
        %v1670 = vadd.f32 0.0, %v1669
        %v1671 = vpop.f32.mrb[0].mxu0
        %1672 = vmatprep.mubr.bf16.mxu0 0
        %1673 = vmatmul.mubr.bf16.gmra.mrb[0].mxu0 %v1539
        %v1674 = vpop.f32.mrb[0].mxu0
        %v1675 = vadd.f32 0.0, %v1674
        %v1676 = vpop.f32.mrb[0].mxu0
        %v1677 = vpop.f32.mrb[0].mxu0
        %v1678 = vadd.f32 0.0, %v1677
        %v1679 = vpop.f32.mrb[0].mxu0
        %1680 = vmatprep.mubr.bf16.mxu0 0
        %1681 = vmatmul.mubr.bf16.gmra.mrb[0].mxu0 %v1542
        %v1682 = vpop.f32.mrb[0].mxu0
        %v1683 = vadd.f32 0.0, %v1682
        %v1684 = vpop.f32.mrb[0].mxu0
        %v1685 = vpop.f32.mrb[0].mxu0
        %v1686 = vadd.f32 0.0, %v1685
        %v1687 = vpop.f32.mrb[0].mxu0
        %1688 = vmatprep.mubr.bf16.mxu0 0
        %1689 = vmatmul.mubr.bf16.gmra.mrb[0].mxu0 %v1545
        %v1690 = vpop.f32.mrb[0].mxu0
        %v1691 = vadd.f32 0.0, %v1690
        %v1692 = vpop.f32.mrb[0].mxu0
        %v1693 = vpop.f32.mrb[0].mxu0
        %v1694 = vadd.f32 0.0, %v1693
        %v1695 = vpop.f32.mrb[0].mxu0
        %1696 = vmatprep.mubr.bf16.mxu0 0
        %1697 = vmatmul.mubr.bf16.gmra.mrb[0].mxu0 %v1548
        %v1698 = vpop.f32.mrb[0].mxu0
        %v1699 = vadd.f32 0.0, %v1698
        %v1700 = vpop.f32.mrb[0].mxu0
        %v1701 = vpop.f32.mrb[0].mxu0
        %v1702 = vadd.f32 0.0, %v1701
        %v1703 = vpop.f32.mrb[0].mxu0
        %1704 = vmatprep.mubr.bf16.mxu0 0
        %1705 = vmatmul.mubr.bf16.gmra.mrb[0].mxu0 %v1551
        %v1706 = vpop.f32.mrb[0].mxu0
        %v1707 = vadd.f32 0.0, %v1706
        %v1708 = vpop.f32.mrb[0].mxu0
        %v1709 = vpop.f32.mrb[0].mxu0
        %v1710 = vadd.f32 0.0, %v1709
        %v1711 = vpop.f32.mrb[0].mxu0
        %1712 = vmatprep.mubr.bf16.mxu0 0
        %1713 = vmatmul.mubr.bf16.gmra.mrb[0].mxu0 %v1554
        %v1714 = vpop.f32.mrb[0].mxu0
        %v1715 = vadd.f32 0.0, %v1714
        %v1716 = vpop.f32.mrb[0].mxu0
        %v1717 = vpop.f32.mrb[0].mxu0
        %v1718 = vadd.f32 0.0, %v1717
        %v1719 = vpop.f32.mrb[0].mxu0
        %1720 = vdwg.mxu0
        %v1721 = vld [vmem:[%s9] sm:$0x1]
        %v1723 = vlaneseq
        %v1724 = vshrl.u32 %v1723, 7
        %v1725 = vsub.s32 0, %v1724
        %v1726 = vrot.slane %v1721, %v1725
        %v1728 = vmul.f32 %v1595, %v1726
        %v1729 = vmul.f32 %v1598, %v1726
        %v1730 = vmul.f32 %v1603, %v1726
        %v1731 = vmul.f32 %v1606, %v1726
        %v1732 = vmul.f32 %v1611, %v1726
        %v1733 = vmul.f32 %v1614, %v1726
        %v1734 = vmul.f32 %v1619, %v1726
        %v1735 = vmul.f32 %v1622, %v1726
        %v1736 = vmul.f32 %v1627, %v1726
        %v1737 = vmul.f32 %v1630, %v1726
        %v1738 = vmul.f32 %v1635, %v1726
        %v1739 = vmul.f32 %v1638, %v1726
        %v1740 = vmul.f32 %v1643, %v1726
        %v1741 = vmul.f32 %v1646, %v1726
        %v1742 = vmul.f32 %v1651, %v1726
        %v1743 = vmul.f32 %v1654, %v1726
        %v1744 = vmul.f32 %v1659, %v1726
        %v1745 = vmul.f32 %v1662, %v1726
        %v1746 = vmul.f32 %v1667, %v1726
        %v1747 = vmul.f32 %v1670, %v1726
        %v1748 = vmul.f32 %v1675, %v1726
        %v1749 = vmul.f32 %v1678, %v1726
        %v1750 = vmul.f32 %v1683, %v1726
        %v1751 = vmul.f32 %v1686, %v1726
        %v1752 = vmul.f32 %v1691, %v1726
        %v1753 = vmul.f32 %v1694, %v1726
        %v1754 = vmul.f32 %v1699, %v1726
        %v1755 = vmul.f32 %v1702, %v1726
        %v1756 = vmul.f32 %v1707, %v1726
        %v1757 = vmul.f32 %v1710, %v1726
        %v1758 = vmul.f32 %v1715, %v1726
        %v1759 = vmul.f32 %v1718, %v1726
        %v1760 = vld [vmem:[%s11] sm:$0x1]
        %v1762 = vlaneseq
        %v1763 = vshrl.u32 %v1762, 7
        %v1764 = vsub.s32 0, %v1763
        %v1765 = vrot.slane %v1760, %v1764
        %v1767 = vadd.f32 %v1728, %v1765
        %v1768 = vadd.f32 %v1729, %v1765
        %v1769 = vadd.f32 %v1730, %v1765
        %v1770 = vadd.f32 %v1731, %v1765
        %v1771 = vadd.f32 %v1732, %v1765
        %v1772 = vadd.f32 %v1733, %v1765
        %v1773 = vadd.f32 %v1734, %v1765
        %v1774 = vadd.f32 %v1735, %v1765
        %v1775 = vadd.f32 %v1736, %v1765
        %v1776 = vadd.f32 %v1737, %v1765
        %v1777 = vadd.f32 %v1738, %v1765
        %v1778 = vadd.f32 %v1739, %v1765
        %v1779 = vadd.f32 %v1740, %v1765
        %v1780 = vadd.f32 %v1741, %v1765
        %v1781 = vadd.f32 %v1742, %v1765
        %v1782 = vadd.f32 %v1743, %v1765
        %v1783 = vadd.f32 %v1744, %v1765
        %v1784 = vadd.f32 %v1745, %v1765
        %v1785 = vadd.f32 %v1746, %v1765
        %v1786 = vadd.f32 %v1747, %v1765
        %v1787 = vadd.f32 %v1748, %v1765
        %v1788 = vadd.f32 %v1749, %v1765
        %v1789 = vadd.f32 %v1750, %v1765
        %v1790 = vadd.f32 %v1751, %v1765
        %v1791 = vadd.f32 %v1752, %v1765
        %v1792 = vadd.f32 %v1753, %v1765
        %v1793 = vadd.f32 %v1754, %v1765
        %v1794 = vadd.f32 %v1755, %v1765
        %v1795 = vadd.f32 %v1756, %v1765
        %v1796 = vadd.f32 %v1757, %v1765
        %v1797 = vadd.f32 %v1758, %v1765
        %v1798 = vadd.f32 %v1759, %v1765
        %v1799 = vmax.f32 %v1767, 0.0
        %v1800 = vmax.f32 %v1768, 0.0
        %v1801 = vmax.f32 %v1769, 0.0
        %v1802 = vmax.f32 %v1770, 0.0
        %v1803 = vmax.f32 %v1771, 0.0
        %v1804 = vmax.f32 %v1772, 0.0
        %v1805 = vmax.f32 %v1773, 0.0
        %v1806 = vmax.f32 %v1774, 0.0
        %v1807 = vmax.f32 %v1775, 0.0
        %v1808 = vmax.f32 %v1776, 0.0
        %v1809 = vmax.f32 %v1777, 0.0
        %v1810 = vmax.f32 %v1778, 0.0
        %v1811 = vmax.f32 %v1779, 0.0
        %v1812 = vmax.f32 %v1780, 0.0
        %v1813 = vmax.f32 %v1781, 0.0
        %v1814 = vmax.f32 %v1782, 0.0
        %v1815 = vmax.f32 %v1783, 0.0
        %v1816 = vmax.f32 %v1784, 0.0
        %v1817 = vmax.f32 %v1785, 0.0
        %v1818 = vmax.f32 %v1786, 0.0
        %v1819 = vmax.f32 %v1787, 0.0
        %v1820 = vmax.f32 %v1788, 0.0
        %v1821 = vmax.f32 %v1789, 0.0
        %v1822 = vmax.f32 %v1790, 0.0
        %v1823 = vmax.f32 %v1791, 0.0
        %v1824 = vmax.f32 %v1792, 0.0
        %v1825 = vmax.f32 %v1793, 0.0
        %v1826 = vmax.f32 %v1794, 0.0
        %v1827 = vmax.f32 %v1795, 0.0
        %v1828 = vmax.f32 %v1796, 0.0
        %v1829 = vmax.f32 %v1797, 0.0
        %v1830 = vmax.f32 %v1798, 0.0
        %s1831 = scalar_lea.vmem [#allocation3], 32
        %1832 = vst.msk [vmem:[%s1831 + $0x8] sm:$0xff] %vm1242, %v1799
        %1833 = vst.msk [vmem:[%s1831 + $0x10] sm:$0xff] %vm1242, %v1800
        %1834 = vst.msk [vmem:[%s1831 + $0x28] sm:$0xff] %vm1242, %v1801
        %1835 = vst.msk [vmem:[%s1831 + $0x30] sm:$0xff] %vm1242, %v1802
        %1836 = vst.msk [vmem:[%s1831 + $0x48] sm:$0xff] %vm1242, %v1803
        %1837 = vst.msk [vmem:[%s1831 + $0x50] sm:$0xff] %vm1242, %v1804
        %1838 = vst.msk [vmem:[%s1831 + $0x68] sm:$0xff] %vm1242, %v1805
        %1839 = vst.msk [vmem:[%s1831 + $0x70] sm:$0xff] %vm1242, %v1806
        %1840 = vst.msk [vmem:[%s1831 + $0x88] sm:$0xff] %vm1242, %v1807
        %1841 = vst.msk [vmem:[%s1831 + $0x90] sm:$0xff] %vm1242, %v1808
        %1842 = vst.msk [vmem:[%s1831 + $0xa8] sm:$0xff] %vm1242, %v1809
        %1843 = vst.msk [vmem:[%s1831 + $0xb0] sm:$0xff] %vm1242, %v1810
        %1844 = vst.msk [vmem:[%s1831 + $0xc8] sm:$0xff] %vm1242, %v1811
        %1845 = vst.msk [vmem:[%s1831 + $0xd0] sm:$0xff] %vm1242, %v1812
        %1846 = vst.msk [vmem:[%s1831 + $0xe8] sm:$0xff] %vm1242, %v1813
        %1847 = vst.msk [vmem:[%s1831 + $0xf0] sm:$0xff] %vm1242, %v1814
        %1848 = vst.msk [vmem:[%s1831 + $0x108] sm:$0xff] %vm1242, %v1815
        %1849 = vst.msk [vmem:[%s1831 + $0x110] sm:$0xff] %vm1242, %v1816
        %1850 = vst.msk [vmem:[%s1831 + $0x128] sm:$0xff] %vm1242, %v1817
        %1851 = vst.msk [vmem:[%s1831 + $0x130] sm:$0xff] %vm1242, %v1818
        %1852 = vst.msk [vmem:[%s1831 + $0x148] sm:$0xff] %vm1242, %v1819
        %1853 = vst.msk [vmem:[%s1831 + $0x150] sm:$0xff] %vm1242, %v1820
        %1854 = vst.msk [vmem:[%s1831 + $0x168] sm:$0xff] %vm1242, %v1821
        %1855 = vst.msk [vmem:[%s1831 + $0x170] sm:$0xff] %vm1242, %v1822
        %1856 = vst.msk [vmem:[%s1831 + $0x188] sm:$0xff] %vm1242, %v1823
        %1857 = vst.msk [vmem:[%s1831 + $0x190] sm:$0xff] %vm1242, %v1824
        %1858 = vst.msk [vmem:[%s1831 + $0x1a8] sm:$0xff] %vm1242, %v1825
        %1859 = vst.msk [vmem:[%s1831 + $0x1b0] sm:$0xff] %vm1242, %v1826
        %1860 = vst.msk [vmem:[%s1831 + $0x1c8] sm:$0xff] %vm1242, %v1827
        %1861 = vst.msk [vmem:[%s1831 + $0x1d0] sm:$0xff] %vm1242, %v1828
        %1862 = vst.msk [vmem:[%s1831 + $0x1e8] sm:$0xff] %vm1242, %v1829
        %1863 = vst.msk [vmem:[%s1831 + $0x1f0] sm:$0xff] %vm1242, %v1830
        %v1864 = vld [vmem:[#allocation3 + $0x7] sm:$0xff]
        %v1865 = vld [vmem:[#allocation3 + $0xf] sm:$0xff]
        %v1866 = vld [vmem:[#allocation3 + $0x27] sm:$0xff]
        %v1867 = vld [vmem:[#allocation3 + $0x2f] sm:$0xff]
        %v1868 = vld [vmem:[#allocation3 + $0x47] sm:$0xff]
        %v1869 = vld [vmem:[#allocation3 + $0x4f] sm:$0xff]
        %v1870 = vld [vmem:[#allocation3 + $0x67] sm:$0xff]
        %v1871 = vld [vmem:[#allocation3 + $0x6f] sm:$0xff]
        %v1872 = vld [vmem:[#allocation3 + $0x87] sm:$0xff]
        %v1873 = vld [vmem:[#allocation3 + $0x8f] sm:$0xff]
        %v1874 = vld [vmem:[#allocation3 + $0xa7] sm:$0xff]
        %v1875 = vld [vmem:[#allocation3 + $0xaf] sm:$0xff]
        %v1876 = vld [vmem:[#allocation3 + $0xc7] sm:$0xff]
        %v1877 = vld [vmem:[#allocation3 + $0xcf] sm:$0xff]
        %v1878 = vld [vmem:[#allocation3 + $0xe7] sm:$0xff]
        %v1879 = vld [vmem:[#allocation3 + $0xef] sm:$0xff]
        %v1880 = vld [vmem:[#allocation3 + $0x107] sm:$0xff]
        %v1881 = vld [vmem:[#allocation3 + $0x10f] sm:$0xff]
        %v1882 = vld [vmem:[#allocation3 + $0x127] sm:$0xff]
        %v1883 = vld [vmem:[#allocation3 + $0x12f] sm:$0xff]
        %v1884 = vld [vmem:[#allocation3 + $0x147] sm:$0xff]
        %v1885 = vld [vmem:[#allocation3 + $0x14f] sm:$0xff]
        %v1886 = vld [vmem:[#allocation3 + $0x167] sm:$0xff]
        %v1887 = vld [vmem:[#allocation3 + $0x16f] sm:$0xff]
        %v1888 = vld [vmem:[#allocation3 + $0x187] sm:$0xff]
        %v1889 = vld [vmem:[#allocation3 + $0x18f] sm:$0xff]
        %v1890 = vld [vmem:[#allocation3 + $0x1a7] sm:$0xff]
        %v1891 = vld [vmem:[#allocation3 + $0x1af] sm:$0xff]
        %v1892 = vld [vmem:[#allocation3 + $0x1c7] sm:$0xff]
        %v1893 = vld [vmem:[#allocation3 + $0x1cf] sm:$0xff]
        %v1894 = vld [vmem:[#allocation3 + $0x1e7] sm:$0xff]
        %v1895 = vld [vmem:[#allocation3 + $0x1ef] sm:$0xff]
        %1896 = vst.msk [vmem:[#allocation4] sm:$0xff] %vm1242, %v1864
        %1897 = vst.msk [vmem:[#allocation4 + $0x10] sm:$0xff] %vm1242, %v1865
        %1898 = vst.msk [vmem:[#allocation4 + $0x20] sm:$0xff] %vm1242, %v1866
        %1899 = vst.msk [vmem:[#allocation4 + $0x30] sm:$0xff] %vm1242, %v1867
        %1900 = vst.msk [vmem:[#allocation4 + $0x40] sm:$0xff] %vm1242, %v1868
        %1901 = vst.msk [vmem:[#allocation4 + $0x50] sm:$0xff] %vm1242, %v1869
        %1902 = vst.msk [vmem:[#allocation4 + $0x60] sm:$0xff] %vm1242, %v1870
        %1903 = vst.msk [vmem:[#allocation4 + $0x70] sm:$0xff] %vm1242, %v1871
        %1904 = vst.msk [vmem:[#allocation4 + $0x80] sm:$0xff] %vm1242, %v1872
        %1905 = vst.msk [vmem:[#allocation4 + $0x90] sm:$0xff] %vm1242, %v1873
        %1906 = vst.msk [vmem:[#allocation4 + $0xa0] sm:$0xff] %vm1242, %v1874
        %1907 = vst.msk [vmem:[#allocation4 + $0xb0] sm:$0xff] %vm1242, %v1875
        %1908 = vst.msk [vmem:[#allocation4 + $0xc0] sm:$0xff] %vm1242, %v1876
        %1909 = vst.msk [vmem:[#allocation4 + $0xd0] sm:$0xff] %vm1242, %v1877
        %1910 = vst.msk [vmem:[#allocation4 + $0xe0] sm:$0xff] %vm1242, %v1878
        %1911 = vst.msk [vmem:[#allocation4 + $0xf0] sm:$0xff] %vm1242, %v1879
        %1912 = vst.msk [vmem:[#allocation4 + $0x100] sm:$0xff] %vm1242, %v1880
        %1913 = vst.msk [vmem:[#allocation4 + $0x110] sm:$0xff] %vm1242, %v1881
        %1914 = vst.msk [vmem:[#allocation4 + $0x120] sm:$0xff] %vm1242, %v1882
        %1915 = vst.msk [vmem:[#allocation4 + $0x130] sm:$0xff] %vm1242, %v1883
        %1916 = vst.msk [vmem:[#allocation4 + $0x140] sm:$0xff] %vm1242, %v1884
        %1917 = vst.msk [vmem:[#allocation4 + $0x150] sm:$0xff] %vm1242, %v1885
        %1918 = vst.msk [vmem:[#allocation4 + $0x160] sm:$0xff] %vm1242, %v1886
        %1919 = vst.msk [vmem:[#allocation4 + $0x170] sm:$0xff] %vm1242, %v1887
        %1920 = vst.msk [vmem:[#allocation4 + $0x180] sm:$0xff] %vm1242, %v1888
        %1921 = vst.msk [vmem:[#allocation4 + $0x190] sm:$0xff] %vm1242, %v1889
        %1922 = vst.msk [vmem:[#allocation4 + $0x1a0] sm:$0xff] %vm1242, %v1890
        %1923 = vst.msk [vmem:[#allocation4 + $0x1b0] sm:$0xff] %vm1242, %v1891
        %1924 = vst.msk [vmem:[#allocation4 + $0x1c0] sm:$0xff] %vm1242, %v1892
        %1925 = vst.msk [vmem:[#allocation4 + $0x1d0] sm:$0xff] %vm1242, %v1893
        %1926 = vst.msk [vmem:[#allocation4 + $0x1e0] sm:$0xff] %vm1242, %v1894
        %1927 = vst.msk [vmem:[#allocation4 + $0x1f0] sm:$0xff] %vm1242, %v1895
        %v1928 = vld [vmem:[#allocation3 + $0x8] sm:$0xff]
        %v1929 = vld [vmem:[#allocation3 + $0x10] sm:$0xff]
        %v1930 = vld [vmem:[#allocation3 + $0x28] sm:$0xff]
        %v1931 = vld [vmem:[#allocation3 + $0x30] sm:$0xff]
        %v1932 = vld [vmem:[#allocation3 + $0x48] sm:$0xff]
        %v1933 = vld [vmem:[#allocation3 + $0x50] sm:$0xff]
        %v1934 = vld [vmem:[#allocation3 + $0x68] sm:$0xff]
        %v1935 = vld [vmem:[#allocation3 + $0x70] sm:$0xff]
        %v1936 = vld [vmem:[#allocation3 + $0x88] sm:$0xff]
        %v1937 = vld [vmem:[#allocation3 + $0x90] sm:$0xff]
        %v1938 = vld [vmem:[#allocation3 + $0xa8] sm:$0xff]
        %v1939 = vld [vmem:[#allocation3 + $0xb0] sm:$0xff]
        %v1940 = vld [vmem:[#allocation3 + $0xc8] sm:$0xff]
        %v1941 = vld [vmem:[#allocation3 + $0xd0] sm:$0xff]
        %v1942 = vld [vmem:[#allocation3 + $0xe8] sm:$0xff]
        %v1943 = vld [vmem:[#allocation3 + $0xf0] sm:$0xff]
        %v1944 = vld [vmem:[#allocation3 + $0x108] sm:$0xff]
        %v1945 = vld [vmem:[#allocation3 + $0x110] sm:$0xff]
        %v1946 = vld [vmem:[#allocation3 + $0x128] sm:$0xff]
        %v1947 = vld [vmem:[#allocation3 + $0x130] sm:$0xff]
        %v1948 = vld [vmem:[#allocation3 + $0x148] sm:$0xff]
        %v1949 = vld [vmem:[#allocation3 + $0x150] sm:$0xff]
        %v1950 = vld [vmem:[#allocation3 + $0x168] sm:$0xff]
        %v1951 = vld [vmem:[#allocation3 + $0x170] sm:$0xff]
        %v1952 = vld [vmem:[#allocation3 + $0x188] sm:$0xff]
        %v1953 = vld [vmem:[#allocation3 + $0x190] sm:$0xff]
        %v1954 = vld [vmem:[#allocation3 + $0x1a8] sm:$0xff]
        %v1955 = vld [vmem:[#allocation3 + $0x1b0] sm:$0xff]
        %v1956 = vld [vmem:[#allocation3 + $0x1c8] sm:$0xff]
        %v1957 = vld [vmem:[#allocation3 + $0x1d0] sm:$0xff]
        %v1958 = vld [vmem:[#allocation3 + $0x1e8] sm:$0xff]
        %v1959 = vld [vmem:[#allocation3 + $0x1f0] sm:$0xff]
        %1992 = vrot.lane.b32.xlu0 %v1928, 16
        %v1993 = vpop.permute.xlu0 %1992
        %1994 = vrot.lane.b32.xlu0 %v1929, 16
        %v1995 = vpop.permute.xlu0 %1994
        %1996 = vrot.lane.b32.xlu0 %v1930, 16
        %v1997 = vpop.permute.xlu0 %1996
        %1998 = vrot.lane.b32.xlu0 %v1931, 16
        %v1999 = vpop.permute.xlu0 %1998
        %2000 = vrot.lane.b32.xlu0 %v1932, 16
        %v2001 = vpop.permute.xlu0 %2000
        %2002 = vrot.lane.b32.xlu0 %v1933, 16
        %v2003 = vpop.permute.xlu0 %2002
        %2004 = vrot.lane.b32.xlu0 %v1934, 16
        %v2005 = vpop.permute.xlu0 %2004
        %2006 = vrot.lane.b32.xlu0 %v1935, 16
        %v2007 = vpop.permute.xlu0 %2006
        %2008 = vrot.lane.b32.xlu0 %v1936, 16
        %v2009 = vpop.permute.xlu0 %2008
        %2010 = vrot.lane.b32.xlu0 %v1937, 16
        %v2011 = vpop.permute.xlu0 %2010
        %2012 = vrot.lane.b32.xlu0 %v1938, 16
        %v2013 = vpop.permute.xlu0 %2012
        %2014 = vrot.lane.b32.xlu0 %v1939, 16
        %v2015 = vpop.permute.xlu0 %2014
        %2016 = vrot.lane.b32.xlu0 %v1940, 16
        %v2017 = vpop.permute.xlu0 %2016
        %2018 = vrot.lane.b32.xlu0 %v1941, 16
        %v2019 = vpop.permute.xlu0 %2018
        %2020 = vrot.lane.b32.xlu0 %v1942, 16
        %v2021 = vpop.permute.xlu0 %2020
        %2022 = vrot.lane.b32.xlu0 %v1943, 16
        %v2023 = vpop.permute.xlu0 %2022
        %2024 = vrot.lane.b32.xlu0 %v1944, 16
        %v2025 = vpop.permute.xlu0 %2024
        %2026 = vrot.lane.b32.xlu0 %v1945, 16
        %v2027 = vpop.permute.xlu0 %2026
        %2028 = vrot.lane.b32.xlu0 %v1946, 16
        %v2029 = vpop.permute.xlu0 %2028
        %2030 = vrot.lane.b32.xlu0 %v1947, 16
        %v2031 = vpop.permute.xlu0 %2030
        %2032 = vrot.lane.b32.xlu0 %v1948, 16
        %v2033 = vpop.permute.xlu0 %2032
        %2034 = vrot.lane.b32.xlu0 %v1949, 16
        %v2035 = vpop.permute.xlu0 %2034
        %2036 = vrot.lane.b32.xlu0 %v1950, 16
        %v2037 = vpop.permute.xlu0 %2036
        %2038 = vrot.lane.b32.xlu0 %v1951, 16
        %v2039 = vpop.permute.xlu0 %2038
        %2040 = vrot.lane.b32.xlu0 %v1952, 16
        %v2041 = vpop.permute.xlu0 %2040
        %2042 = vrot.lane.b32.xlu0 %v1953, 16
        %v2043 = vpop.permute.xlu0 %2042
        %2044 = vrot.lane.b32.xlu0 %v1954, 16
        %v2045 = vpop.permute.xlu0 %2044
        %2046 = vrot.lane.b32.xlu0 %v1955, 16
        %v2047 = vpop.permute.xlu0 %2046
        %2048 = vrot.lane.b32.xlu0 %v1956, 16
        %v2049 = vpop.permute.xlu0 %2048
        %2050 = vrot.lane.b32.xlu0 %v1957, 16
        %v2051 = vpop.permute.xlu0 %2050
        %2052 = vrot.lane.b32.xlu0 %v1958, 16
        %v2053 = vpop.permute.xlu0 %2052
        %2054 = vrot.lane.b32.xlu0 %v1959, 16
        %v2055 = vpop.permute.xlu0 %2054
        %vm2088 = vcmask 261248
        %2089 = vst.msk [vmem:[#allocation4] sm:$0xff] %vm2088, %v1993
        %2090 = vst.msk [vmem:[#allocation4 + $0x10] sm:$0xff] %vm2088, %v1995
        %2091 = vst.msk [vmem:[#allocation4 + $0x20] sm:$0xff] %vm2088, %v1997
        %2092 = vst.msk [vmem:[#allocation4 + $0x30] sm:$0xff] %vm2088, %v1999
        %2093 = vst.msk [vmem:[#allocation4 + $0x40] sm:$0xff] %vm2088, %v2001
        %2094 = vst.msk [vmem:[#allocation4 + $0x50] sm:$0xff] %vm2088, %v2003
        %2095 = vst.msk [vmem:[#allocation4 + $0x60] sm:$0xff] %vm2088, %v2005
        %2096 = vst.msk [vmem:[#allocation4 + $0x70] sm:$0xff] %vm2088, %v2007
        %2097 = vst.msk [vmem:[#allocation4 + $0x80] sm:$0xff] %vm2088, %v2009
        %2098 = vst.msk [vmem:[#allocation4 + $0x90] sm:$0xff] %vm2088, %v2011
        %2099 = vst.msk [vmem:[#allocation4 + $0xa0] sm:$0xff] %vm2088, %v2013
        %2100 = vst.msk [vmem:[#allocation4 + $0xb0] sm:$0xff] %vm2088, %v2015
        %2101 = vst.msk [vmem:[#allocation4 + $0xc0] sm:$0xff] %vm2088, %v2017
        %2102 = vst.msk [vmem:[#allocation4 + $0xd0] sm:$0xff] %vm2088, %v2019
        %2103 = vst.msk [vmem:[#allocation4 + $0xe0] sm:$0xff] %vm2088, %v2021
        %2104 = vst.msk [vmem:[#allocation4 + $0xf0] sm:$0xff] %vm2088, %v2023
        %2105 = vst.msk [vmem:[#allocation4 + $0x100] sm:$0xff] %vm2088, %v2025
        %2106 = vst.msk [vmem:[#allocation4 + $0x110] sm:$0xff] %vm2088, %v2027
        %2107 = vst.msk [vmem:[#allocation4 + $0x120] sm:$0xff] %vm2088, %v2029
        %2108 = vst.msk [vmem:[#allocation4 + $0x130] sm:$0xff] %vm2088, %v2031
        %2109 = vst.msk [vmem:[#allocation4 + $0x140] sm:$0xff] %vm2088, %v2033
        %2110 = vst.msk [vmem:[#allocation4 + $0x150] sm:$0xff] %vm2088, %v2035
        %2111 = vst.msk [vmem:[#allocation4 + $0x160] sm:$0xff] %vm2088, %v2037
        %2112 = vst.msk [vmem:[#allocation4 + $0x170] sm:$0xff] %vm2088, %v2039
        %2113 = vst.msk [vmem:[#allocation4 + $0x180] sm:$0xff] %vm2088, %v2041
        %2114 = vst.msk [vmem:[#allocation4 + $0x190] sm:$0xff] %vm2088, %v2043
        %2115 = vst.msk [vmem:[#allocation4 + $0x1a0] sm:$0xff] %vm2088, %v2045
        %2116 = vst.msk [vmem:[#allocation4 + $0x1b0] sm:$0xff] %vm2088, %v2047
        %2117 = vst.msk [vmem:[#allocation4 + $0x1c0] sm:$0xff] %vm2088, %v2049
        %2118 = vst.msk [vmem:[#allocation4 + $0x1d0] sm:$0xff] %vm2088, %v2051
        %2119 = vst.msk [vmem:[#allocation4 + $0x1e0] sm:$0xff] %vm2088, %v2053
        %2120 = vst.msk [vmem:[#allocation4 + $0x1f0] sm:$0xff] %vm2088, %v2055
        %v2121 = vld [vmem:[#allocation3 + $0x9] sm:$0xff]
        %v2122 = vld [vmem:[#allocation3 + $0x11] sm:$0xff]
        %v2123 = vld [vmem:[#allocation3 + $0x29] sm:$0xff]
        %v2124 = vld [vmem:[#allocation3 + $0x31] sm:$0xff]
        %v2125 = vld [vmem:[#allocation3 + $0x49] sm:$0xff]
        %v2126 = vld [vmem:[#allocation3 + $0x51] sm:$0xff]
        %v2127 = vld [vmem:[#allocation3 + $0x69] sm:$0xff]
        %v2128 = vld [vmem:[#allocation3 + $0x71] sm:$0xff]
        %v2129 = vld [vmem:[#allocation3 + $0x89] sm:$0xff]
        %v2130 = vld [vmem:[#allocation3 + $0x91] sm:$0xff]
        %v2131 = vld [vmem:[#allocation3 + $0xa9] sm:$0xff]
        %v2132 = vld [vmem:[#allocation3 + $0xb1] sm:$0xff]
        %v2133 = vld [vmem:[#allocation3 + $0xc9] sm:$0xff]
        %v2134 = vld [vmem:[#allocation3 + $0xd1] sm:$0xff]
        %v2135 = vld [vmem:[#allocation3 + $0xe9] sm:$0xff]
        %v2136 = vld [vmem:[#allocation3 + $0xf1] sm:$0xff]
        %v2137 = vld [vmem:[#allocation3 + $0x109] sm:$0xff]
        %v2138 = vld [vmem:[#allocation3 + $0x111] sm:$0xff]
        %v2139 = vld [vmem:[#allocation3 + $0x129] sm:$0xff]
        %v2140 = vld [vmem:[#allocation3 + $0x131] sm:$0xff]
        %v2141 = vld [vmem:[#allocation3 + $0x149] sm:$0xff]
        %v2142 = vld [vmem:[#allocation3 + $0x151] sm:$0xff]
        %v2143 = vld [vmem:[#allocation3 + $0x169] sm:$0xff]
        %v2144 = vld [vmem:[#allocation3 + $0x171] sm:$0xff]
        %v2145 = vld [vmem:[#allocation3 + $0x189] sm:$0xff]
        %v2146 = vld [vmem:[#allocation3 + $0x191] sm:$0xff]
        %v2147 = vld [vmem:[#allocation3 + $0x1a9] sm:$0xff]
        %v2148 = vld [vmem:[#allocation3 + $0x1b1] sm:$0xff]
        %v2149 = vld [vmem:[#allocation3 + $0x1c9] sm:$0xff]
        %v2150 = vld [vmem:[#allocation3 + $0x1d1] sm:$0xff]
        %v2151 = vld [vmem:[#allocation3 + $0x1e9] sm:$0xff]
        %v2152 = vld [vmem:[#allocation3 + $0x1f1] sm:$0xff]
        %2185 = vrot.lane.b32.xlu0 %v2121, 32
        %v2186 = vpop.permute.xlu0 %2185
        %2187 = vrot.lane.b32.xlu0 %v2122, 32
        %v2188 = vpop.permute.xlu0 %2187
        %2189 = vrot.lane.b32.xlu0 %v2123, 32
        %v2190 = vpop.permute.xlu0 %2189
        %2191 = vrot.lane.b32.xlu0 %v2124, 32
        %v2192 = vpop.permute.xlu0 %2191
        %2193 = vrot.lane.b32.xlu0 %v2125, 32
        %v2194 = vpop.permute.xlu0 %2193
        %2195 = vrot.lane.b32.xlu0 %v2126, 32
        %v2196 = vpop.permute.xlu0 %2195
        %2197 = vrot.lane.b32.xlu0 %v2127, 32
        %v2198 = vpop.permute.xlu0 %2197
        %2199 = vrot.lane.b32.xlu0 %v2128, 32
        %v2200 = vpop.permute.xlu0 %2199
        %2201 = vrot.lane.b32.xlu0 %v2129, 32
        %v2202 = vpop.permute.xlu0 %2201
        %2203 = vrot.lane.b32.xlu0 %v2130, 32
        %v2204 = vpop.permute.xlu0 %2203
        %2205 = vrot.lane.b32.xlu0 %v2131, 32
        %v2206 = vpop.permute.xlu0 %2205
        %2207 = vrot.lane.b32.xlu0 %v2132, 32
        %v2208 = vpop.permute.xlu0 %2207
        %2209 = vrot.lane.b32.xlu0 %v2133, 32
        %v2210 = vpop.permute.xlu0 %2209
        %2211 = vrot.lane.b32.xlu0 %v2134, 32
        %v2212 = vpop.permute.xlu0 %2211
        %2213 = vrot.lane.b32.xlu0 %v2135, 32
        %v2214 = vpop.permute.xlu0 %2213
        %2215 = vrot.lane.b32.xlu0 %v2136, 32
        %v2216 = vpop.permute.xlu0 %2215
        %2217 = vrot.lane.b32.xlu0 %v2137, 32
        %v2218 = vpop.permute.xlu0 %2217
        %2219 = vrot.lane.b32.xlu0 %v2138, 32
        %v2220 = vpop.permute.xlu0 %2219
        %2221 = vrot.lane.b32.xlu0 %v2139, 32
        %v2222 = vpop.permute.xlu0 %2221
        %2223 = vrot.lane.b32.xlu0 %v2140, 32
        %v2224 = vpop.permute.xlu0 %2223
        %2225 = vrot.lane.b32.xlu0 %v2141, 32
        %v2226 = vpop.permute.xlu0 %2225
        %2227 = vrot.lane.b32.xlu0 %v2142, 32
        %v2228 = vpop.permute.xlu0 %2227
        %2229 = vrot.lane.b32.xlu0 %v2143, 32
        %v2230 = vpop.permute.xlu0 %2229
        %2231 = vrot.lane.b32.xlu0 %v2144, 32
        %v2232 = vpop.permute.xlu0 %2231
        %2233 = vrot.lane.b32.xlu0 %v2145, 32
        %v2234 = vpop.permute.xlu0 %2233
        %2235 = vrot.lane.b32.xlu0 %v2146, 32
        %v2236 = vpop.permute.xlu0 %2235
        %2237 = vrot.lane.b32.xlu0 %v2147, 32
        %v2238 = vpop.permute.xlu0 %2237
        %2239 = vrot.lane.b32.xlu0 %v2148, 32
        %v2240 = vpop.permute.xlu0 %2239
        %2241 = vrot.lane.b32.xlu0 %v2149, 32
        %v2242 = vpop.permute.xlu0 %2241
        %2243 = vrot.lane.b32.xlu0 %v2150, 32
        %v2244 = vpop.permute.xlu0 %2243
        %2245 = vrot.lane.b32.xlu0 %v2151, 32
        %v2246 = vpop.permute.xlu0 %2245
        %2247 = vrot.lane.b32.xlu0 %v2152, 32
        %v2248 = vpop.permute.xlu0 %2247
        %vm2281 = vcmask 392448
        %2282 = vst.msk [vmem:[#allocation4] sm:$0xff] %vm2281, %v2186
        %2283 = vst.msk [vmem:[#allocation4 + $0x10] sm:$0xff] %vm2281, %v2188
        %2284 = vst.msk [vmem:[#allocation4 + $0x20] sm:$0xff] %vm2281, %v2190
        %2285 = vst.msk [vmem:[#allocation4 + $0x30] sm:$0xff] %vm2281, %v2192
        %2286 = vst.msk [vmem:[#allocation4 + $0x40] sm:$0xff] %vm2281, %v2194
        %2287 = vst.msk [vmem:[#allocation4 + $0x50] sm:$0xff] %vm2281, %v2196
        %2288 = vst.msk [vmem:[#allocation4 + $0x60] sm:$0xff] %vm2281, %v2198
        %2289 = vst.msk [vmem:[#allocation4 + $0x70] sm:$0xff] %vm2281, %v2200
        %2290 = vst.msk [vmem:[#allocation4 + $0x80] sm:$0xff] %vm2281, %v2202
        %2291 = vst.msk [vmem:[#allocation4 + $0x90] sm:$0xff] %vm2281, %v2204
        %2292 = vst.msk [vmem:[#allocation4 + $0xa0] sm:$0xff] %vm2281, %v2206
        %2293 = vst.msk [vmem:[#allocation4 + $0xb0] sm:$0xff] %vm2281, %v2208
        %2294 = vst.msk [vmem:[#allocation4 + $0xc0] sm:$0xff] %vm2281, %v2210
        %2295 = vst.msk [vmem:[#allocation4 + $0xd0] sm:$0xff] %vm2281, %v2212
        %2296 = vst.msk [vmem:[#allocation4 + $0xe0] sm:$0xff] %vm2281, %v2214
        %2297 = vst.msk [vmem:[#allocation4 + $0xf0] sm:$0xff] %vm2281, %v2216
        %2298 = vst.msk [vmem:[#allocation4 + $0x100] sm:$0xff] %vm2281, %v2218
        %2299 = vst.msk [vmem:[#allocation4 + $0x110] sm:$0xff] %vm2281, %v2220
        %2300 = vst.msk [vmem:[#allocation4 + $0x120] sm:$0xff] %vm2281, %v2222
        %2301 = vst.msk [vmem:[#allocation4 + $0x130] sm:$0xff] %vm2281, %v2224
        %2302 = vst.msk [vmem:[#allocation4 + $0x140] sm:$0xff] %vm2281, %v2226
        %2303 = vst.msk [vmem:[#allocation4 + $0x150] sm:$0xff] %vm2281, %v2228
        %2304 = vst.msk [vmem:[#allocation4 + $0x160] sm:$0xff] %vm2281, %v2230
        %2305 = vst.msk [vmem:[#allocation4 + $0x170] sm:$0xff] %vm2281, %v2232
        %2306 = vst.msk [vmem:[#allocation4 + $0x180] sm:$0xff] %vm2281, %v2234
        %2307 = vst.msk [vmem:[#allocation4 + $0x190] sm:$0xff] %vm2281, %v2236
        %2308 = vst.msk [vmem:[#allocation4 + $0x1a0] sm:$0xff] %vm2281, %v2238
        %2309 = vst.msk [vmem:[#allocation4 + $0x1b0] sm:$0xff] %vm2281, %v2240
        %2310 = vst.msk [vmem:[#allocation4 + $0x1c0] sm:$0xff] %vm2281, %v2242
        %2311 = vst.msk [vmem:[#allocation4 + $0x1d0] sm:$0xff] %vm2281, %v2244
        %2312 = vst.msk [vmem:[#allocation4 + $0x1e0] sm:$0xff] %vm2281, %v2246
        %2313 = vst.msk [vmem:[#allocation4 + $0x1f0] sm:$0xff] %vm2281, %v2248
        %v2314 = vld [vmem:[%s1831 + $0x7] sm:$0xff]
        %v2315 = vld [vmem:[%s1831 + $0xf] sm:$0xff]
        %v2316 = vld [vmem:[%s1831 + $0x27] sm:$0xff]
        %v2317 = vld [vmem:[%s1831 + $0x2f] sm:$0xff]
        %v2318 = vld [vmem:[%s1831 + $0x47] sm:$0xff]
        %v2319 = vld [vmem:[%s1831 + $0x4f] sm:$0xff]
        %v2320 = vld [vmem:[%s1831 + $0x67] sm:$0xff]
        %v2321 = vld [vmem:[%s1831 + $0x6f] sm:$0xff]
        %v2322 = vld [vmem:[%s1831 + $0x87] sm:$0xff]
        %v2323 = vld [vmem:[%s1831 + $0x8f] sm:$0xff]
        %v2324 = vld [vmem:[%s1831 + $0xa7] sm:$0xff]
        %v2325 = vld [vmem:[%s1831 + $0xaf] sm:$0xff]
        %v2326 = vld [vmem:[%s1831 + $0xc7] sm:$0xff]
        %v2327 = vld [vmem:[%s1831 + $0xcf] sm:$0xff]
        %v2328 = vld [vmem:[%s1831 + $0xe7] sm:$0xff]
        %v2329 = vld [vmem:[%s1831 + $0xef] sm:$0xff]
        %v2330 = vld [vmem:[%s1831 + $0x107] sm:$0xff]
        %v2331 = vld [vmem:[%s1831 + $0x10f] sm:$0xff]
        %v2332 = vld [vmem:[%s1831 + $0x127] sm:$0xff]
        %v2333 = vld [vmem:[%s1831 + $0x12f] sm:$0xff]
        %v2334 = vld [vmem:[%s1831 + $0x147] sm:$0xff]
        %v2335 = vld [vmem:[%s1831 + $0x14f] sm:$0xff]
        %v2336 = vld [vmem:[%s1831 + $0x167] sm:$0xff]
        %v2337 = vld [vmem:[%s1831 + $0x16f] sm:$0xff]
        %v2338 = vld [vmem:[%s1831 + $0x187] sm:$0xff]
        %v2339 = vld [vmem:[%s1831 + $0x18f] sm:$0xff]
        %v2340 = vld [vmem:[%s1831 + $0x1a7] sm:$0xff]
        %v2341 = vld [vmem:[%s1831 + $0x1af] sm:$0xff]
        %v2342 = vld [vmem:[%s1831 + $0x1c7] sm:$0xff]
        %v2343 = vld [vmem:[%s1831 + $0x1cf] sm:$0xff]
        %v2344 = vld [vmem:[%s1831 + $0x1e7] sm:$0xff]
        %v2345 = vld [vmem:[%s1831 + $0x1ef] sm:$0xff]
        %2378 = vrot.lane.b32.xlu0 %v2314, 48
        %v2379 = vpop.permute.xlu0 %2378
        %2380 = vrot.lane.b32.xlu0 %v2315, 48
        %v2381 = vpop.permute.xlu0 %2380
        %2382 = vrot.lane.b32.xlu0 %v2316, 48
        %v2383 = vpop.permute.xlu0 %2382
        %2384 = vrot.lane.b32.xlu0 %v2317, 48
        %v2385 = vpop.permute.xlu0 %2384
        %2386 = vrot.lane.b32.xlu0 %v2318, 48
        %v2387 = vpop.permute.xlu0 %2386
        %2388 = vrot.lane.b32.xlu0 %v2319, 48
        %v2389 = vpop.permute.xlu0 %2388
        %2390 = vrot.lane.b32.xlu0 %v2320, 48
        %v2391 = vpop.permute.xlu0 %2390
        %2392 = vrot.lane.b32.xlu0 %v2321, 48
        %v2393 = vpop.permute.xlu0 %2392
        %2394 = vrot.lane.b32.xlu0 %v2322, 48
        %v2395 = vpop.permute.xlu0 %2394
        %2396 = vrot.lane.b32.xlu0 %v2323, 48
        %v2397 = vpop.permute.xlu0 %2396
        %2398 = vrot.lane.b32.xlu0 %v2324, 48
        %v2399 = vpop.permute.xlu0 %2398
        %2400 = vrot.lane.b32.xlu0 %v2325, 48
        %v2401 = vpop.permute.xlu0 %2400
        %2402 = vrot.lane.b32.xlu0 %v2326, 48
        %v2403 = vpop.permute.xlu0 %2402
        %2404 = vrot.lane.b32.xlu0 %v2327, 48
        %v2405 = vpop.permute.xlu0 %2404
        %2406 = vrot.lane.b32.xlu0 %v2328, 48
        %v2407 = vpop.permute.xlu0 %2406
        %2408 = vrot.lane.b32.xlu0 %v2329, 48
        %v2409 = vpop.permute.xlu0 %2408
        %2410 = vrot.lane.b32.xlu0 %v2330, 48
        %v2411 = vpop.permute.xlu0 %2410
        %2412 = vrot.lane.b32.xlu0 %v2331, 48
        %v2413 = vpop.permute.xlu0 %2412
        %2414 = vrot.lane.b32.xlu0 %v2332, 48
        %v2415 = vpop.permute.xlu0 %2414
        %2416 = vrot.lane.b32.xlu0 %v2333, 48
        %v2417 = vpop.permute.xlu0 %2416
        %2418 = vrot.lane.b32.xlu0 %v2334, 48
        %v2419 = vpop.permute.xlu0 %2418
        %2420 = vrot.lane.b32.xlu0 %v2335, 48
        %v2421 = vpop.permute.xlu0 %2420
        %2422 = vrot.lane.b32.xlu0 %v2336, 48
        %v2423 = vpop.permute.xlu0 %2422
        %2424 = vrot.lane.b32.xlu0 %v2337, 48
        %v2425 = vpop.permute.xlu0 %2424
        %2426 = vrot.lane.b32.xlu0 %v2338, 48
        %v2427 = vpop.permute.xlu0 %2426
        %2428 = vrot.lane.b32.xlu0 %v2339, 48
        %v2429 = vpop.permute.xlu0 %2428
        %2430 = vrot.lane.b32.xlu0 %v2340, 48
        %v2431 = vpop.permute.xlu0 %2430
        %2432 = vrot.lane.b32.xlu0 %v2341, 48
        %v2433 = vpop.permute.xlu0 %2432
        %2434 = vrot.lane.b32.xlu0 %v2342, 48
        %v2435 = vpop.permute.xlu0 %2434
        %2436 = vrot.lane.b32.xlu0 %v2343, 48
        %v2437 = vpop.permute.xlu0 %2436
        %2438 = vrot.lane.b32.xlu0 %v2344, 48
        %v2439 = vpop.permute.xlu0 %2438
        %2440 = vrot.lane.b32.xlu0 %v2345, 48
        %v2441 = vpop.permute.xlu0 %2440
        %vm2474 = vcmask 523648
        %2475 = vst.msk [vmem:[#allocation4] sm:$0xff] %vm2474, %v2379
        %2476 = vst.msk [vmem:[#allocation4 + $0x10] sm:$0xff] %vm2474, %v2381
        %2477 = vst.msk [vmem:[#allocation4 + $0x20] sm:$0xff] %vm2474, %v2383
        %2478 = vst.msk [vmem:[#allocation4 + $0x30] sm:$0xff] %vm2474, %v2385
        %2479 = vst.msk [vmem:[#allocation4 + $0x40] sm:$0xff] %vm2474, %v2387
        %2480 = vst.msk [vmem:[#allocation4 + $0x50] sm:$0xff] %vm2474, %v2389
        %2481 = vst.msk [vmem:[#allocation4 + $0x60] sm:$0xff] %vm2474, %v2391
        %2482 = vst.msk [vmem:[#allocation4 + $0x70] sm:$0xff] %vm2474, %v2393
        %2483 = vst.msk [vmem:[#allocation4 + $0x80] sm:$0xff] %vm2474, %v2395
        %2484 = vst.msk [vmem:[#allocation4 + $0x90] sm:$0xff] %vm2474, %v2397
        %2485 = vst.msk [vmem:[#allocation4 + $0xa0] sm:$0xff] %vm2474, %v2399
        %2486 = vst.msk [vmem:[#allocation4 + $0xb0] sm:$0xff] %vm2474, %v2401
        %2487 = vst.msk [vmem:[#allocation4 + $0xc0] sm:$0xff] %vm2474, %v2403
        %2488 = vst.msk [vmem:[#allocation4 + $0xd0] sm:$0xff] %vm2474, %v2405
        %2489 = vst.msk [vmem:[#allocation4 + $0xe0] sm:$0xff] %vm2474, %v2407
        %2490 = vst.msk [vmem:[#allocation4 + $0xf0] sm:$0xff] %vm2474, %v2409
        %2491 = vst.msk [vmem:[#allocation4 + $0x100] sm:$0xff] %vm2474, %v2411
        %2492 = vst.msk [vmem:[#allocation4 + $0x110] sm:$0xff] %vm2474, %v2413
        %2493 = vst.msk [vmem:[#allocation4 + $0x120] sm:$0xff] %vm2474, %v2415
        %2494 = vst.msk [vmem:[#allocation4 + $0x130] sm:$0xff] %vm2474, %v2417
        %2495 = vst.msk [vmem:[#allocation4 + $0x140] sm:$0xff] %vm2474, %v2419
        %2496 = vst.msk [vmem:[#allocation4 + $0x150] sm:$0xff] %vm2474, %v2421
        %2497 = vst.msk [vmem:[#allocation4 + $0x160] sm:$0xff] %vm2474, %v2423
        %2498 = vst.msk [vmem:[#allocation4 + $0x170] sm:$0xff] %vm2474, %v2425
        %2499 = vst.msk [vmem:[#allocation4 + $0x180] sm:$0xff] %vm2474, %v2427
        %2500 = vst.msk [vmem:[#allocation4 + $0x190] sm:$0xff] %vm2474, %v2429
        %2501 = vst.msk [vmem:[#allocation4 + $0x1a0] sm:$0xff] %vm2474, %v2431
        %2502 = vst.msk [vmem:[#allocation4 + $0x1b0] sm:$0xff] %vm2474, %v2433
        %2503 = vst.msk [vmem:[#allocation4 + $0x1c0] sm:$0xff] %vm2474, %v2435
        %2504 = vst.msk [vmem:[#allocation4 + $0x1d0] sm:$0xff] %vm2474, %v2437
        %2505 = vst.msk [vmem:[#allocation4 + $0x1e0] sm:$0xff] %vm2474, %v2439
        %2506 = vst.msk [vmem:[#allocation4 + $0x1f0] sm:$0xff] %vm2474, %v2441
        %v2507 = vld [vmem:[%s1831 + $0x8] sm:$0xff]
        %v2508 = vld [vmem:[%s1831 + $0x10] sm:$0xff]
        %v2509 = vld [vmem:[%s1831 + $0x28] sm:$0xff]
        %v2510 = vld [vmem:[%s1831 + $0x30] sm:$0xff]
        %v2511 = vld [vmem:[%s1831 + $0x48] sm:$0xff]
        %v2512 = vld [vmem:[%s1831 + $0x50] sm:$0xff]
        %v2513 = vld [vmem:[%s1831 + $0x68] sm:$0xff]
        %v2514 = vld [vmem:[%s1831 + $0x70] sm:$0xff]
        %v2515 = vld [vmem:[%s1831 + $0x88] sm:$0xff]
        %v2516 = vld [vmem:[%s1831 + $0x90] sm:$0xff]
        %v2517 = vld [vmem:[%s1831 + $0xa8] sm:$0xff]
        %v2518 = vld [vmem:[%s1831 + $0xb0] sm:$0xff]
        %v2519 = vld [vmem:[%s1831 + $0xc8] sm:$0xff]
        %v2520 = vld [vmem:[%s1831 + $0xd0] sm:$0xff]
        %v2521 = vld [vmem:[%s1831 + $0xe8] sm:$0xff]
        %v2522 = vld [vmem:[%s1831 + $0xf0] sm:$0xff]
        %v2523 = vld [vmem:[%s1831 + $0x108] sm:$0xff]
        %v2524 = vld [vmem:[%s1831 + $0x110] sm:$0xff]
        %v2525 = vld [vmem:[%s1831 + $0x128] sm:$0xff]
        %v2526 = vld [vmem:[%s1831 + $0x130] sm:$0xff]
        %v2527 = vld [vmem:[%s1831 + $0x148] sm:$0xff]
        %v2528 = vld [vmem:[%s1831 + $0x150] sm:$0xff]
        %v2529 = vld [vmem:[%s1831 + $0x168] sm:$0xff]
        %v2530 = vld [vmem:[%s1831 + $0x170] sm:$0xff]
        %v2531 = vld [vmem:[%s1831 + $0x188] sm:$0xff]
        %v2532 = vld [vmem:[%s1831 + $0x190] sm:$0xff]
        %v2533 = vld [vmem:[%s1831 + $0x1a8] sm:$0xff]
        %v2534 = vld [vmem:[%s1831 + $0x1b0] sm:$0xff]
        %v2535 = vld [vmem:[%s1831 + $0x1c8] sm:$0xff]
        %v2536 = vld [vmem:[%s1831 + $0x1d0] sm:$0xff]
        %v2537 = vld [vmem:[%s1831 + $0x1e8] sm:$0xff]
        %v2538 = vld [vmem:[%s1831 + $0x1f0] sm:$0xff]
        %2571 = vrot.lane.b32.xlu0 %v2507, 64
        %v2572 = vpop.permute.xlu0 %2571
        %2573 = vrot.lane.b32.xlu0 %v2508, 64
        %v2574 = vpop.permute.xlu0 %2573
        %2575 = vrot.lane.b32.xlu0 %v2509, 64
        %v2576 = vpop.permute.xlu0 %2575
        %2577 = vrot.lane.b32.xlu0 %v2510, 64
        %v2578 = vpop.permute.xlu0 %2577
        %2579 = vrot.lane.b32.xlu0 %v2511, 64
        %v2580 = vpop.permute.xlu0 %2579
        %2581 = vrot.lane.b32.xlu0 %v2512, 64
        %v2582 = vpop.permute.xlu0 %2581
        %2583 = vrot.lane.b32.xlu0 %v2513, 64
        %v2584 = vpop.permute.xlu0 %2583
        %2585 = vrot.lane.b32.xlu0 %v2514, 64
        %v2586 = vpop.permute.xlu0 %2585
        %2587 = vrot.lane.b32.xlu0 %v2515, 64
        %v2588 = vpop.permute.xlu0 %2587
        %2589 = vrot.lane.b32.xlu0 %v2516, 64
        %v2590 = vpop.permute.xlu0 %2589
        %2591 = vrot.lane.b32.xlu0 %v2517, 64
        %v2592 = vpop.permute.xlu0 %2591
        %2593 = vrot.lane.b32.xlu0 %v2518, 64
        %v2594 = vpop.permute.xlu0 %2593
        %2595 = vrot.lane.b32.xlu0 %v2519, 64
        %v2596 = vpop.permute.xlu0 %2595
        %2597 = vrot.lane.b32.xlu0 %v2520, 64
        %v2598 = vpop.permute.xlu0 %2597
        %2599 = vrot.lane.b32.xlu0 %v2521, 64
        %v2600 = vpop.permute.xlu0 %2599
        %2601 = vrot.lane.b32.xlu0 %v2522, 64
        %v2602 = vpop.permute.xlu0 %2601
        %2603 = vrot.lane.b32.xlu0 %v2523, 64
        %v2604 = vpop.permute.xlu0 %2603
        %2605 = vrot.lane.b32.xlu0 %v2524, 64
        %v2606 = vpop.permute.xlu0 %2605
        %2607 = vrot.lane.b32.xlu0 %v2525, 64
        %v2608 = vpop.permute.xlu0 %2607
        %2609 = vrot.lane.b32.xlu0 %v2526, 64
        %v2610 = vpop.permute.xlu0 %2609
        %2611 = vrot.lane.b32.xlu0 %v2527, 64
        %v2612 = vpop.permute.xlu0 %2611
        %2613 = vrot.lane.b32.xlu0 %v2528, 64
        %v2614 = vpop.permute.xlu0 %2613
        %2615 = vrot.lane.b32.xlu0 %v2529, 64
        %v2616 = vpop.permute.xlu0 %2615
        %2617 = vrot.lane.b32.xlu0 %v2530, 64
        %v2618 = vpop.permute.xlu0 %2617
        %2619 = vrot.lane.b32.xlu0 %v2531, 64
        %v2620 = vpop.permute.xlu0 %2619
        %2621 = vrot.lane.b32.xlu0 %v2532, 64
        %v2622 = vpop.permute.xlu0 %2621
        %2623 = vrot.lane.b32.xlu0 %v2533, 64
        %v2624 = vpop.permute.xlu0 %2623
        %2625 = vrot.lane.b32.xlu0 %v2534, 64
        %v2626 = vpop.permute.xlu0 %2625
        %2627 = vrot.lane.b32.xlu0 %v2535, 64
        %v2628 = vpop.permute.xlu0 %2627
        %2629 = vrot.lane.b32.xlu0 %v2536, 64
        %v2630 = vpop.permute.xlu0 %2629
        %2631 = vrot.lane.b32.xlu0 %v2537, 64
        %v2632 = vpop.permute.xlu0 %2631
        %2633 = vrot.lane.b32.xlu0 %v2538, 64
        %v2634 = vpop.permute.xlu0 %2633
        %vm2667 = vcmask 654848
        %2668 = vst.msk [vmem:[#allocation4] sm:$0xff] %vm2667, %v2572
        %2669 = vst.msk [vmem:[#allocation4 + $0x10] sm:$0xff] %vm2667, %v2574
        %2670 = vst.msk [vmem:[#allocation4 + $0x20] sm:$0xff] %vm2667, %v2576
        %2671 = vst.msk [vmem:[#allocation4 + $0x30] sm:$0xff] %vm2667, %v2578
        %2672 = vst.msk [vmem:[#allocation4 + $0x40] sm:$0xff] %vm2667, %v2580
        %2673 = vst.msk [vmem:[#allocation4 + $0x50] sm:$0xff] %vm2667, %v2582
        %2674 = vst.msk [vmem:[#allocation4 + $0x60] sm:$0xff] %vm2667, %v2584
        %2675 = vst.msk [vmem:[#allocation4 + $0x70] sm:$0xff] %vm2667, %v2586
        %2676 = vst.msk [vmem:[#allocation4 + $0x80] sm:$0xff] %vm2667, %v2588
        %2677 = vst.msk [vmem:[#allocation4 + $0x90] sm:$0xff] %vm2667, %v2590
        %2678 = vst.msk [vmem:[#allocation4 + $0xa0] sm:$0xff] %vm2667, %v2592
        %2679 = vst.msk [vmem:[#allocation4 + $0xb0] sm:$0xff] %vm2667, %v2594
        %2680 = vst.msk [vmem:[#allocation4 + $0xc0] sm:$0xff] %vm2667, %v2596
        %2681 = vst.msk [vmem:[#allocation4 + $0xd0] sm:$0xff] %vm2667, %v2598
        %2682 = vst.msk [vmem:[#allocation4 + $0xe0] sm:$0xff] %vm2667, %v2600
        %2683 = vst.msk [vmem:[#allocation4 + $0xf0] sm:$0xff] %vm2667, %v2602
        %2684 = vst.msk [vmem:[#allocation4 + $0x100] sm:$0xff] %vm2667, %v2604
        %2685 = vst.msk [vmem:[#allocation4 + $0x110] sm:$0xff] %vm2667, %v2606
        %2686 = vst.msk [vmem:[#allocation4 + $0x120] sm:$0xff] %vm2667, %v2608
        %2687 = vst.msk [vmem:[#allocation4 + $0x130] sm:$0xff] %vm2667, %v2610
        %2688 = vst.msk [vmem:[#allocation4 + $0x140] sm:$0xff] %vm2667, %v2612
        %2689 = vst.msk [vmem:[#allocation4 + $0x150] sm:$0xff] %vm2667, %v2614
        %2690 = vst.msk [vmem:[#allocation4 + $0x160] sm:$0xff] %vm2667, %v2616
        %2691 = vst.msk [vmem:[#allocation4 + $0x170] sm:$0xff] %vm2667, %v2618
        %2692 = vst.msk [vmem:[#allocation4 + $0x180] sm:$0xff] %vm2667, %v2620
        %2693 = vst.msk [vmem:[#allocation4 + $0x190] sm:$0xff] %vm2667, %v2622
        %2694 = vst.msk [vmem:[#allocation4 + $0x1a0] sm:$0xff] %vm2667, %v2624
        %2695 = vst.msk [vmem:[#allocation4 + $0x1b0] sm:$0xff] %vm2667, %v2626
        %2696 = vst.msk [vmem:[#allocation4 + $0x1c0] sm:$0xff] %vm2667, %v2628
        %2697 = vst.msk [vmem:[#allocation4 + $0x1d0] sm:$0xff] %vm2667, %v2630
        %2698 = vst.msk [vmem:[#allocation4 + $0x1e0] sm:$0xff] %vm2667, %v2632
        %2699 = vst.msk [vmem:[#allocation4 + $0x1f0] sm:$0xff] %vm2667, %v2634
        %v2700 = vld [vmem:[%s1831 + $0x9] sm:$0xff]
        %v2701 = vld [vmem:[%s1831 + $0x11] sm:$0xff]
        %v2702 = vld [vmem:[%s1831 + $0x29] sm:$0xff]
        %v2703 = vld [vmem:[%s1831 + $0x31] sm:$0xff]
        %v2704 = vld [vmem:[%s1831 + $0x49] sm:$0xff]
        %v2705 = vld [vmem:[%s1831 + $0x51] sm:$0xff]
        %v2706 = vld [vmem:[%s1831 + $0x69] sm:$0xff]
        %v2707 = vld [vmem:[%s1831 + $0x71] sm:$0xff]
        %v2708 = vld [vmem:[%s1831 + $0x89] sm:$0xff]
        %v2709 = vld [vmem:[%s1831 + $0x91] sm:$0xff]
        %v2710 = vld [vmem:[%s1831 + $0xa9] sm:$0xff]
        %v2711 = vld [vmem:[%s1831 + $0xb1] sm:$0xff]
        %v2712 = vld [vmem:[%s1831 + $0xc9] sm:$0xff]
        %v2713 = vld [vmem:[%s1831 + $0xd1] sm:$0xff]
        %v2714 = vld [vmem:[%s1831 + $0xe9] sm:$0xff]
        %v2715 = vld [vmem:[%s1831 + $0xf1] sm:$0xff]
        %v2716 = vld [vmem:[%s1831 + $0x109] sm:$0xff]
        %v2717 = vld [vmem:[%s1831 + $0x111] sm:$0xff]
        %v2718 = vld [vmem:[%s1831 + $0x129] sm:$0xff]
        %v2719 = vld [vmem:[%s1831 + $0x131] sm:$0xff]
        %v2720 = vld [vmem:[%s1831 + $0x149] sm:$0xff]
        %v2721 = vld [vmem:[%s1831 + $0x151] sm:$0xff]
        %v2722 = vld [vmem:[%s1831 + $0x169] sm:$0xff]
        %v2723 = vld [vmem:[%s1831 + $0x171] sm:$0xff]
        %v2724 = vld [vmem:[%s1831 + $0x189] sm:$0xff]
        %v2725 = vld [vmem:[%s1831 + $0x191] sm:$0xff]
        %v2726 = vld [vmem:[%s1831 + $0x1a9] sm:$0xff]
        %v2727 = vld [vmem:[%s1831 + $0x1b1] sm:$0xff]
        %v2728 = vld [vmem:[%s1831 + $0x1c9] sm:$0xff]
        %v2729 = vld [vmem:[%s1831 + $0x1d1] sm:$0xff]
        %v2730 = vld [vmem:[%s1831 + $0x1e9] sm:$0xff]
        %v2731 = vld [vmem:[%s1831 + $0x1f1] sm:$0xff]
        %2764 = vrot.lane.b32.xlu0 %v2700, 80
        %v2765 = vpop.permute.xlu0 %2764
        %2766 = vrot.lane.b32.xlu0 %v2701, 80
        %v2767 = vpop.permute.xlu0 %2766
        %2768 = vrot.lane.b32.xlu0 %v2702, 80
        %v2769 = vpop.permute.xlu0 %2768
        %2770 = vrot.lane.b32.xlu0 %v2703, 80
        %v2771 = vpop.permute.xlu0 %2770
        %2772 = vrot.lane.b32.xlu0 %v2704, 80
        %v2773 = vpop.permute.xlu0 %2772
        %2774 = vrot.lane.b32.xlu0 %v2705, 80
        %v2775 = vpop.permute.xlu0 %2774
        %2776 = vrot.lane.b32.xlu0 %v2706, 80
        %v2777 = vpop.permute.xlu0 %2776
        %2778 = vrot.lane.b32.xlu0 %v2707, 80
        %v2779 = vpop.permute.xlu0 %2778
        %2780 = vrot.lane.b32.xlu0 %v2708, 80
        %v2781 = vpop.permute.xlu0 %2780
        %2782 = vrot.lane.b32.xlu0 %v2709, 80
        %v2783 = vpop.permute.xlu0 %2782
        %2784 = vrot.lane.b32.xlu0 %v2710, 80
        %v2785 = vpop.permute.xlu0 %2784
        %2786 = vrot.lane.b32.xlu0 %v2711, 80
        %v2787 = vpop.permute.xlu0 %2786
        %2788 = vrot.lane.b32.xlu0 %v2712, 80
        %v2789 = vpop.permute.xlu0 %2788
        %2790 = vrot.lane.b32.xlu0 %v2713, 80
        %v2791 = vpop.permute.xlu0 %2790
        %2792 = vrot.lane.b32.xlu0 %v2714, 80
        %v2793 = vpop.permute.xlu0 %2792
        %2794 = vrot.lane.b32.xlu0 %v2715, 80
        %v2795 = vpop.permute.xlu0 %2794
        %2796 = vrot.lane.b32.xlu0 %v2716, 80
        %v2797 = vpop.permute.xlu0 %2796
        %2798 = vrot.lane.b32.xlu0 %v2717, 80
        %v2799 = vpop.permute.xlu0 %2798
        %2800 = vrot.lane.b32.xlu0 %v2718, 80
        %v2801 = vpop.permute.xlu0 %2800
        %2802 = vrot.lane.b32.xlu0 %v2719, 80
        %v2803 = vpop.permute.xlu0 %2802
        %2804 = vrot.lane.b32.xlu0 %v2720, 80
        %v2805 = vpop.permute.xlu0 %2804
        %2806 = vrot.lane.b32.xlu0 %v2721, 80
        %v2807 = vpop.permute.xlu0 %2806
        %2808 = vrot.lane.b32.xlu0 %v2722, 80
        %v2809 = vpop.permute.xlu0 %2808
        %2810 = vrot.lane.b32.xlu0 %v2723, 80
        %v2811 = vpop.permute.xlu0 %2810
        %2812 = vrot.lane.b32.xlu0 %v2724, 80
        %v2813 = vpop.permute.xlu0 %2812
        %2814 = vrot.lane.b32.xlu0 %v2725, 80
        %v2815 = vpop.permute.xlu0 %2814
        %2816 = vrot.lane.b32.xlu0 %v2726, 80
        %v2817 = vpop.permute.xlu0 %2816
        %2818 = vrot.lane.b32.xlu0 %v2727, 80
        %v2819 = vpop.permute.xlu0 %2818
        %2820 = vrot.lane.b32.xlu0 %v2728, 80
        %v2821 = vpop.permute.xlu0 %2820
        %2822 = vrot.lane.b32.xlu0 %v2729, 80
        %v2823 = vpop.permute.xlu0 %2822
        %2824 = vrot.lane.b32.xlu0 %v2730, 80
        %v2825 = vpop.permute.xlu0 %2824
        %2826 = vrot.lane.b32.xlu0 %v2731, 80
        %v2827 = vpop.permute.xlu0 %2826
        %vm2860 = vcmask 786048
        %2861 = vst.msk [vmem:[#allocation4] sm:$0xff] %vm2860, %v2765
        %2862 = vst.msk [vmem:[#allocation4 + $0x10] sm:$0xff] %vm2860, %v2767
        %2863 = vst.msk [vmem:[#allocation4 + $0x20] sm:$0xff] %vm2860, %v2769
        %2864 = vst.msk [vmem:[#allocation4 + $0x30] sm:$0xff] %vm2860, %v2771
        %2865 = vst.msk [vmem:[#allocation4 + $0x40] sm:$0xff] %vm2860, %v2773
        %2866 = vst.msk [vmem:[#allocation4 + $0x50] sm:$0xff] %vm2860, %v2775
        %2867 = vst.msk [vmem:[#allocation4 + $0x60] sm:$0xff] %vm2860, %v2777
        %2868 = vst.msk [vmem:[#allocation4 + $0x70] sm:$0xff] %vm2860, %v2779
        %2869 = vst.msk [vmem:[#allocation4 + $0x80] sm:$0xff] %vm2860, %v2781
        %2870 = vst.msk [vmem:[#allocation4 + $0x90] sm:$0xff] %vm2860, %v2783
        %2871 = vst.msk [vmem:[#allocation4 + $0xa0] sm:$0xff] %vm2860, %v2785
        %2872 = vst.msk [vmem:[#allocation4 + $0xb0] sm:$0xff] %vm2860, %v2787
        %2873 = vst.msk [vmem:[#allocation4 + $0xc0] sm:$0xff] %vm2860, %v2789
        %2874 = vst.msk [vmem:[#allocation4 + $0xd0] sm:$0xff] %vm2860, %v2791
        %2875 = vst.msk [vmem:[#allocation4 + $0xe0] sm:$0xff] %vm2860, %v2793
        %2876 = vst.msk [vmem:[#allocation4 + $0xf0] sm:$0xff] %vm2860, %v2795
        %2877 = vst.msk [vmem:[#allocation4 + $0x100] sm:$0xff] %vm2860, %v2797
        %2878 = vst.msk [vmem:[#allocation4 + $0x110] sm:$0xff] %vm2860, %v2799
        %2879 = vst.msk [vmem:[#allocation4 + $0x120] sm:$0xff] %vm2860, %v2801
        %2880 = vst.msk [vmem:[#allocation4 + $0x130] sm:$0xff] %vm2860, %v2803
        %2881 = vst.msk [vmem:[#allocation4 + $0x140] sm:$0xff] %vm2860, %v2805
        %2882 = vst.msk [vmem:[#allocation4 + $0x150] sm:$0xff] %vm2860, %v2807
        %2883 = vst.msk [vmem:[#allocation4 + $0x160] sm:$0xff] %vm2860, %v2809
        %2884 = vst.msk [vmem:[#allocation4 + $0x170] sm:$0xff] %vm2860, %v2811
        %2885 = vst.msk [vmem:[#allocation4 + $0x180] sm:$0xff] %vm2860, %v2813
        %2886 = vst.msk [vmem:[#allocation4 + $0x190] sm:$0xff] %vm2860, %v2815
        %2887 = vst.msk [vmem:[#allocation4 + $0x1a0] sm:$0xff] %vm2860, %v2817
        %2888 = vst.msk [vmem:[#allocation4 + $0x1b0] sm:$0xff] %vm2860, %v2819
        %2889 = vst.msk [vmem:[#allocation4 + $0x1c0] sm:$0xff] %vm2860, %v2821
        %2890 = vst.msk [vmem:[#allocation4 + $0x1d0] sm:$0xff] %vm2860, %v2823
        %2891 = vst.msk [vmem:[#allocation4 + $0x1e0] sm:$0xff] %vm2860, %v2825
        %2892 = vst.msk [vmem:[#allocation4 + $0x1f0] sm:$0xff] %vm2860, %v2827
        %s2893 = scalar_lea.vmem [#allocation3], 64
        %v2894 = vld [vmem:[%s2893 + $0x7] sm:$0xff]
        %v2895 = vld [vmem:[%s2893 + $0xf] sm:$0xff]
        %v2896 = vld [vmem:[%s2893 + $0x27] sm:$0xff]
        %v2897 = vld [vmem:[%s2893 + $0x2f] sm:$0xff]
        %v2898 = vld [vmem:[%s2893 + $0x47] sm:$0xff]
        %v2899 = vld [vmem:[%s2893 + $0x4f] sm:$0xff]
        %v2900 = vld [vmem:[%s2893 + $0x67] sm:$0xff]
        %v2901 = vld [vmem:[%s2893 + $0x6f] sm:$0xff]
        %v2902 = vld [vmem:[%s2893 + $0x87] sm:$0xff]
        %v2903 = vld [vmem:[%s2893 + $0x8f] sm:$0xff]
        %v2904 = vld [vmem:[%s2893 + $0xa7] sm:$0xff]
        %v2905 = vld [vmem:[%s2893 + $0xaf] sm:$0xff]
        %v2906 = vld [vmem:[%s2893 + $0xc7] sm:$0xff]
        %v2907 = vld [vmem:[%s2893 + $0xcf] sm:$0xff]
        %v2908 = vld [vmem:[%s2893 + $0xe7] sm:$0xff]
        %v2909 = vld [vmem:[%s2893 + $0xef] sm:$0xff]
        %v2910 = vld [vmem:[%s2893 + $0x107] sm:$0xff]
        %v2911 = vld [vmem:[%s2893 + $0x10f] sm:$0xff]
        %v2912 = vld [vmem:[%s2893 + $0x127] sm:$0xff]
        %v2913 = vld [vmem:[%s2893 + $0x12f] sm:$0xff]
        %v2914 = vld [vmem:[%s2893 + $0x147] sm:$0xff]
        %v2915 = vld [vmem:[%s2893 + $0x14f] sm:$0xff]
        %v2916 = vld [vmem:[%s2893 + $0x167] sm:$0xff]
        %v2917 = vld [vmem:[%s2893 + $0x16f] sm:$0xff]
        %v2918 = vld [vmem:[%s2893 + $0x187] sm:$0xff]
        %v2919 = vld [vmem:[%s2893 + $0x18f] sm:$0xff]
        %v2920 = vld [vmem:[%s2893 + $0x1a7] sm:$0xff]
        %v2921 = vld [vmem:[%s2893 + $0x1af] sm:$0xff]
        %v2922 = vld [vmem:[%s2893 + $0x1c7] sm:$0xff]
        %v2923 = vld [vmem:[%s2893 + $0x1cf] sm:$0xff]
        %v2924 = vld [vmem:[%s2893 + $0x1e7] sm:$0xff]
        %v2925 = vld [vmem:[%s2893 + $0x1ef] sm:$0xff]
        %2958 = vrot.lane.b32.xlu0 %v2894, 96
        %v2959 = vpop.permute.xlu0 %2958
        %2960 = vrot.lane.b32.xlu0 %v2895, 96
        %v2961 = vpop.permute.xlu0 %2960
        %2962 = vrot.lane.b32.xlu0 %v2896, 96
        %v2963 = vpop.permute.xlu0 %2962
        %2964 = vrot.lane.b32.xlu0 %v2897, 96
        %v2965 = vpop.permute.xlu0 %2964
        %2966 = vrot.lane.b32.xlu0 %v2898, 96
        %v2967 = vpop.permute.xlu0 %2966
        %2968 = vrot.lane.b32.xlu0 %v2899, 96
        %v2969 = vpop.permute.xlu0 %2968
        %2970 = vrot.lane.b32.xlu0 %v2900, 96
        %v2971 = vpop.permute.xlu0 %2970
        %2972 = vrot.lane.b32.xlu0 %v2901, 96
        %v2973 = vpop.permute.xlu0 %2972
        %2974 = vrot.lane.b32.xlu0 %v2902, 96
        %v2975 = vpop.permute.xlu0 %2974
        %2976 = vrot.lane.b32.xlu0 %v2903, 96
        %v2977 = vpop.permute.xlu0 %2976
        %2978 = vrot.lane.b32.xlu0 %v2904, 96
        %v2979 = vpop.permute.xlu0 %2978
        %2980 = vrot.lane.b32.xlu0 %v2905, 96
        %v2981 = vpop.permute.xlu0 %2980
        %2982 = vrot.lane.b32.xlu0 %v2906, 96
        %v2983 = vpop.permute.xlu0 %2982
        %2984 = vrot.lane.b32.xlu0 %v2907, 96
        %v2985 = vpop.permute.xlu0 %2984
        %2986 = vrot.lane.b32.xlu0 %v2908, 96
        %v2987 = vpop.permute.xlu0 %2986
        %2988 = vrot.lane.b32.xlu0 %v2909, 96
        %v2989 = vpop.permute.xlu0 %2988
        %2990 = vrot.lane.b32.xlu0 %v2910, 96
        %v2991 = vpop.permute.xlu0 %2990
        %2992 = vrot.lane.b32.xlu0 %v2911, 96
        %v2993 = vpop.permute.xlu0 %2992
        %2994 = vrot.lane.b32.xlu0 %v2912, 96
        %v2995 = vpop.permute.xlu0 %2994
        %2996 = vrot.lane.b32.xlu0 %v2913, 96
        %v2997 = vpop.permute.xlu0 %2996
        %2998 = vrot.lane.b32.xlu0 %v2914, 96
        %v2999 = vpop.permute.xlu0 %2998
        %3000 = vrot.lane.b32.xlu0 %v2915, 96
        %v3001 = vpop.permute.xlu0 %3000
        %3002 = vrot.lane.b32.xlu0 %v2916, 96
        %v3003 = vpop.permute.xlu0 %3002
        %3004 = vrot.lane.b32.xlu0 %v2917, 96
        %v3005 = vpop.permute.xlu0 %3004
        %3006 = vrot.lane.b32.xlu0 %v2918, 96
        %v3007 = vpop.permute.xlu0 %3006
        %3008 = vrot.lane.b32.xlu0 %v2919, 96
        %v3009 = vpop.permute.xlu0 %3008
        %3010 = vrot.lane.b32.xlu0 %v2920, 96
        %v3011 = vpop.permute.xlu0 %3010
        %3012 = vrot.lane.b32.xlu0 %v2921, 96
        %v3013 = vpop.permute.xlu0 %3012
        %3014 = vrot.lane.b32.xlu0 %v2922, 96
        %v3015 = vpop.permute.xlu0 %3014
        %3016 = vrot.lane.b32.xlu0 %v2923, 96
        %v3017 = vpop.permute.xlu0 %3016
        %3018 = vrot.lane.b32.xlu0 %v2924, 96
        %v3019 = vpop.permute.xlu0 %3018
        %3020 = vrot.lane.b32.xlu0 %v2925, 96
        %v3021 = vpop.permute.xlu0 %3020
        %vm3054 = vcmask 917248
        %3055 = vst.msk [vmem:[#allocation4] sm:$0xff] %vm3054, %v2959
        %3056 = vst.msk [vmem:[#allocation4 + $0x10] sm:$0xff] %vm3054, %v2961
        %3057 = vst.msk [vmem:[#allocation4 + $0x20] sm:$0xff] %vm3054, %v2963
        %3058 = vst.msk [vmem:[#allocation4 + $0x30] sm:$0xff] %vm3054, %v2965
        %3059 = vst.msk [vmem:[#allocation4 + $0x40] sm:$0xff] %vm3054, %v2967
        %3060 = vst.msk [vmem:[#allocation4 + $0x50] sm:$0xff] %vm3054, %v2969
        %3061 = vst.msk [vmem:[#allocation4 + $0x60] sm:$0xff] %vm3054, %v2971
        %3062 = vst.msk [vmem:[#allocation4 + $0x70] sm:$0xff] %vm3054, %v2973
        %3063 = vst.msk [vmem:[#allocation4 + $0x80] sm:$0xff] %vm3054, %v2975
        %3064 = vst.msk [vmem:[#allocation4 + $0x90] sm:$0xff] %vm3054, %v2977
        %3065 = vst.msk [vmem:[#allocation4 + $0xa0] sm:$0xff] %vm3054, %v2979
        %3066 = vst.msk [vmem:[#allocation4 + $0xb0] sm:$0xff] %vm3054, %v2981
        %3067 = vst.msk [vmem:[#allocation4 + $0xc0] sm:$0xff] %vm3054, %v2983
        %3068 = vst.msk [vmem:[#allocation4 + $0xd0] sm:$0xff] %vm3054, %v2985
        %3069 = vst.msk [vmem:[#allocation4 + $0xe0] sm:$0xff] %vm3054, %v2987
        %3070 = vst.msk [vmem:[#allocation4 + $0xf0] sm:$0xff] %vm3054, %v2989
        %3071 = vst.msk [vmem:[#allocation4 + $0x100] sm:$0xff] %vm3054, %v2991
        %3072 = vst.msk [vmem:[#allocation4 + $0x110] sm:$0xff] %vm3054, %v2993
        %3073 = vst.msk [vmem:[#allocation4 + $0x120] sm:$0xff] %vm3054, %v2995
        %3074 = vst.msk [vmem:[#allocation4 + $0x130] sm:$0xff] %vm3054, %v2997
        %3075 = vst.msk [vmem:[#allocation4 + $0x140] sm:$0xff] %vm3054, %v2999
        %3076 = vst.msk [vmem:[#allocation4 + $0x150] sm:$0xff] %vm3054, %v3001
        %3077 = vst.msk [vmem:[#allocation4 + $0x160] sm:$0xff] %vm3054, %v3003
        %3078 = vst.msk [vmem:[#allocation4 + $0x170] sm:$0xff] %vm3054, %v3005
        %3079 = vst.msk [vmem:[#allocation4 + $0x180] sm:$0xff] %vm3054, %v3007
        %3080 = vst.msk [vmem:[#allocation4 + $0x190] sm:$0xff] %vm3054, %v3009
        %3081 = vst.msk [vmem:[#allocation4 + $0x1a0] sm:$0xff] %vm3054, %v3011
        %3082 = vst.msk [vmem:[#allocation4 + $0x1b0] sm:$0xff] %vm3054, %v3013
        %3083 = vst.msk [vmem:[#allocation4 + $0x1c0] sm:$0xff] %vm3054, %v3015
        %3084 = vst.msk [vmem:[#allocation4 + $0x1d0] sm:$0xff] %vm3054, %v3017
        %3085 = vst.msk [vmem:[#allocation4 + $0x1e0] sm:$0xff] %vm3054, %v3019
        %3086 = vst.msk [vmem:[#allocation4 + $0x1f0] sm:$0xff] %vm3054, %v3021
        %v3087 = vld [vmem:[%s2893 + $0x8] sm:$0xff]
        %v3088 = vld [vmem:[%s2893 + $0x10] sm:$0xff]
        %v3089 = vld [vmem:[%s2893 + $0x28] sm:$0xff]
        %v3090 = vld [vmem:[%s2893 + $0x30] sm:$0xff]
        %v3091 = vld [vmem:[%s2893 + $0x48] sm:$0xff]
        %v3092 = vld [vmem:[%s2893 + $0x50] sm:$0xff]
        %v3093 = vld [vmem:[%s2893 + $0x68] sm:$0xff]
        %v3094 = vld [vmem:[%s2893 + $0x70] sm:$0xff]
        %v3095 = vld [vmem:[%s2893 + $0x88] sm:$0xff]
        %v3096 = vld [vmem:[%s2893 + $0x90] sm:$0xff]
        %v3097 = vld [vmem:[%s2893 + $0xa8] sm:$0xff]
        %v3098 = vld [vmem:[%s2893 + $0xb0] sm:$0xff]
        %v3099 = vld [vmem:[%s2893 + $0xc8] sm:$0xff]
        %v3100 = vld [vmem:[%s2893 + $0xd0] sm:$0xff]
        %v3101 = vld [vmem:[%s2893 + $0xe8] sm:$0xff]
        %v3102 = vld [vmem:[%s2893 + $0xf0] sm:$0xff]
        %v3103 = vld [vmem:[%s2893 + $0x108] sm:$0xff]
        %v3104 = vld [vmem:[%s2893 + $0x110] sm:$0xff]
        %v3105 = vld [vmem:[%s2893 + $0x128] sm:$0xff]
        %v3106 = vld [vmem:[%s2893 + $0x130] sm:$0xff]
        %v3107 = vld [vmem:[%s2893 + $0x148] sm:$0xff]
        %v3108 = vld [vmem:[%s2893 + $0x150] sm:$0xff]
        %v3109 = vld [vmem:[%s2893 + $0x168] sm:$0xff]
        %v3110 = vld [vmem:[%s2893 + $0x170] sm:$0xff]
        %v3111 = vld [vmem:[%s2893 + $0x188] sm:$0xff]
        %v3112 = vld [vmem:[%s2893 + $0x190] sm:$0xff]
        %v3113 = vld [vmem:[%s2893 + $0x1a8] sm:$0xff]
        %v3114 = vld [vmem:[%s2893 + $0x1b0] sm:$0xff]
        %v3115 = vld [vmem:[%s2893 + $0x1c8] sm:$0xff]
        %v3116 = vld [vmem:[%s2893 + $0x1d0] sm:$0xff]
        %v3117 = vld [vmem:[%s2893 + $0x1e8] sm:$0xff]
        %v3118 = vld [vmem:[%s2893 + $0x1f0] sm:$0xff]
        %3151 = vrot.lane.b32.xlu0 %v3087, 112
        %v3152 = vpop.permute.xlu0 %3151
        %3153 = vrot.lane.b32.xlu0 %v3088, 112
        %v3154 = vpop.permute.xlu0 %3153
        %3155 = vrot.lane.b32.xlu0 %v3089, 112
        %v3156 = vpop.permute.xlu0 %3155
        %3157 = vrot.lane.b32.xlu0 %v3090, 112
        %v3158 = vpop.permute.xlu0 %3157
        %3159 = vrot.lane.b32.xlu0 %v3091, 112
        %v3160 = vpop.permute.xlu0 %3159
        %3161 = vrot.lane.b32.xlu0 %v3092, 112
        %v3162 = vpop.permute.xlu0 %3161
        %3163 = vrot.lane.b32.xlu0 %v3093, 112
        %v3164 = vpop.permute.xlu0 %3163
        %3165 = vrot.lane.b32.xlu0 %v3094, 112
        %v3166 = vpop.permute.xlu0 %3165
        %3167 = vrot.lane.b32.xlu0 %v3095, 112
        %v3168 = vpop.permute.xlu0 %3167
        %3169 = vrot.lane.b32.xlu0 %v3096, 112
        %v3170 = vpop.permute.xlu0 %3169
        %3171 = vrot.lane.b32.xlu0 %v3097, 112
        %v3172 = vpop.permute.xlu0 %3171
        %3173 = vrot.lane.b32.xlu0 %v3098, 112
        %v3174 = vpop.permute.xlu0 %3173
        %3175 = vrot.lane.b32.xlu0 %v3099, 112
        %v3176 = vpop.permute.xlu0 %3175
        %3177 = vrot.lane.b32.xlu0 %v3100, 112
        %v3178 = vpop.permute.xlu0 %3177
        %3179 = vrot.lane.b32.xlu0 %v3101, 112
        %v3180 = vpop.permute.xlu0 %3179
        %3181 = vrot.lane.b32.xlu0 %v3102, 112
        %v3182 = vpop.permute.xlu0 %3181
        %3183 = vrot.lane.b32.xlu0 %v3103, 112
        %v3184 = vpop.permute.xlu0 %3183
        %3185 = vrot.lane.b32.xlu0 %v3104, 112
        %v3186 = vpop.permute.xlu0 %3185
        %3187 = vrot.lane.b32.xlu0 %v3105, 112
        %v3188 = vpop.permute.xlu0 %3187
        %3189 = vrot.lane.b32.xlu0 %v3106, 112
        %v3190 = vpop.permute.xlu0 %3189
        %3191 = vrot.lane.b32.xlu0 %v3107, 112
        %v3192 = vpop.permute.xlu0 %3191
        %3193 = vrot.lane.b32.xlu0 %v3108, 112
        %v3194 = vpop.permute.xlu0 %3193
        %3195 = vrot.lane.b32.xlu0 %v3109, 112
        %v3196 = vpop.permute.xlu0 %3195
        %3197 = vrot.lane.b32.xlu0 %v3110, 112
        %v3198 = vpop.permute.xlu0 %3197
        %3199 = vrot.lane.b32.xlu0 %v3111, 112
        %v3200 = vpop.permute.xlu0 %3199
        %3201 = vrot.lane.b32.xlu0 %v3112, 112
        %v3202 = vpop.permute.xlu0 %3201
        %3203 = vrot.lane.b32.xlu0 %v3113, 112
        %v3204 = vpop.permute.xlu0 %3203
        %3205 = vrot.lane.b32.xlu0 %v3114, 112
        %v3206 = vpop.permute.xlu0 %3205
        %3207 = vrot.lane.b32.xlu0 %v3115, 112
        %v3208 = vpop.permute.xlu0 %3207
        %3209 = vrot.lane.b32.xlu0 %v3116, 112
        %v3210 = vpop.permute.xlu0 %3209
        %3211 = vrot.lane.b32.xlu0 %v3117, 112
        %v3212 = vpop.permute.xlu0 %3211
        %3213 = vrot.lane.b32.xlu0 %v3118, 112
        %v3214 = vpop.permute.xlu0 %3213
        %vm3247 = vcmask 1048448
        %3248 = vst.msk [vmem:[#allocation4] sm:$0xff] %vm3247, %v3152
        %3249 = vst.msk [vmem:[#allocation4 + $0x10] sm:$0xff] %vm3247, %v3154
        %3250 = vst.msk [vmem:[#allocation4 + $0x20] sm:$0xff] %vm3247, %v3156
        %3251 = vst.msk [vmem:[#allocation4 + $0x30] sm:$0xff] %vm3247, %v3158
        %3252 = vst.msk [vmem:[#allocation4 + $0x40] sm:$0xff] %vm3247, %v3160
        %3253 = vst.msk [vmem:[#allocation4 + $0x50] sm:$0xff] %vm3247, %v3162
        %3254 = vst.msk [vmem:[#allocation4 + $0x60] sm:$0xff] %vm3247, %v3164
        %3255 = vst.msk [vmem:[#allocation4 + $0x70] sm:$0xff] %vm3247, %v3166
        %3256 = vst.msk [vmem:[#allocation4 + $0x80] sm:$0xff] %vm3247, %v3168
        %3257 = vst.msk [vmem:[#allocation4 + $0x90] sm:$0xff] %vm3247, %v3170
        %3258 = vst.msk [vmem:[#allocation4 + $0xa0] sm:$0xff] %vm3247, %v3172
        %3259 = vst.msk [vmem:[#allocation4 + $0xb0] sm:$0xff] %vm3247, %v3174
        %3260 = vst.msk [vmem:[#allocation4 + $0xc0] sm:$0xff] %vm3247, %v3176
        %3261 = vst.msk [vmem:[#allocation4 + $0xd0] sm:$0xff] %vm3247, %v3178
        %3262 = vst.msk [vmem:[#allocation4 + $0xe0] sm:$0xff] %vm3247, %v3180
        %3263 = vst.msk [vmem:[#allocation4 + $0xf0] sm:$0xff] %vm3247, %v3182
        %3264 = vst.msk [vmem:[#allocation4 + $0x100] sm:$0xff] %vm3247, %v3184
        %3265 = vst.msk [vmem:[#allocation4 + $0x110] sm:$0xff] %vm3247, %v3186
        %3266 = vst.msk [vmem:[#allocation4 + $0x120] sm:$0xff] %vm3247, %v3188
        %3267 = vst.msk [vmem:[#allocation4 + $0x130] sm:$0xff] %vm3247, %v3190
        %3268 = vst.msk [vmem:[#allocation4 + $0x140] sm:$0xff] %vm3247, %v3192
        %3269 = vst.msk [vmem:[#allocation4 + $0x150] sm:$0xff] %vm3247, %v3194
        %3270 = vst.msk [vmem:[#allocation4 + $0x160] sm:$0xff] %vm3247, %v3196
        %3271 = vst.msk [vmem:[#allocation4 + $0x170] sm:$0xff] %vm3247, %v3198
        %3272 = vst.msk [vmem:[#allocation4 + $0x180] sm:$0xff] %vm3247, %v3200
        %3273 = vst.msk [vmem:[#allocation4 + $0x190] sm:$0xff] %vm3247, %v3202
        %3274 = vst.msk [vmem:[#allocation4 + $0x1a0] sm:$0xff] %vm3247, %v3204
        %3275 = vst.msk [vmem:[#allocation4 + $0x1b0] sm:$0xff] %vm3247, %v3206
        %3276 = vst.msk [vmem:[#allocation4 + $0x1c0] sm:$0xff] %vm3247, %v3208
        %3277 = vst.msk [vmem:[#allocation4 + $0x1d0] sm:$0xff] %vm3247, %v3210
        %3278 = vst.msk [vmem:[#allocation4 + $0x1e0] sm:$0xff] %vm3247, %v3212
        %3279 = vst.msk [vmem:[#allocation4 + $0x1f0] sm:$0xff] %vm3247, %v3214
        %v3280 = vld [vmem:[%s2893 + $0x9] sm:$0xff]
        %v3281 = vld [vmem:[%s2893 + $0x11] sm:$0xff]
        %v3282 = vld [vmem:[%s2893 + $0x29] sm:$0xff]
        %v3283 = vld [vmem:[%s2893 + $0x31] sm:$0xff]
        %v3284 = vld [vmem:[%s2893 + $0x49] sm:$0xff]
        %v3285 = vld [vmem:[%s2893 + $0x51] sm:$0xff]
        %v3286 = vld [vmem:[%s2893 + $0x69] sm:$0xff]
        %v3287 = vld [vmem:[%s2893 + $0x71] sm:$0xff]
        %v3288 = vld [vmem:[%s2893 + $0x89] sm:$0xff]
        %v3289 = vld [vmem:[%s2893 + $0x91] sm:$0xff]
        %v3290 = vld [vmem:[%s2893 + $0xa9] sm:$0xff]
        %v3291 = vld [vmem:[%s2893 + $0xb1] sm:$0xff]
        %v3292 = vld [vmem:[%s2893 + $0xc9] sm:$0xff]
        %v3293 = vld [vmem:[%s2893 + $0xd1] sm:$0xff]
        %v3294 = vld [vmem:[%s2893 + $0xe9] sm:$0xff]
        %v3295 = vld [vmem:[%s2893 + $0xf1] sm:$0xff]
        %v3296 = vld [vmem:[%s2893 + $0x109] sm:$0xff]
        %v3297 = vld [vmem:[%s2893 + $0x111] sm:$0xff]
        %v3298 = vld [vmem:[%s2893 + $0x129] sm:$0xff]
        %v3299 = vld [vmem:[%s2893 + $0x131] sm:$0xff]
        %v3300 = vld [vmem:[%s2893 + $0x149] sm:$0xff]
        %v3301 = vld [vmem:[%s2893 + $0x151] sm:$0xff]
        %v3302 = vld [vmem:[%s2893 + $0x169] sm:$0xff]
        %v3303 = vld [vmem:[%s2893 + $0x171] sm:$0xff]
        %v3304 = vld [vmem:[%s2893 + $0x189] sm:$0xff]
        %v3305 = vld [vmem:[%s2893 + $0x191] sm:$0xff]
        %v3306 = vld [vmem:[%s2893 + $0x1a9] sm:$0xff]
        %v3307 = vld [vmem:[%s2893 + $0x1b1] sm:$0xff]
        %v3308 = vld [vmem:[%s2893 + $0x1c9] sm:$0xff]
        %v3309 = vld [vmem:[%s2893 + $0x1d1] sm:$0xff]
        %v3310 = vld [vmem:[%s2893 + $0x1e9] sm:$0xff]
        %v3311 = vld [vmem:[%s2893 + $0x1f1] sm:$0xff]
        %3312 = vst.msk [vmem:[#allocation4 + $0x8] sm:$0xff] %vm1242, %v3280
        %3313 = vst.msk [vmem:[#allocation4 + $0x18] sm:$0xff] %vm1242, %v3281
        %3314 = vst.msk [vmem:[#allocation4 + $0x28] sm:$0xff] %vm1242, %v3282
        %3315 = vst.msk [vmem:[#allocation4 + $0x38] sm:$0xff] %vm1242, %v3283
        %3316 = vst.msk [vmem:[#allocation4 + $0x48] sm:$0xff] %vm1242, %v3284
        %3317 = vst.msk [vmem:[#allocation4 + $0x58] sm:$0xff] %vm1242, %v3285
        %3318 = vst.msk [vmem:[#allocation4 + $0x68] sm:$0xff] %vm1242, %v3286
        %3319 = vst.msk [vmem:[#allocation4 + $0x78] sm:$0xff] %vm1242, %v3287
        %3320 = vst.msk [vmem:[#allocation4 + $0x88] sm:$0xff] %vm1242, %v3288
        %3321 = vst.msk [vmem:[#allocation4 + $0x98] sm:$0xff] %vm1242, %v3289
        %3322 = vst.msk [vmem:[#allocation4 + $0xa8] sm:$0xff] %vm1242, %v3290
        %3323 = vst.msk [vmem:[#allocation4 + $0xb8] sm:$0xff] %vm1242, %v3291
        %3324 = vst.msk [vmem:[#allocation4 + $0xc8] sm:$0xff] %vm1242, %v3292
        %3325 = vst.msk [vmem:[#allocation4 + $0xd8] sm:$0xff] %vm1242, %v3293
        %3326 = vst.msk [vmem:[#allocation4 + $0xe8] sm:$0xff] %vm1242, %v3294
        %3327 = vst.msk [vmem:[#allocation4 + $0xf8] sm:$0xff] %vm1242, %v3295
        %3328 = vst.msk [vmem:[#allocation4 + $0x108] sm:$0xff] %vm1242, %v3296
        %3329 = vst.msk [vmem:[#allocation4 + $0x118] sm:$0xff] %vm1242, %v3297
        %3330 = vst.msk [vmem:[#allocation4 + $0x128] sm:$0xff] %vm1242, %v3298
        %3331 = vst.msk [vmem:[#allocation4 + $0x138] sm:$0xff] %vm1242, %v3299
        %3332 = vst.msk [vmem:[#allocation4 + $0x148] sm:$0xff] %vm1242, %v3300
        %3333 = vst.msk [vmem:[#allocation4 + $0x158] sm:$0xff] %vm1242, %v3301
        %3334 = vst.msk [vmem:[#allocation4 + $0x168] sm:$0xff] %vm1242, %v3302
        %3335 = vst.msk [vmem:[#allocation4 + $0x178] sm:$0xff] %vm1242, %v3303
        %3336 = vst.msk [vmem:[#allocation4 + $0x188] sm:$0xff] %vm1242, %v3304
        %3337 = vst.msk [vmem:[#allocation4 + $0x198] sm:$0xff] %vm1242, %v3305
        %3338 = vst.msk [vmem:[#allocation4 + $0x1a8] sm:$0xff] %vm1242, %v3306
        %3339 = vst.msk [vmem:[#allocation4 + $0x1b8] sm:$0xff] %vm1242, %v3307
        %3340 = vst.msk [vmem:[#allocation4 + $0x1c8] sm:$0xff] %vm1242, %v3308
        %3341 = vst.msk [vmem:[#allocation4 + $0x1d8] sm:$0xff] %vm1242, %v3309
        %3342 = vst.msk [vmem:[#allocation4 + $0x1e8] sm:$0xff] %vm1242, %v3310
        %3343 = vst.msk [vmem:[#allocation4 + $0x1f8] sm:$0xff] %vm1242, %v3311
        %v3344 = vld [vmem:[#allocation4] sm:$0xff]
        %v3345 = vld [vmem:[#allocation4 + $0x8] sm:$0xff]
        %v3346 = vld [vmem:[#allocation4 + $0x10] sm:$0xff]
        %v3347 = vld [vmem:[#allocation4 + $0x18] sm:$0xff]
        %v3348 = vld [vmem:[#allocation4 + $0x20] sm:$0xff]
        %v3349 = vld [vmem:[#allocation4 + $0x28] sm:$0xff]
        %v3350 = vld [vmem:[#allocation4 + $0x30] sm:$0xff]
        %v3351 = vld [vmem:[#allocation4 + $0x38] sm:$0xff]
        %v3352 = vld [vmem:[#allocation4 + $0x40] sm:$0xff]
        %v3353 = vld [vmem:[#allocation4 + $0x48] sm:$0xff]
        %v3354 = vld [vmem:[#allocation4 + $0x50] sm:$0xff]
        %v3355 = vld [vmem:[#allocation4 + $0x58] sm:$0xff]
        %v3356 = vld [vmem:[#allocation4 + $0x60] sm:$0xff]
        %v3357 = vld [vmem:[#allocation4 + $0x68] sm:$0xff]
        %v3358 = vld [vmem:[#allocation4 + $0x70] sm:$0xff]
        %v3359 = vld [vmem:[#allocation4 + $0x78] sm:$0xff]
        %v3360 = vld [vmem:[#allocation4 + $0x80] sm:$0xff]
        %v3361 = vld [vmem:[#allocation4 + $0x88] sm:$0xff]
        %v3362 = vld [vmem:[#allocation4 + $0x90] sm:$0xff]
        %v3363 = vld [vmem:[#allocation4 + $0x98] sm:$0xff]
        %v3364 = vld [vmem:[#allocation4 + $0xa0] sm:$0xff]
        %v3365 = vld [vmem:[#allocation4 + $0xa8] sm:$0xff]
        %v3366 = vld [vmem:[#allocation4 + $0xb0] sm:$0xff]
        %v3367 = vld [vmem:[#allocation4 + $0xb8] sm:$0xff]
        %v3368 = vld [vmem:[#allocation4 + $0xc0] sm:$0xff]
        %v3369 = vld [vmem:[#allocation4 + $0xc8] sm:$0xff]
        %v3370 = vld [vmem:[#allocation4 + $0xd0] sm:$0xff]
        %v3371 = vld [vmem:[#allocation4 + $0xd8] sm:$0xff]
        %v3372 = vld [vmem:[#allocation4 + $0xe0] sm:$0xff]
        %v3373 = vld [vmem:[#allocation4 + $0xe8] sm:$0xff]
        %v3374 = vld [vmem:[#allocation4 + $0xf0] sm:$0xff]
        %v3375 = vld [vmem:[#allocation4 + $0xf8] sm:$0xff]
        %v3376 = vld [vmem:[#allocation4 + $0x100] sm:$0xff]
        %v3377 = vld [vmem:[#allocation4 + $0x108] sm:$0xff]
        %v3378 = vld [vmem:[#allocation4 + $0x110] sm:$0xff]
        %v3379 = vld [vmem:[#allocation4 + $0x118] sm:$0xff]
        %v3380 = vld [vmem:[#allocation4 + $0x120] sm:$0xff]
        %v3381 = vld [vmem:[#allocation4 + $0x128] sm:$0xff]
        %v3382 = vld [vmem:[#allocation4 + $0x130] sm:$0xff]
        %v3383 = vld [vmem:[#allocation4 + $0x138] sm:$0xff]
        %v3384 = vld [vmem:[#allocation4 + $0x140] sm:$0xff]
        %v3385 = vld [vmem:[#allocation4 + $0x148] sm:$0xff]
        %v3386 = vld [vmem:[#allocation4 + $0x150] sm:$0xff]
        %v3387 = vld [vmem:[#allocation4 + $0x158] sm:$0xff]
        %v3388 = vld [vmem:[#allocation4 + $0x160] sm:$0xff]
        %v3389 = vld [vmem:[#allocation4 + $0x168] sm:$0xff]
        %v3390 = vld [vmem:[#allocation4 + $0x170] sm:$0xff]
        %v3391 = vld [vmem:[#allocation4 + $0x178] sm:$0xff]
        %v3392 = vld [vmem:[#allocation4 + $0x180] sm:$0xff]
        %v3393 = vld [vmem:[#allocation4 + $0x188] sm:$0xff]
        %v3394 = vld [vmem:[#allocation4 + $0x190] sm:$0xff]
        %v3395 = vld [vmem:[#allocation4 + $0x198] sm:$0xff]
        %v3396 = vld [vmem:[#allocation4 + $0x1a0] sm:$0xff]
        %v3397 = vld [vmem:[#allocation4 + $0x1a8] sm:$0xff]
        %v3398 = vld [vmem:[#allocation4 + $0x1b0] sm:$0xff]
        %v3399 = vld [vmem:[#allocation4 + $0x1b8] sm:$0xff]
        %v3400 = vld [vmem:[#allocation4 + $0x1c0] sm:$0xff]
        %v3401 = vld [vmem:[#allocation4 + $0x1c8] sm:$0xff]
        %v3402 = vld [vmem:[#allocation4 + $0x1d0] sm:$0xff]
        %v3403 = vld [vmem:[#allocation4 + $0x1d8] sm:$0xff]
        %v3404 = vld [vmem:[#allocation4 + $0x1e0] sm:$0xff]
        %v3405 = vld [vmem:[#allocation4 + $0x1e8] sm:$0xff]
        %v3406 = vld [vmem:[#allocation4 + $0x1f0] sm:$0xff]
        %v3407 = vld [vmem:[#allocation4 + $0x1f8] sm:$0xff]
        %v3408 = vpack.c.bf16 %v3346, %v3344
        %v3409 = vpack.c.bf16 %v3347, %v3345
        %v3410 = vpack.c.bf16 %v3350, %v3348
        %v3411 = vpack.c.bf16 %v3351, %v3349
        %v3412 = vpack.c.bf16 %v3354, %v3352
        %v3413 = vpack.c.bf16 %v3355, %v3353
        %v3414 = vpack.c.bf16 %v3358, %v3356
        %v3415 = vpack.c.bf16 %v3359, %v3357
        %v3416 = vpack.c.bf16 %v3362, %v3360
        %v3417 = vpack.c.bf16 %v3363, %v3361
        %v3418 = vpack.c.bf16 %v3366, %v3364
        %v3419 = vpack.c.bf16 %v3367, %v3365
        %v3420 = vpack.c.bf16 %v3370, %v3368
        %v3421 = vpack.c.bf16 %v3371, %v3369
        %v3422 = vpack.c.bf16 %v3374, %v3372
        %v3423 = vpack.c.bf16 %v3375, %v3373
        %v3424 = vpack.c.bf16 %v3378, %v3376
        %v3425 = vpack.c.bf16 %v3379, %v3377
        %v3426 = vpack.c.bf16 %v3382, %v3380
        %v3427 = vpack.c.bf16 %v3383, %v3381
        %v3428 = vpack.c.bf16 %v3386, %v3384
        %v3429 = vpack.c.bf16 %v3387, %v3385
        %v3430 = vpack.c.bf16 %v3390, %v3388
        %v3431 = vpack.c.bf16 %v3391, %v3389
        %v3432 = vpack.c.bf16 %v3394, %v3392
        %v3433 = vpack.c.bf16 %v3395, %v3393
        %v3434 = vpack.c.bf16 %v3398, %v3396
        %v3435 = vpack.c.bf16 %v3399, %v3397
        %v3436 = vpack.c.bf16 %v3402, %v3400
        %v3437 = vpack.c.bf16 %v3403, %v3401
        %v3438 = vpack.c.bf16 %v3406, %v3404
        %v3439 = vpack.c.bf16 %v3407, %v3405
        %v3440 = vld [vmem:[%s13] sm:$0xf]
        %v3441 = vld [vmem:[%s13 + $0x4] sm:$0xf]
        %v3442 = vld [vmem:[%s13 + $0x8] sm:$0xf]
        %v3443 = vld [vmem:[%s13 + $0xc] sm:$0xf]
        %v3444 = vld [vmem:[%s13 + $0x10] sm:$0xf]
        %v3445 = vld [vmem:[%s13 + $0x14] sm:$0xf]
        %v3446 = vld [vmem:[%s13 + $0x18] sm:$0xf]
        %v3447 = vld [vmem:[%s13 + $0x1c] sm:$0xf]
        %v3448 = vld [vmem:[%s13 + $0x20] sm:$0xf]
        %v3449 = vld [vmem:[%s13 + $0x24] sm:$0xf]
        %v3450 = vld [vmem:[%s13 + $0x28] sm:$0xf]
        %v3451 = vld [vmem:[%s13 + $0x2c] sm:$0xf]
        %v3452 = vld [vmem:[%s13 + $0x30] sm:$0xf]
        %v3453 = vld [vmem:[%s13 + $0x34] sm:$0xf]
        %v3454 = vld [vmem:[%s13 + $0x38] sm:$0xf]
        %v3455 = vld [vmem:[%s13 + $0x3c] sm:$0xf]
        %v3456 = vld [vmem:[%s13 + $0x40] sm:$0xf]
        %v3457 = vld [vmem:[%s13 + $0x44] sm:$0xf]
        %v3476 = vunpack.c.l.b16 %v3440
        %v3477 = vunpack.c.l.b16 %v3441
        %v3478 = vunpack.c.l.b16 %v3442
        %v3479 = vunpack.c.l.b16 %v3443
        %v3480 = vunpack.c.l.b16 %v3444
        %v3481 = vunpack.c.l.b16 %v3445
        %v3482 = vunpack.c.l.b16 %v3446
        %v3483 = vunpack.c.l.b16 %v3447
        %v3484 = vunpack.c.l.b16 %v3448
        %v3485 = vunpack.c.l.b16 %v3449
        %v3486 = vunpack.c.l.b16 %v3450
        %v3487 = vunpack.c.l.b16 %v3451
        %v3488 = vunpack.c.l.b16 %v3452
        %v3489 = vunpack.c.l.b16 %v3453
        %v3490 = vunpack.c.l.b16 %v3454
        %v3491 = vunpack.c.l.b16 %v3455
        %v3492 = vunpack.c.l.b16 %v3456
        %v3493 = vunpack.c.l.b16 %v3457
        %v3494 = vpack.c.b16 %v3477, %v3476
        %v3495 = vpack.c.b16 %v3479, %v3478
        %v3496 = vpack.c.b16 %v3481, %v3480
        %v3497 = vpack.c.b16 %v3483, %v3482
        %v3498 = vpack.c.b16 %v3485, %v3484
        %v3499 = vpack.c.b16 %v3487, %v3486
        %v3500 = vpack.c.b16 %v3489, %v3488
        %v3501 = vpack.c.b16 %v3491, %v3490
        %v3502 = vpack.c.b16 %v3493, %v3492
        %v3513 = vsel %vm1242, %v3409, 0
        %v3516 = vsel %vm1242, %v3411, 0
        %v3519 = vsel %vm1242, %v3413, 0
        %v3522 = vsel %vm1242, %v3415, 0
        %v3525 = vsel %vm1242, %v3417, 0
        %v3528 = vsel %vm1242, %v3419, 0
        %v3531 = vsel %vm1242, %v3421, 0
        %v3534 = vsel %vm1242, %v3423, 0
        %v3537 = vsel %vm1242, %v3425, 0
        %v3540 = vsel %vm1242, %v3427, 0
        %v3543 = vsel %vm1242, %v3429, 0
        %v3546 = vsel %vm1242, %v3431, 0
        %v3549 = vsel %vm1242, %v3433, 0
        %v3552 = vsel %vm1242, %v3435, 0
        %v3555 = vsel %vm1242, %v3437, 0
        %v3558 = vsel %vm1242, %v3439, 0
        %3560 = vmatprep.subr.bf16.mxu0 0
        %3561 = vmatpush1.bf16.msra.mxu0 %v3494
        %3562 = vmatprep.subr.bf16.mxu0 0
        %3563 = vmatpush1.bf16.msra.mxu0 %v3495
        %3564 = vmatprep.subr.bf16.mxu0 0
        %3565 = vmatpush1.bf16.msra.mxu0 %v3496
        %3566 = vmatprep.subr.bf16.mxu0 0
        %3567 = vmatpush1.bf16.msra.mxu0 %v3497
        %3568 = vmatprep.subr.bf16.mxu0 0
        %3569 = vmatpush1.bf16.msra.mxu0 %v3498
        %3570 = vmatprep.subr.bf16.mxu0 0
        %3571 = vmatpush1.bf16.msra.mxu0 %v3499
        %3572 = vmatprep.subr.bf16.mxu0 0
        %3573 = vmatpush1.bf16.msra.mxu0 %v3500
        %3574 = vmatprep.subr.bf16.mxu0 0
        %3575 = vmatpush1.bf16.msra.mxu0 %v3501
        %3576 = vmatprep.subr.bf16.mxu0 0
        %3577 = vmatpush1.bf16.msra.mxu0 %v3502
        %3578 = vmatprep.subr.bf16.mxu0 0
        %3579 = vmatpush1.bf16.msra.mxu0 0
        %3580 = vmatprep.subr.bf16.mxu0 0
        %3581 = vmatpush1.bf16.msra.mxu0 0
        %3582 = vmatprep.subr.bf16.mxu0 0
        %3583 = vmatpush1.bf16.msra.mxu0 0
        %3584 = vmatprep.subr.bf16.mxu0 0
        %3585 = vmatpush1.bf16.msra.mxu0 0
        %3586 = vmatprep.subr.bf16.mxu0 0
        %3587 = vmatpush1.bf16.msra.mxu0 0
        %3588 = vmatprep.subr.bf16.mxu0 0
        %3589 = vmatpush1.bf16.msra.mxu0 0
        %3590 = vmatprep.subr.bf16.mxu0 0
        %3591 = vmatpush1.bf16.msra.mxu0 0
        %3592 = vmatprep.mubr.bf16.mxu0 %v3513
        %3593 = vmatmul.mubr.bf16.gmra.mrb[0].mxu0 %v3408
        %v3594 = vpop.f32.mrb[0].mxu0
        %v3595 = vadd.f32 0.0, %v3594
        %v3596 = vpop.f32.mrb[0].mxu0
        %v3597 = vpop.f32.mrb[0].mxu0
        %v3598 = vadd.f32 0.0, %v3597
        %v3599 = vpop.f32.mrb[0].mxu0
        %3600 = vmatprep.mubr.bf16.mxu0 %v3516
        %3601 = vmatmul.mubr.bf16.gmra.mrb[0].mxu0 %v3410
        %v3602 = vpop.f32.mrb[0].mxu0
        %v3603 = vadd.f32 0.0, %v3602
        %v3604 = vpop.f32.mrb[0].mxu0
        %v3605 = vpop.f32.mrb[0].mxu0
        %v3606 = vadd.f32 0.0, %v3605
        %v3607 = vpop.f32.mrb[0].mxu0
        %3608 = vmatprep.mubr.bf16.mxu0 %v3519
        %3609 = vmatmul.mubr.bf16.gmra.mrb[0].mxu0 %v3412
        %v3610 = vpop.f32.mrb[0].mxu0
        %v3611 = vadd.f32 0.0, %v3610
        %v3612 = vpop.f32.mrb[0].mxu0
        %v3613 = vpop.f32.mrb[0].mxu0
        %v3614 = vadd.f32 0.0, %v3613
        %v3615 = vpop.f32.mrb[0].mxu0
        %3616 = vmatprep.mubr.bf16.mxu0 %v3522
        %3617 = vmatmul.mubr.bf16.gmra.mrb[0].mxu0 %v3414
        %v3618 = vpop.f32.mrb[0].mxu0
        %v3619 = vadd.f32 0.0, %v3618
        %v3620 = vpop.f32.mrb[0].mxu0
        %v3621 = vpop.f32.mrb[0].mxu0
        %v3622 = vadd.f32 0.0, %v3621
        %v3623 = vpop.f32.mrb[0].mxu0
        %3624 = vmatprep.mubr.bf16.mxu0 %v3525
        %3625 = vmatmul.mubr.bf16.gmra.mrb[0].mxu0 %v3416
        %v3626 = vpop.f32.mrb[0].mxu0
        %v3627 = vadd.f32 0.0, %v3626
        %v3628 = vpop.f32.mrb[0].mxu0
        %v3629 = vpop.f32.mrb[0].mxu0
        %v3630 = vadd.f32 0.0, %v3629
        %v3631 = vpop.f32.mrb[0].mxu0
        %3632 = vmatprep.mubr.bf16.mxu0 %v3528
        %3633 = vmatmul.mubr.bf16.gmra.mrb[0].mxu0 %v3418
        %v3634 = vpop.f32.mrb[0].mxu0
        %v3635 = vadd.f32 0.0, %v3634
        %v3636 = vpop.f32.mrb[0].mxu0
        %v3637 = vpop.f32.mrb[0].mxu0
        %v3638 = vadd.f32 0.0, %v3637
        %v3639 = vpop.f32.mrb[0].mxu0
        %3640 = vmatprep.mubr.bf16.mxu0 %v3531
        %3641 = vmatmul.mubr.bf16.gmra.mrb[0].mxu0 %v3420
        %v3642 = vpop.f32.mrb[0].mxu0
        %v3643 = vadd.f32 0.0, %v3642
        %v3644 = vpop.f32.mrb[0].mxu0
        %v3645 = vpop.f32.mrb[0].mxu0
        %v3646 = vadd.f32 0.0, %v3645
        %v3647 = vpop.f32.mrb[0].mxu0
        %3648 = vmatprep.mubr.bf16.mxu0 %v3534
        %3649 = vmatmul.mubr.bf16.gmra.mrb[0].mxu0 %v3422
        %v3650 = vpop.f32.mrb[0].mxu0
        %v3651 = vadd.f32 0.0, %v3650
        %v3652 = vpop.f32.mrb[0].mxu0
        %v3653 = vpop.f32.mrb[0].mxu0
        %v3654 = vadd.f32 0.0, %v3653
        %v3655 = vpop.f32.mrb[0].mxu0
        %3656 = vmatprep.mubr.bf16.mxu0 %v3537
        %3657 = vmatmul.mubr.bf16.gmra.mrb[0].mxu0 %v3424
        %v3658 = vpop.f32.mrb[0].mxu0
        %v3659 = vadd.f32 0.0, %v3658
        %v3660 = vpop.f32.mrb[0].mxu0
        %v3661 = vpop.f32.mrb[0].mxu0
        %v3662 = vadd.f32 0.0, %v3661
        %v3663 = vpop.f32.mrb[0].mxu0
        %3664 = vmatprep.mubr.bf16.mxu0 %v3540
        %3665 = vmatmul.mubr.bf16.gmra.mrb[0].mxu0 %v3426
        %v3666 = vpop.f32.mrb[0].mxu0
        %v3667 = vadd.f32 0.0, %v3666
        %v3668 = vpop.f32.mrb[0].mxu0
        %v3669 = vpop.f32.mrb[0].mxu0
        %v3670 = vadd.f32 0.0, %v3669
        %v3671 = vpop.f32.mrb[0].mxu0
        %3672 = vmatprep.mubr.bf16.mxu0 %v3543
        %3673 = vmatmul.mubr.bf16.gmra.mrb[0].mxu0 %v3428
        %v3674 = vpop.f32.mrb[0].mxu0
        %v3675 = vadd.f32 0.0, %v3674
        %v3676 = vpop.f32.mrb[0].mxu0
        %v3677 = vpop.f32.mrb[0].mxu0
        %v3678 = vadd.f32 0.0, %v3677
        %v3679 = vpop.f32.mrb[0].mxu0
        %3680 = vmatprep.mubr.bf16.mxu0 %v3546
        %3681 = vmatmul.mubr.bf16.gmra.mrb[0].mxu0 %v3430
        %v3682 = vpop.f32.mrb[0].mxu0
        %v3683 = vadd.f32 0.0, %v3682
        %v3684 = vpop.f32.mrb[0].mxu0
        %v3685 = vpop.f32.mrb[0].mxu0
        %v3686 = vadd.f32 0.0, %v3685
        %v3687 = vpop.f32.mrb[0].mxu0
        %3688 = vmatprep.mubr.bf16.mxu0 %v3549
        %3689 = vmatmul.mubr.bf16.gmra.mrb[0].mxu0 %v3432
        %v3690 = vpop.f32.mrb[0].mxu0
        %v3691 = vadd.f32 0.0, %v3690
        %v3692 = vpop.f32.mrb[0].mxu0
        %v3693 = vpop.f32.mrb[0].mxu0
        %v3694 = vadd.f32 0.0, %v3693
        %v3695 = vpop.f32.mrb[0].mxu0
        %3696 = vmatprep.mubr.bf16.mxu0 %v3552
        %3697 = vmatmul.mubr.bf16.gmra.mrb[0].mxu0 %v3434
        %v3698 = vpop.f32.mrb[0].mxu0
        %v3699 = vadd.f32 0.0, %v3698
        %v3700 = vpop.f32.mrb[0].mxu0
        %v3701 = vpop.f32.mrb[0].mxu0
        %v3702 = vadd.f32 0.0, %v3701
        %v3703 = vpop.f32.mrb[0].mxu0
        %3704 = vmatprep.mubr.bf16.mxu0 %v3555
        %3705 = vmatmul.mubr.bf16.gmra.mrb[0].mxu0 %v3436
        %v3706 = vpop.f32.mrb[0].mxu0
        %v3707 = vadd.f32 0.0, %v3706
        %v3708 = vpop.f32.mrb[0].mxu0
        %v3709 = vpop.f32.mrb[0].mxu0
        %v3710 = vadd.f32 0.0, %v3709
        %v3711 = vpop.f32.mrb[0].mxu0
        %3712 = vmatprep.mubr.bf16.mxu0 %v3558
        %3713 = vmatmul.mubr.bf16.gmra.mrb[0].mxu0 %v3438
        %v3714 = vpop.f32.mrb[0].mxu0
        %v3715 = vadd.f32 0.0, %v3714
        %v3716 = vpop.f32.mrb[0].mxu0
        %v3717 = vpop.f32.mrb[0].mxu0
        %v3718 = vadd.f32 0.0, %v3717
        %v3719 = vpop.f32.mrb[0].mxu0
        %3720 = vdwg.mxu0
        %3753 = vrot.lane.b32.xlu0 %v3595, 4
        %v3754 = vpop.permute.xlu0 %3753
        %3755 = vrot.lane.b32.xlu0 %v3598, 4
        %v3756 = vpop.permute.xlu0 %3755
        %3757 = vrot.lane.b32.xlu0 %v3603, 4
        %v3758 = vpop.permute.xlu0 %3757
        %3759 = vrot.lane.b32.xlu0 %v3606, 4
        %v3760 = vpop.permute.xlu0 %3759
        %3761 = vrot.lane.b32.xlu0 %v3611, 4
        %v3762 = vpop.permute.xlu0 %3761
        %3763 = vrot.lane.b32.xlu0 %v3614, 4
        %v3764 = vpop.permute.xlu0 %3763
        %3765 = vrot.lane.b32.xlu0 %v3619, 4
        %v3766 = vpop.permute.xlu0 %3765
        %3767 = vrot.lane.b32.xlu0 %v3622, 4
        %v3768 = vpop.permute.xlu0 %3767
        %3769 = vrot.lane.b32.xlu0 %v3627, 4
        %v3770 = vpop.permute.xlu0 %3769
        %3771 = vrot.lane.b32.xlu0 %v3630, 4
        %v3772 = vpop.permute.xlu0 %3771
        %3773 = vrot.lane.b32.xlu0 %v3635, 4
        %v3774 = vpop.permute.xlu0 %3773
        %3775 = vrot.lane.b32.xlu0 %v3638, 4
        %v3776 = vpop.permute.xlu0 %3775
        %3777 = vrot.lane.b32.xlu0 %v3643, 4
        %v3778 = vpop.permute.xlu0 %3777
        %3779 = vrot.lane.b32.xlu0 %v3646, 4
        %v3780 = vpop.permute.xlu0 %3779
        %3781 = vrot.lane.b32.xlu0 %v3651, 4
        %v3782 = vpop.permute.xlu0 %3781
        %3783 = vrot.lane.b32.xlu0 %v3654, 4
        %v3784 = vpop.permute.xlu0 %3783
        %3785 = vrot.lane.b32.xlu0 %v3659, 4
        %v3786 = vpop.permute.xlu0 %3785
        %3787 = vrot.lane.b32.xlu0 %v3662, 4
        %v3788 = vpop.permute.xlu0 %3787
        %3789 = vrot.lane.b32.xlu0 %v3667, 4
        %v3790 = vpop.permute.xlu0 %3789
        %3791 = vrot.lane.b32.xlu0 %v3670, 4
        %v3792 = vpop.permute.xlu0 %3791
        %3793 = vrot.lane.b32.xlu0 %v3675, 4
        %v3794 = vpop.permute.xlu0 %3793
        %3795 = vrot.lane.b32.xlu0 %v3678, 4
        %v3796 = vpop.permute.xlu0 %3795
        %3797 = vrot.lane.b32.xlu0 %v3683, 4
        %v3798 = vpop.permute.xlu0 %3797
        %3799 = vrot.lane.b32.xlu0 %v3686, 4
        %v3800 = vpop.permute.xlu0 %3799
        %3801 = vrot.lane.b32.xlu0 %v3691, 4
        %v3802 = vpop.permute.xlu0 %3801
        %3803 = vrot.lane.b32.xlu0 %v3694, 4
        %v3804 = vpop.permute.xlu0 %3803
        %3805 = vrot.lane.b32.xlu0 %v3699, 4
        %v3806 = vpop.permute.xlu0 %3805
        %3807 = vrot.lane.b32.xlu0 %v3702, 4
        %v3808 = vpop.permute.xlu0 %3807
        %3809 = vrot.lane.b32.xlu0 %v3707, 4
        %v3810 = vpop.permute.xlu0 %3809
        %3811 = vrot.lane.b32.xlu0 %v3710, 4
        %v3812 = vpop.permute.xlu0 %3811
        %3813 = vrot.lane.b32.xlu0 %v3715, 4
        %v3814 = vpop.permute.xlu0 %3813
        %3815 = vrot.lane.b32.xlu0 %v3718, 4
        %v3816 = vpop.permute.xlu0 %3815
        %vm3849 = vcmask 64544
        %3850 = vst.msk [vmem:[#allocation2] sm:$0xff] %vm3849, %v3754
        %3851 = vst.msk [vmem:[#allocation2 + $0x8] sm:$0xff] %vm3849, %v3756
        %3852 = vst.msk [vmem:[#allocation2 + $0x10] sm:$0xff] %vm3849, %v3758
        %3853 = vst.msk [vmem:[#allocation2 + $0x18] sm:$0xff] %vm3849, %v3760
        %3854 = vst.msk [vmem:[#allocation2 + $0x20] sm:$0xff] %vm3849, %v3762
        %3855 = vst.msk [vmem:[#allocation2 + $0x28] sm:$0xff] %vm3849, %v3764
        %3856 = vst.msk [vmem:[#allocation2 + $0x30] sm:$0xff] %vm3849, %v3766
        %3857 = vst.msk [vmem:[#allocation2 + $0x38] sm:$0xff] %vm3849, %v3768
        %3858 = vst.msk [vmem:[#allocation2 + $0x40] sm:$0xff] %vm3849, %v3770
        %3859 = vst.msk [vmem:[#allocation2 + $0x48] sm:$0xff] %vm3849, %v3772
        %3860 = vst.msk [vmem:[#allocation2 + $0x50] sm:$0xff] %vm3849, %v3774
        %3861 = vst.msk [vmem:[#allocation2 + $0x58] sm:$0xff] %vm3849, %v3776
        %3862 = vst.msk [vmem:[#allocation2 + $0x60] sm:$0xff] %vm3849, %v3778
        %3863 = vst.msk [vmem:[#allocation2 + $0x68] sm:$0xff] %vm3849, %v3780
        %3864 = vst.msk [vmem:[#allocation2 + $0x70] sm:$0xff] %vm3849, %v3782
        %3865 = vst.msk [vmem:[#allocation2 + $0x78] sm:$0xff] %vm3849, %v3784
        %3866 = vst.msk [vmem:[#allocation2 + $0x80] sm:$0xff] %vm3849, %v3786
        %3867 = vst.msk [vmem:[#allocation2 + $0x88] sm:$0xff] %vm3849, %v3788
        %3868 = vst.msk [vmem:[#allocation2 + $0x90] sm:$0xff] %vm3849, %v3790
        %3869 = vst.msk [vmem:[#allocation2 + $0x98] sm:$0xff] %vm3849, %v3792
        %3870 = vst.msk [vmem:[#allocation2 + $0xa0] sm:$0xff] %vm3849, %v3794
        %3871 = vst.msk [vmem:[#allocation2 + $0xa8] sm:$0xff] %vm3849, %v3796
        %3872 = vst.msk [vmem:[#allocation2 + $0xb0] sm:$0xff] %vm3849, %v3798
        %3873 = vst.msk [vmem:[#allocation2 + $0xb8] sm:$0xff] %vm3849, %v3800
        %3874 = vst.msk [vmem:[#allocation2 + $0xc0] sm:$0xff] %vm3849, %v3802
        %3875 = vst.msk [vmem:[#allocation2 + $0xc8] sm:$0xff] %vm3849, %v3804
        %3876 = vst.msk [vmem:[#allocation2 + $0xd0] sm:$0xff] %vm3849, %v3806
        %3877 = vst.msk [vmem:[#allocation2 + $0xd8] sm:$0xff] %vm3849, %v3808
        %3878 = vst.msk [vmem:[#allocation2 + $0xe0] sm:$0xff] %vm3849, %v3810
        %3879 = vst.msk [vmem:[#allocation2 + $0xe8] sm:$0xff] %vm3849, %v3812
        %3880 = vst.msk [vmem:[#allocation2 + $0xf0] sm:$0xff] %vm3849, %v3814
        %3881 = vst.msk [vmem:[#allocation2 + $0xf8] sm:$0xff] %vm3849, %v3816
        %v3882 = vld [vmem:[#allocation2] sm:$0xff]
        %v3883 = vld [vmem:[#allocation2 + $0x8] sm:$0xff]
        %v3884 = vld [vmem:[#allocation2 + $0x10] sm:$0xff]
        %v3885 = vld [vmem:[#allocation2 + $0x18] sm:$0xff]
        %v3886 = vld [vmem:[#allocation2 + $0x20] sm:$0xff]
        %v3887 = vld [vmem:[#allocation2 + $0x28] sm:$0xff]
        %v3888 = vld [vmem:[#allocation2 + $0x30] sm:$0xff]
        %v3889 = vld [vmem:[#allocation2 + $0x38] sm:$0xff]
        %v3890 = vld [vmem:[#allocation2 + $0x40] sm:$0xff]
        %v3891 = vld [vmem:[#allocation2 + $0x48] sm:$0xff]
        %v3892 = vld [vmem:[#allocation2 + $0x50] sm:$0xff]
        %v3893 = vld [vmem:[#allocation2 + $0x58] sm:$0xff]
        %v3894 = vld [vmem:[#allocation2 + $0x60] sm:$0xff]
        %v3895 = vld [vmem:[#allocation2 + $0x68] sm:$0xff]
        %v3896 = vld [vmem:[#allocation2 + $0x70] sm:$0xff]
        %v3897 = vld [vmem:[#allocation2 + $0x78] sm:$0xff]
        %v3898 = vld [vmem:[#allocation2 + $0x80] sm:$0xff]
        %v3899 = vld [vmem:[#allocation2 + $0x88] sm:$0xff]
        %v3900 = vld [vmem:[#allocation2 + $0x90] sm:$0xff]
        %v3901 = vld [vmem:[#allocation2 + $0x98] sm:$0xff]
        %v3902 = vld [vmem:[#allocation2 + $0xa0] sm:$0xff]
        %v3903 = vld [vmem:[#allocation2 + $0xa8] sm:$0xff]
        %v3904 = vld [vmem:[#allocation2 + $0xb0] sm:$0xff]
        %v3905 = vld [vmem:[#allocation2 + $0xb8] sm:$0xff]
        %v3906 = vld [vmem:[#allocation2 + $0xc0] sm:$0xff]
        %v3907 = vld [vmem:[#allocation2 + $0xc8] sm:$0xff]
        %v3908 = vld [vmem:[#allocation2 + $0xd0] sm:$0xff]
        %v3909 = vld [vmem:[#allocation2 + $0xd8] sm:$0xff]
        %v3910 = vld [vmem:[#allocation2 + $0xe0] sm:$0xff]
        %v3911 = vld [vmem:[#allocation2 + $0xe8] sm:$0xff]
        %v3912 = vld [vmem:[#allocation2 + $0xf0] sm:$0xff]
        %v3913 = vld [vmem:[#allocation2 + $0xf8] sm:$0xff]
        %v3914 = vld [vmem:[%s15] sm:$0x1]
        %v3916 = vlaneseq
        %v3917 = vshrl.u32 %v3916, 7
        %v3918 = vsub.s32 0, %v3917
        %v3919 = vrot.slane %v3914, %v3918
        %v3921 = vmul.f32 %v3882, %v3919
        %v3922 = vmul.f32 %v3883, %v3919
        %v3923 = vmul.f32 %v3884, %v3919
        %v3924 = vmul.f32 %v3885, %v3919
        %v3925 = vmul.f32 %v3886, %v3919
        %v3926 = vmul.f32 %v3887, %v3919
        %v3927 = vmul.f32 %v3888, %v3919
        %v3928 = vmul.f32 %v3889, %v3919
        %v3929 = vmul.f32 %v3890, %v3919
        %v3930 = vmul.f32 %v3891, %v3919
        %v3931 = vmul.f32 %v3892, %v3919
        %v3932 = vmul.f32 %v3893, %v3919
        %v3933 = vmul.f32 %v3894, %v3919
        %v3934 = vmul.f32 %v3895, %v3919
        %v3935 = vmul.f32 %v3896, %v3919
        %v3936 = vmul.f32 %v3897, %v3919
        %v3937 = vmul.f32 %v3898, %v3919
        %v3938 = vmul.f32 %v3899, %v3919
        %v3939 = vmul.f32 %v3900, %v3919
        %v3940 = vmul.f32 %v3901, %v3919
        %v3941 = vmul.f32 %v3902, %v3919
        %v3942 = vmul.f32 %v3903, %v3919
        %v3943 = vmul.f32 %v3904, %v3919
        %v3944 = vmul.f32 %v3905, %v3919
        %v3945 = vmul.f32 %v3906, %v3919
        %v3946 = vmul.f32 %v3907, %v3919
        %v3947 = vmul.f32 %v3908, %v3919
        %v3948 = vmul.f32 %v3909, %v3919
        %v3949 = vmul.f32 %v3910, %v3919
        %v3950 = vmul.f32 %v3911, %v3919
        %v3951 = vmul.f32 %v3912, %v3919
        %v3952 = vmul.f32 %v3913, %v3919
        %v3953 = vld [vmem:[%s17] sm:$0x1]
        %v3955 = vlaneseq
        %v3956 = vshrl.u32 %v3955, 7
        %v3957 = vsub.s32 0, %v3956
        %v3958 = vrot.slane %v3953, %v3957
        %v3960 = vadd.f32 %v3921, %v3958
        %v3961 = vadd.f32 %v3922, %v3958
        %v3962 = vadd.f32 %v3923, %v3958
        %v3963 = vadd.f32 %v3924, %v3958
        %v3964 = vadd.f32 %v3925, %v3958
        %v3965 = vadd.f32 %v3926, %v3958
        %v3966 = vadd.f32 %v3927, %v3958
        %v3967 = vadd.f32 %v3928, %v3958
        %v3968 = vadd.f32 %v3929, %v3958
        %v3969 = vadd.f32 %v3930, %v3958
        %v3970 = vadd.f32 %v3931, %v3958
        %v3971 = vadd.f32 %v3932, %v3958
        %v3972 = vadd.f32 %v3933, %v3958
        %v3973 = vadd.f32 %v3934, %v3958
        %v3974 = vadd.f32 %v3935, %v3958
        %v3975 = vadd.f32 %v3936, %v3958
        %v3976 = vadd.f32 %v3937, %v3958
        %v3977 = vadd.f32 %v3938, %v3958
        %v3978 = vadd.f32 %v3939, %v3958
        %v3979 = vadd.f32 %v3940, %v3958
        %v3980 = vadd.f32 %v3941, %v3958
        %v3981 = vadd.f32 %v3942, %v3958
        %v3982 = vadd.f32 %v3943, %v3958
        %v3983 = vadd.f32 %v3944, %v3958
        %v3984 = vadd.f32 %v3945, %v3958
        %v3985 = vadd.f32 %v3946, %v3958
        %v3986 = vadd.f32 %v3947, %v3958
        %v3987 = vadd.f32 %v3948, %v3958
        %v3988 = vadd.f32 %v3949, %v3958
        %v3989 = vadd.f32 %v3950, %v3958
        %v3990 = vadd.f32 %v3951, %v3958
        %v3991 = vadd.f32 %v3952, %v3958
        %v3992 = vmax.f32 %v3960, 0.0
        %v3993 = vmax.f32 %v3961, 0.0
        %v3994 = vmax.f32 %v3962, 0.0
        %v3995 = vmax.f32 %v3963, 0.0
        %v3996 = vmax.f32 %v3964, 0.0
        %v3997 = vmax.f32 %v3965, 0.0
        %v3998 = vmax.f32 %v3966, 0.0
        %v3999 = vmax.f32 %v3967, 0.0
        %v4000 = vmax.f32 %v3968, 0.0
        %v4001 = vmax.f32 %v3969, 0.0
        %v4002 = vmax.f32 %v3970, 0.0
        %v4003 = vmax.f32 %v3971, 0.0
        %v4004 = vmax.f32 %v3972, 0.0
        %v4005 = vmax.f32 %v3973, 0.0
        %v4006 = vmax.f32 %v3974, 0.0
        %v4007 = vmax.f32 %v3975, 0.0
        %v4008 = vmax.f32 %v3976, 0.0
        %v4009 = vmax.f32 %v3977, 0.0
        %v4010 = vmax.f32 %v3978, 0.0
        %v4011 = vmax.f32 %v3979, 0.0
        %v4012 = vmax.f32 %v3980, 0.0
        %v4013 = vmax.f32 %v3981, 0.0
        %v4014 = vmax.f32 %v3982, 0.0
        %v4015 = vmax.f32 %v3983, 0.0
        %v4016 = vmax.f32 %v3984, 0.0
        %v4017 = vmax.f32 %v3985, 0.0
        %v4018 = vmax.f32 %v3986, 0.0
        %v4019 = vmax.f32 %v3987, 0.0
        %v4020 = vmax.f32 %v3988, 0.0
        %v4021 = vmax.f32 %v3989, 0.0
        %v4022 = vmax.f32 %v3990, 0.0
        %v4023 = vmax.f32 %v3991, 0.0
        %v4024 = vpack.c.bf16 %v3993, %v3992
        %v4025 = vpack.c.bf16 %v3995, %v3994
        %v4026 = vpack.c.bf16 %v3997, %v3996
        %v4027 = vpack.c.bf16 %v3999, %v3998
        %v4028 = vpack.c.bf16 %v4001, %v4000
        %v4029 = vpack.c.bf16 %v4003, %v4002
        %v4030 = vpack.c.bf16 %v4005, %v4004
        %v4031 = vpack.c.bf16 %v4007, %v4006
        %v4032 = vpack.c.bf16 %v4009, %v4008
        %v4033 = vpack.c.bf16 %v4011, %v4010
        %v4034 = vpack.c.bf16 %v4013, %v4012
        %v4035 = vpack.c.bf16 %v4015, %v4014
        %v4036 = vpack.c.bf16 %v4017, %v4016
        %v4037 = vpack.c.bf16 %v4019, %v4018
        %v4038 = vpack.c.bf16 %v4021, %v4020
        %v4039 = vpack.c.bf16 %v4023, %v4022
        %v4040 = vld [vmem:[%s19] sm:$0xf]
        %vm4041 = vcmask 64512
        %v4043 = vsel %vm4041, %v4024, 0
        %v4046 = vsel %vm4041, %v4025, 0
        %v4049 = vsel %vm4041, %v4026, 0
        %v4052 = vsel %vm4041, %v4027, 0
        %v4055 = vsel %vm4041, %v4028, 0
        %v4058 = vsel %vm4041, %v4029, 0
        %v4061 = vsel %vm4041, %v4030, 0
        %v4064 = vsel %vm4041, %v4031, 0
        %v4067 = vsel %vm4041, %v4032, 0
        %v4070 = vsel %vm4041, %v4033, 0
        %v4073 = vsel %vm4041, %v4034, 0
        %v4076 = vsel %vm4041, %v4035, 0
        %v4079 = vsel %vm4041, %v4036, 0
        %v4082 = vsel %vm4041, %v4037, 0
        %v4085 = vsel %vm4041, %v4038, 0
        %v4088 = vsel %vm4041, %v4039, 0
        %vm4090 = vcmask 1043456
        %v4092 = vsel %vm4090, %v4040, 0
        %4094 = vmatprep.subr.bf16.mxu0 0
        %4095 = vmatpush1.bf16.msra.mxu0 %v4092
        %4096 = vmatprep.subr.bf16.mxu0 0
        %4097 = vmatpush1.bf16.msra.mxu0 0
        %4098 = vmatprep.subr.bf16.mxu0 0
        %4099 = vmatpush1.bf16.msra.mxu0 0
        %4100 = vmatprep.subr.bf16.mxu0 0
        %4101 = vmatpush1.bf16.msra.mxu0 0
        %4102 = vmatprep.subr.bf16.mxu0 0
        %4103 = vmatpush1.bf16.msra.mxu0 0
        %4104 = vmatprep.subr.bf16.mxu0 0
        %4105 = vmatpush1.bf16.msra.mxu0 0
        %4106 = vmatprep.subr.bf16.mxu0 0
        %4107 = vmatpush1.bf16.msra.mxu0 0
        %4108 = vmatprep.subr.bf16.mxu0 0
        %4109 = vmatpush1.bf16.msra.mxu0 0
        %4110 = vmatprep.subr.bf16.mxu0 0
        %4111 = vmatpush1.bf16.msra.mxu0 0
        %4112 = vmatprep.subr.bf16.mxu0 0
        %4113 = vmatpush1.bf16.msra.mxu0 0
        %4114 = vmatprep.subr.bf16.mxu0 0
        %4115 = vmatpush1.bf16.msra.mxu0 0
        %4116 = vmatprep.subr.bf16.mxu0 0
        %4117 = vmatpush1.bf16.msra.mxu0 0
        %4118 = vmatprep.subr.bf16.mxu0 0
        %4119 = vmatpush1.bf16.msra.mxu0 0
        %4120 = vmatprep.subr.bf16.mxu0 0
        %4121 = vmatpush1.bf16.msra.mxu0 0
        %4122 = vmatprep.subr.bf16.mxu0 0
        %4123 = vmatpush1.bf16.msra.mxu0 0
        %4124 = vmatprep.subr.bf16.mxu0 0
        %4125 = vmatpush1.bf16.msra.mxu0 0
        %4126 = vmatprep.mubr.bf16.mxu0 0
        %4127 = vmatmul.mubr.bf16.gmra.mrb[0].mxu0 %v4043
        %v4128 = vpop.f32.mrb[0].mxu0
        %v4129 = vadd.f32 0.0, %v4128
        %v4130 = vpop.f32.mrb[0].mxu0
        %v4131 = vpop.f32.mrb[0].mxu0
        %v4132 = vadd.f32 0.0, %v4131
        %v4133 = vpop.f32.mrb[0].mxu0
        %4134 = vmatprep.mubr.bf16.mxu0 0
        %4135 = vmatmul.mubr.bf16.gmra.mrb[0].mxu0 %v4046
        %v4136 = vpop.f32.mrb[0].mxu0
        %v4137 = vadd.f32 0.0, %v4136
        %v4138 = vpop.f32.mrb[0].mxu0
        %v4139 = vpop.f32.mrb[0].mxu0
        %v4140 = vadd.f32 0.0, %v4139
        %v4141 = vpop.f32.mrb[0].mxu0
        %4142 = vmatprep.mubr.bf16.mxu0 0
        %4143 = vmatmul.mubr.bf16.gmra.mrb[0].mxu0 %v4049
        %v4144 = vpop.f32.mrb[0].mxu0
        %v4145 = vadd.f32 0.0, %v4144
        %v4146 = vpop.f32.mrb[0].mxu0
        %v4147 = vpop.f32.mrb[0].mxu0
        %v4148 = vadd.f32 0.0, %v4147
        %v4149 = vpop.f32.mrb[0].mxu0
        %4150 = vmatprep.mubr.bf16.mxu0 0
        %4151 = vmatmul.mubr.bf16.gmra.mrb[0].mxu0 %v4052
        %v4152 = vpop.f32.mrb[0].mxu0
        %v4153 = vadd.f32 0.0, %v4152
        %v4154 = vpop.f32.mrb[0].mxu0
        %v4155 = vpop.f32.mrb[0].mxu0
        %v4156 = vadd.f32 0.0, %v4155
        %v4157 = vpop.f32.mrb[0].mxu0
        %4158 = vmatprep.mubr.bf16.mxu0 0
        %4159 = vmatmul.mubr.bf16.gmra.mrb[0].mxu0 %v4055
        %v4160 = vpop.f32.mrb[0].mxu0
        %v4161 = vadd.f32 0.0, %v4160
        %v4162 = vpop.f32.mrb[0].mxu0
        %v4163 = vpop.f32.mrb[0].mxu0
        %v4164 = vadd.f32 0.0, %v4163
        %v4165 = vpop.f32.mrb[0].mxu0
        %4166 = vmatprep.mubr.bf16.mxu0 0
        %4167 = vmatmul.mubr.bf16.gmra.mrb[0].mxu0 %v4058
        %v4168 = vpop.f32.mrb[0].mxu0
        %v4169 = vadd.f32 0.0, %v4168
        %v4170 = vpop.f32.mrb[0].mxu0
        %v4171 = vpop.f32.mrb[0].mxu0
        %v4172 = vadd.f32 0.0, %v4171
        %v4173 = vpop.f32.mrb[0].mxu0
        %4174 = vmatprep.mubr.bf16.mxu0 0
        %4175 = vmatmul.mubr.bf16.gmra.mrb[0].mxu0 %v4061
        %v4176 = vpop.f32.mrb[0].mxu0
        %v4177 = vadd.f32 0.0, %v4176
        %v4178 = vpop.f32.mrb[0].mxu0
        %v4179 = vpop.f32.mrb[0].mxu0
        %v4180 = vadd.f32 0.0, %v4179
        %v4181 = vpop.f32.mrb[0].mxu0
        %4182 = vmatprep.mubr.bf16.mxu0 0
        %4183 = vmatmul.mubr.bf16.gmra.mrb[0].mxu0 %v4064
        %v4184 = vpop.f32.mrb[0].mxu0
        %v4185 = vadd.f32 0.0, %v4184
        %v4186 = vpop.f32.mrb[0].mxu0
        %v4187 = vpop.f32.mrb[0].mxu0
        %v4188 = vadd.f32 0.0, %v4187
        %v4189 = vpop.f32.mrb[0].mxu0
        %4190 = vmatprep.mubr.bf16.mxu0 0
        %4191 = vmatmul.mubr.bf16.gmra.mrb[0].mxu0 %v4067
        %v4192 = vpop.f32.mrb[0].mxu0
        %v4193 = vadd.f32 0.0, %v4192
        %v4194 = vpop.f32.mrb[0].mxu0
        %v4195 = vpop.f32.mrb[0].mxu0
        %v4196 = vadd.f32 0.0, %v4195
        %v4197 = vpop.f32.mrb[0].mxu0
        %4198 = vmatprep.mubr.bf16.mxu0 0
        %4199 = vmatmul.mubr.bf16.gmra.mrb[0].mxu0 %v4070
        %v4200 = vpop.f32.mrb[0].mxu0
        %v4201 = vadd.f32 0.0, %v4200
        %v4202 = vpop.f32.mrb[0].mxu0
        %v4203 = vpop.f32.mrb[0].mxu0
        %v4204 = vadd.f32 0.0, %v4203
        %v4205 = vpop.f32.mrb[0].mxu0
        %4206 = vmatprep.mubr.bf16.mxu0 0
        %4207 = vmatmul.mubr.bf16.gmra.mrb[0].mxu0 %v4073
        %v4208 = vpop.f32.mrb[0].mxu0
        %v4209 = vadd.f32 0.0, %v4208
        %v4210 = vpop.f32.mrb[0].mxu0
        %v4211 = vpop.f32.mrb[0].mxu0
        %v4212 = vadd.f32 0.0, %v4211
        %v4213 = vpop.f32.mrb[0].mxu0
        %4214 = vmatprep.mubr.bf16.mxu0 0
        %4215 = vmatmul.mubr.bf16.gmra.mrb[0].mxu0 %v4076
        %v4216 = vpop.f32.mrb[0].mxu0
        %v4217 = vadd.f32 0.0, %v4216
        %v4218 = vpop.f32.mrb[0].mxu0
        %v4219 = vpop.f32.mrb[0].mxu0
        %v4220 = vadd.f32 0.0, %v4219
        %v4221 = vpop.f32.mrb[0].mxu0
        %4222 = vmatprep.mubr.bf16.mxu0 0
        %4223 = vmatmul.mubr.bf16.gmra.mrb[0].mxu0 %v4079
        %v4224 = vpop.f32.mrb[0].mxu0
        %v4225 = vadd.f32 0.0, %v4224
        %v4226 = vpop.f32.mrb[0].mxu0
        %v4227 = vpop.f32.mrb[0].mxu0
        %v4228 = vadd.f32 0.0, %v4227
        %v4229 = vpop.f32.mrb[0].mxu0
        %4230 = vmatprep.mubr.bf16.mxu0 0
        %4231 = vmatmul.mubr.bf16.gmra.mrb[0].mxu0 %v4082
        %v4232 = vpop.f32.mrb[0].mxu0
        %v4233 = vadd.f32 0.0, %v4232
        %v4234 = vpop.f32.mrb[0].mxu0
        %v4235 = vpop.f32.mrb[0].mxu0
        %v4236 = vadd.f32 0.0, %v4235
        %v4237 = vpop.f32.mrb[0].mxu0
        %4238 = vmatprep.mubr.bf16.mxu0 0
        %4239 = vmatmul.mubr.bf16.gmra.mrb[0].mxu0 %v4085
        %v4240 = vpop.f32.mrb[0].mxu0
        %v4241 = vadd.f32 0.0, %v4240
        %v4242 = vpop.f32.mrb[0].mxu0
        %v4243 = vpop.f32.mrb[0].mxu0
        %v4244 = vadd.f32 0.0, %v4243
        %v4245 = vpop.f32.mrb[0].mxu0
        %4246 = vmatprep.mubr.bf16.mxu0 0
        %4247 = vmatmul.mubr.bf16.gmra.mrb[0].mxu0 %v4088
        %v4248 = vpop.f32.mrb[0].mxu0
        %v4249 = vadd.f32 0.0, %v4248
        %v4250 = vpop.f32.mrb[0].mxu0
        %v4251 = vpop.f32.mrb[0].mxu0
        %v4252 = vadd.f32 0.0, %v4251
        %v4253 = vpop.f32.mrb[0].mxu0
        %4254 = vdwg.mxu0
        %v4255 = vld [vmem:[%s21] sm:$0x1]
        %v4257 = vlaneseq
        %v4258 = vshrl.u32 %v4257, 7
        %v4259 = vsub.s32 0, %v4258
        %v4260 = vrot.slane %v4255, %v4259
        %v4262 = vmul.f32 %v4129, %v4260
        %v4263 = vmul.f32 %v4132, %v4260
        %v4264 = vmul.f32 %v4137, %v4260
        %v4265 = vmul.f32 %v4140, %v4260
        %v4266 = vmul.f32 %v4145, %v4260
        %v4267 = vmul.f32 %v4148, %v4260
        %v4268 = vmul.f32 %v4153, %v4260
        %v4269 = vmul.f32 %v4156, %v4260
        %v4270 = vmul.f32 %v4161, %v4260
        %v4271 = vmul.f32 %v4164, %v4260
        %v4272 = vmul.f32 %v4169, %v4260
        %v4273 = vmul.f32 %v4172, %v4260
        %v4274 = vmul.f32 %v4177, %v4260
        %v4275 = vmul.f32 %v4180, %v4260
        %v4276 = vmul.f32 %v4185, %v4260
        %v4277 = vmul.f32 %v4188, %v4260
        %v4278 = vmul.f32 %v4193, %v4260
        %v4279 = vmul.f32 %v4196, %v4260
        %v4280 = vmul.f32 %v4201, %v4260
        %v4281 = vmul.f32 %v4204, %v4260
        %v4282 = vmul.f32 %v4209, %v4260
        %v4283 = vmul.f32 %v4212, %v4260
        %v4284 = vmul.f32 %v4217, %v4260
        %v4285 = vmul.f32 %v4220, %v4260
        %v4286 = vmul.f32 %v4225, %v4260
        %v4287 = vmul.f32 %v4228, %v4260
        %v4288 = vmul.f32 %v4233, %v4260
        %v4289 = vmul.f32 %v4236, %v4260
        %v4290 = vmul.f32 %v4241, %v4260
        %v4291 = vmul.f32 %v4244, %v4260
        %v4292 = vmul.f32 %v4249, %v4260
        %v4293 = vmul.f32 %v4252, %v4260
        %v4294 = vld [vmem:[%s23] sm:$0x1]
        %v4296 = vlaneseq
        %v4297 = vshrl.u32 %v4296, 7
        %v4298 = vsub.s32 0, %v4297
        %v4299 = vrot.slane %v4294, %v4298
        %v4301 = vadd.f32 %v4262, %v4299
        %v4302 = vadd.f32 %v4263, %v4299
        %v4303 = vadd.f32 %v4264, %v4299
        %v4304 = vadd.f32 %v4265, %v4299
        %v4305 = vadd.f32 %v4266, %v4299
        %v4306 = vadd.f32 %v4267, %v4299
        %v4307 = vadd.f32 %v4268, %v4299
        %v4308 = vadd.f32 %v4269, %v4299
        %v4309 = vadd.f32 %v4270, %v4299
        %v4310 = vadd.f32 %v4271, %v4299
        %v4311 = vadd.f32 %v4272, %v4299
        %v4312 = vadd.f32 %v4273, %v4299
        %v4313 = vadd.f32 %v4274, %v4299
        %v4314 = vadd.f32 %v4275, %v4299
        %v4315 = vadd.f32 %v4276, %v4299
        %v4316 = vadd.f32 %v4277, %v4299
        %v4317 = vadd.f32 %v4278, %v4299
        %v4318 = vadd.f32 %v4279, %v4299
        %v4319 = vadd.f32 %v4280, %v4299
        %v4320 = vadd.f32 %v4281, %v4299
        %v4321 = vadd.f32 %v4282, %v4299
        %v4322 = vadd.f32 %v4283, %v4299
        %v4323 = vadd.f32 %v4284, %v4299
        %v4324 = vadd.f32 %v4285, %v4299
        %v4325 = vadd.f32 %v4286, %v4299
        %v4326 = vadd.f32 %v4287, %v4299
        %v4327 = vadd.f32 %v4288, %v4299
        %v4328 = vadd.f32 %v4289, %v4299
        %v4329 = vadd.f32 %v4290, %v4299
        %v4330 = vadd.f32 %v4291, %v4299
        %v4331 = vadd.f32 %v4292, %v4299
        %v4332 = vadd.f32 %v4293, %v4299
        %v4333 = vmax.f32 %v4301, 0.0
        %v4334 = vmax.f32 %v4302, 0.0
        %v4335 = vmax.f32 %v4303, 0.0
        %v4336 = vmax.f32 %v4304, 0.0
        %v4337 = vmax.f32 %v4305, 0.0
        %v4338 = vmax.f32 %v4306, 0.0
        %v4339 = vmax.f32 %v4307, 0.0
        %v4340 = vmax.f32 %v4308, 0.0
        %v4341 = vmax.f32 %v4309, 0.0
        %v4342 = vmax.f32 %v4310, 0.0
        %v4343 = vmax.f32 %v4311, 0.0
        %v4344 = vmax.f32 %v4312, 0.0
        %v4345 = vmax.f32 %v4313, 0.0
        %v4346 = vmax.f32 %v4314, 0.0
        %v4347 = vmax.f32 %v4315, 0.0
        %v4348 = vmax.f32 %v4316, 0.0
        %v4349 = vmax.f32 %v4317, 0.0
        %v4350 = vmax.f32 %v4318, 0.0
        %v4351 = vmax.f32 %v4319, 0.0
        %v4352 = vmax.f32 %v4320, 0.0
        %v4353 = vmax.f32 %v4321, 0.0
        %v4354 = vmax.f32 %v4322, 0.0
        %v4355 = vmax.f32 %v4323, 0.0
        %v4356 = vmax.f32 %v4324, 0.0
        %v4357 = vmax.f32 %v4325, 0.0
        %v4358 = vmax.f32 %v4326, 0.0
        %v4359 = vmax.f32 %v4327, 0.0
        %v4360 = vmax.f32 %v4328, 0.0
        %v4361 = vmax.f32 %v4329, 0.0
        %v4362 = vmax.f32 %v4330, 0.0
        %v4363 = vmax.f32 %v4331, 0.0
        %v4364 = vmax.f32 %v4332, 0.0
        %4365 = vst.msk [vmem:[%s1831 + $0x8] sm:$0xff] %vm1242, %v4333
        %4366 = vst.msk [vmem:[%s1831 + $0x10] sm:$0xff] %vm1242, %v4334
        %4367 = vst.msk [vmem:[%s1831 + $0x28] sm:$0xff] %vm1242, %v4335
        %4368 = vst.msk [vmem:[%s1831 + $0x30] sm:$0xff] %vm1242, %v4336
        %4369 = vst.msk [vmem:[%s1831 + $0x48] sm:$0xff] %vm1242, %v4337
        %4370 = vst.msk [vmem:[%s1831 + $0x50] sm:$0xff] %vm1242, %v4338
        %4371 = vst.msk [vmem:[%s1831 + $0x68] sm:$0xff] %vm1242, %v4339
        %4372 = vst.msk [vmem:[%s1831 + $0x70] sm:$0xff] %vm1242, %v4340
        %4373 = vst.msk [vmem:[%s1831 + $0x88] sm:$0xff] %vm1242, %v4341
        %4374 = vst.msk [vmem:[%s1831 + $0x90] sm:$0xff] %vm1242, %v4342
        %4375 = vst.msk [vmem:[%s1831 + $0xa8] sm:$0xff] %vm1242, %v4343
        %4376 = vst.msk [vmem:[%s1831 + $0xb0] sm:$0xff] %vm1242, %v4344
        %4377 = vst.msk [vmem:[%s1831 + $0xc8] sm:$0xff] %vm1242, %v4345
        %4378 = vst.msk [vmem:[%s1831 + $0xd0] sm:$0xff] %vm1242, %v4346
        %4379 = vst.msk [vmem:[%s1831 + $0xe8] sm:$0xff] %vm1242, %v4347
        %4380 = vst.msk [vmem:[%s1831 + $0xf0] sm:$0xff] %vm1242, %v4348
        %4381 = vst.msk [vmem:[%s1831 + $0x108] sm:$0xff] %vm1242, %v4349
        %4382 = vst.msk [vmem:[%s1831 + $0x110] sm:$0xff] %vm1242, %v4350
        %4383 = vst.msk [vmem:[%s1831 + $0x128] sm:$0xff] %vm1242, %v4351
        %4384 = vst.msk [vmem:[%s1831 + $0x130] sm:$0xff] %vm1242, %v4352
        %4385 = vst.msk [vmem:[%s1831 + $0x148] sm:$0xff] %vm1242, %v4353
        %4386 = vst.msk [vmem:[%s1831 + $0x150] sm:$0xff] %vm1242, %v4354
        %4387 = vst.msk [vmem:[%s1831 + $0x168] sm:$0xff] %vm1242, %v4355
        %4388 = vst.msk [vmem:[%s1831 + $0x170] sm:$0xff] %vm1242, %v4356
        %4389 = vst.msk [vmem:[%s1831 + $0x188] sm:$0xff] %vm1242, %v4357
        %4390 = vst.msk [vmem:[%s1831 + $0x190] sm:$0xff] %vm1242, %v4358
        %4391 = vst.msk [vmem:[%s1831 + $0x1a8] sm:$0xff] %vm1242, %v4359
        %4392 = vst.msk [vmem:[%s1831 + $0x1b0] sm:$0xff] %vm1242, %v4360
        %4393 = vst.msk [vmem:[%s1831 + $0x1c8] sm:$0xff] %vm1242, %v4361
        %4394 = vst.msk [vmem:[%s1831 + $0x1d0] sm:$0xff] %vm1242, %v4362
        %4395 = vst.msk [vmem:[%s1831 + $0x1e8] sm:$0xff] %vm1242, %v4363
        %4396 = vst.msk [vmem:[%s1831 + $0x1f0] sm:$0xff] %vm1242, %v4364
        %v4397 = vld [vmem:[#allocation3 + $0x7] sm:$0xff]
        %v4398 = vld [vmem:[#allocation3 + $0xf] sm:$0xff]
        %v4399 = vld [vmem:[#allocation3 + $0x27] sm:$0xff]
        %v4400 = vld [vmem:[#allocation3 + $0x2f] sm:$0xff]
        %v4401 = vld [vmem:[#allocation3 + $0x47] sm:$0xff]
        %v4402 = vld [vmem:[#allocation3 + $0x4f] sm:$0xff]
        %v4403 = vld [vmem:[#allocation3 + $0x67] sm:$0xff]
        %v4404 = vld [vmem:[#allocation3 + $0x6f] sm:$0xff]
        %v4405 = vld [vmem:[#allocation3 + $0x87] sm:$0xff]
        %v4406 = vld [vmem:[#allocation3 + $0x8f] sm:$0xff]
        %v4407 = vld [vmem:[#allocation3 + $0xa7] sm:$0xff]
        %v4408 = vld [vmem:[#allocation3 + $0xaf] sm:$0xff]
        %v4409 = vld [vmem:[#allocation3 + $0xc7] sm:$0xff]
        %v4410 = vld [vmem:[#allocation3 + $0xcf] sm:$0xff]
        %v4411 = vld [vmem:[#allocation3 + $0xe7] sm:$0xff]
        %v4412 = vld [vmem:[#allocation3 + $0xef] sm:$0xff]
        %v4413 = vld [vmem:[#allocation3 + $0x107] sm:$0xff]
        %v4414 = vld [vmem:[#allocation3 + $0x10f] sm:$0xff]
        %v4415 = vld [vmem:[#allocation3 + $0x127] sm:$0xff]
        %v4416 = vld [vmem:[#allocation3 + $0x12f] sm:$0xff]
        %v4417 = vld [vmem:[#allocation3 + $0x147] sm:$0xff]
        %v4418 = vld [vmem:[#allocation3 + $0x14f] sm:$0xff]
        %v4419 = vld [vmem:[#allocation3 + $0x167] sm:$0xff]
        %v4420 = vld [vmem:[#allocation3 + $0x16f] sm:$0xff]
        %v4421 = vld [vmem:[#allocation3 + $0x187] sm:$0xff]
        %v4422 = vld [vmem:[#allocation3 + $0x18f] sm:$0xff]
        %v4423 = vld [vmem:[#allocation3 + $0x1a7] sm:$0xff]
        %v4424 = vld [vmem:[#allocation3 + $0x1af] sm:$0xff]
        %v4425 = vld [vmem:[#allocation3 + $0x1c7] sm:$0xff]
        %v4426 = vld [vmem:[#allocation3 + $0x1cf] sm:$0xff]
        %v4427 = vld [vmem:[#allocation3 + $0x1e7] sm:$0xff]
        %v4428 = vld [vmem:[#allocation3 + $0x1ef] sm:$0xff]
        %4429 = vst.msk [vmem:[#allocation4] sm:$0xff] %vm1242, %v4397
        %4430 = vst.msk [vmem:[#allocation4 + $0x10] sm:$0xff] %vm1242, %v4398
        %4431 = vst.msk [vmem:[#allocation4 + $0x20] sm:$0xff] %vm1242, %v4399
        %4432 = vst.msk [vmem:[#allocation4 + $0x30] sm:$0xff] %vm1242, %v4400
        %4433 = vst.msk [vmem:[#allocation4 + $0x40] sm:$0xff] %vm1242, %v4401
        %4434 = vst.msk [vmem:[#allocation4 + $0x50] sm:$0xff] %vm1242, %v4402
        %4435 = vst.msk [vmem:[#allocation4 + $0x60] sm:$0xff] %vm1242, %v4403
        %4436 = vst.msk [vmem:[#allocation4 + $0x70] sm:$0xff] %vm1242, %v4404
        %4437 = vst.msk [vmem:[#allocation4 + $0x80] sm:$0xff] %vm1242, %v4405
        %4438 = vst.msk [vmem:[#allocation4 + $0x90] sm:$0xff] %vm1242, %v4406
        %4439 = vst.msk [vmem:[#allocation4 + $0xa0] sm:$0xff] %vm1242, %v4407
        %4440 = vst.msk [vmem:[#allocation4 + $0xb0] sm:$0xff] %vm1242, %v4408
        %4441 = vst.msk [vmem:[#allocation4 + $0xc0] sm:$0xff] %vm1242, %v4409
        %4442 = vst.msk [vmem:[#allocation4 + $0xd0] sm:$0xff] %vm1242, %v4410
        %4443 = vst.msk [vmem:[#allocation4 + $0xe0] sm:$0xff] %vm1242, %v4411
        %4444 = vst.msk [vmem:[#allocation4 + $0xf0] sm:$0xff] %vm1242, %v4412
        %4445 = vst.msk [vmem:[#allocation4 + $0x100] sm:$0xff] %vm1242, %v4413
        %4446 = vst.msk [vmem:[#allocation4 + $0x110] sm:$0xff] %vm1242, %v4414
        %4447 = vst.msk [vmem:[#allocation4 + $0x120] sm:$0xff] %vm1242, %v4415
        %4448 = vst.msk [vmem:[#allocation4 + $0x130] sm:$0xff] %vm1242, %v4416
        %4449 = vst.msk [vmem:[#allocation4 + $0x140] sm:$0xff] %vm1242, %v4417
        %4450 = vst.msk [vmem:[#allocation4 + $0x150] sm:$0xff] %vm1242, %v4418
        %4451 = vst.msk [vmem:[#allocation4 + $0x160] sm:$0xff] %vm1242, %v4419
        %4452 = vst.msk [vmem:[#allocation4 + $0x170] sm:$0xff] %vm1242, %v4420
        %4453 = vst.msk [vmem:[#allocation4 + $0x180] sm:$0xff] %vm1242, %v4421
        %4454 = vst.msk [vmem:[#allocation4 + $0x190] sm:$0xff] %vm1242, %v4422
        %4455 = vst.msk [vmem:[#allocation4 + $0x1a0] sm:$0xff] %vm1242, %v4423
        %4456 = vst.msk [vmem:[#allocation4 + $0x1b0] sm:$0xff] %vm1242, %v4424
        %4457 = vst.msk [vmem:[#allocation4 + $0x1c0] sm:$0xff] %vm1242, %v4425
        %4458 = vst.msk [vmem:[#allocation4 + $0x1d0] sm:$0xff] %vm1242, %v4426
        %4459 = vst.msk [vmem:[#allocation4 + $0x1e0] sm:$0xff] %vm1242, %v4427
        %4460 = vst.msk [vmem:[#allocation4 + $0x1f0] sm:$0xff] %vm1242, %v4428
        %v4461 = vld [vmem:[#allocation3 + $0x8] sm:$0xff]
        %v4462 = vld [vmem:[#allocation3 + $0x10] sm:$0xff]
        %v4463 = vld [vmem:[#allocation3 + $0x28] sm:$0xff]
        %v4464 = vld [vmem:[#allocation3 + $0x30] sm:$0xff]
        %v4465 = vld [vmem:[#allocation3 + $0x48] sm:$0xff]
        %v4466 = vld [vmem:[#allocation3 + $0x50] sm:$0xff]
        %v4467 = vld [vmem:[#allocation3 + $0x68] sm:$0xff]
        %v4468 = vld [vmem:[#allocation3 + $0x70] sm:$0xff]
        %v4469 = vld [vmem:[#allocation3 + $0x88] sm:$0xff]
        %v4470 = vld [vmem:[#allocation3 + $0x90] sm:$0xff]
        %v4471 = vld [vmem:[#allocation3 + $0xa8] sm:$0xff]
        %v4472 = vld [vmem:[#allocation3 + $0xb0] sm:$0xff]
        %v4473 = vld [vmem:[#allocation3 + $0xc8] sm:$0xff]
        %v4474 = vld [vmem:[#allocation3 + $0xd0] sm:$0xff]
        %v4475 = vld [vmem:[#allocation3 + $0xe8] sm:$0xff]
        %v4476 = vld [vmem:[#allocation3 + $0xf0] sm:$0xff]
        %v4477 = vld [vmem:[#allocation3 + $0x108] sm:$0xff]
        %v4478 = vld [vmem:[#allocation3 + $0x110] sm:$0xff]
        %v4479 = vld [vmem:[#allocation3 + $0x128] sm:$0xff]
        %v4480 = vld [vmem:[#allocation3 + $0x130] sm:$0xff]
        %v4481 = vld [vmem:[#allocation3 + $0x148] sm:$0xff]
        %v4482 = vld [vmem:[#allocation3 + $0x150] sm:$0xff]
        %v4483 = vld [vmem:[#allocation3 + $0x168] sm:$0xff]
        %v4484 = vld [vmem:[#allocation3 + $0x170] sm:$0xff]
        %v4485 = vld [vmem:[#allocation3 + $0x188] sm:$0xff]
        %v4486 = vld [vmem:[#allocation3 + $0x190] sm:$0xff]
        %v4487 = vld [vmem:[#allocation3 + $0x1a8] sm:$0xff]
        %v4488 = vld [vmem:[#allocation3 + $0x1b0] sm:$0xff]
        %v4489 = vld [vmem:[#allocation3 + $0x1c8] sm:$0xff]
        %v4490 = vld [vmem:[#allocation3 + $0x1d0] sm:$0xff]
        %v4491 = vld [vmem:[#allocation3 + $0x1e8] sm:$0xff]
        %v4492 = vld [vmem:[#allocation3 + $0x1f0] sm:$0xff]
        %4525 = vrot.lane.b32.xlu0 %v4461, 16
        %v4526 = vpop.permute.xlu0 %4525
        %4527 = vrot.lane.b32.xlu0 %v4462, 16
        %v4528 = vpop.permute.xlu0 %4527
        %4529 = vrot.lane.b32.xlu0 %v4463, 16
        %v4530 = vpop.permute.xlu0 %4529
        %4531 = vrot.lane.b32.xlu0 %v4464, 16
        %v4532 = vpop.permute.xlu0 %4531
        %4533 = vrot.lane.b32.xlu0 %v4465, 16
        %v4534 = vpop.permute.xlu0 %4533
        %4535 = vrot.lane.b32.xlu0 %v4466, 16
        %v4536 = vpop.permute.xlu0 %4535
        %4537 = vrot.lane.b32.xlu0 %v4467, 16
        %v4538 = vpop.permute.xlu0 %4537
        %4539 = vrot.lane.b32.xlu0 %v4468, 16
        %v4540 = vpop.permute.xlu0 %4539
        %4541 = vrot.lane.b32.xlu0 %v4469, 16
        %v4542 = vpop.permute.xlu0 %4541
        %4543 = vrot.lane.b32.xlu0 %v4470, 16
        %v4544 = vpop.permute.xlu0 %4543
        %4545 = vrot.lane.b32.xlu0 %v4471, 16
        %v4546 = vpop.permute.xlu0 %4545
        %4547 = vrot.lane.b32.xlu0 %v4472, 16
        %v4548 = vpop.permute.xlu0 %4547
        %4549 = vrot.lane.b32.xlu0 %v4473, 16
        %v4550 = vpop.permute.xlu0 %4549
        %4551 = vrot.lane.b32.xlu0 %v4474, 16
        %v4552 = vpop.permute.xlu0 %4551
        %4553 = vrot.lane.b32.xlu0 %v4475, 16
        %v4554 = vpop.permute.xlu0 %4553
        %4555 = vrot.lane.b32.xlu0 %v4476, 16
        %v4556 = vpop.permute.xlu0 %4555
        %4557 = vrot.lane.b32.xlu0 %v4477, 16
        %v4558 = vpop.permute.xlu0 %4557
        %4559 = vrot.lane.b32.xlu0 %v4478, 16
        %v4560 = vpop.permute.xlu0 %4559
        %4561 = vrot.lane.b32.xlu0 %v4479, 16
        %v4562 = vpop.permute.xlu0 %4561
        %4563 = vrot.lane.b32.xlu0 %v4480, 16
        %v4564 = vpop.permute.xlu0 %4563
        %4565 = vrot.lane.b32.xlu0 %v4481, 16
        %v4566 = vpop.permute.xlu0 %4565
        %4567 = vrot.lane.b32.xlu0 %v4482, 16
        %v4568 = vpop.permute.xlu0 %4567
        %4569 = vrot.lane.b32.xlu0 %v4483, 16
        %v4570 = vpop.permute.xlu0 %4569
        %4571 = vrot.lane.b32.xlu0 %v4484, 16
        %v4572 = vpop.permute.xlu0 %4571
        %4573 = vrot.lane.b32.xlu0 %v4485, 16
        %v4574 = vpop.permute.xlu0 %4573
        %4575 = vrot.lane.b32.xlu0 %v4486, 16
        %v4576 = vpop.permute.xlu0 %4575
        %4577 = vrot.lane.b32.xlu0 %v4487, 16
        %v4578 = vpop.permute.xlu0 %4577
        %4579 = vrot.lane.b32.xlu0 %v4488, 16
        %v4580 = vpop.permute.xlu0 %4579
        %4581 = vrot.lane.b32.xlu0 %v4489, 16
        %v4582 = vpop.permute.xlu0 %4581
        %4583 = vrot.lane.b32.xlu0 %v4490, 16
        %v4584 = vpop.permute.xlu0 %4583
        %4585 = vrot.lane.b32.xlu0 %v4491, 16
        %v4586 = vpop.permute.xlu0 %4585
        %4587 = vrot.lane.b32.xlu0 %v4492, 16
        %v4588 = vpop.permute.xlu0 %4587
        %4621 = vst.msk [vmem:[#allocation4] sm:$0xff] %vm2088, %v4526
        %4622 = vst.msk [vmem:[#allocation4 + $0x10] sm:$0xff] %vm2088, %v4528
        %4623 = vst.msk [vmem:[#allocation4 + $0x20] sm:$0xff] %vm2088, %v4530
        %4624 = vst.msk [vmem:[#allocation4 + $0x30] sm:$0xff] %vm2088, %v4532
        %4625 = vst.msk [vmem:[#allocation4 + $0x40] sm:$0xff] %vm2088, %v4534
        %4626 = vst.msk [vmem:[#allocation4 + $0x50] sm:$0xff] %vm2088, %v4536
        %4627 = vst.msk [vmem:[#allocation4 + $0x60] sm:$0xff] %vm2088, %v4538
        %4628 = vst.msk [vmem:[#allocation4 + $0x70] sm:$0xff] %vm2088, %v4540
        %4629 = vst.msk [vmem:[#allocation4 + $0x80] sm:$0xff] %vm2088, %v4542
        %4630 = vst.msk [vmem:[#allocation4 + $0x90] sm:$0xff] %vm2088, %v4544
        %4631 = vst.msk [vmem:[#allocation4 + $0xa0] sm:$0xff] %vm2088, %v4546
        %4632 = vst.msk [vmem:[#allocation4 + $0xb0] sm:$0xff] %vm2088, %v4548
        %4633 = vst.msk [vmem:[#allocation4 + $0xc0] sm:$0xff] %vm2088, %v4550
        %4634 = vst.msk [vmem:[#allocation4 + $0xd0] sm:$0xff] %vm2088, %v4552
        %4635 = vst.msk [vmem:[#allocation4 + $0xe0] sm:$0xff] %vm2088, %v4554
        %4636 = vst.msk [vmem:[#allocation4 + $0xf0] sm:$0xff] %vm2088, %v4556
        %4637 = vst.msk [vmem:[#allocation4 + $0x100] sm:$0xff] %vm2088, %v4558
        %4638 = vst.msk [vmem:[#allocation4 + $0x110] sm:$0xff] %vm2088, %v4560
        %4639 = vst.msk [vmem:[#allocation4 + $0x120] sm:$0xff] %vm2088, %v4562
        %4640 = vst.msk [vmem:[#allocation4 + $0x130] sm:$0xff] %vm2088, %v4564
        %4641 = vst.msk [vmem:[#allocation4 + $0x140] sm:$0xff] %vm2088, %v4566
        %4642 = vst.msk [vmem:[#allocation4 + $0x150] sm:$0xff] %vm2088, %v4568
        %4643 = vst.msk [vmem:[#allocation4 + $0x160] sm:$0xff] %vm2088, %v4570
        %4644 = vst.msk [vmem:[#allocation4 + $0x170] sm:$0xff] %vm2088, %v4572
        %4645 = vst.msk [vmem:[#allocation4 + $0x180] sm:$0xff] %vm2088, %v4574
        %4646 = vst.msk [vmem:[#allocation4 + $0x190] sm:$0xff] %vm2088, %v4576
        %4647 = vst.msk [vmem:[#allocation4 + $0x1a0] sm:$0xff] %vm2088, %v4578
        %4648 = vst.msk [vmem:[#allocation4 + $0x1b0] sm:$0xff] %vm2088, %v4580
        %4649 = vst.msk [vmem:[#allocation4 + $0x1c0] sm:$0xff] %vm2088, %v4582
        %4650 = vst.msk [vmem:[#allocation4 + $0x1d0] sm:$0xff] %vm2088, %v4584
        %4651 = vst.msk [vmem:[#allocation4 + $0x1e0] sm:$0xff] %vm2088, %v4586
        %4652 = vst.msk [vmem:[#allocation4 + $0x1f0] sm:$0xff] %vm2088, %v4588
        %v4653 = vld [vmem:[#allocation3 + $0x9] sm:$0xff]
        %v4654 = vld [vmem:[#allocation3 + $0x11] sm:$0xff]
        %v4655 = vld [vmem:[#allocation3 + $0x29] sm:$0xff]
        %v4656 = vld [vmem:[#allocation3 + $0x31] sm:$0xff]
        %v4657 = vld [vmem:[#allocation3 + $0x49] sm:$0xff]
        %v4658 = vld [vmem:[#allocation3 + $0x51] sm:$0xff]
        %v4659 = vld [vmem:[#allocation3 + $0x69] sm:$0xff]
        %v4660 = vld [vmem:[#allocation3 + $0x71] sm:$0xff]
        %v4661 = vld [vmem:[#allocation3 + $0x89] sm:$0xff]
        %v4662 = vld [vmem:[#allocation3 + $0x91] sm:$0xff]
        %v4663 = vld [vmem:[#allocation3 + $0xa9] sm:$0xff]
        %v4664 = vld [vmem:[#allocation3 + $0xb1] sm:$0xff]
        %v4665 = vld [vmem:[#allocation3 + $0xc9] sm:$0xff]
        %v4666 = vld [vmem:[#allocation3 + $0xd1] sm:$0xff]
        %v4667 = vld [vmem:[#allocation3 + $0xe9] sm:$0xff]
        %v4668 = vld [vmem:[#allocation3 + $0xf1] sm:$0xff]
        %v4669 = vld [vmem:[#allocation3 + $0x109] sm:$0xff]
        %v4670 = vld [vmem:[#allocation3 + $0x111] sm:$0xff]
        %v4671 = vld [vmem:[#allocation3 + $0x129] sm:$0xff]
        %v4672 = vld [vmem:[#allocation3 + $0x131] sm:$0xff]
        %v4673 = vld [vmem:[#allocation3 + $0x149] sm:$0xff]
        %v4674 = vld [vmem:[#allocation3 + $0x151] sm:$0xff]
        %v4675 = vld [vmem:[#allocation3 + $0x169] sm:$0xff]
        %v4676 = vld [vmem:[#allocation3 + $0x171] sm:$0xff]
        %v4677 = vld [vmem:[#allocation3 + $0x189] sm:$0xff]
        %v4678 = vld [vmem:[#allocation3 + $0x191] sm:$0xff]
        %v4679 = vld [vmem:[#allocation3 + $0x1a9] sm:$0xff]
        %v4680 = vld [vmem:[#allocation3 + $0x1b1] sm:$0xff]
        %v4681 = vld [vmem:[#allocation3 + $0x1c9] sm:$0xff]
        %v4682 = vld [vmem:[#allocation3 + $0x1d1] sm:$0xff]
        %v4683 = vld [vmem:[#allocation3 + $0x1e9] sm:$0xff]
        %v4684 = vld [vmem:[#allocation3 + $0x1f1] sm:$0xff]
        %4717 = vrot.lane.b32.xlu0 %v4653, 32
        %v4718 = vpop.permute.xlu0 %4717
        %4719 = vrot.lane.b32.xlu0 %v4654, 32
        %v4720 = vpop.permute.xlu0 %4719
        %4721 = vrot.lane.b32.xlu0 %v4655, 32
        %v4722 = vpop.permute.xlu0 %4721
        %4723 = vrot.lane.b32.xlu0 %v4656, 32
        %v4724 = vpop.permute.xlu0 %4723
        %4725 = vrot.lane.b32.xlu0 %v4657, 32
        %v4726 = vpop.permute.xlu0 %4725
        %4727 = vrot.lane.b32.xlu0 %v4658, 32
        %v4728 = vpop.permute.xlu0 %4727
        %4729 = vrot.lane.b32.xlu0 %v4659, 32
        %v4730 = vpop.permute.xlu0 %4729
        %4731 = vrot.lane.b32.xlu0 %v4660, 32
        %v4732 = vpop.permute.xlu0 %4731
        %4733 = vrot.lane.b32.xlu0 %v4661, 32
        %v4734 = vpop.permute.xlu0 %4733
        %4735 = vrot.lane.b32.xlu0 %v4662, 32
        %v4736 = vpop.permute.xlu0 %4735
        %4737 = vrot.lane.b32.xlu0 %v4663, 32
        %v4738 = vpop.permute.xlu0 %4737
        %4739 = vrot.lane.b32.xlu0 %v4664, 32
        %v4740 = vpop.permute.xlu0 %4739
        %4741 = vrot.lane.b32.xlu0 %v4665, 32
        %v4742 = vpop.permute.xlu0 %4741
        %4743 = vrot.lane.b32.xlu0 %v4666, 32
        %v4744 = vpop.permute.xlu0 %4743
        %4745 = vrot.lane.b32.xlu0 %v4667, 32
        %v4746 = vpop.permute.xlu0 %4745
        %4747 = vrot.lane.b32.xlu0 %v4668, 32
        %v4748 = vpop.permute.xlu0 %4747
        %4749 = vrot.lane.b32.xlu0 %v4669, 32
        %v4750 = vpop.permute.xlu0 %4749
        %4751 = vrot.lane.b32.xlu0 %v4670, 32
        %v4752 = vpop.permute.xlu0 %4751
        %4753 = vrot.lane.b32.xlu0 %v4671, 32
        %v4754 = vpop.permute.xlu0 %4753
        %4755 = vrot.lane.b32.xlu0 %v4672, 32
        %v4756 = vpop.permute.xlu0 %4755
        %4757 = vrot.lane.b32.xlu0 %v4673, 32
        %v4758 = vpop.permute.xlu0 %4757
        %4759 = vrot.lane.b32.xlu0 %v4674, 32
        %v4760 = vpop.permute.xlu0 %4759
        %4761 = vrot.lane.b32.xlu0 %v4675, 32
        %v4762 = vpop.permute.xlu0 %4761
        %4763 = vrot.lane.b32.xlu0 %v4676, 32
        %v4764 = vpop.permute.xlu0 %4763
        %4765 = vrot.lane.b32.xlu0 %v4677, 32
        %v4766 = vpop.permute.xlu0 %4765
        %4767 = vrot.lane.b32.xlu0 %v4678, 32
        %v4768 = vpop.permute.xlu0 %4767
        %4769 = vrot.lane.b32.xlu0 %v4679, 32
        %v4770 = vpop.permute.xlu0 %4769
        %4771 = vrot.lane.b32.xlu0 %v4680, 32
        %v4772 = vpop.permute.xlu0 %4771
        %4773 = vrot.lane.b32.xlu0 %v4681, 32
        %v4774 = vpop.permute.xlu0 %4773
        %4775 = vrot.lane.b32.xlu0 %v4682, 32
        %v4776 = vpop.permute.xlu0 %4775
        %4777 = vrot.lane.b32.xlu0 %v4683, 32
        %v4778 = vpop.permute.xlu0 %4777
        %4779 = vrot.lane.b32.xlu0 %v4684, 32
        %v4780 = vpop.permute.xlu0 %4779
        %4813 = vst.msk [vmem:[#allocation4] sm:$0xff] %vm2281, %v4718
        %4814 = vst.msk [vmem:[#allocation4 + $0x10] sm:$0xff] %vm2281, %v4720
        %4815 = vst.msk [vmem:[#allocation4 + $0x20] sm:$0xff] %vm2281, %v4722
        %4816 = vst.msk [vmem:[#allocation4 + $0x30] sm:$0xff] %vm2281, %v4724
        %4817 = vst.msk [vmem:[#allocation4 + $0x40] sm:$0xff] %vm2281, %v4726
        %4818 = vst.msk [vmem:[#allocation4 + $0x50] sm:$0xff] %vm2281, %v4728
        %4819 = vst.msk [vmem:[#allocation4 + $0x60] sm:$0xff] %vm2281, %v4730
        %4820 = vst.msk [vmem:[#allocation4 + $0x70] sm:$0xff] %vm2281, %v4732
        %4821 = vst.msk [vmem:[#allocation4 + $0x80] sm:$0xff] %vm2281, %v4734
        %4822 = vst.msk [vmem:[#allocation4 + $0x90] sm:$0xff] %vm2281, %v4736
        %4823 = vst.msk [vmem:[#allocation4 + $0xa0] sm:$0xff] %vm2281, %v4738
        %4824 = vst.msk [vmem:[#allocation4 + $0xb0] sm:$0xff] %vm2281, %v4740
        %4825 = vst.msk [vmem:[#allocation4 + $0xc0] sm:$0xff] %vm2281, %v4742
        %4826 = vst.msk [vmem:[#allocation4 + $0xd0] sm:$0xff] %vm2281, %v4744
        %4827 = vst.msk [vmem:[#allocation4 + $0xe0] sm:$0xff] %vm2281, %v4746
        %4828 = vst.msk [vmem:[#allocation4 + $0xf0] sm:$0xff] %vm2281, %v4748
        %4829 = vst.msk [vmem:[#allocation4 + $0x100] sm:$0xff] %vm2281, %v4750
        %4830 = vst.msk [vmem:[#allocation4 + $0x110] sm:$0xff] %vm2281, %v4752
        %4831 = vst.msk [vmem:[#allocation4 + $0x120] sm:$0xff] %vm2281, %v4754
        %4832 = vst.msk [vmem:[#allocation4 + $0x130] sm:$0xff] %vm2281, %v4756
        %4833 = vst.msk [vmem:[#allocation4 + $0x140] sm:$0xff] %vm2281, %v4758
        %4834 = vst.msk [vmem:[#allocation4 + $0x150] sm:$0xff] %vm2281, %v4760
        %4835 = vst.msk [vmem:[#allocation4 + $0x160] sm:$0xff] %vm2281, %v4762
        %4836 = vst.msk [vmem:[#allocation4 + $0x170] sm:$0xff] %vm2281, %v4764
        %4837 = vst.msk [vmem:[#allocation4 + $0x180] sm:$0xff] %vm2281, %v4766
        %4838 = vst.msk [vmem:[#allocation4 + $0x190] sm:$0xff] %vm2281, %v4768
        %4839 = vst.msk [vmem:[#allocation4 + $0x1a0] sm:$0xff] %vm2281, %v4770
        %4840 = vst.msk [vmem:[#allocation4 + $0x1b0] sm:$0xff] %vm2281, %v4772
        %4841 = vst.msk [vmem:[#allocation4 + $0x1c0] sm:$0xff] %vm2281, %v4774
        %4842 = vst.msk [vmem:[#allocation4 + $0x1d0] sm:$0xff] %vm2281, %v4776
        %4843 = vst.msk [vmem:[#allocation4 + $0x1e0] sm:$0xff] %vm2281, %v4778
        %4844 = vst.msk [vmem:[#allocation4 + $0x1f0] sm:$0xff] %vm2281, %v4780
        %v4845 = vld [vmem:[%s1831 + $0x7] sm:$0xff]
        %v4846 = vld [vmem:[%s1831 + $0xf] sm:$0xff]
        %v4847 = vld [vmem:[%s1831 + $0x27] sm:$0xff]
        %v4848 = vld [vmem:[%s1831 + $0x2f] sm:$0xff]
        %v4849 = vld [vmem:[%s1831 + $0x47] sm:$0xff]
        %v4850 = vld [vmem:[%s1831 + $0x4f] sm:$0xff]
        %v4851 = vld [vmem:[%s1831 + $0x67] sm:$0xff]
        %v4852 = vld [vmem:[%s1831 + $0x6f] sm:$0xff]
        %v4853 = vld [vmem:[%s1831 + $0x87] sm:$0xff]
        %v4854 = vld [vmem:[%s1831 + $0x8f] sm:$0xff]
        %v4855 = vld [vmem:[%s1831 + $0xa7] sm:$0xff]
        %v4856 = vld [vmem:[%s1831 + $0xaf] sm:$0xff]
        %v4857 = vld [vmem:[%s1831 + $0xc7] sm:$0xff]
        %v4858 = vld [vmem:[%s1831 + $0xcf] sm:$0xff]
        %v4859 = vld [vmem:[%s1831 + $0xe7] sm:$0xff]
        %v4860 = vld [vmem:[%s1831 + $0xef] sm:$0xff]
        %v4861 = vld [vmem:[%s1831 + $0x107] sm:$0xff]
        %v4862 = vld [vmem:[%s1831 + $0x10f] sm:$0xff]
        %v4863 = vld [vmem:[%s1831 + $0x127] sm:$0xff]
        %v4864 = vld [vmem:[%s1831 + $0x12f] sm:$0xff]
        %v4865 = vld [vmem:[%s1831 + $0x147] sm:$0xff]
        %v4866 = vld [vmem:[%s1831 + $0x14f] sm:$0xff]
        %v4867 = vld [vmem:[%s1831 + $0x167] sm:$0xff]
        %v4868 = vld [vmem:[%s1831 + $0x16f] sm:$0xff]
        %v4869 = vld [vmem:[%s1831 + $0x187] sm:$0xff]
        %v4870 = vld [vmem:[%s1831 + $0x18f] sm:$0xff]
        %v4871 = vld [vmem:[%s1831 + $0x1a7] sm:$0xff]
        %v4872 = vld [vmem:[%s1831 + $0x1af] sm:$0xff]
        %v4873 = vld [vmem:[%s1831 + $0x1c7] sm:$0xff]
        %v4874 = vld [vmem:[%s1831 + $0x1cf] sm:$0xff]
        %v4875 = vld [vmem:[%s1831 + $0x1e7] sm:$0xff]
        %v4876 = vld [vmem:[%s1831 + $0x1ef] sm:$0xff]
        %4909 = vrot.lane.b32.xlu0 %v4845, 48
        %v4910 = vpop.permute.xlu0 %4909
        %4911 = vrot.lane.b32.xlu0 %v4846, 48
        %v4912 = vpop.permute.xlu0 %4911
        %4913 = vrot.lane.b32.xlu0 %v4847, 48
        %v4914 = vpop.permute.xlu0 %4913
        %4915 = vrot.lane.b32.xlu0 %v4848, 48
        %v4916 = vpop.permute.xlu0 %4915
        %4917 = vrot.lane.b32.xlu0 %v4849, 48
        %v4918 = vpop.permute.xlu0 %4917
        %4919 = vrot.lane.b32.xlu0 %v4850, 48
        %v4920 = vpop.permute.xlu0 %4919
        %4921 = vrot.lane.b32.xlu0 %v4851, 48
        %v4922 = vpop.permute.xlu0 %4921
        %4923 = vrot.lane.b32.xlu0 %v4852, 48
        %v4924 = vpop.permute.xlu0 %4923
        %4925 = vrot.lane.b32.xlu0 %v4853, 48
        %v4926 = vpop.permute.xlu0 %4925
        %4927 = vrot.lane.b32.xlu0 %v4854, 48
        %v4928 = vpop.permute.xlu0 %4927
        %4929 = vrot.lane.b32.xlu0 %v4855, 48
        %v4930 = vpop.permute.xlu0 %4929
        %4931 = vrot.lane.b32.xlu0 %v4856, 48
        %v4932 = vpop.permute.xlu0 %4931
        %4933 = vrot.lane.b32.xlu0 %v4857, 48
        %v4934 = vpop.permute.xlu0 %4933
        %4935 = vrot.lane.b32.xlu0 %v4858, 48
        %v4936 = vpop.permute.xlu0 %4935
        %4937 = vrot.lane.b32.xlu0 %v4859, 48
        %v4938 = vpop.permute.xlu0 %4937
        %4939 = vrot.lane.b32.xlu0 %v4860, 48
        %v4940 = vpop.permute.xlu0 %4939
        %4941 = vrot.lane.b32.xlu0 %v4861, 48
        %v4942 = vpop.permute.xlu0 %4941
        %4943 = vrot.lane.b32.xlu0 %v4862, 48
        %v4944 = vpop.permute.xlu0 %4943
        %4945 = vrot.lane.b32.xlu0 %v4863, 48
        %v4946 = vpop.permute.xlu0 %4945
        %4947 = vrot.lane.b32.xlu0 %v4864, 48
        %v4948 = vpop.permute.xlu0 %4947
        %4949 = vrot.lane.b32.xlu0 %v4865, 48
        %v4950 = vpop.permute.xlu0 %4949
        %4951 = vrot.lane.b32.xlu0 %v4866, 48
        %v4952 = vpop.permute.xlu0 %4951
        %4953 = vrot.lane.b32.xlu0 %v4867, 48
        %v4954 = vpop.permute.xlu0 %4953
        %4955 = vrot.lane.b32.xlu0 %v4868, 48
        %v4956 = vpop.permute.xlu0 %4955
        %4957 = vrot.lane.b32.xlu0 %v4869, 48
        %v4958 = vpop.permute.xlu0 %4957
        %4959 = vrot.lane.b32.xlu0 %v4870, 48
        %v4960 = vpop.permute.xlu0 %4959
        %4961 = vrot.lane.b32.xlu0 %v4871, 48
        %v4962 = vpop.permute.xlu0 %4961
        %4963 = vrot.lane.b32.xlu0 %v4872, 48
        %v4964 = vpop.permute.xlu0 %4963
        %4965 = vrot.lane.b32.xlu0 %v4873, 48
        %v4966 = vpop.permute.xlu0 %4965
        %4967 = vrot.lane.b32.xlu0 %v4874, 48
        %v4968 = vpop.permute.xlu0 %4967
        %4969 = vrot.lane.b32.xlu0 %v4875, 48
        %v4970 = vpop.permute.xlu0 %4969
        %4971 = vrot.lane.b32.xlu0 %v4876, 48
        %v4972 = vpop.permute.xlu0 %4971
        %5005 = vst.msk [vmem:[#allocation4] sm:$0xff] %vm2474, %v4910
        %5006 = vst.msk [vmem:[#allocation4 + $0x10] sm:$0xff] %vm2474, %v4912
        %5007 = vst.msk [vmem:[#allocation4 + $0x20] sm:$0xff] %vm2474, %v4914
        %5008 = vst.msk [vmem:[#allocation4 + $0x30] sm:$0xff] %vm2474, %v4916
        %5009 = vst.msk [vmem:[#allocation4 + $0x40] sm:$0xff] %vm2474, %v4918
        %5010 = vst.msk [vmem:[#allocation4 + $0x50] sm:$0xff] %vm2474, %v4920
        %5011 = vst.msk [vmem:[#allocation4 + $0x60] sm:$0xff] %vm2474, %v4922
        %5012 = vst.msk [vmem:[#allocation4 + $0x70] sm:$0xff] %vm2474, %v4924
        %5013 = vst.msk [vmem:[#allocation4 + $0x80] sm:$0xff] %vm2474, %v4926
        %5014 = vst.msk [vmem:[#allocation4 + $0x90] sm:$0xff] %vm2474, %v4928
        %5015 = vst.msk [vmem:[#allocation4 + $0xa0] sm:$0xff] %vm2474, %v4930
        %5016 = vst.msk [vmem:[#allocation4 + $0xb0] sm:$0xff] %vm2474, %v4932
        %5017 = vst.msk [vmem:[#allocation4 + $0xc0] sm:$0xff] %vm2474, %v4934
        %5018 = vst.msk [vmem:[#allocation4 + $0xd0] sm:$0xff] %vm2474, %v4936
        %5019 = vst.msk [vmem:[#allocation4 + $0xe0] sm:$0xff] %vm2474, %v4938
        %5020 = vst.msk [vmem:[#allocation4 + $0xf0] sm:$0xff] %vm2474, %v4940
        %5021 = vst.msk [vmem:[#allocation4 + $0x100] sm:$0xff] %vm2474, %v4942
        %5022 = vst.msk [vmem:[#allocation4 + $0x110] sm:$0xff] %vm2474, %v4944
        %5023 = vst.msk [vmem:[#allocation4 + $0x120] sm:$0xff] %vm2474, %v4946
        %5024 = vst.msk [vmem:[#allocation4 + $0x130] sm:$0xff] %vm2474, %v4948
        %5025 = vst.msk [vmem:[#allocation4 + $0x140] sm:$0xff] %vm2474, %v4950
        %5026 = vst.msk [vmem:[#allocation4 + $0x150] sm:$0xff] %vm2474, %v4952
        %5027 = vst.msk [vmem:[#allocation4 + $0x160] sm:$0xff] %vm2474, %v4954
        %5028 = vst.msk [vmem:[#allocation4 + $0x170] sm:$0xff] %vm2474, %v4956
        %5029 = vst.msk [vmem:[#allocation4 + $0x180] sm:$0xff] %vm2474, %v4958
        %5030 = vst.msk [vmem:[#allocation4 + $0x190] sm:$0xff] %vm2474, %v4960
        %5031 = vst.msk [vmem:[#allocation4 + $0x1a0] sm:$0xff] %vm2474, %v4962
        %5032 = vst.msk [vmem:[#allocation4 + $0x1b0] sm:$0xff] %vm2474, %v4964
        %5033 = vst.msk [vmem:[#allocation4 + $0x1c0] sm:$0xff] %vm2474, %v4966
        %5034 = vst.msk [vmem:[#allocation4 + $0x1d0] sm:$0xff] %vm2474, %v4968
        %5035 = vst.msk [vmem:[#allocation4 + $0x1e0] sm:$0xff] %vm2474, %v4970
        %5036 = vst.msk [vmem:[#allocation4 + $0x1f0] sm:$0xff] %vm2474, %v4972
        %v5037 = vld [vmem:[%s1831 + $0x8] sm:$0xff]
        %v5038 = vld [vmem:[%s1831 + $0x10] sm:$0xff]
        %v5039 = vld [vmem:[%s1831 + $0x28] sm:$0xff]
        %v5040 = vld [vmem:[%s1831 + $0x30] sm:$0xff]
        %v5041 = vld [vmem:[%s1831 + $0x48] sm:$0xff]
        %v5042 = vld [vmem:[%s1831 + $0x50] sm:$0xff]
        %v5043 = vld [vmem:[%s1831 + $0x68] sm:$0xff]
        %v5044 = vld [vmem:[%s1831 + $0x70] sm:$0xff]
        %v5045 = vld [vmem:[%s1831 + $0x88] sm:$0xff]
        %v5046 = vld [vmem:[%s1831 + $0x90] sm:$0xff]
        %v5047 = vld [vmem:[%s1831 + $0xa8] sm:$0xff]
        %v5048 = vld [vmem:[%s1831 + $0xb0] sm:$0xff]
        %v5049 = vld [vmem:[%s1831 + $0xc8] sm:$0xff]
        %v5050 = vld [vmem:[%s1831 + $0xd0] sm:$0xff]
        %v5051 = vld [vmem:[%s1831 + $0xe8] sm:$0xff]
        %v5052 = vld [vmem:[%s1831 + $0xf0] sm:$0xff]
        %v5053 = vld [vmem:[%s1831 + $0x108] sm:$0xff]
        %v5054 = vld [vmem:[%s1831 + $0x110] sm:$0xff]
        %v5055 = vld [vmem:[%s1831 + $0x128] sm:$0xff]
        %v5056 = vld [vmem:[%s1831 + $0x130] sm:$0xff]
        %v5057 = vld [vmem:[%s1831 + $0x148] sm:$0xff]
        %v5058 = vld [vmem:[%s1831 + $0x150] sm:$0xff]
        %v5059 = vld [vmem:[%s1831 + $0x168] sm:$0xff]
        %v5060 = vld [vmem:[%s1831 + $0x170] sm:$0xff]
        %v5061 = vld [vmem:[%s1831 + $0x188] sm:$0xff]
        %v5062 = vld [vmem:[%s1831 + $0x190] sm:$0xff]
        %v5063 = vld [vmem:[%s1831 + $0x1a8] sm:$0xff]
        %v5064 = vld [vmem:[%s1831 + $0x1b0] sm:$0xff]
        %v5065 = vld [vmem:[%s1831 + $0x1c8] sm:$0xff]
        %v5066 = vld [vmem:[%s1831 + $0x1d0] sm:$0xff]
        %v5067 = vld [vmem:[%s1831 + $0x1e8] sm:$0xff]
        %v5068 = vld [vmem:[%s1831 + $0x1f0] sm:$0xff]
        %5101 = vrot.lane.b32.xlu0 %v5037, 64
        %v5102 = vpop.permute.xlu0 %5101
        %5103 = vrot.lane.b32.xlu0 %v5038, 64
        %v5104 = vpop.permute.xlu0 %5103
        %5105 = vrot.lane.b32.xlu0 %v5039, 64
        %v5106 = vpop.permute.xlu0 %5105
        %5107 = vrot.lane.b32.xlu0 %v5040, 64
        %v5108 = vpop.permute.xlu0 %5107
        %5109 = vrot.lane.b32.xlu0 %v5041, 64
        %v5110 = vpop.permute.xlu0 %5109
        %5111 = vrot.lane.b32.xlu0 %v5042, 64
        %v5112 = vpop.permute.xlu0 %5111
        %5113 = vrot.lane.b32.xlu0 %v5043, 64
        %v5114 = vpop.permute.xlu0 %5113
        %5115 = vrot.lane.b32.xlu0 %v5044, 64
        %v5116 = vpop.permute.xlu0 %5115
        %5117 = vrot.lane.b32.xlu0 %v5045, 64
        %v5118 = vpop.permute.xlu0 %5117
        %5119 = vrot.lane.b32.xlu0 %v5046, 64
        %v5120 = vpop.permute.xlu0 %5119
        %5121 = vrot.lane.b32.xlu0 %v5047, 64
        %v5122 = vpop.permute.xlu0 %5121
        %5123 = vrot.lane.b32.xlu0 %v5048, 64
        %v5124 = vpop.permute.xlu0 %5123
        %5125 = vrot.lane.b32.xlu0 %v5049, 64
        %v5126 = vpop.permute.xlu0 %5125
        %5127 = vrot.lane.b32.xlu0 %v5050, 64
        %v5128 = vpop.permute.xlu0 %5127
        %5129 = vrot.lane.b32.xlu0 %v5051, 64
        %v5130 = vpop.permute.xlu0 %5129
        %5131 = vrot.lane.b32.xlu0 %v5052, 64
        %v5132 = vpop.permute.xlu0 %5131
        %5133 = vrot.lane.b32.xlu0 %v5053, 64
        %v5134 = vpop.permute.xlu0 %5133
        %5135 = vrot.lane.b32.xlu0 %v5054, 64
        %v5136 = vpop.permute.xlu0 %5135
        %5137 = vrot.lane.b32.xlu0 %v5055, 64
        %v5138 = vpop.permute.xlu0 %5137
        %5139 = vrot.lane.b32.xlu0 %v5056, 64
        %v5140 = vpop.permute.xlu0 %5139
        %5141 = vrot.lane.b32.xlu0 %v5057, 64
        %v5142 = vpop.permute.xlu0 %5141
        %5143 = vrot.lane.b32.xlu0 %v5058, 64
        %v5144 = vpop.permute.xlu0 %5143
        %5145 = vrot.lane.b32.xlu0 %v5059, 64
        %v5146 = vpop.permute.xlu0 %5145
        %5147 = vrot.lane.b32.xlu0 %v5060, 64
        %v5148 = vpop.permute.xlu0 %5147
        %5149 = vrot.lane.b32.xlu0 %v5061, 64
        %v5150 = vpop.permute.xlu0 %5149
        %5151 = vrot.lane.b32.xlu0 %v5062, 64
        %v5152 = vpop.permute.xlu0 %5151
        %5153 = vrot.lane.b32.xlu0 %v5063, 64
        %v5154 = vpop.permute.xlu0 %5153
        %5155 = vrot.lane.b32.xlu0 %v5064, 64
        %v5156 = vpop.permute.xlu0 %5155
        %5157 = vrot.lane.b32.xlu0 %v5065, 64
        %v5158 = vpop.permute.xlu0 %5157
        %5159 = vrot.lane.b32.xlu0 %v5066, 64
        %v5160 = vpop.permute.xlu0 %5159
        %5161 = vrot.lane.b32.xlu0 %v5067, 64
        %v5162 = vpop.permute.xlu0 %5161
        %5163 = vrot.lane.b32.xlu0 %v5068, 64
        %v5164 = vpop.permute.xlu0 %5163
        %5197 = vst.msk [vmem:[#allocation4] sm:$0xff] %vm2667, %v5102
        %5198 = vst.msk [vmem:[#allocation4 + $0x10] sm:$0xff] %vm2667, %v5104
        %5199 = vst.msk [vmem:[#allocation4 + $0x20] sm:$0xff] %vm2667, %v5106
        %5200 = vst.msk [vmem:[#allocation4 + $0x30] sm:$0xff] %vm2667, %v5108
        %5201 = vst.msk [vmem:[#allocation4 + $0x40] sm:$0xff] %vm2667, %v5110
        %5202 = vst.msk [vmem:[#allocation4 + $0x50] sm:$0xff] %vm2667, %v5112
        %5203 = vst.msk [vmem:[#allocation4 + $0x60] sm:$0xff] %vm2667, %v5114
        %5204 = vst.msk [vmem:[#allocation4 + $0x70] sm:$0xff] %vm2667, %v5116
        %5205 = vst.msk [vmem:[#allocation4 + $0x80] sm:$0xff] %vm2667, %v5118
        %5206 = vst.msk [vmem:[#allocation4 + $0x90] sm:$0xff] %vm2667, %v5120
        %5207 = vst.msk [vmem:[#allocation4 + $0xa0] sm:$0xff] %vm2667, %v5122
        %5208 = vst.msk [vmem:[#allocation4 + $0xb0] sm:$0xff] %vm2667, %v5124
        %5209 = vst.msk [vmem:[#allocation4 + $0xc0] sm:$0xff] %vm2667, %v5126
        %5210 = vst.msk [vmem:[#allocation4 + $0xd0] sm:$0xff] %vm2667, %v5128
        %5211 = vst.msk [vmem:[#allocation4 + $0xe0] sm:$0xff] %vm2667, %v5130
        %5212 = vst.msk [vmem:[#allocation4 + $0xf0] sm:$0xff] %vm2667, %v5132
        %5213 = vst.msk [vmem:[#allocation4 + $0x100] sm:$0xff] %vm2667, %v5134
        %5214 = vst.msk [vmem:[#allocation4 + $0x110] sm:$0xff] %vm2667, %v5136
        %5215 = vst.msk [vmem:[#allocation4 + $0x120] sm:$0xff] %vm2667, %v5138
        %5216 = vst.msk [vmem:[#allocation4 + $0x130] sm:$0xff] %vm2667, %v5140
        %5217 = vst.msk [vmem:[#allocation4 + $0x140] sm:$0xff] %vm2667, %v5142
        %5218 = vst.msk [vmem:[#allocation4 + $0x150] sm:$0xff] %vm2667, %v5144
        %5219 = vst.msk [vmem:[#allocation4 + $0x160] sm:$0xff] %vm2667, %v5146
        %5220 = vst.msk [vmem:[#allocation4 + $0x170] sm:$0xff] %vm2667, %v5148
        %5221 = vst.msk [vmem:[#allocation4 + $0x180] sm:$0xff] %vm2667, %v5150
        %5222 = vst.msk [vmem:[#allocation4 + $0x190] sm:$0xff] %vm2667, %v5152
        %5223 = vst.msk [vmem:[#allocation4 + $0x1a0] sm:$0xff] %vm2667, %v5154
        %5224 = vst.msk [vmem:[#allocation4 + $0x1b0] sm:$0xff] %vm2667, %v5156
        %5225 = vst.msk [vmem:[#allocation4 + $0x1c0] sm:$0xff] %vm2667, %v5158
        %5226 = vst.msk [vmem:[#allocation4 + $0x1d0] sm:$0xff] %vm2667, %v5160
        %5227 = vst.msk [vmem:[#allocation4 + $0x1e0] sm:$0xff] %vm2667, %v5162
        %5228 = vst.msk [vmem:[#allocation4 + $0x1f0] sm:$0xff] %vm2667, %v5164
        %v5229 = vld [vmem:[%s1831 + $0x9] sm:$0xff]
        %v5230 = vld [vmem:[%s1831 + $0x11] sm:$0xff]
        %v5231 = vld [vmem:[%s1831 + $0x29] sm:$0xff]
        %v5232 = vld [vmem:[%s1831 + $0x31] sm:$0xff]
        %v5233 = vld [vmem:[%s1831 + $0x49] sm:$0xff]
        %v5234 = vld [vmem:[%s1831 + $0x51] sm:$0xff]
        %v5235 = vld [vmem:[%s1831 + $0x69] sm:$0xff]
        %v5236 = vld [vmem:[%s1831 + $0x71] sm:$0xff]
        %v5237 = vld [vmem:[%s1831 + $0x89] sm:$0xff]
        %v5238 = vld [vmem:[%s1831 + $0x91] sm:$0xff]
        %v5239 = vld [vmem:[%s1831 + $0xa9] sm:$0xff]
        %v5240 = vld [vmem:[%s1831 + $0xb1] sm:$0xff]
        %v5241 = vld [vmem:[%s1831 + $0xc9] sm:$0xff]
        %v5242 = vld [vmem:[%s1831 + $0xd1] sm:$0xff]
        %v5243 = vld [vmem:[%s1831 + $0xe9] sm:$0xff]
        %v5244 = vld [vmem:[%s1831 + $0xf1] sm:$0xff]
        %v5245 = vld [vmem:[%s1831 + $0x109] sm:$0xff]
        %v5246 = vld [vmem:[%s1831 + $0x111] sm:$0xff]
        %v5247 = vld [vmem:[%s1831 + $0x129] sm:$0xff]
        %v5248 = vld [vmem:[%s1831 + $0x131] sm:$0xff]
        %v5249 = vld [vmem:[%s1831 + $0x149] sm:$0xff]
        %v5250 = vld [vmem:[%s1831 + $0x151] sm:$0xff]
        %v5251 = vld [vmem:[%s1831 + $0x169] sm:$0xff]
        %v5252 = vld [vmem:[%s1831 + $0x171] sm:$0xff]
        %v5253 = vld [vmem:[%s1831 + $0x189] sm:$0xff]
        %v5254 = vld [vmem:[%s1831 + $0x191] sm:$0xff]
        %v5255 = vld [vmem:[%s1831 + $0x1a9] sm:$0xff]
        %v5256 = vld [vmem:[%s1831 + $0x1b1] sm:$0xff]
        %v5257 = vld [vmem:[%s1831 + $0x1c9] sm:$0xff]
        %v5258 = vld [vmem:[%s1831 + $0x1d1] sm:$0xff]
        %v5259 = vld [vmem:[%s1831 + $0x1e9] sm:$0xff]
        %v5260 = vld [vmem:[%s1831 + $0x1f1] sm:$0xff]
        %5293 = vrot.lane.b32.xlu0 %v5229, 80
        %v5294 = vpop.permute.xlu0 %5293
        %5295 = vrot.lane.b32.xlu0 %v5230, 80
        %v5296 = vpop.permute.xlu0 %5295
        %5297 = vrot.lane.b32.xlu0 %v5231, 80
        %v5298 = vpop.permute.xlu0 %5297
        %5299 = vrot.lane.b32.xlu0 %v5232, 80
        %v5300 = vpop.permute.xlu0 %5299
        %5301 = vrot.lane.b32.xlu0 %v5233, 80
        %v5302 = vpop.permute.xlu0 %5301
        %5303 = vrot.lane.b32.xlu0 %v5234, 80
        %v5304 = vpop.permute.xlu0 %5303
        %5305 = vrot.lane.b32.xlu0 %v5235, 80
        %v5306 = vpop.permute.xlu0 %5305
        %5307 = vrot.lane.b32.xlu0 %v5236, 80
        %v5308 = vpop.permute.xlu0 %5307
        %5309 = vrot.lane.b32.xlu0 %v5237, 80
        %v5310 = vpop.permute.xlu0 %5309
        %5311 = vrot.lane.b32.xlu0 %v5238, 80
        %v5312 = vpop.permute.xlu0 %5311
        %5313 = vrot.lane.b32.xlu0 %v5239, 80
        %v5314 = vpop.permute.xlu0 %5313
        %5315 = vrot.lane.b32.xlu0 %v5240, 80
        %v5316 = vpop.permute.xlu0 %5315
        %5317 = vrot.lane.b32.xlu0 %v5241, 80
        %v5318 = vpop.permute.xlu0 %5317
        %5319 = vrot.lane.b32.xlu0 %v5242, 80
        %v5320 = vpop.permute.xlu0 %5319
        %5321 = vrot.lane.b32.xlu0 %v5243, 80
        %v5322 = vpop.permute.xlu0 %5321
        %5323 = vrot.lane.b32.xlu0 %v5244, 80
        %v5324 = vpop.permute.xlu0 %5323
        %5325 = vrot.lane.b32.xlu0 %v5245, 80
        %v5326 = vpop.permute.xlu0 %5325
        %5327 = vrot.lane.b32.xlu0 %v5246, 80
        %v5328 = vpop.permute.xlu0 %5327
        %5329 = vrot.lane.b32.xlu0 %v5247, 80
        %v5330 = vpop.permute.xlu0 %5329
        %5331 = vrot.lane.b32.xlu0 %v5248, 80
        %v5332 = vpop.permute.xlu0 %5331
        %5333 = vrot.lane.b32.xlu0 %v5249, 80
        %v5334 = vpop.permute.xlu0 %5333
        %5335 = vrot.lane.b32.xlu0 %v5250, 80
        %v5336 = vpop.permute.xlu0 %5335
        %5337 = vrot.lane.b32.xlu0 %v5251, 80
        %v5338 = vpop.permute.xlu0 %5337
        %5339 = vrot.lane.b32.xlu0 %v5252, 80
        %v5340 = vpop.permute.xlu0 %5339
        %5341 = vrot.lane.b32.xlu0 %v5253, 80
        %v5342 = vpop.permute.xlu0 %5341
        %5343 = vrot.lane.b32.xlu0 %v5254, 80
        %v5344 = vpop.permute.xlu0 %5343
        %5345 = vrot.lane.b32.xlu0 %v5255, 80
        %v5346 = vpop.permute.xlu0 %5345
        %5347 = vrot.lane.b32.xlu0 %v5256, 80
        %v5348 = vpop.permute.xlu0 %5347
        %5349 = vrot.lane.b32.xlu0 %v5257, 80
        %v5350 = vpop.permute.xlu0 %5349
        %5351 = vrot.lane.b32.xlu0 %v5258, 80
        %v5352 = vpop.permute.xlu0 %5351
        %5353 = vrot.lane.b32.xlu0 %v5259, 80
        %v5354 = vpop.permute.xlu0 %5353
        %5355 = vrot.lane.b32.xlu0 %v5260, 80
        %v5356 = vpop.permute.xlu0 %5355
        %5389 = vst.msk [vmem:[#allocation4] sm:$0xff] %vm2860, %v5294
        %5390 = vst.msk [vmem:[#allocation4 + $0x10] sm:$0xff] %vm2860, %v5296
        %5391 = vst.msk [vmem:[#allocation4 + $0x20] sm:$0xff] %vm2860, %v5298
        %5392 = vst.msk [vmem:[#allocation4 + $0x30] sm:$0xff] %vm2860, %v5300
        %5393 = vst.msk [vmem:[#allocation4 + $0x40] sm:$0xff] %vm2860, %v5302
        %5394 = vst.msk [vmem:[#allocation4 + $0x50] sm:$0xff] %vm2860, %v5304
        %5395 = vst.msk [vmem:[#allocation4 + $0x60] sm:$0xff] %vm2860, %v5306
        %5396 = vst.msk [vmem:[#allocation4 + $0x70] sm:$0xff] %vm2860, %v5308
        %5397 = vst.msk [vmem:[#allocation4 + $0x80] sm:$0xff] %vm2860, %v5310
        %5398 = vst.msk [vmem:[#allocation4 + $0x90] sm:$0xff] %vm2860, %v5312
        %5399 = vst.msk [vmem:[#allocation4 + $0xa0] sm:$0xff] %vm2860, %v5314
        %5400 = vst.msk [vmem:[#allocation4 + $0xb0] sm:$0xff] %vm2860, %v5316
        %5401 = vst.msk [vmem:[#allocation4 + $0xc0] sm:$0xff] %vm2860, %v5318
        %5402 = vst.msk [vmem:[#allocation4 + $0xd0] sm:$0xff] %vm2860, %v5320
        %5403 = vst.msk [vmem:[#allocation4 + $0xe0] sm:$0xff] %vm2860, %v5322
        %5404 = vst.msk [vmem:[#allocation4 + $0xf0] sm:$0xff] %vm2860, %v5324
        %5405 = vst.msk [vmem:[#allocation4 + $0x100] sm:$0xff] %vm2860, %v5326
        %5406 = vst.msk [vmem:[#allocation4 + $0x110] sm:$0xff] %vm2860, %v5328
        %5407 = vst.msk [vmem:[#allocation4 + $0x120] sm:$0xff] %vm2860, %v5330
        %5408 = vst.msk [vmem:[#allocation4 + $0x130] sm:$0xff] %vm2860, %v5332
        %5409 = vst.msk [vmem:[#allocation4 + $0x140] sm:$0xff] %vm2860, %v5334
        %5410 = vst.msk [vmem:[#allocation4 + $0x150] sm:$0xff] %vm2860, %v5336
        %5411 = vst.msk [vmem:[#allocation4 + $0x160] sm:$0xff] %vm2860, %v5338
        %5412 = vst.msk [vmem:[#allocation4 + $0x170] sm:$0xff] %vm2860, %v5340
        %5413 = vst.msk [vmem:[#allocation4 + $0x180] sm:$0xff] %vm2860, %v5342
        %5414 = vst.msk [vmem:[#allocation4 + $0x190] sm:$0xff] %vm2860, %v5344
        %5415 = vst.msk [vmem:[#allocation4 + $0x1a0] sm:$0xff] %vm2860, %v5346
        %5416 = vst.msk [vmem:[#allocation4 + $0x1b0] sm:$0xff] %vm2860, %v5348
        %5417 = vst.msk [vmem:[#allocation4 + $0x1c0] sm:$0xff] %vm2860, %v5350
        %5418 = vst.msk [vmem:[#allocation4 + $0x1d0] sm:$0xff] %vm2860, %v5352
        %5419 = vst.msk [vmem:[#allocation4 + $0x1e0] sm:$0xff] %vm2860, %v5354
        %5420 = vst.msk [vmem:[#allocation4 + $0x1f0] sm:$0xff] %vm2860, %v5356
        %v5421 = vld [vmem:[%s2893 + $0x7] sm:$0xff]
        %v5422 = vld [vmem:[%s2893 + $0xf] sm:$0xff]
        %v5423 = vld [vmem:[%s2893 + $0x27] sm:$0xff]
        %v5424 = vld [vmem:[%s2893 + $0x2f] sm:$0xff]
        %v5425 = vld [vmem:[%s2893 + $0x47] sm:$0xff]
        %v5426 = vld [vmem:[%s2893 + $0x4f] sm:$0xff]
        %v5427 = vld [vmem:[%s2893 + $0x67] sm:$0xff]
        %v5428 = vld [vmem:[%s2893 + $0x6f] sm:$0xff]
        %v5429 = vld [vmem:[%s2893 + $0x87] sm:$0xff]
        %v5430 = vld [vmem:[%s2893 + $0x8f] sm:$0xff]
        %v5431 = vld [vmem:[%s2893 + $0xa7] sm:$0xff]
        %v5432 = vld [vmem:[%s2893 + $0xaf] sm:$0xff]
        %v5433 = vld [vmem:[%s2893 + $0xc7] sm:$0xff]
        %v5434 = vld [vmem:[%s2893 + $0xcf] sm:$0xff]
        %v5435 = vld [vmem:[%s2893 + $0xe7] sm:$0xff]
        %v5436 = vld [vmem:[%s2893 + $0xef] sm:$0xff]
        %v5437 = vld [vmem:[%s2893 + $0x107] sm:$0xff]
        %v5438 = vld [vmem:[%s2893 + $0x10f] sm:$0xff]
        %v5439 = vld [vmem:[%s2893 + $0x127] sm:$0xff]
        %v5440 = vld [vmem:[%s2893 + $0x12f] sm:$0xff]
        %v5441 = vld [vmem:[%s2893 + $0x147] sm:$0xff]
        %v5442 = vld [vmem:[%s2893 + $0x14f] sm:$0xff]
        %v5443 = vld [vmem:[%s2893 + $0x167] sm:$0xff]
        %v5444 = vld [vmem:[%s2893 + $0x16f] sm:$0xff]
        %v5445 = vld [vmem:[%s2893 + $0x187] sm:$0xff]
        %v5446 = vld [vmem:[%s2893 + $0x18f] sm:$0xff]
        %v5447 = vld [vmem:[%s2893 + $0x1a7] sm:$0xff]
        %v5448 = vld [vmem:[%s2893 + $0x1af] sm:$0xff]
        %v5449 = vld [vmem:[%s2893 + $0x1c7] sm:$0xff]
        %v5450 = vld [vmem:[%s2893 + $0x1cf] sm:$0xff]
        %v5451 = vld [vmem:[%s2893 + $0x1e7] sm:$0xff]
        %v5452 = vld [vmem:[%s2893 + $0x1ef] sm:$0xff]
        %5485 = vrot.lane.b32.xlu0 %v5421, 96
        %v5486 = vpop.permute.xlu0 %5485
        %5487 = vrot.lane.b32.xlu0 %v5422, 96
        %v5488 = vpop.permute.xlu0 %5487
        %5489 = vrot.lane.b32.xlu0 %v5423, 96
        %v5490 = vpop.permute.xlu0 %5489
        %5491 = vrot.lane.b32.xlu0 %v5424, 96
        %v5492 = vpop.permute.xlu0 %5491
        %5493 = vrot.lane.b32.xlu0 %v5425, 96
        %v5494 = vpop.permute.xlu0 %5493
        %5495 = vrot.lane.b32.xlu0 %v5426, 96
        %v5496 = vpop.permute.xlu0 %5495
        %5497 = vrot.lane.b32.xlu0 %v5427, 96
        %v5498 = vpop.permute.xlu0 %5497
        %5499 = vrot.lane.b32.xlu0 %v5428, 96
        %v5500 = vpop.permute.xlu0 %5499
        %5501 = vrot.lane.b32.xlu0 %v5429, 96
        %v5502 = vpop.permute.xlu0 %5501
        %5503 = vrot.lane.b32.xlu0 %v5430, 96
        %v5504 = vpop.permute.xlu0 %5503
        %5505 = vrot.lane.b32.xlu0 %v5431, 96
        %v5506 = vpop.permute.xlu0 %5505
        %5507 = vrot.lane.b32.xlu0 %v5432, 96
        %v5508 = vpop.permute.xlu0 %5507
        %5509 = vrot.lane.b32.xlu0 %v5433, 96
        %v5510 = vpop.permute.xlu0 %5509
        %5511 = vrot.lane.b32.xlu0 %v5434, 96
        %v5512 = vpop.permute.xlu0 %5511
        %5513 = vrot.lane.b32.xlu0 %v5435, 96
        %v5514 = vpop.permute.xlu0 %5513
        %5515 = vrot.lane.b32.xlu0 %v5436, 96
        %v5516 = vpop.permute.xlu0 %5515
        %5517 = vrot.lane.b32.xlu0 %v5437, 96
        %v5518 = vpop.permute.xlu0 %5517
        %5519 = vrot.lane.b32.xlu0 %v5438, 96
        %v5520 = vpop.permute.xlu0 %5519
        %5521 = vrot.lane.b32.xlu0 %v5439, 96
        %v5522 = vpop.permute.xlu0 %5521
        %5523 = vrot.lane.b32.xlu0 %v5440, 96
        %v5524 = vpop.permute.xlu0 %5523
        %5525 = vrot.lane.b32.xlu0 %v5441, 96
        %v5526 = vpop.permute.xlu0 %5525
        %5527 = vrot.lane.b32.xlu0 %v5442, 96
        %v5528 = vpop.permute.xlu0 %5527
        %5529 = vrot.lane.b32.xlu0 %v5443, 96
        %v5530 = vpop.permute.xlu0 %5529
        %5531 = vrot.lane.b32.xlu0 %v5444, 96
        %v5532 = vpop.permute.xlu0 %5531
        %5533 = vrot.lane.b32.xlu0 %v5445, 96
        %v5534 = vpop.permute.xlu0 %5533
        %5535 = vrot.lane.b32.xlu0 %v5446, 96
        %v5536 = vpop.permute.xlu0 %5535
        %5537 = vrot.lane.b32.xlu0 %v5447, 96
        %v5538 = vpop.permute.xlu0 %5537
        %5539 = vrot.lane.b32.xlu0 %v5448, 96
        %v5540 = vpop.permute.xlu0 %5539
        %5541 = vrot.lane.b32.xlu0 %v5449, 96
        %v5542 = vpop.permute.xlu0 %5541
        %5543 = vrot.lane.b32.xlu0 %v5450, 96
        %v5544 = vpop.permute.xlu0 %5543
        %5545 = vrot.lane.b32.xlu0 %v5451, 96
        %v5546 = vpop.permute.xlu0 %5545
        %5547 = vrot.lane.b32.xlu0 %v5452, 96
        %v5548 = vpop.permute.xlu0 %5547
        %5581 = vst.msk [vmem:[#allocation4] sm:$0xff] %vm3054, %v5486
        %5582 = vst.msk [vmem:[#allocation4 + $0x10] sm:$0xff] %vm3054, %v5488
        %5583 = vst.msk [vmem:[#allocation4 + $0x20] sm:$0xff] %vm3054, %v5490
        %5584 = vst.msk [vmem:[#allocation4 + $0x30] sm:$0xff] %vm3054, %v5492
        %5585 = vst.msk [vmem:[#allocation4 + $0x40] sm:$0xff] %vm3054, %v5494
        %5586 = vst.msk [vmem:[#allocation4 + $0x50] sm:$0xff] %vm3054, %v5496
        %5587 = vst.msk [vmem:[#allocation4 + $0x60] sm:$0xff] %vm3054, %v5498
        %5588 = vst.msk [vmem:[#allocation4 + $0x70] sm:$0xff] %vm3054, %v5500
        %5589 = vst.msk [vmem:[#allocation4 + $0x80] sm:$0xff] %vm3054, %v5502
        %5590 = vst.msk [vmem:[#allocation4 + $0x90] sm:$0xff] %vm3054, %v5504
        %5591 = vst.msk [vmem:[#allocation4 + $0xa0] sm:$0xff] %vm3054, %v5506
        %5592 = vst.msk [vmem:[#allocation4 + $0xb0] sm:$0xff] %vm3054, %v5508
        %5593 = vst.msk [vmem:[#allocation4 + $0xc0] sm:$0xff] %vm3054, %v5510
        %5594 = vst.msk [vmem:[#allocation4 + $0xd0] sm:$0xff] %vm3054, %v5512
        %5595 = vst.msk [vmem:[#allocation4 + $0xe0] sm:$0xff] %vm3054, %v5514
        %5596 = vst.msk [vmem:[#allocation4 + $0xf0] sm:$0xff] %vm3054, %v5516
        %5597 = vst.msk [vmem:[#allocation4 + $0x100] sm:$0xff] %vm3054, %v5518
        %5598 = vst.msk [vmem:[#allocation4 + $0x110] sm:$0xff] %vm3054, %v5520
        %5599 = vst.msk [vmem:[#allocation4 + $0x120] sm:$0xff] %vm3054, %v5522
        %5600 = vst.msk [vmem:[#allocation4 + $0x130] sm:$0xff] %vm3054, %v5524
        %5601 = vst.msk [vmem:[#allocation4 + $0x140] sm:$0xff] %vm3054, %v5526
        %5602 = vst.msk [vmem:[#allocation4 + $0x150] sm:$0xff] %vm3054, %v5528
        %5603 = vst.msk [vmem:[#allocation4 + $0x160] sm:$0xff] %vm3054, %v5530
        %5604 = vst.msk [vmem:[#allocation4 + $0x170] sm:$0xff] %vm3054, %v5532
        %5605 = vst.msk [vmem:[#allocation4 + $0x180] sm:$0xff] %vm3054, %v5534
        %5606 = vst.msk [vmem:[#allocation4 + $0x190] sm:$0xff] %vm3054, %v5536
        %5607 = vst.msk [vmem:[#allocation4 + $0x1a0] sm:$0xff] %vm3054, %v5538
        %5608 = vst.msk [vmem:[#allocation4 + $0x1b0] sm:$0xff] %vm3054, %v5540
        %5609 = vst.msk [vmem:[#allocation4 + $0x1c0] sm:$0xff] %vm3054, %v5542
        %5610 = vst.msk [vmem:[#allocation4 + $0x1d0] sm:$0xff] %vm3054, %v5544
        %5611 = vst.msk [vmem:[#allocation4 + $0x1e0] sm:$0xff] %vm3054, %v5546
        %5612 = vst.msk [vmem:[#allocation4 + $0x1f0] sm:$0xff] %vm3054, %v5548
        %v5613 = vld [vmem:[%s2893 + $0x8] sm:$0xff]
        %v5614 = vld [vmem:[%s2893 + $0x10] sm:$0xff]
        %v5615 = vld [vmem:[%s2893 + $0x28] sm:$0xff]
        %v5616 = vld [vmem:[%s2893 + $0x30] sm:$0xff]
        %v5617 = vld [vmem:[%s2893 + $0x48] sm:$0xff]
        %v5618 = vld [vmem:[%s2893 + $0x50] sm:$0xff]
        %v5619 = vld [vmem:[%s2893 + $0x68] sm:$0xff]
        %v5620 = vld [vmem:[%s2893 + $0x70] sm:$0xff]
        %v5621 = vld [vmem:[%s2893 + $0x88] sm:$0xff]
        %v5622 = vld [vmem:[%s2893 + $0x90] sm:$0xff]
        %v5623 = vld [vmem:[%s2893 + $0xa8] sm:$0xff]
        %v5624 = vld [vmem:[%s2893 + $0xb0] sm:$0xff]
        %v5625 = vld [vmem:[%s2893 + $0xc8] sm:$0xff]
        %v5626 = vld [vmem:[%s2893 + $0xd0] sm:$0xff]
        %v5627 = vld [vmem:[%s2893 + $0xe8] sm:$0xff]
        %v5628 = vld [vmem:[%s2893 + $0xf0] sm:$0xff]
        %v5629 = vld [vmem:[%s2893 + $0x108] sm:$0xff]
        %v5630 = vld [vmem:[%s2893 + $0x110] sm:$0xff]
        %v5631 = vld [vmem:[%s2893 + $0x128] sm:$0xff]
        %v5632 = vld [vmem:[%s2893 + $0x130] sm:$0xff]
        %v5633 = vld [vmem:[%s2893 + $0x148] sm:$0xff]
        %v5634 = vld [vmem:[%s2893 + $0x150] sm:$0xff]
        %v5635 = vld [vmem:[%s2893 + $0x168] sm:$0xff]
        %v5636 = vld [vmem:[%s2893 + $0x170] sm:$0xff]
        %v5637 = vld [vmem:[%s2893 + $0x188] sm:$0xff]
        %v5638 = vld [vmem:[%s2893 + $0x190] sm:$0xff]
        %v5639 = vld [vmem:[%s2893 + $0x1a8] sm:$0xff]
        %v5640 = vld [vmem:[%s2893 + $0x1b0] sm:$0xff]
        %v5641 = vld [vmem:[%s2893 + $0x1c8] sm:$0xff]
        %v5642 = vld [vmem:[%s2893 + $0x1d0] sm:$0xff]
        %v5643 = vld [vmem:[%s2893 + $0x1e8] sm:$0xff]
        %v5644 = vld [vmem:[%s2893 + $0x1f0] sm:$0xff]
        %5677 = vrot.lane.b32.xlu0 %v5613, 112
        %v5678 = vpop.permute.xlu0 %5677
        %5679 = vrot.lane.b32.xlu0 %v5614, 112
        %v5680 = vpop.permute.xlu0 %5679
        %5681 = vrot.lane.b32.xlu0 %v5615, 112
        %v5682 = vpop.permute.xlu0 %5681
        %5683 = vrot.lane.b32.xlu0 %v5616, 112
        %v5684 = vpop.permute.xlu0 %5683
        %5685 = vrot.lane.b32.xlu0 %v5617, 112
        %v5686 = vpop.permute.xlu0 %5685
        %5687 = vrot.lane.b32.xlu0 %v5618, 112
        %v5688 = vpop.permute.xlu0 %5687
        %5689 = vrot.lane.b32.xlu0 %v5619, 112
        %v5690 = vpop.permute.xlu0 %5689
        %5691 = vrot.lane.b32.xlu0 %v5620, 112
        %v5692 = vpop.permute.xlu0 %5691
        %5693 = vrot.lane.b32.xlu0 %v5621, 112
        %v5694 = vpop.permute.xlu0 %5693
        %5695 = vrot.lane.b32.xlu0 %v5622, 112
        %v5696 = vpop.permute.xlu0 %5695
        %5697 = vrot.lane.b32.xlu0 %v5623, 112
        %v5698 = vpop.permute.xlu0 %5697
        %5699 = vrot.lane.b32.xlu0 %v5624, 112
        %v5700 = vpop.permute.xlu0 %5699
        %5701 = vrot.lane.b32.xlu0 %v5625, 112
        %v5702 = vpop.permute.xlu0 %5701
        %5703 = vrot.lane.b32.xlu0 %v5626, 112
        %v5704 = vpop.permute.xlu0 %5703
        %5705 = vrot.lane.b32.xlu0 %v5627, 112
        %v5706 = vpop.permute.xlu0 %5705
        %5707 = vrot.lane.b32.xlu0 %v5628, 112
        %v5708 = vpop.permute.xlu0 %5707
        %5709 = vrot.lane.b32.xlu0 %v5629, 112
        %v5710 = vpop.permute.xlu0 %5709
        %5711 = vrot.lane.b32.xlu0 %v5630, 112
        %v5712 = vpop.permute.xlu0 %5711
        %5713 = vrot.lane.b32.xlu0 %v5631, 112
        %v5714 = vpop.permute.xlu0 %5713
        %5715 = vrot.lane.b32.xlu0 %v5632, 112
        %v5716 = vpop.permute.xlu0 %5715
        %5717 = vrot.lane.b32.xlu0 %v5633, 112
        %v5718 = vpop.permute.xlu0 %5717
        %5719 = vrot.lane.b32.xlu0 %v5634, 112
        %v5720 = vpop.permute.xlu0 %5719
        %5721 = vrot.lane.b32.xlu0 %v5635, 112
        %v5722 = vpop.permute.xlu0 %5721
        %5723 = vrot.lane.b32.xlu0 %v5636, 112
        %v5724 = vpop.permute.xlu0 %5723
        %5725 = vrot.lane.b32.xlu0 %v5637, 112
        %v5726 = vpop.permute.xlu0 %5725
        %5727 = vrot.lane.b32.xlu0 %v5638, 112
        %v5728 = vpop.permute.xlu0 %5727
        %5729 = vrot.lane.b32.xlu0 %v5639, 112
        %v5730 = vpop.permute.xlu0 %5729
        %5731 = vrot.lane.b32.xlu0 %v5640, 112
        %v5732 = vpop.permute.xlu0 %5731
        %5733 = vrot.lane.b32.xlu0 %v5641, 112
        %v5734 = vpop.permute.xlu0 %5733
        %5735 = vrot.lane.b32.xlu0 %v5642, 112
        %v5736 = vpop.permute.xlu0 %5735
        %5737 = vrot.lane.b32.xlu0 %v5643, 112
        %v5738 = vpop.permute.xlu0 %5737
        %5739 = vrot.lane.b32.xlu0 %v5644, 112
        %v5740 = vpop.permute.xlu0 %5739
        %5773 = vst.msk [vmem:[#allocation4] sm:$0xff] %vm3247, %v5678
        %5774 = vst.msk [vmem:[#allocation4 + $0x10] sm:$0xff] %vm3247, %v5680
        %5775 = vst.msk [vmem:[#allocation4 + $0x20] sm:$0xff] %vm3247, %v5682
        %5776 = vst.msk [vmem:[#allocation4 + $0x30] sm:$0xff] %vm3247, %v5684
        %5777 = vst.msk [vmem:[#allocation4 + $0x40] sm:$0xff] %vm3247, %v5686
        %5778 = vst.msk [vmem:[#allocation4 + $0x50] sm:$0xff] %vm3247, %v5688
        %5779 = vst.msk [vmem:[#allocation4 + $0x60] sm:$0xff] %vm3247, %v5690
        %5780 = vst.msk [vmem:[#allocation4 + $0x70] sm:$0xff] %vm3247, %v5692
        %5781 = vst.msk [vmem:[#allocation4 + $0x80] sm:$0xff] %vm3247, %v5694
        %5782 = vst.msk [vmem:[#allocation4 + $0x90] sm:$0xff] %vm3247, %v5696
        %5783 = vst.msk [vmem:[#allocation4 + $0xa0] sm:$0xff] %vm3247, %v5698
        %5784 = vst.msk [vmem:[#allocation4 + $0xb0] sm:$0xff] %vm3247, %v5700
        %5785 = vst.msk [vmem:[#allocation4 + $0xc0] sm:$0xff] %vm3247, %v5702
        %5786 = vst.msk [vmem:[#allocation4 + $0xd0] sm:$0xff] %vm3247, %v5704
        %5787 = vst.msk [vmem:[#allocation4 + $0xe0] sm:$0xff] %vm3247, %v5706
        %5788 = vst.msk [vmem:[#allocation4 + $0xf0] sm:$0xff] %vm3247, %v5708
        %5789 = vst.msk [vmem:[#allocation4 + $0x100] sm:$0xff] %vm3247, %v5710
        %5790 = vst.msk [vmem:[#allocation4 + $0x110] sm:$0xff] %vm3247, %v5712
        %5791 = vst.msk [vmem:[#allocation4 + $0x120] sm:$0xff] %vm3247, %v5714
        %5792 = vst.msk [vmem:[#allocation4 + $0x130] sm:$0xff] %vm3247, %v5716
        %5793 = vst.msk [vmem:[#allocation4 + $0x140] sm:$0xff] %vm3247, %v5718
        %5794 = vst.msk [vmem:[#allocation4 + $0x150] sm:$0xff] %vm3247, %v5720
        %5795 = vst.msk [vmem:[#allocation4 + $0x160] sm:$0xff] %vm3247, %v5722
        %5796 = vst.msk [vmem:[#allocation4 + $0x170] sm:$0xff] %vm3247, %v5724
        %5797 = vst.msk [vmem:[#allocation4 + $0x180] sm:$0xff] %vm3247, %v5726
        %5798 = vst.msk [vmem:[#allocation4 + $0x190] sm:$0xff] %vm3247, %v5728
        %5799 = vst.msk [vmem:[#allocation4 + $0x1a0] sm:$0xff] %vm3247, %v5730
        %5800 = vst.msk [vmem:[#allocation4 + $0x1b0] sm:$0xff] %vm3247, %v5732
        %5801 = vst.msk [vmem:[#allocation4 + $0x1c0] sm:$0xff] %vm3247, %v5734
        %5802 = vst.msk [vmem:[#allocation4 + $0x1d0] sm:$0xff] %vm3247, %v5736
        %5803 = vst.msk [vmem:[#allocation4 + $0x1e0] sm:$0xff] %vm3247, %v5738
        %5804 = vst.msk [vmem:[#allocation4 + $0x1f0] sm:$0xff] %vm3247, %v5740
        %v5805 = vld [vmem:[%s2893 + $0x9] sm:$0xff]
        %v5806 = vld [vmem:[%s2893 + $0x11] sm:$0xff]
        %v5807 = vld [vmem:[%s2893 + $0x29] sm:$0xff]
        %v5808 = vld [vmem:[%s2893 + $0x31] sm:$0xff]
        %v5809 = vld [vmem:[%s2893 + $0x49] sm:$0xff]
        %v5810 = vld [vmem:[%s2893 + $0x51] sm:$0xff]
        %v5811 = vld [vmem:[%s2893 + $0x69] sm:$0xff]
        %v5812 = vld [vmem:[%s2893 + $0x71] sm:$0xff]
        %v5813 = vld [vmem:[%s2893 + $0x89] sm:$0xff]
        %v5814 = vld [vmem:[%s2893 + $0x91] sm:$0xff]
        %v5815 = vld [vmem:[%s2893 + $0xa9] sm:$0xff]
        %v5816 = vld [vmem:[%s2893 + $0xb1] sm:$0xff]
        %v5817 = vld [vmem:[%s2893 + $0xc9] sm:$0xff]
        %v5818 = vld [vmem:[%s2893 + $0xd1] sm:$0xff]
        %v5819 = vld [vmem:[%s2893 + $0xe9] sm:$0xff]
        %v5820 = vld [vmem:[%s2893 + $0xf1] sm:$0xff]
        %v5821 = vld [vmem:[%s2893 + $0x109] sm:$0xff]
        %v5822 = vld [vmem:[%s2893 + $0x111] sm:$0xff]
        %v5823 = vld [vmem:[%s2893 + $0x129] sm:$0xff]
        %v5824 = vld [vmem:[%s2893 + $0x131] sm:$0xff]
        %v5825 = vld [vmem:[%s2893 + $0x149] sm:$0xff]
        %v5826 = vld [vmem:[%s2893 + $0x151] sm:$0xff]
        %v5827 = vld [vmem:[%s2893 + $0x169] sm:$0xff]
        %v5828 = vld [vmem:[%s2893 + $0x171] sm:$0xff]
        %v5829 = vld [vmem:[%s2893 + $0x189] sm:$0xff]
        %v5830 = vld [vmem:[%s2893 + $0x191] sm:$0xff]
        %v5831 = vld [vmem:[%s2893 + $0x1a9] sm:$0xff]
        %v5832 = vld [vmem:[%s2893 + $0x1b1] sm:$0xff]
        %v5833 = vld [vmem:[%s2893 + $0x1c9] sm:$0xff]
        %v5834 = vld [vmem:[%s2893 + $0x1d1] sm:$0xff]
        %v5835 = vld [vmem:[%s2893 + $0x1e9] sm:$0xff]
        %v5836 = vld [vmem:[%s2893 + $0x1f1] sm:$0xff]
        %5837 = vst.msk [vmem:[#allocation4 + $0x8] sm:$0xff] %vm1242, %v5805
        %5838 = vst.msk [vmem:[#allocation4 + $0x18] sm:$0xff] %vm1242, %v5806
        %5839 = vst.msk [vmem:[#allocation4 + $0x28] sm:$0xff] %vm1242, %v5807
        %5840 = vst.msk [vmem:[#allocation4 + $0x38] sm:$0xff] %vm1242, %v5808
        %5841 = vst.msk [vmem:[#allocation4 + $0x48] sm:$0xff] %vm1242, %v5809
        %5842 = vst.msk [vmem:[#allocation4 + $0x58] sm:$0xff] %vm1242, %v5810
        %5843 = vst.msk [vmem:[#allocation4 + $0x68] sm:$0xff] %vm1242, %v5811
        %5844 = vst.msk [vmem:[#allocation4 + $0x78] sm:$0xff] %vm1242, %v5812
        %5845 = vst.msk [vmem:[#allocation4 + $0x88] sm:$0xff] %vm1242, %v5813
        %5846 = vst.msk [vmem:[#allocation4 + $0x98] sm:$0xff] %vm1242, %v5814
        %5847 = vst.msk [vmem:[#allocation4 + $0xa8] sm:$0xff] %vm1242, %v5815
        %5848 = vst.msk [vmem:[#allocation4 + $0xb8] sm:$0xff] %vm1242, %v5816
        %5849 = vst.msk [vmem:[#allocation4 + $0xc8] sm:$0xff] %vm1242, %v5817
        %5850 = vst.msk [vmem:[#allocation4 + $0xd8] sm:$0xff] %vm1242, %v5818
        %5851 = vst.msk [vmem:[#allocation4 + $0xe8] sm:$0xff] %vm1242, %v5819
        %5852 = vst.msk [vmem:[#allocation4 + $0xf8] sm:$0xff] %vm1242, %v5820
        %5853 = vst.msk [vmem:[#allocation4 + $0x108] sm:$0xff] %vm1242, %v5821
        %5854 = vst.msk [vmem:[#allocation4 + $0x118] sm:$0xff] %vm1242, %v5822
        %5855 = vst.msk [vmem:[#allocation4 + $0x128] sm:$0xff] %vm1242, %v5823
        %5856 = vst.msk [vmem:[#allocation4 + $0x138] sm:$0xff] %vm1242, %v5824
        %5857 = vst.msk [vmem:[#allocation4 + $0x148] sm:$0xff] %vm1242, %v5825
        %5858 = vst.msk [vmem:[#allocation4 + $0x158] sm:$0xff] %vm1242, %v5826
        %5859 = vst.msk [vmem:[#allocation4 + $0x168] sm:$0xff] %vm1242, %v5827
        %5860 = vst.msk [vmem:[#allocation4 + $0x178] sm:$0xff] %vm1242, %v5828
        %5861 = vst.msk [vmem:[#allocation4 + $0x188] sm:$0xff] %vm1242, %v5829
        %5862 = vst.msk [vmem:[#allocation4 + $0x198] sm:$0xff] %vm1242, %v5830
        %5863 = vst.msk [vmem:[#allocation4 + $0x1a8] sm:$0xff] %vm1242, %v5831
        %5864 = vst.msk [vmem:[#allocation4 + $0x1b8] sm:$0xff] %vm1242, %v5832
        %5865 = vst.msk [vmem:[#allocation4 + $0x1c8] sm:$0xff] %vm1242, %v5833
        %5866 = vst.msk [vmem:[#allocation4 + $0x1d8] sm:$0xff] %vm1242, %v5834
        %5867 = vst.msk [vmem:[#allocation4 + $0x1e8] sm:$0xff] %vm1242, %v5835
        %5868 = vst.msk [vmem:[#allocation4 + $0x1f8] sm:$0xff] %vm1242, %v5836
        %v5869 = vld [vmem:[#allocation4] sm:$0xff]
        %v5870 = vld [vmem:[#allocation4 + $0x8] sm:$0xff]
        %v5871 = vld [vmem:[#allocation4 + $0x10] sm:$0xff]
        %v5872 = vld [vmem:[#allocation4 + $0x18] sm:$0xff]
        %v5873 = vld [vmem:[#allocation4 + $0x20] sm:$0xff]
        %v5874 = vld [vmem:[#allocation4 + $0x28] sm:$0xff]
        %v5875 = vld [vmem:[#allocation4 + $0x30] sm:$0xff]
        %v5876 = vld [vmem:[#allocation4 + $0x38] sm:$0xff]
        %v5877 = vld [vmem:[#allocation4 + $0x40] sm:$0xff]
        %v5878 = vld [vmem:[#allocation4 + $0x48] sm:$0xff]
        %v5879 = vld [vmem:[#allocation4 + $0x50] sm:$0xff]
        %v5880 = vld [vmem:[#allocation4 + $0x58] sm:$0xff]
        %v5881 = vld [vmem:[#allocation4 + $0x60] sm:$0xff]
        %v5882 = vld [vmem:[#allocation4 + $0x68] sm:$0xff]
        %v5883 = vld [vmem:[#allocation4 + $0x70] sm:$0xff]
        %v5884 = vld [vmem:[#allocation4 + $0x78] sm:$0xff]
        %v5885 = vld [vmem:[#allocation4 + $0x80] sm:$0xff]
        %v5886 = vld [vmem:[#allocation4 + $0x88] sm:$0xff]
        %v5887 = vld [vmem:[#allocation4 + $0x90] sm:$0xff]
        %v5888 = vld [vmem:[#allocation4 + $0x98] sm:$0xff]
        %v5889 = vld [vmem:[#allocation4 + $0xa0] sm:$0xff]
        %v5890 = vld [vmem:[#allocation4 + $0xa8] sm:$0xff]
        %v5891 = vld [vmem:[#allocation4 + $0xb0] sm:$0xff]
        %v5892 = vld [vmem:[#allocation4 + $0xb8] sm:$0xff]
        %v5893 = vld [vmem:[#allocation4 + $0xc0] sm:$0xff]
        %v5894 = vld [vmem:[#allocation4 + $0xc8] sm:$0xff]
        %v5895 = vld [vmem:[#allocation4 + $0xd0] sm:$0xff]
        %v5896 = vld [vmem:[#allocation4 + $0xd8] sm:$0xff]
        %v5897 = vld [vmem:[#allocation4 + $0xe0] sm:$0xff]
        %v5898 = vld [vmem:[#allocation4 + $0xe8] sm:$0xff]
        %v5899 = vld [vmem:[#allocation4 + $0xf0] sm:$0xff]
        %v5900 = vld [vmem:[#allocation4 + $0xf8] sm:$0xff]
        %v5901 = vld [vmem:[#allocation4 + $0x100] sm:$0xff]
        %v5902 = vld [vmem:[#allocation4 + $0x108] sm:$0xff]
        %v5903 = vld [vmem:[#allocation4 + $0x110] sm:$0xff]
        %v5904 = vld [vmem:[#allocation4 + $0x118] sm:$0xff]
        %v5905 = vld [vmem:[#allocation4 + $0x120] sm:$0xff]
        %v5906 = vld [vmem:[#allocation4 + $0x128] sm:$0xff]
        %v5907 = vld [vmem:[#allocation4 + $0x130] sm:$0xff]
        %v5908 = vld [vmem:[#allocation4 + $0x138] sm:$0xff]
        %v5909 = vld [vmem:[#allocation4 + $0x140] sm:$0xff]
        %v5910 = vld [vmem:[#allocation4 + $0x148] sm:$0xff]
        %v5911 = vld [vmem:[#allocation4 + $0x150] sm:$0xff]
        %v5912 = vld [vmem:[#allocation4 + $0x158] sm:$0xff]
        %v5913 = vld [vmem:[#allocation4 + $0x160] sm:$0xff]
        %v5914 = vld [vmem:[#allocation4 + $0x168] sm:$0xff]
        %v5915 = vld [vmem:[#allocation4 + $0x170] sm:$0xff]
        %v5916 = vld [vmem:[#allocation4 + $0x178] sm:$0xff]
        %v5917 = vld [vmem:[#allocation4 + $0x180] sm:$0xff]
        %v5918 = vld [vmem:[#allocation4 + $0x188] sm:$0xff]
        %v5919 = vld [vmem:[#allocation4 + $0x190] sm:$0xff]
        %v5920 = vld [vmem:[#allocation4 + $0x198] sm:$0xff]
        %v5921 = vld [vmem:[#allocation4 + $0x1a0] sm:$0xff]
        %v5922 = vld [vmem:[#allocation4 + $0x1a8] sm:$0xff]
        %v5923 = vld [vmem:[#allocation4 + $0x1b0] sm:$0xff]
        %v5924 = vld [vmem:[#allocation4 + $0x1b8] sm:$0xff]
        %v5925 = vld [vmem:[#allocation4 + $0x1c0] sm:$0xff]
        %v5926 = vld [vmem:[#allocation4 + $0x1c8] sm:$0xff]
        %v5927 = vld [vmem:[#allocation4 + $0x1d0] sm:$0xff]
        %v5928 = vld [vmem:[#allocation4 + $0x1d8] sm:$0xff]
        %v5929 = vld [vmem:[#allocation4 + $0x1e0] sm:$0xff]
        %v5930 = vld [vmem:[#allocation4 + $0x1e8] sm:$0xff]
        %v5931 = vld [vmem:[#allocation4 + $0x1f0] sm:$0xff]
        %v5932 = vld [vmem:[#allocation4 + $0x1f8] sm:$0xff]
        %v5933 = vpack.c.bf16 %v5871, %v5869
        %v5934 = vpack.c.bf16 %v5872, %v5870
        %v5935 = vpack.c.bf16 %v5875, %v5873
        %v5936 = vpack.c.bf16 %v5876, %v5874
        %v5937 = vpack.c.bf16 %v5879, %v5877
        %v5938 = vpack.c.bf16 %v5880, %v5878
        %v5939 = vpack.c.bf16 %v5883, %v5881
        %v5940 = vpack.c.bf16 %v5884, %v5882
        %v5941 = vpack.c.bf16 %v5887, %v5885
        %v5942 = vpack.c.bf16 %v5888, %v5886
        %v5943 = vpack.c.bf16 %v5891, %v5889
        %v5944 = vpack.c.bf16 %v5892, %v5890
        %v5945 = vpack.c.bf16 %v5895, %v5893
        %v5946 = vpack.c.bf16 %v5896, %v5894
        %v5947 = vpack.c.bf16 %v5899, %v5897
        %v5948 = vpack.c.bf16 %v5900, %v5898
        %v5949 = vpack.c.bf16 %v5903, %v5901
        %v5950 = vpack.c.bf16 %v5904, %v5902
        %v5951 = vpack.c.bf16 %v5907, %v5905
        %v5952 = vpack.c.bf16 %v5908, %v5906
        %v5953 = vpack.c.bf16 %v5911, %v5909
        %v5954 = vpack.c.bf16 %v5912, %v5910
        %v5955 = vpack.c.bf16 %v5915, %v5913
        %v5956 = vpack.c.bf16 %v5916, %v5914
        %v5957 = vpack.c.bf16 %v5919, %v5917
        %v5958 = vpack.c.bf16 %v5920, %v5918
        %v5959 = vpack.c.bf16 %v5923, %v5921
        %v5960 = vpack.c.bf16 %v5924, %v5922
        %v5961 = vpack.c.bf16 %v5927, %v5925
        %v5962 = vpack.c.bf16 %v5928, %v5926
        %v5963 = vpack.c.bf16 %v5931, %v5929
        %v5964 = vpack.c.bf16 %v5932, %v5930
        %v5965 = vld [vmem:[%s25] sm:$0xf]
        %v5966 = vld [vmem:[%s25 + $0x4] sm:$0xf]
        %v5967 = vld [vmem:[%s25 + $0x8] sm:$0xf]
        %v5968 = vld [vmem:[%s25 + $0xc] sm:$0xf]
        %v5969 = vld [vmem:[%s25 + $0x10] sm:$0xf]
        %v5970 = vld [vmem:[%s25 + $0x14] sm:$0xf]
        %v5971 = vld [vmem:[%s25 + $0x18] sm:$0xf]
        %v5972 = vld [vmem:[%s25 + $0x1c] sm:$0xf]
        %v5973 = vld [vmem:[%s25 + $0x20] sm:$0xf]
        %v5974 = vld [vmem:[%s25 + $0x24] sm:$0xf]
        %v5975 = vld [vmem:[%s25 + $0x28] sm:$0xf]
        %v5976 = vld [vmem:[%s25 + $0x2c] sm:$0xf]
        %v5977 = vld [vmem:[%s25 + $0x30] sm:$0xf]
        %v5978 = vld [vmem:[%s25 + $0x34] sm:$0xf]
        %v5979 = vld [vmem:[%s25 + $0x38] sm:$0xf]
        %v5980 = vld [vmem:[%s25 + $0x3c] sm:$0xf]
        %v5981 = vld [vmem:[%s25 + $0x40] sm:$0xf]
        %v5982 = vld [vmem:[%s25 + $0x44] sm:$0xf]
        %v6001 = vunpack.c.l.b16 %v5965
        %v6002 = vunpack.c.l.b16 %v5966
        %v6003 = vunpack.c.l.b16 %v5967
        %v6004 = vunpack.c.l.b16 %v5968
        %v6005 = vunpack.c.l.b16 %v5969
        %v6006 = vunpack.c.l.b16 %v5970
        %v6007 = vunpack.c.l.b16 %v5971
        %v6008 = vunpack.c.l.b16 %v5972
        %v6009 = vunpack.c.l.b16 %v5973
        %v6010 = vunpack.c.l.b16 %v5974
        %v6011 = vunpack.c.l.b16 %v5975
        %v6012 = vunpack.c.l.b16 %v5976
        %v6013 = vunpack.c.l.b16 %v5977
        %v6014 = vunpack.c.l.b16 %v5978
        %v6015 = vunpack.c.l.b16 %v5979
        %v6016 = vunpack.c.l.b16 %v5980
        %v6017 = vunpack.c.l.b16 %v5981
        %v6018 = vunpack.c.l.b16 %v5982
        %v6019 = vpack.c.b16 %v6002, %v6001
        %v6020 = vpack.c.b16 %v6004, %v6003
        %v6021 = vpack.c.b16 %v6006, %v6005
        %v6022 = vpack.c.b16 %v6008, %v6007
        %v6023 = vpack.c.b16 %v6010, %v6009
        %v6024 = vpack.c.b16 %v6012, %v6011
        %v6025 = vpack.c.b16 %v6014, %v6013
        %v6026 = vpack.c.b16 %v6016, %v6015
        %v6027 = vpack.c.b16 %v6018, %v6017
        %v6038 = vsel %vm1242, %v5934, 0
        %v6041 = vsel %vm1242, %v5936, 0
        %v6044 = vsel %vm1242, %v5938, 0
        %v6047 = vsel %vm1242, %v5940, 0
        %v6050 = vsel %vm1242, %v5942, 0
        %v6053 = vsel %vm1242, %v5944, 0
        %v6056 = vsel %vm1242, %v5946, 0
        %v6059 = vsel %vm1242, %v5948, 0
        %v6062 = vsel %vm1242, %v5950, 0
        %v6065 = vsel %vm1242, %v5952, 0
        %v6068 = vsel %vm1242, %v5954, 0
        %v6071 = vsel %vm1242, %v5956, 0
        %v6074 = vsel %vm1242, %v5958, 0
        %v6077 = vsel %vm1242, %v5960, 0
        %v6080 = vsel %vm1242, %v5962, 0
        %v6083 = vsel %vm1242, %v5964, 0
        %6085 = vmatprep.subr.bf16.mxu0 0
        %6086 = vmatpush1.bf16.msra.mxu0 %v6019
        %6087 = vmatprep.subr.bf16.mxu0 0
        %6088 = vmatpush1.bf16.msra.mxu0 %v6020
        %6089 = vmatprep.subr.bf16.mxu0 0
        %6090 = vmatpush1.bf16.msra.mxu0 %v6021
        %6091 = vmatprep.subr.bf16.mxu0 0
        %6092 = vmatpush1.bf16.msra.mxu0 %v6022
        %6093 = vmatprep.subr.bf16.mxu0 0
        %6094 = vmatpush1.bf16.msra.mxu0 %v6023
        %6095 = vmatprep.subr.bf16.mxu0 0
        %6096 = vmatpush1.bf16.msra.mxu0 %v6024
        %6097 = vmatprep.subr.bf16.mxu0 0
        %6098 = vmatpush1.bf16.msra.mxu0 %v6025
        %6099 = vmatprep.subr.bf16.mxu0 0
        %6100 = vmatpush1.bf16.msra.mxu0 %v6026
        %6101 = vmatprep.subr.bf16.mxu0 0
        %6102 = vmatpush1.bf16.msra.mxu0 %v6027
        %6103 = vmatprep.subr.bf16.mxu0 0
        %6104 = vmatpush1.bf16.msra.mxu0 0
        %6105 = vmatprep.subr.bf16.mxu0 0
        %6106 = vmatpush1.bf16.msra.mxu0 0
        %6107 = vmatprep.subr.bf16.mxu0 0
        %6108 = vmatpush1.bf16.msra.mxu0 0
        %6109 = vmatprep.subr.bf16.mxu0 0
        %6110 = vmatpush1.bf16.msra.mxu0 0
        %6111 = vmatprep.subr.bf16.mxu0 0
        %6112 = vmatpush1.bf16.msra.mxu0 0
        %6113 = vmatprep.subr.bf16.mxu0 0
        %6114 = vmatpush1.bf16.msra.mxu0 0
        %6115 = vmatprep.subr.bf16.mxu0 0
        %6116 = vmatpush1.bf16.msra.mxu0 0
        %6117 = vmatprep.mubr.bf16.mxu0 %v6038
        %6118 = vmatmul.mubr.bf16.gmra.mrb[0].mxu0 %v5933
        %v6119 = vpop.f32.mrb[0].mxu0
        %v6120 = vadd.f32 0.0, %v6119
        %v6121 = vpop.f32.mrb[0].mxu0
        %v6122 = vpop.f32.mrb[0].mxu0
        %v6123 = vadd.f32 0.0, %v6122
        %v6124 = vpop.f32.mrb[0].mxu0
        %6125 = vmatprep.mubr.bf16.mxu0 %v6041
        %6126 = vmatmul.mubr.bf16.gmra.mrb[0].mxu0 %v5935
        %v6127 = vpop.f32.mrb[0].mxu0
        %v6128 = vadd.f32 0.0, %v6127
        %v6129 = vpop.f32.mrb[0].mxu0
        %v6130 = vpop.f32.mrb[0].mxu0
        %v6131 = vadd.f32 0.0, %v6130
        %v6132 = vpop.f32.mrb[0].mxu0
        %6133 = vmatprep.mubr.bf16.mxu0 %v6044
        %6134 = vmatmul.mubr.bf16.gmra.mrb[0].mxu0 %v5937
        %v6135 = vpop.f32.mrb[0].mxu0
        %v6136 = vadd.f32 0.0, %v6135
        %v6137 = vpop.f32.mrb[0].mxu0
        %v6138 = vpop.f32.mrb[0].mxu0
        %v6139 = vadd.f32 0.0, %v6138
        %v6140 = vpop.f32.mrb[0].mxu0
        %6141 = vmatprep.mubr.bf16.mxu0 %v6047
        %6142 = vmatmul.mubr.bf16.gmra.mrb[0].mxu0 %v5939
        %v6143 = vpop.f32.mrb[0].mxu0
        %v6144 = vadd.f32 0.0, %v6143
        %v6145 = vpop.f32.mrb[0].mxu0
        %v6146 = vpop.f32.mrb[0].mxu0
        %v6147 = vadd.f32 0.0, %v6146
        %v6148 = vpop.f32.mrb[0].mxu0
        %6149 = vmatprep.mubr.bf16.mxu0 %v6050
        %6150 = vmatmul.mubr.bf16.gmra.mrb[0].mxu0 %v5941
        %v6151 = vpop.f32.mrb[0].mxu0
        %v6152 = vadd.f32 0.0, %v6151
        %v6153 = vpop.f32.mrb[0].mxu0
        %v6154 = vpop.f32.mrb[0].mxu0
        %v6155 = vadd.f32 0.0, %v6154
        %v6156 = vpop.f32.mrb[0].mxu0
        %6157 = vmatprep.mubr.bf16.mxu0 %v6053
        %6158 = vmatmul.mubr.bf16.gmra.mrb[0].mxu0 %v5943
        %v6159 = vpop.f32.mrb[0].mxu0
        %v6160 = vadd.f32 0.0, %v6159
        %v6161 = vpop.f32.mrb[0].mxu0
        %v6162 = vpop.f32.mrb[0].mxu0
        %v6163 = vadd.f32 0.0, %v6162
        %v6164 = vpop.f32.mrb[0].mxu0
        %6165 = vmatprep.mubr.bf16.mxu0 %v6056
        %6166 = vmatmul.mubr.bf16.gmra.mrb[0].mxu0 %v5945
        %v6167 = vpop.f32.mrb[0].mxu0
        %v6168 = vadd.f32 0.0, %v6167
        %v6169 = vpop.f32.mrb[0].mxu0
        %v6170 = vpop.f32.mrb[0].mxu0
        %v6171 = vadd.f32 0.0, %v6170
        %v6172 = vpop.f32.mrb[0].mxu0
        %6173 = vmatprep.mubr.bf16.mxu0 %v6059
        %6174 = vmatmul.mubr.bf16.gmra.mrb[0].mxu0 %v5947
        %v6175 = vpop.f32.mrb[0].mxu0
        %v6176 = vadd.f32 0.0, %v6175
        %v6177 = vpop.f32.mrb[0].mxu0
        %v6178 = vpop.f32.mrb[0].mxu0
        %v6179 = vadd.f32 0.0, %v6178
        %v6180 = vpop.f32.mrb[0].mxu0
        %6181 = vmatprep.mubr.bf16.mxu0 %v6062
        %6182 = vmatmul.mubr.bf16.gmra.mrb[0].mxu0 %v5949
        %v6183 = vpop.f32.mrb[0].mxu0
        %v6184 = vadd.f32 0.0, %v6183
        %v6185 = vpop.f32.mrb[0].mxu0
        %v6186 = vpop.f32.mrb[0].mxu0
        %v6187 = vadd.f32 0.0, %v6186
        %v6188 = vpop.f32.mrb[0].mxu0
        %6189 = vmatprep.mubr.bf16.mxu0 %v6065
        %6190 = vmatmul.mubr.bf16.gmra.mrb[0].mxu0 %v5951
        %v6191 = vpop.f32.mrb[0].mxu0
        %v6192 = vadd.f32 0.0, %v6191
        %v6193 = vpop.f32.mrb[0].mxu0
        %v6194 = vpop.f32.mrb[0].mxu0
        %v6195 = vadd.f32 0.0, %v6194
        %v6196 = vpop.f32.mrb[0].mxu0
        %6197 = vmatprep.mubr.bf16.mxu0 %v6068
        %6198 = vmatmul.mubr.bf16.gmra.mrb[0].mxu0 %v5953
        %v6199 = vpop.f32.mrb[0].mxu0
        %v6200 = vadd.f32 0.0, %v6199
        %v6201 = vpop.f32.mrb[0].mxu0
        %v6202 = vpop.f32.mrb[0].mxu0
        %v6203 = vadd.f32 0.0, %v6202
        %v6204 = vpop.f32.mrb[0].mxu0
        %6205 = vmatprep.mubr.bf16.mxu0 %v6071
        %6206 = vmatmul.mubr.bf16.gmra.mrb[0].mxu0 %v5955
        %v6207 = vpop.f32.mrb[0].mxu0
        %v6208 = vadd.f32 0.0, %v6207
        %v6209 = vpop.f32.mrb[0].mxu0
        %v6210 = vpop.f32.mrb[0].mxu0
        %v6211 = vadd.f32 0.0, %v6210
        %v6212 = vpop.f32.mrb[0].mxu0
        %6213 = vmatprep.mubr.bf16.mxu0 %v6074
        %6214 = vmatmul.mubr.bf16.gmra.mrb[0].mxu0 %v5957
        %v6215 = vpop.f32.mrb[0].mxu0
        %v6216 = vadd.f32 0.0, %v6215
        %v6217 = vpop.f32.mrb[0].mxu0
        %v6218 = vpop.f32.mrb[0].mxu0
        %v6219 = vadd.f32 0.0, %v6218
        %v6220 = vpop.f32.mrb[0].mxu0
        %6221 = vmatprep.mubr.bf16.mxu0 %v6077
        %6222 = vmatmul.mubr.bf16.gmra.mrb[0].mxu0 %v5959
        %v6223 = vpop.f32.mrb[0].mxu0
        %v6224 = vadd.f32 0.0, %v6223
        %v6225 = vpop.f32.mrb[0].mxu0
        %v6226 = vpop.f32.mrb[0].mxu0
        %v6227 = vadd.f32 0.0, %v6226
        %v6228 = vpop.f32.mrb[0].mxu0
        %6229 = vmatprep.mubr.bf16.mxu0 %v6080
        %6230 = vmatmul.mubr.bf16.gmra.mrb[0].mxu0 %v5961
        %v6231 = vpop.f32.mrb[0].mxu0
        %v6232 = vadd.f32 0.0, %v6231
        %v6233 = vpop.f32.mrb[0].mxu0
        %v6234 = vpop.f32.mrb[0].mxu0
        %v6235 = vadd.f32 0.0, %v6234
        %v6236 = vpop.f32.mrb[0].mxu0
        %6237 = vmatprep.mubr.bf16.mxu0 %v6083
        %6238 = vmatmul.mubr.bf16.gmra.mrb[0].mxu0 %v5963
        %v6239 = vpop.f32.mrb[0].mxu0
        %v6240 = vadd.f32 0.0, %v6239
        %v6241 = vpop.f32.mrb[0].mxu0
        %v6242 = vpop.f32.mrb[0].mxu0
        %v6243 = vadd.f32 0.0, %v6242
        %v6244 = vpop.f32.mrb[0].mxu0
        %6245 = vdwg.mxu0
        %6278 = vrot.lane.b32.xlu0 %v6120, 8
        %v6279 = vpop.permute.xlu0 %6278
        %6280 = vrot.lane.b32.xlu0 %v6123, 8
        %v6281 = vpop.permute.xlu0 %6280
        %6282 = vrot.lane.b32.xlu0 %v6128, 8
        %v6283 = vpop.permute.xlu0 %6282
        %6284 = vrot.lane.b32.xlu0 %v6131, 8
        %v6285 = vpop.permute.xlu0 %6284
        %6286 = vrot.lane.b32.xlu0 %v6136, 8
        %v6287 = vpop.permute.xlu0 %6286
        %6288 = vrot.lane.b32.xlu0 %v6139, 8
        %v6289 = vpop.permute.xlu0 %6288
        %6290 = vrot.lane.b32.xlu0 %v6144, 8
        %v6291 = vpop.permute.xlu0 %6290
        %6292 = vrot.lane.b32.xlu0 %v6147, 8
        %v6293 = vpop.permute.xlu0 %6292
        %6294 = vrot.lane.b32.xlu0 %v6152, 8
        %v6295 = vpop.permute.xlu0 %6294
        %6296 = vrot.lane.b32.xlu0 %v6155, 8
        %v6297 = vpop.permute.xlu0 %6296
        %6298 = vrot.lane.b32.xlu0 %v6160, 8
        %v6299 = vpop.permute.xlu0 %6298
        %6300 = vrot.lane.b32.xlu0 %v6163, 8
        %v6301 = vpop.permute.xlu0 %6300
        %6302 = vrot.lane.b32.xlu0 %v6168, 8
        %v6303 = vpop.permute.xlu0 %6302
        %6304 = vrot.lane.b32.xlu0 %v6171, 8
        %v6305 = vpop.permute.xlu0 %6304
        %6306 = vrot.lane.b32.xlu0 %v6176, 8
        %v6307 = vpop.permute.xlu0 %6306
        %6308 = vrot.lane.b32.xlu0 %v6179, 8
        %v6309 = vpop.permute.xlu0 %6308
        %6310 = vrot.lane.b32.xlu0 %v6184, 8
        %v6311 = vpop.permute.xlu0 %6310
        %6312 = vrot.lane.b32.xlu0 %v6187, 8
        %v6313 = vpop.permute.xlu0 %6312
        %6314 = vrot.lane.b32.xlu0 %v6192, 8
        %v6315 = vpop.permute.xlu0 %6314
        %6316 = vrot.lane.b32.xlu0 %v6195, 8
        %v6317 = vpop.permute.xlu0 %6316
        %6318 = vrot.lane.b32.xlu0 %v6200, 8
        %v6319 = vpop.permute.xlu0 %6318
        %6320 = vrot.lane.b32.xlu0 %v6203, 8
        %v6321 = vpop.permute.xlu0 %6320
        %6322 = vrot.lane.b32.xlu0 %v6208, 8
        %v6323 = vpop.permute.xlu0 %6322
        %6324 = vrot.lane.b32.xlu0 %v6211, 8
        %v6325 = vpop.permute.xlu0 %6324
        %6326 = vrot.lane.b32.xlu0 %v6216, 8
        %v6327 = vpop.permute.xlu0 %6326
        %6328 = vrot.lane.b32.xlu0 %v6219, 8
        %v6329 = vpop.permute.xlu0 %6328
        %6330 = vrot.lane.b32.xlu0 %v6224, 8
        %v6331 = vpop.permute.xlu0 %6330
        %6332 = vrot.lane.b32.xlu0 %v6227, 8
        %v6333 = vpop.permute.xlu0 %6332
        %6334 = vrot.lane.b32.xlu0 %v6232, 8
        %v6335 = vpop.permute.xlu0 %6334
        %6336 = vrot.lane.b32.xlu0 %v6235, 8
        %v6337 = vpop.permute.xlu0 %6336
        %6338 = vrot.lane.b32.xlu0 %v6240, 8
        %v6339 = vpop.permute.xlu0 %6338
        %6340 = vrot.lane.b32.xlu0 %v6243, 8
        %v6341 = vpop.permute.xlu0 %6340
        %vm6374 = vcmask 97344
        %6375 = vst.msk [vmem:[#allocation2] sm:$0xff] %vm6374, %v6279
        %6376 = vst.msk [vmem:[#allocation2 + $0x8] sm:$0xff] %vm6374, %v6281
        %6377 = vst.msk [vmem:[#allocation2 + $0x10] sm:$0xff] %vm6374, %v6283
        %6378 = vst.msk [vmem:[#allocation2 + $0x18] sm:$0xff] %vm6374, %v6285
        %6379 = vst.msk [vmem:[#allocation2 + $0x20] sm:$0xff] %vm6374, %v6287
        %6380 = vst.msk [vmem:[#allocation2 + $0x28] sm:$0xff] %vm6374, %v6289
        %6381 = vst.msk [vmem:[#allocation2 + $0x30] sm:$0xff] %vm6374, %v6291
        %6382 = vst.msk [vmem:[#allocation2 + $0x38] sm:$0xff] %vm6374, %v6293
        %6383 = vst.msk [vmem:[#allocation2 + $0x40] sm:$0xff] %vm6374, %v6295
        %6384 = vst.msk [vmem:[#allocation2 + $0x48] sm:$0xff] %vm6374, %v6297
        %6385 = vst.msk [vmem:[#allocation2 + $0x50] sm:$0xff] %vm6374, %v6299
        %6386 = vst.msk [vmem:[#allocation2 + $0x58] sm:$0xff] %vm6374, %v6301
        %6387 = vst.msk [vmem:[#allocation2 + $0x60] sm:$0xff] %vm6374, %v6303
        %6388 = vst.msk [vmem:[#allocation2 + $0x68] sm:$0xff] %vm6374, %v6305
        %6389 = vst.msk [vmem:[#allocation2 + $0x70] sm:$0xff] %vm6374, %v6307
        %6390 = vst.msk [vmem:[#allocation2 + $0x78] sm:$0xff] %vm6374, %v6309
        %6391 = vst.msk [vmem:[#allocation2 + $0x80] sm:$0xff] %vm6374, %v6311
        %6392 = vst.msk [vmem:[#allocation2 + $0x88] sm:$0xff] %vm6374, %v6313
        %6393 = vst.msk [vmem:[#allocation2 + $0x90] sm:$0xff] %vm6374, %v6315
        %6394 = vst.msk [vmem:[#allocation2 + $0x98] sm:$0xff] %vm6374, %v6317
        %6395 = vst.msk [vmem:[#allocation2 + $0xa0] sm:$0xff] %vm6374, %v6319
        %6396 = vst.msk [vmem:[#allocation2 + $0xa8] sm:$0xff] %vm6374, %v6321
        %6397 = vst.msk [vmem:[#allocation2 + $0xb0] sm:$0xff] %vm6374, %v6323
        %6398 = vst.msk [vmem:[#allocation2 + $0xb8] sm:$0xff] %vm6374, %v6325
        %6399 = vst.msk [vmem:[#allocation2 + $0xc0] sm:$0xff] %vm6374, %v6327
        %6400 = vst.msk [vmem:[#allocation2 + $0xc8] sm:$0xff] %vm6374, %v6329
        %6401 = vst.msk [vmem:[#allocation2 + $0xd0] sm:$0xff] %vm6374, %v6331
        %6402 = vst.msk [vmem:[#allocation2 + $0xd8] sm:$0xff] %vm6374, %v6333
        %6403 = vst.msk [vmem:[#allocation2 + $0xe0] sm:$0xff] %vm6374, %v6335
        %6404 = vst.msk [vmem:[#allocation2 + $0xe8] sm:$0xff] %vm6374, %v6337
        %6405 = vst.msk [vmem:[#allocation2 + $0xf0] sm:$0xff] %vm6374, %v6339
        %6406 = vst.msk [vmem:[#allocation2 + $0xf8] sm:$0xff] %vm6374, %v6341
        %v6407 = vld [vmem:[#allocation2] sm:$0xff]
        %v6408 = vld [vmem:[#allocation2 + $0x8] sm:$0xff]
        %v6409 = vld [vmem:[#allocation2 + $0x10] sm:$0xff]
        %v6410 = vld [vmem:[#allocation2 + $0x18] sm:$0xff]
        %v6411 = vld [vmem:[#allocation2 + $0x20] sm:$0xff]
        %v6412 = vld [vmem:[#allocation2 + $0x28] sm:$0xff]
        %v6413 = vld [vmem:[#allocation2 + $0x30] sm:$0xff]
        %v6414 = vld [vmem:[#allocation2 + $0x38] sm:$0xff]
        %v6415 = vld [vmem:[#allocation2 + $0x40] sm:$0xff]
        %v6416 = vld [vmem:[#allocation2 + $0x48] sm:$0xff]
        %v6417 = vld [vmem:[#allocation2 + $0x50] sm:$0xff]
        %v6418 = vld [vmem:[#allocation2 + $0x58] sm:$0xff]
        %v6419 = vld [vmem:[#allocation2 + $0x60] sm:$0xff]
        %v6420 = vld [vmem:[#allocation2 + $0x68] sm:$0xff]
        %v6421 = vld [vmem:[#allocation2 + $0x70] sm:$0xff]
        %v6422 = vld [vmem:[#allocation2 + $0x78] sm:$0xff]
        %v6423 = vld [vmem:[#allocation2 + $0x80] sm:$0xff]
        %v6424 = vld [vmem:[#allocation2 + $0x88] sm:$0xff]
        %v6425 = vld [vmem:[#allocation2 + $0x90] sm:$0xff]
        %v6426 = vld [vmem:[#allocation2 + $0x98] sm:$0xff]
        %v6427 = vld [vmem:[#allocation2 + $0xa0] sm:$0xff]
        %v6428 = vld [vmem:[#allocation2 + $0xa8] sm:$0xff]
        %v6429 = vld [vmem:[#allocation2 + $0xb0] sm:$0xff]
        %v6430 = vld [vmem:[#allocation2 + $0xb8] sm:$0xff]
        %v6431 = vld [vmem:[#allocation2 + $0xc0] sm:$0xff]
        %v6432 = vld [vmem:[#allocation2 + $0xc8] sm:$0xff]
        %v6433 = vld [vmem:[#allocation2 + $0xd0] sm:$0xff]
        %v6434 = vld [vmem:[#allocation2 + $0xd8] sm:$0xff]
        %v6435 = vld [vmem:[#allocation2 + $0xe0] sm:$0xff]
        %v6436 = vld [vmem:[#allocation2 + $0xe8] sm:$0xff]
        %v6437 = vld [vmem:[#allocation2 + $0xf0] sm:$0xff]
        %v6438 = vld [vmem:[#allocation2 + $0xf8] sm:$0xff]
        %v6439 = vld [vmem:[%s27] sm:$0x1]
        %v6441 = vlaneseq
        %v6442 = vshrl.u32 %v6441, 7
        %v6443 = vsub.s32 0, %v6442
        %v6444 = vrot.slane %v6439, %v6443
        %v6446 = vmul.f32 %v6407, %v6444
        %v6447 = vmul.f32 %v6408, %v6444
        %v6448 = vmul.f32 %v6409, %v6444
        %v6449 = vmul.f32 %v6410, %v6444
        %v6450 = vmul.f32 %v6411, %v6444
        %v6451 = vmul.f32 %v6412, %v6444
        %v6452 = vmul.f32 %v6413, %v6444
        %v6453 = vmul.f32 %v6414, %v6444
        %v6454 = vmul.f32 %v6415, %v6444
        %v6455 = vmul.f32 %v6416, %v6444
        %v6456 = vmul.f32 %v6417, %v6444
        %v6457 = vmul.f32 %v6418, %v6444
        %v6458 = vmul.f32 %v6419, %v6444
        %v6459 = vmul.f32 %v6420, %v6444
        %v6460 = vmul.f32 %v6421, %v6444
        %v6461 = vmul.f32 %v6422, %v6444
        %v6462 = vmul.f32 %v6423, %v6444
        %v6463 = vmul.f32 %v6424, %v6444
        %v6464 = vmul.f32 %v6425, %v6444
        %v6465 = vmul.f32 %v6426, %v6444
        %v6466 = vmul.f32 %v6427, %v6444
        %v6467 = vmul.f32 %v6428, %v6444
        %v6468 = vmul.f32 %v6429, %v6444
        %v6469 = vmul.f32 %v6430, %v6444
        %v6470 = vmul.f32 %v6431, %v6444
        %v6471 = vmul.f32 %v6432, %v6444
        %v6472 = vmul.f32 %v6433, %v6444
        %v6473 = vmul.f32 %v6434, %v6444
        %v6474 = vmul.f32 %v6435, %v6444
        %v6475 = vmul.f32 %v6436, %v6444
        %v6476 = vmul.f32 %v6437, %v6444
        %v6477 = vmul.f32 %v6438, %v6444
        %v6478 = vld [vmem:[%s29] sm:$0x1]
        %v6480 = vlaneseq
        %v6481 = vshrl.u32 %v6480, 7
        %v6482 = vsub.s32 0, %v6481
        %v6483 = vrot.slane %v6478, %v6482
        %v6485 = vadd.f32 %v6446, %v6483
        %v6486 = vadd.f32 %v6447, %v6483
        %v6487 = vadd.f32 %v6448, %v6483
        %v6488 = vadd.f32 %v6449, %v6483
        %v6489 = vadd.f32 %v6450, %v6483
        %v6490 = vadd.f32 %v6451, %v6483
        %v6491 = vadd.f32 %v6452, %v6483
        %v6492 = vadd.f32 %v6453, %v6483
        %v6493 = vadd.f32 %v6454, %v6483
        %v6494 = vadd.f32 %v6455, %v6483
        %v6495 = vadd.f32 %v6456, %v6483
        %v6496 = vadd.f32 %v6457, %v6483
        %v6497 = vadd.f32 %v6458, %v6483
        %v6498 = vadd.f32 %v6459, %v6483
        %v6499 = vadd.f32 %v6460, %v6483
        %v6500 = vadd.f32 %v6461, %v6483
        %v6501 = vadd.f32 %v6462, %v6483
        %v6502 = vadd.f32 %v6463, %v6483
        %v6503 = vadd.f32 %v6464, %v6483
        %v6504 = vadd.f32 %v6465, %v6483
        %v6505 = vadd.f32 %v6466, %v6483
        %v6506 = vadd.f32 %v6467, %v6483
        %v6507 = vadd.f32 %v6468, %v6483
        %v6508 = vadd.f32 %v6469, %v6483
        %v6509 = vadd.f32 %v6470, %v6483
        %v6510 = vadd.f32 %v6471, %v6483
        %v6511 = vadd.f32 %v6472, %v6483
        %v6512 = vadd.f32 %v6473, %v6483
        %v6513 = vadd.f32 %v6474, %v6483
        %v6514 = vadd.f32 %v6475, %v6483
        %v6515 = vadd.f32 %v6476, %v6483
        %v6516 = vadd.f32 %v6477, %v6483
        %v6517 = vmax.f32 %v6485, 0.0
        %v6518 = vmax.f32 %v6486, 0.0
        %v6519 = vmax.f32 %v6487, 0.0
        %v6520 = vmax.f32 %v6488, 0.0
        %v6521 = vmax.f32 %v6489, 0.0
        %v6522 = vmax.f32 %v6490, 0.0
        %v6523 = vmax.f32 %v6491, 0.0
        %v6524 = vmax.f32 %v6492, 0.0
        %v6525 = vmax.f32 %v6493, 0.0
        %v6526 = vmax.f32 %v6494, 0.0
        %v6527 = vmax.f32 %v6495, 0.0
        %v6528 = vmax.f32 %v6496, 0.0
        %v6529 = vmax.f32 %v6497, 0.0
        %v6530 = vmax.f32 %v6498, 0.0
        %v6531 = vmax.f32 %v6499, 0.0
        %v6532 = vmax.f32 %v6500, 0.0
        %v6533 = vmax.f32 %v6501, 0.0
        %v6534 = vmax.f32 %v6502, 0.0
        %v6535 = vmax.f32 %v6503, 0.0
        %v6536 = vmax.f32 %v6504, 0.0
        %v6537 = vmax.f32 %v6505, 0.0
        %v6538 = vmax.f32 %v6506, 0.0
        %v6539 = vmax.f32 %v6507, 0.0
        %v6540 = vmax.f32 %v6508, 0.0
        %v6541 = vmax.f32 %v6509, 0.0
        %v6542 = vmax.f32 %v6510, 0.0
        %v6543 = vmax.f32 %v6511, 0.0
        %v6544 = vmax.f32 %v6512, 0.0
        %v6545 = vmax.f32 %v6513, 0.0
        %v6546 = vmax.f32 %v6514, 0.0
        %v6547 = vmax.f32 %v6515, 0.0
        %v6548 = vmax.f32 %v6516, 0.0
        %v6549 = vpack.c.bf16 %v6518, %v6517
        %v6550 = vpack.c.bf16 %v6520, %v6519
        %v6551 = vpack.c.bf16 %v6522, %v6521
        %v6552 = vpack.c.bf16 %v6524, %v6523
        %v6553 = vpack.c.bf16 %v6526, %v6525
        %v6554 = vpack.c.bf16 %v6528, %v6527
        %v6555 = vpack.c.bf16 %v6530, %v6529
        %v6556 = vpack.c.bf16 %v6532, %v6531
        %v6557 = vpack.c.bf16 %v6534, %v6533
        %v6558 = vpack.c.bf16 %v6536, %v6535
        %v6559 = vpack.c.bf16 %v6538, %v6537
        %v6560 = vpack.c.bf16 %v6540, %v6539
        %v6561 = vpack.c.bf16 %v6542, %v6541
        %v6562 = vpack.c.bf16 %v6544, %v6543
        %v6563 = vpack.c.bf16 %v6546, %v6545
        %v6564 = vpack.c.bf16 %v6548, %v6547
        %v6565 = vld [vmem:[%s31] sm:$0xf]
        %v6566 = vld [vmem:[%s31 + $0x4] sm:$0x3]
        %v6569 = vunpack.c.l.b16 %v6565
        %v6570 = vunpack.c.l.b16 %v6566
        %v6571 = vpack.c.b16 %v6570, %v6569
        %vm6572 = vcmask 97280
        %v6574 = vsel %vm6572, %v6549, 0
        %v6577 = vsel %vm6572, %v6550, 0
        %v6580 = vsel %vm6572, %v6551, 0
        %v6583 = vsel %vm6572, %v6552, 0
        %v6586 = vsel %vm6572, %v6553, 0
        %v6589 = vsel %vm6572, %v6554, 0
        %v6592 = vsel %vm6572, %v6555, 0
        %v6595 = vsel %vm6572, %v6556, 0
        %v6598 = vsel %vm6572, %v6557, 0
        %v6601 = vsel %vm6572, %v6558, 0
        %v6604 = vsel %vm6572, %v6559, 0
        %v6607 = vsel %vm6572, %v6560, 0
        %v6610 = vsel %vm6572, %v6561, 0
        %v6613 = vsel %vm6572, %v6562, 0
        %v6616 = vsel %vm6572, %v6563, 0
        %v6619 = vsel %vm6572, %v6564, 0
        %vm6621 = vcmask 1045504
        %v6623 = vsel %vm6621, %v6571, 0
        %6625 = vmatprep.subr.bf16.mxu0 0
        %6626 = vmatpush1.bf16.msra.mxu0 %v6623
        %6627 = vmatprep.subr.bf16.mxu0 0
        %6628 = vmatpush1.bf16.msra.mxu0 0
        %6629 = vmatprep.subr.bf16.mxu0 0
        %6630 = vmatpush1.bf16.msra.mxu0 0
        %6631 = vmatprep.subr.bf16.mxu0 0
        %6632 = vmatpush1.bf16.msra.mxu0 0
        %6633 = vmatprep.subr.bf16.mxu0 0
        %6634 = vmatpush1.bf16.msra.mxu0 0
        %6635 = vmatprep.subr.bf16.mxu0 0
        %6636 = vmatpush1.bf16.msra.mxu0 0
        %6637 = vmatprep.subr.bf16.mxu0 0
        %6638 = vmatpush1.bf16.msra.mxu0 0
        %6639 = vmatprep.subr.bf16.mxu0 0
        %6640 = vmatpush1.bf16.msra.mxu0 0
        %6641 = vmatprep.subr.bf16.mxu0 0
        %6642 = vmatpush1.bf16.msra.mxu0 0
        %6643 = vmatprep.subr.bf16.mxu0 0
        %6644 = vmatpush1.bf16.msra.mxu0 0
        %6645 = vmatprep.subr.bf16.mxu0 0
        %6646 = vmatpush1.bf16.msra.mxu0 0
        %6647 = vmatprep.subr.bf16.mxu0 0
        %6648 = vmatpush1.bf16.msra.mxu0 0
        %6649 = vmatprep.subr.bf16.mxu0 0
        %6650 = vmatpush1.bf16.msra.mxu0 0
        %6651 = vmatprep.subr.bf16.mxu0 0
        %6652 = vmatpush1.bf16.msra.mxu0 0
        %6653 = vmatprep.subr.bf16.mxu0 0
        %6654 = vmatpush1.bf16.msra.mxu0 0
        %6655 = vmatprep.subr.bf16.mxu0 0
        %6656 = vmatpush1.bf16.msra.mxu0 0
        %6657 = vmatprep.mubr.bf16.mxu0 0
        %6658 = vmatmul.mubr.bf16.gmra.mrb[0].mxu0 %v6574
        %v6659 = vpop.f32.mrb[0].mxu0
        %v6660 = vadd.f32 0.0, %v6659
        %v6661 = vpop.f32.mrb[0].mxu0
        %v6662 = vpop.f32.mrb[0].mxu0
        %v6663 = vadd.f32 0.0, %v6662
        %v6664 = vpop.f32.mrb[0].mxu0
        %6665 = vmatprep.mubr.bf16.mxu0 0
        %6666 = vmatmul.mubr.bf16.gmra.mrb[0].mxu0 %v6577
        %v6667 = vpop.f32.mrb[0].mxu0
        %v6668 = vadd.f32 0.0, %v6667
        %v6669 = vpop.f32.mrb[0].mxu0
        %v6670 = vpop.f32.mrb[0].mxu0
        %v6671 = vadd.f32 0.0, %v6670
        %v6672 = vpop.f32.mrb[0].mxu0
        %6673 = vmatprep.mubr.bf16.mxu0 0
        %6674 = vmatmul.mubr.bf16.gmra.mrb[0].mxu0 %v6580
        %v6675 = vpop.f32.mrb[0].mxu0
        %v6676 = vadd.f32 0.0, %v6675
        %v6677 = vpop.f32.mrb[0].mxu0
        %v6678 = vpop.f32.mrb[0].mxu0
        %v6679 = vadd.f32 0.0, %v6678
        %v6680 = vpop.f32.mrb[0].mxu0
        %6681 = vmatprep.mubr.bf16.mxu0 0
        %6682 = vmatmul.mubr.bf16.gmra.mrb[0].mxu0 %v6583
        %v6683 = vpop.f32.mrb[0].mxu0
        %v6684 = vadd.f32 0.0, %v6683
        %v6685 = vpop.f32.mrb[0].mxu0
        %v6686 = vpop.f32.mrb[0].mxu0
        %v6687 = vadd.f32 0.0, %v6686
        %v6688 = vpop.f32.mrb[0].mxu0
        %6689 = vmatprep.mubr.bf16.mxu0 0
        %6690 = vmatmul.mubr.bf16.gmra.mrb[0].mxu0 %v6586
        %v6691 = vpop.f32.mrb[0].mxu0
        %v6692 = vadd.f32 0.0, %v6691
        %v6693 = vpop.f32.mrb[0].mxu0
        %v6694 = vpop.f32.mrb[0].mxu0
        %v6695 = vadd.f32 0.0, %v6694
        %v6696 = vpop.f32.mrb[0].mxu0
        %6697 = vmatprep.mubr.bf16.mxu0 0
        %6698 = vmatmul.mubr.bf16.gmra.mrb[0].mxu0 %v6589
        %v6699 = vpop.f32.mrb[0].mxu0
        %v6700 = vadd.f32 0.0, %v6699
        %v6701 = vpop.f32.mrb[0].mxu0
        %v6702 = vpop.f32.mrb[0].mxu0
        %v6703 = vadd.f32 0.0, %v6702
        %v6704 = vpop.f32.mrb[0].mxu0
        %6705 = vmatprep.mubr.bf16.mxu0 0
        %6706 = vmatmul.mubr.bf16.gmra.mrb[0].mxu0 %v6592
        %v6707 = vpop.f32.mrb[0].mxu0
        %v6708 = vadd.f32 0.0, %v6707
        %v6709 = vpop.f32.mrb[0].mxu0
        %v6710 = vpop.f32.mrb[0].mxu0
        %v6711 = vadd.f32 0.0, %v6710
        %v6712 = vpop.f32.mrb[0].mxu0
        %6713 = vmatprep.mubr.bf16.mxu0 0
        %6714 = vmatmul.mubr.bf16.gmra.mrb[0].mxu0 %v6595
        %v6715 = vpop.f32.mrb[0].mxu0
        %v6716 = vadd.f32 0.0, %v6715
        %v6717 = vpop.f32.mrb[0].mxu0
        %v6718 = vpop.f32.mrb[0].mxu0
        %v6719 = vadd.f32 0.0, %v6718
        %v6720 = vpop.f32.mrb[0].mxu0
        %6721 = vmatprep.mubr.bf16.mxu0 0
        %6722 = vmatmul.mubr.bf16.gmra.mrb[0].mxu0 %v6598
        %v6723 = vpop.f32.mrb[0].mxu0
        %v6724 = vadd.f32 0.0, %v6723
        %v6725 = vpop.f32.mrb[0].mxu0
        %v6726 = vpop.f32.mrb[0].mxu0
        %v6727 = vadd.f32 0.0, %v6726
        %v6728 = vpop.f32.mrb[0].mxu0
        %6729 = vmatprep.mubr.bf16.mxu0 0
        %6730 = vmatmul.mubr.bf16.gmra.mrb[0].mxu0 %v6601
        %v6731 = vpop.f32.mrb[0].mxu0
        %v6732 = vadd.f32 0.0, %v6731
        %v6733 = vpop.f32.mrb[0].mxu0
        %v6734 = vpop.f32.mrb[0].mxu0
        %v6735 = vadd.f32 0.0, %v6734
        %v6736 = vpop.f32.mrb[0].mxu0
        %6737 = vmatprep.mubr.bf16.mxu0 0
        %6738 = vmatmul.mubr.bf16.gmra.mrb[0].mxu0 %v6604
        %v6739 = vpop.f32.mrb[0].mxu0
        %v6740 = vadd.f32 0.0, %v6739
        %v6741 = vpop.f32.mrb[0].mxu0
        %v6742 = vpop.f32.mrb[0].mxu0
        %v6743 = vadd.f32 0.0, %v6742
        %v6744 = vpop.f32.mrb[0].mxu0
        %6745 = vmatprep.mubr.bf16.mxu0 0
        %6746 = vmatmul.mubr.bf16.gmra.mrb[0].mxu0 %v6607
        %v6747 = vpop.f32.mrb[0].mxu0
        %v6748 = vadd.f32 0.0, %v6747
        %v6749 = vpop.f32.mrb[0].mxu0
        %v6750 = vpop.f32.mrb[0].mxu0
        %v6751 = vadd.f32 0.0, %v6750
        %v6752 = vpop.f32.mrb[0].mxu0
        %6753 = vmatprep.mubr.bf16.mxu0 0
        %6754 = vmatmul.mubr.bf16.gmra.mrb[0].mxu0 %v6610
        %v6755 = vpop.f32.mrb[0].mxu0
        %v6756 = vadd.f32 0.0, %v6755
        %v6757 = vpop.f32.mrb[0].mxu0
        %v6758 = vpop.f32.mrb[0].mxu0
        %v6759 = vadd.f32 0.0, %v6758
        %v6760 = vpop.f32.mrb[0].mxu0
        %6761 = vmatprep.mubr.bf16.mxu0 0
        %6762 = vmatmul.mubr.bf16.gmra.mrb[0].mxu0 %v6613
        %v6763 = vpop.f32.mrb[0].mxu0
        %v6764 = vadd.f32 0.0, %v6763
        %v6765 = vpop.f32.mrb[0].mxu0
        %v6766 = vpop.f32.mrb[0].mxu0
        %v6767 = vadd.f32 0.0, %v6766
        %v6768 = vpop.f32.mrb[0].mxu0
        %6769 = vmatprep.mubr.bf16.mxu0 0
        %6770 = vmatmul.mubr.bf16.gmra.mrb[0].mxu0 %v6616
        %v6771 = vpop.f32.mrb[0].mxu0
        %v6772 = vadd.f32 0.0, %v6771
        %v6773 = vpop.f32.mrb[0].mxu0
        %v6774 = vpop.f32.mrb[0].mxu0
        %v6775 = vadd.f32 0.0, %v6774
        %v6776 = vpop.f32.mrb[0].mxu0
        %6777 = vmatprep.mubr.bf16.mxu0 0
        %6778 = vmatmul.mubr.bf16.gmra.mrb[0].mxu0 %v6619
        %v6779 = vpop.f32.mrb[0].mxu0
        %v6780 = vadd.f32 0.0, %v6779
        %v6781 = vpop.f32.mrb[0].mxu0
        %v6782 = vpop.f32.mrb[0].mxu0
        %v6783 = vadd.f32 0.0, %v6782
        %v6784 = vpop.f32.mrb[0].mxu0
        %6785 = vdwg.mxu0
        %v6786 = vld [vmem:[%s33] sm:$0xff]
        %v6787 = vld [vmem:[%s33 + $0x8] sm:$0xff]
        %v6788 = vld [vmem:[%s33 + $0x10] sm:$0xff]
        %v6789 = vld [vmem:[%s33 + $0x18] sm:$0xff]
        %v6790 = vld [vmem:[%s33 + $0x20] sm:$0xff]
        %v6791 = vld [vmem:[%s33 + $0x28] sm:$0xff]
        %v6792 = vld [vmem:[%s33 + $0x30] sm:$0xff]
        %v6793 = vld [vmem:[%s33 + $0x38] sm:$0xff]
        %v6794 = vld [vmem:[%s33 + $0x40] sm:$0xff]
        %v6795 = vld [vmem:[%s33 + $0x48] sm:$0xff]
        %v6796 = vld [vmem:[%s33 + $0x50] sm:$0xff]
        %v6797 = vld [vmem:[%s33 + $0x58] sm:$0xff]
        %v6798 = vld [vmem:[%s33 + $0x60] sm:$0xff]
        %v6799 = vld [vmem:[%s33 + $0x68] sm:$0xff]
        %v6800 = vld [vmem:[%s33 + $0x70] sm:$0xff]
        %v6801 = vld [vmem:[%s33 + $0x78] sm:$0xff]
        %v6802 = vld [vmem:[%s35] sm:$0xff]
        %v6803 = vld [vmem:[%s35 + $0x8] sm:$0xff]
        %v6804 = vld [vmem:[%s35 + $0x10] sm:$0xff]
        %v6805 = vld [vmem:[%s35 + $0x18] sm:$0xff]
        %v6806 = vld [vmem:[%s35 + $0x20] sm:$0xff]
        %v6807 = vld [vmem:[%s35 + $0x28] sm:$0xff]
        %v6808 = vld [vmem:[%s35 + $0x30] sm:$0xff]
        %v6809 = vld [vmem:[%s35 + $0x38] sm:$0xff]
        %v6810 = vld [vmem:[%s35 + $0x40] sm:$0xff]
        %v6811 = vld [vmem:[%s35 + $0x48] sm:$0xff]
        %v6812 = vld [vmem:[%s35 + $0x50] sm:$0xff]
        %v6813 = vld [vmem:[%s35 + $0x58] sm:$0xff]
        %v6814 = vld [vmem:[%s35 + $0x60] sm:$0xff]
        %v6815 = vld [vmem:[%s35 + $0x68] sm:$0xff]
        %v6816 = vld [vmem:[%s35 + $0x70] sm:$0xff]
        %v6817 = vld [vmem:[%s35 + $0x78] sm:$0xff]
        %6818 = vmatprep.subr.mxu0 0.0
        %6819 = vmatpush1.msra.mxu0 %v1210
        %6820 = vmatprep.subr.mxu0 0.0
        %6821 = vmatpush1.msra.mxu0 %v1211
        %6822 = vmatprep.subr.mxu0 0.0
        %6823 = vmatpush1.msra.mxu0 %v1212
        %6824 = vmatprep.subr.mxu0 0.0
        %6825 = vmatpush1.msra.mxu0 %v1213
        %6826 = vmatprep.subr.mxu0 0.0
        %6827 = vmatpush1.msra.mxu0 %v1214
        %6828 = vmatprep.subr.mxu0 0.0
        %6829 = vmatpush1.msra.mxu0 %v1215
        %6830 = vmatprep.subr.mxu0 0.0
        %6831 = vmatpush1.msra.mxu0 %v1216
        %6832 = vmatprep.subr.mxu0 0.0
        %6833 = vmatpush1.msra.mxu0 %v1217
        %6834 = vmatprep.subr.mxu0 0.0
        %6835 = vmatpush1.msra.mxu0 %v1218
        %6836 = vmatprep.subr.mxu0 0.0
        %6837 = vmatpush1.msra.mxu0 %v1219
        %6838 = vmatprep.subr.mxu0 0.0
        %6839 = vmatpush1.msra.mxu0 %v1220
        %6840 = vmatprep.subr.mxu0 0.0
        %6841 = vmatpush1.msra.mxu0 %v1221
        %6842 = vmatprep.subr.mxu0 0.0
        %6843 = vmatpush1.msra.mxu0 %v1222
        %6844 = vmatprep.subr.mxu0 0.0
        %6845 = vmatpush1.msra.mxu0 %v1223
        %6846 = vmatprep.subr.mxu0 0.0
        %6847 = vmatpush1.msra.mxu0 %v1224
        %6848 = vmatprep.subr.mxu0 0.0
        %6849 = vmatpush1.msra.mxu0 %v1225
        %6850 = vmatprep.subr.mxu0 0.0
        %6851 = vmatpush1.msra.mxu0 %v1226
        %6852 = vmatprep.subr.mxu0 0.0
        %6853 = vmatpush1.msra.mxu0 %v1227
        %6854 = vmatprep.subr.mxu0 0.0
        %6855 = vmatpush1.msra.mxu0 %v1228
        %6856 = vmatprep.subr.mxu0 0.0
        %6857 = vmatpush1.msra.mxu0 %v1229
        %6858 = vmatprep.subr.mxu0 0.0
        %6859 = vmatpush1.msra.mxu0 %v1230
        %6860 = vmatprep.subr.mxu0 0.0
        %6861 = vmatpush1.msra.mxu0 %v1231
        %6862 = vmatprep.subr.mxu0 0.0
        %6863 = vmatpush1.msra.mxu0 %v1232
        %6864 = vmatprep.subr.mxu0 0.0
        %6865 = vmatpush1.msra.mxu0 %v1233
        %6866 = vmatprep.subr.mxu0 0.0
        %6867 = vmatpush1.msra.mxu0 %v1234
        %6868 = vmatprep.subr.mxu0 0.0
        %6869 = vmatpush1.msra.mxu0 %v1235
        %6870 = vmatprep.subr.mxu0 0.0
        %6871 = vmatpush1.msra.mxu0 %v1236
        %6872 = vmatprep.subr.mxu0 0.0
        %6873 = vmatpush1.msra.mxu0 %v1237
        %6874 = vmatprep.subr.mxu0 0.0
        %6875 = vmatpush1.msra.mxu0 %v1238
        %6876 = vmatprep.subr.mxu0 0.0
        %6877 = vmatpush1.msra.mxu0 %v1239
        %6878 = vmatprep.subr.mxu0 0.0
        %6879 = vmatpush1.msra.mxu0 %v1240
        %6880 = vmatprep.subr.mxu0 0.0
        %6881 = vmatpush1.msra.mxu0 %v1241
        %6882 = vmatprep.mubr.f32.mxu0 %v6803
        %6883 = vmatmul.mubr.f32.gmra.mrb[0].mxu0 %v6802
        %v6884 = vpop.f32.mrb[0].mxu0
        %v6885 = vadd.f32 0.0, %v6884
        %v6886 = vpop.f32.mrb[0].mxu0
        %6887 = vmatprep.mubr.f32.mxu0 %v6805
        %6888 = vmatmul.mubr.f32.gmra.mrb[0].mxu0 %v6804
        %v6889 = vpop.f32.mrb[0].mxu0
        %v6890 = vadd.f32 0.0, %v6889
        %v6891 = vpop.f32.mrb[0].mxu0
        %6892 = vmatprep.mubr.f32.mxu0 %v6807
        %6893 = vmatmul.mubr.f32.gmra.mrb[0].mxu0 %v6806
        %v6894 = vpop.f32.mrb[0].mxu0
        %v6895 = vadd.f32 0.0, %v6894
        %v6896 = vpop.f32.mrb[0].mxu0
        %6897 = vmatprep.mubr.f32.mxu0 %v6809
        %6898 = vmatmul.mubr.f32.gmra.mrb[0].mxu0 %v6808
        %v6899 = vpop.f32.mrb[0].mxu0
        %v6900 = vadd.f32 0.0, %v6899
        %v6901 = vpop.f32.mrb[0].mxu0
        %6902 = vmatprep.mubr.f32.mxu0 %v6811
        %6903 = vmatmul.mubr.f32.gmra.mrb[0].mxu0 %v6810
        %v6904 = vpop.f32.mrb[0].mxu0
        %v6905 = vadd.f32 0.0, %v6904
        %v6906 = vpop.f32.mrb[0].mxu0
        %6907 = vmatprep.mubr.f32.mxu0 %v6813
        %6908 = vmatmul.mubr.f32.gmra.mrb[0].mxu0 %v6812
        %v6909 = vpop.f32.mrb[0].mxu0
        %v6910 = vadd.f32 0.0, %v6909
        %v6911 = vpop.f32.mrb[0].mxu0
        %6912 = vmatprep.mubr.f32.mxu0 %v6815
        %6913 = vmatmul.mubr.f32.gmra.mrb[0].mxu0 %v6814
        %v6914 = vpop.f32.mrb[0].mxu0
        %v6915 = vadd.f32 0.0, %v6914
        %v6916 = vpop.f32.mrb[0].mxu0
        %6917 = vmatprep.mubr.f32.mxu0 %v6817
        %6918 = vmatmul.mubr.f32.gmra.mrb[0].mxu0 %v6816
        %v6919 = vpop.f32.mrb[0].mxu0
        %v6920 = vadd.f32 0.0, %v6919
        %v6921 = vpop.f32.mrb[0].mxu0
        %6922 = vdwg.mxu0
        %v6923 = vpack.c.bf16 %v6890, %v6885
        %v6924 = vpack.c.bf16 %v6900, %v6895
        %v6925 = vpack.c.bf16 %v6910, %v6905
        %v6926 = vpack.c.bf16 %v6920, %v6915
        %v6927 = vld [vmem:[%s37] sm:$0x3]
        %v6929 = vsel %vm1316, %v6923, 0
        %v6932 = vsel %vm1316, %v6924, 0
        %v6935 = vsel %vm1316, %v6925, 0
        %v6938 = vsel %vm1316, %v6926, 0
        %v6941 = vsel %vm1556, %v6927, 0
        %6943 = vmatprep.subr.bf16.mxu0 0
        %6944 = vmatpush1.bf16.msra.mxu0 %v6941
        %6945 = vmatprep.subr.bf16.mxu0 0
        %6946 = vmatpush1.bf16.msra.mxu0 0
        %6947 = vmatprep.subr.bf16.mxu0 0
        %6948 = vmatpush1.bf16.msra.mxu0 0
        %6949 = vmatprep.subr.bf16.mxu0 0
        %6950 = vmatpush1.bf16.msra.mxu0 0
        %6951 = vmatprep.subr.bf16.mxu0 0
        %6952 = vmatpush1.bf16.msra.mxu0 0
        %6953 = vmatprep.subr.bf16.mxu0 0
        %6954 = vmatpush1.bf16.msra.mxu0 0
        %6955 = vmatprep.subr.bf16.mxu0 0
        %6956 = vmatpush1.bf16.msra.mxu0 0
        %6957 = vmatprep.subr.bf16.mxu0 0
        %6958 = vmatpush1.bf16.msra.mxu0 0
        %6959 = vmatprep.subr.bf16.mxu0 0
        %6960 = vmatpush1.bf16.msra.mxu0 0
        %6961 = vmatprep.subr.bf16.mxu0 0
        %6962 = vmatpush1.bf16.msra.mxu0 0
        %6963 = vmatprep.subr.bf16.mxu0 0
        %6964 = vmatpush1.bf16.msra.mxu0 0
        %6965 = vmatprep.subr.bf16.mxu0 0
        %6966 = vmatpush1.bf16.msra.mxu0 0
        %6967 = vmatprep.subr.bf16.mxu0 0
        %6968 = vmatpush1.bf16.msra.mxu0 0
        %6969 = vmatprep.subr.bf16.mxu0 0
        %6970 = vmatpush1.bf16.msra.mxu0 0
        %6971 = vmatprep.subr.bf16.mxu0 0
        %6972 = vmatpush1.bf16.msra.mxu0 0
        %6973 = vmatprep.subr.bf16.mxu0 0
        %6974 = vmatpush1.bf16.msra.mxu0 0
        %6975 = vmatprep.mubr.bf16.mxu0 0
        %6976 = vmatmul.mubr.bf16.gmra.mrb[0].mxu0 %v6929
        %v6977 = vpop.f32.mrb[0].mxu0
        %v6978 = vadd.f32 0.0, %v6977
        %v6979 = vpop.f32.mrb[0].mxu0
        %v6980 = vpop.f32.mrb[0].mxu0
        %v6981 = vadd.f32 0.0, %v6980
        %v6982 = vpop.f32.mrb[0].mxu0
        %6983 = vmatprep.mubr.bf16.mxu0 0
        %6984 = vmatmul.mubr.bf16.gmra.mrb[0].mxu0 %v6932
        %v6985 = vpop.f32.mrb[0].mxu0
        %v6986 = vadd.f32 0.0, %v6985
        %v6987 = vpop.f32.mrb[0].mxu0
        %v6988 = vpop.f32.mrb[0].mxu0
        %v6989 = vadd.f32 0.0, %v6988
        %v6990 = vpop.f32.mrb[0].mxu0
        %6991 = vmatprep.mubr.bf16.mxu0 0
        %6992 = vmatmul.mubr.bf16.gmra.mrb[0].mxu0 %v6935
        %v6993 = vpop.f32.mrb[0].mxu0
        %v6994 = vadd.f32 0.0, %v6993
        %v6995 = vpop.f32.mrb[0].mxu0
        %v6996 = vpop.f32.mrb[0].mxu0
        %v6997 = vadd.f32 0.0, %v6996
        %v6998 = vpop.f32.mrb[0].mxu0
        %6999 = vmatprep.mubr.bf16.mxu0 0
        %7000 = vmatmul.mubr.bf16.gmra.mrb[0].mxu0 %v6938
        %v7001 = vpop.f32.mrb[0].mxu0
        %v7002 = vadd.f32 0.0, %v7001
        %v7003 = vpop.f32.mrb[0].mxu0
        %v7004 = vpop.f32.mrb[0].mxu0
        %v7005 = vadd.f32 0.0, %v7004
        %v7006 = vpop.f32.mrb[0].mxu0
        %7007 = vdwg.mxu0
        %7008 = vmatprep.subr.mxu0 0.0
        %7009 = vmatpush1.msra.mxu0 %v6660
        %7010 = vmatprep.subr.mxu0 0.0
        %7011 = vmatpush1.msra.mxu0 %v6663
        %7012 = vmatprep.subr.mxu0 0.0
        %7013 = vmatpush1.msra.mxu0 %v6668
        %7014 = vmatprep.subr.mxu0 0.0
        %7015 = vmatpush1.msra.mxu0 %v6671
        %7016 = vmatprep.subr.mxu0 0.0
        %7017 = vmatpush1.msra.mxu0 %v6676
        %7018 = vmatprep.subr.mxu0 0.0
        %7019 = vmatpush1.msra.mxu0 %v6679
        %7020 = vmatprep.subr.mxu0 0.0
        %7021 = vmatpush1.msra.mxu0 %v6684
        %7022 = vmatprep.subr.mxu0 0.0
        %7023 = vmatpush1.msra.mxu0 %v6687
        %7024 = vmatprep.subr.mxu0 0.0
        %7025 = vmatpush1.msra.mxu0 %v6692
        %7026 = vmatprep.subr.mxu0 0.0
        %7027 = vmatpush1.msra.mxu0 %v6695
        %7028 = vmatprep.subr.mxu0 0.0
        %7029 = vmatpush1.msra.mxu0 %v6700
        %7030 = vmatprep.subr.mxu0 0.0
        %7031 = vmatpush1.msra.mxu0 %v6703
        %7032 = vmatprep.subr.mxu0 0.0
        %7033 = vmatpush1.msra.mxu0 %v6708
        %7034 = vmatprep.subr.mxu0 0.0
        %7035 = vmatpush1.msra.mxu0 %v6711
        %7036 = vmatprep.subr.mxu0 0.0
        %7037 = vmatpush1.msra.mxu0 %v6716
        %7038 = vmatprep.subr.mxu0 0.0
        %7039 = vmatpush1.msra.mxu0 %v6719
        %7040 = vmatprep.subr.mxu0 0.0
        %7041 = vmatpush1.msra.mxu0 %v6724
        %7042 = vmatprep.subr.mxu0 0.0
        %7043 = vmatpush1.msra.mxu0 %v6727
        %7044 = vmatprep.subr.mxu0 0.0
        %7045 = vmatpush1.msra.mxu0 %v6732
        %7046 = vmatprep.subr.mxu0 0.0
        %7047 = vmatpush1.msra.mxu0 %v6735
        %7048 = vmatprep.subr.mxu0 0.0
        %7049 = vmatpush1.msra.mxu0 %v6740
        %7050 = vmatprep.subr.mxu0 0.0
        %7051 = vmatpush1.msra.mxu0 %v6743
        %7052 = vmatprep.subr.mxu0 0.0
        %7053 = vmatpush1.msra.mxu0 %v6748
        %7054 = vmatprep.subr.mxu0 0.0
        %7055 = vmatpush1.msra.mxu0 %v6751
        %7056 = vmatprep.subr.mxu0 0.0
        %7057 = vmatpush1.msra.mxu0 %v6756
        %7058 = vmatprep.subr.mxu0 0.0
        %7059 = vmatpush1.msra.mxu0 %v6759
        %7060 = vmatprep.subr.mxu0 0.0
        %7061 = vmatpush1.msra.mxu0 %v6764
        %7062 = vmatprep.subr.mxu0 0.0
        %7063 = vmatpush1.msra.mxu0 %v6767
        %7064 = vmatprep.subr.mxu0 0.0
        %7065 = vmatpush1.msra.mxu0 %v6772
        %7066 = vmatprep.subr.mxu0 0.0
        %7067 = vmatpush1.msra.mxu0 %v6775
        %7068 = vmatprep.subr.mxu0 0.0
        %7069 = vmatpush1.msra.mxu0 %v6780
        %7070 = vmatprep.subr.mxu0 0.0
        %7071 = vmatpush1.msra.mxu0 %v6783
        %7072 = vmatprep.mubr.f32.mxu0 %v6787
        %7073 = vmatmul.mubr.f32.gmra.mrb[0].mxu0 %v6786
        %v7074 = vpop.f32.mrb[0].mxu0
        %v7075 = vadd.f32 %v6978, %v7074
        %v7076 = vpop.f32.mrb[0].mxu0
        %7077 = vmatprep.mubr.f32.mxu0 %v6789
        %7078 = vmatmul.mubr.f32.gmra.mrb[0].mxu0 %v6788
        %v7079 = vpop.f32.mrb[0].mxu0
        %v7080 = vadd.f32 %v6981, %v7079
        %v7081 = vpop.f32.mrb[0].mxu0
        %7082 = vmatprep.mubr.f32.mxu0 %v6791
        %7083 = vmatmul.mubr.f32.gmra.mrb[0].mxu0 %v6790
        %v7084 = vpop.f32.mrb[0].mxu0
        %v7085 = vadd.f32 %v6986, %v7084
        %v7086 = vpop.f32.mrb[0].mxu0
        %7087 = vmatprep.mubr.f32.mxu0 %v6793
        %7088 = vmatmul.mubr.f32.gmra.mrb[0].mxu0 %v6792
        %v7089 = vpop.f32.mrb[0].mxu0
        %v7090 = vadd.f32 %v6989, %v7089
        %v7091 = vpop.f32.mrb[0].mxu0
        %7092 = vmatprep.mubr.f32.mxu0 %v6795
        %7093 = vmatmul.mubr.f32.gmra.mrb[0].mxu0 %v6794
        %v7094 = vpop.f32.mrb[0].mxu0
        %v7095 = vadd.f32 %v6994, %v7094
        %v7096 = vpop.f32.mrb[0].mxu0
        %7097 = vmatprep.mubr.f32.mxu0 %v6797
        %7098 = vmatmul.mubr.f32.gmra.mrb[0].mxu0 %v6796
        %v7099 = vpop.f32.mrb[0].mxu0
        %v7100 = vadd.f32 %v6997, %v7099
        %v7101 = vpop.f32.mrb[0].mxu0
        %7102 = vmatprep.mubr.f32.mxu0 %v6799
        %7103 = vmatmul.mubr.f32.gmra.mrb[0].mxu0 %v6798
        %v7104 = vpop.f32.mrb[0].mxu0
        %v7105 = vadd.f32 %v7002, %v7104
        %v7106 = vpop.f32.mrb[0].mxu0
        %7107 = vmatprep.mubr.f32.mxu0 %v6801
        %7108 = vmatmul.mubr.f32.gmra.mrb[0].mxu0 %v6800
        %v7109 = vpop.f32.mrb[0].mxu0
        %v7110 = vadd.f32 %v7005, %v7109
        %v7111 = vpop.f32.mrb[0].mxu0
        %7112 = vdwg.mxu0
        %v7113 = vmax.f32 %v7075, 0.0
        %v7114 = vmax.f32 %v7080, 0.0
        %v7115 = vmax.f32 %v7085, 0.0
        %v7116 = vmax.f32 %v7090, 0.0
        %v7117 = vmax.f32 %v7095, 0.0
        %v7118 = vmax.f32 %v7100, 0.0
        %v7119 = vmax.f32 %v7105, 0.0
        %v7120 = vmax.f32 %v7110, 0.0
        %7121 = vst.msk [vmem:[#allocation6] sm:$0xff] %vm1242, 0.0
        %7122 = vst.msk [vmem:[#allocation6 + $0x8] sm:$0xff] %vm1242, 0.0
        %7123 = vst.msk [vmem:[#allocation6 + $0x10] sm:$0x1] %vm1246, 0.0
        %7124 = vst.msk [vmem:[#allocation6 + $0x18] sm:$0xff] %vm1242, 0.0
        %7125 = vst.msk [vmem:[#allocation6 + $0x20] sm:$0xff] %vm1242, 0.0
        %7126 = vst.msk [vmem:[#allocation6 + $0x28] sm:$0x1] %vm1246, 0.0
        %7127 = vst.msk [vmem:[#allocation6 + $0x30] sm:$0xff] %vm1242, 0.0
        %7128 = vst.msk [vmem:[#allocation6 + $0x38] sm:$0xff] %vm1242, 0.0
        %7129 = vst.msk [vmem:[#allocation6 + $0x40] sm:$0x1] %vm1246, 0.0
        %7130 = vst.msk [vmem:[#allocation6 + $0x48] sm:$0xff] %vm1242, 0.0
        %7131 = vst.msk [vmem:[#allocation6 + $0x50] sm:$0xff] %vm1242, 0.0
        %7132 = vst.msk [vmem:[#allocation6 + $0x58] sm:$0x1] %vm1246, 0.0
        %7133 = vst.msk [vmem:[#allocation6 + $0x60] sm:$0xff] %vm1242, 0.0
        %7134 = vst.msk [vmem:[#allocation6 + $0x68] sm:$0xff] %vm1242, 0.0
        %7135 = vst.msk [vmem:[#allocation6 + $0x70] sm:$0x1] %vm1246, 0.0
        %7136 = vst.msk [vmem:[#allocation6 + $0x78] sm:$0xff] %vm1242, 0.0
        %7137 = vst.msk [vmem:[#allocation6 + $0x80] sm:$0xff] %vm1242, 0.0
        %7138 = vst.msk [vmem:[#allocation6 + $0x88] sm:$0x1] %vm1246, 0.0
        %7139 = vst.msk [vmem:[#allocation6 + $0x90] sm:$0xff] %vm1242, 0.0
        %7140 = vst.msk [vmem:[#allocation6 + $0x98] sm:$0xff] %vm1242, 0.0
        %7141 = vst.msk [vmem:[#allocation6 + $0xa0] sm:$0x1] %vm1246, 0.0
        %7142 = vst.msk [vmem:[#allocation6 + $0xa8] sm:$0xff] %vm1242, 0.0
        %7143 = vst.msk [vmem:[#allocation6 + $0xb0] sm:$0xff] %vm1242, 0.0
        %7144 = vst.msk [vmem:[#allocation6 + $0xb8] sm:$0x1] %vm1246, 0.0
        %7145 = vst.msk [vmem:[#allocation6 + $0xc0] sm:$0xff] %vm1242, 0.0
        %7146 = vst.msk [vmem:[#allocation6 + $0xc8] sm:$0xff] %vm1242, 0.0
        %7147 = vst.msk [vmem:[#allocation6 + $0xd0] sm:$0x1] %vm1246, 0.0
        %7148 = vst.msk [vmem:[#allocation6 + $0xd8] sm:$0xff] %vm1242, 0.0
        %7149 = vst.msk [vmem:[#allocation6 + $0xe0] sm:$0xff] %vm1242, 0.0
        %7150 = vst.msk [vmem:[#allocation6 + $0xe8] sm:$0x1] %vm1246, 0.0
        %vm7151 = vcmask 48128
        %7152 = vst.msk [vmem:[#allocation5] sm:$0xff] %vm7151, %v7113
        %7153 = vst.msk [vmem:[#allocation5 + $0x8] sm:$0xff] %vm7151, %v7114
        %7154 = vst.msk [vmem:[#allocation5 + $0x10] sm:$0xff] %vm7151, %v7115
        %7155 = vst.msk [vmem:[#allocation5 + $0x18] sm:$0xff] %vm7151, %v7116
        %7156 = vst.msk [vmem:[#allocation5 + $0x20] sm:$0xff] %vm7151, %v7117
        %7157 = vst.msk [vmem:[#allocation5 + $0x28] sm:$0xff] %vm7151, %v7118
        %7158 = vst.msk [vmem:[#allocation5 + $0x30] sm:$0xff] %vm7151, %v7119
        %7159 = vst.msk [vmem:[#allocation5 + $0x38] sm:$0xff] %vm7151, %v7120
        %v7160 = vld [vmem:[#allocation5] sm:$0xff]
        %v7161 = vld [vmem:[#allocation5 + $0x8] sm:$0xff]
        %v7162 = vld [vmem:[#allocation5 + $0x10] sm:$0xff]
        %v7163 = vld [vmem:[#allocation5 + $0x18] sm:$0xff]
        %v7164 = vld [vmem:[#allocation5 + $0x20] sm:$0xff]
        %v7165 = vld [vmem:[#allocation5 + $0x28] sm:$0xff]
        %v7166 = vld [vmem:[#allocation5 + $0x30] sm:$0xff]
        %v7167 = vld [vmem:[#allocation5 + $0x38] sm:$0xff]
        %v7168 = vld [vmem:[%s39] sm:$0x1]
        %v7170 = vlaneseq
        %v7171 = vshrl.u32 %v7170, 7
        %v7172 = vsub.s32 0, %v7171
        %v7173 = vrot.slane %v7168, %v7172
        %v7175 = vmul.f32 %v7160, %v7173
        %v7176 = vmul.f32 %v7161, %v7173
        %v7177 = vmul.f32 %v7162, %v7173
        %v7178 = vmul.f32 %v7163, %v7173
        %v7179 = vmul.f32 %v7164, %v7173
        %v7180 = vmul.f32 %v7165, %v7173
        %v7181 = vmul.f32 %v7166, %v7173
        %v7182 = vmul.f32 %v7167, %v7173
        %v7183 = vld [vmem:[%s41] sm:$0x1]
        %v7185 = vlaneseq
        %v7186 = vshrl.u32 %v7185, 7
        %v7187 = vsub.s32 0, %v7186
        %v7188 = vrot.slane %v7183, %v7187
        %v7190 = vadd.f32 %v7175, %v7188
        %v7191 = vadd.f32 %v7176, %v7188
        %v7192 = vadd.f32 %v7177, %v7188
        %v7193 = vadd.f32 %v7178, %v7188
        %v7194 = vadd.f32 %v7179, %v7188
        %v7195 = vadd.f32 %v7180, %v7188
        %v7196 = vadd.f32 %v7181, %v7188
        %v7197 = vadd.f32 %v7182, %v7188
        %v7198 = vmax.f32 %v7190, 0.0
        %v7199 = vmax.f32 %v7191, 0.0
        %v7200 = vmax.f32 %v7192, 0.0
        %v7201 = vmax.f32 %v7193, 0.0
        %v7202 = vmax.f32 %v7194, 0.0
        %v7203 = vmax.f32 %v7195, 0.0
        %v7204 = vmax.f32 %v7196, 0.0
        %v7205 = vmax.f32 %v7197, 0.0
        %v7206 = vpack.c.bf16 %v7199, %v7198
        %v7207 = vpack.c.bf16 %v7201, %v7200
        %v7208 = vpack.c.bf16 %v7203, %v7202
        %v7209 = vpack.c.bf16 %v7205, %v7204
        %v7210 = vld [vmem:[%s43] sm:$0x7]
        %v7212 = vsel %vm7151, %v7206, 0
        %v7215 = vsel %vm7151, %v7207, 0
        %v7218 = vsel %vm7151, %v7208, 0
        %v7221 = vsel %vm7151, %v7209, 0
        %vm7223 = vcmask 1042432
        %v7225 = vsel %vm7223, %v7210, 0
        %7227 = vmatprep.subr.bf16.mxu0 0
        %7228 = vmatpush1.bf16.msra.mxu0 %v7225
        %7229 = vmatprep.subr.bf16.mxu0 0
        %7230 = vmatpush1.bf16.msra.mxu0 0
        %7231 = vmatprep.subr.bf16.mxu0 0
        %7232 = vmatpush1.bf16.msra.mxu0 0
        %7233 = vmatprep.subr.bf16.mxu0 0
        %7234 = vmatpush1.bf16.msra.mxu0 0
        %7235 = vmatprep.subr.bf16.mxu0 0
        %7236 = vmatpush1.bf16.msra.mxu0 0
        %7237 = vmatprep.subr.bf16.mxu0 0
        %7238 = vmatpush1.bf16.msra.mxu0 0
        %7239 = vmatprep.subr.bf16.mxu0 0
        %7240 = vmatpush1.bf16.msra.mxu0 0
        %7241 = vmatprep.subr.bf16.mxu0 0
        %7242 = vmatpush1.bf16.msra.mxu0 0
        %7243 = vmatprep.subr.bf16.mxu0 0
        %7244 = vmatpush1.bf16.msra.mxu0 0
        %7245 = vmatprep.subr.bf16.mxu0 0
        %7246 = vmatpush1.bf16.msra.mxu0 0
        %7247 = vmatprep.subr.bf16.mxu0 0
        %7248 = vmatpush1.bf16.msra.mxu0 0
        %7249 = vmatprep.subr.bf16.mxu0 0
        %7250 = vmatpush1.bf16.msra.mxu0 0
        %7251 = vmatprep.subr.bf16.mxu0 0
        %7252 = vmatpush1.bf16.msra.mxu0 0
        %7253 = vmatprep.subr.bf16.mxu0 0
        %7254 = vmatpush1.bf16.msra.mxu0 0
        %7255 = vmatprep.subr.bf16.mxu0 0
        %7256 = vmatpush1.bf16.msra.mxu0 0
        %7257 = vmatprep.subr.bf16.mxu0 0
        %7258 = vmatpush1.bf16.msra.mxu0 0
        %7259 = vmatprep.mubr.bf16.mxu0 0
        %7260 = vmatmul.mubr.bf16.gmra.mrb[0].mxu0 %v7212
        %v7261 = vpop.f32.mrb[0].mxu0
        %v7262 = vadd.f32 0.0, %v7261
        %v7263 = vpop.f32.mrb[0].mxu0
        %v7264 = vpop.f32.mrb[0].mxu0
        %v7265 = vadd.f32 0.0, %v7264
        %v7266 = vpop.f32.mrb[0].mxu0
        %7267 = vmatprep.mubr.bf16.mxu0 0
        %7268 = vmatmul.mubr.bf16.gmra.mrb[0].mxu0 %v7215
        %v7269 = vpop.f32.mrb[0].mxu0
        %v7270 = vadd.f32 0.0, %v7269
        %v7271 = vpop.f32.mrb[0].mxu0
        %v7272 = vpop.f32.mrb[0].mxu0
        %v7273 = vadd.f32 0.0, %v7272
        %v7274 = vpop.f32.mrb[0].mxu0
        %7275 = vmatprep.mubr.bf16.mxu0 0
        %7276 = vmatmul.mubr.bf16.gmra.mrb[0].mxu0 %v7218
        %v7277 = vpop.f32.mrb[0].mxu0
        %v7278 = vadd.f32 0.0, %v7277
        %v7279 = vpop.f32.mrb[0].mxu0
        %v7280 = vpop.f32.mrb[0].mxu0
        %v7281 = vadd.f32 0.0, %v7280
        %v7282 = vpop.f32.mrb[0].mxu0
        %7283 = vmatprep.mubr.bf16.mxu0 0
        %7284 = vmatmul.mubr.bf16.gmra.mrb[0].mxu0 %v7221
        %v7285 = vpop.f32.mrb[0].mxu0
        %v7286 = vadd.f32 0.0, %v7285
        %v7287 = vpop.f32.mrb[0].mxu0
        %v7288 = vpop.f32.mrb[0].mxu0
        %v7289 = vadd.f32 0.0, %v7288
        %v7290 = vpop.f32.mrb[0].mxu0
        %7291 = vdwg.mxu0
        %v7292 = vld [vmem:[%s45] sm:$0x1]
        %v7294 = vlaneseq
        %v7295 = vshrl.u32 %v7294, 7
        %v7296 = vsub.s32 0, %v7295
        %v7297 = vrot.slane %v7292, %v7296
        %v7299 = vmul.f32 %v7262, %v7297
        %v7300 = vmul.f32 %v7265, %v7297
        %v7301 = vmul.f32 %v7270, %v7297
        %v7302 = vmul.f32 %v7273, %v7297
        %v7303 = vmul.f32 %v7278, %v7297
        %v7304 = vmul.f32 %v7281, %v7297
        %v7305 = vmul.f32 %v7286, %v7297
        %v7306 = vmul.f32 %v7289, %v7297
        %v7307 = vld [vmem:[%s47] sm:$0x1]
        %v7309 = vlaneseq
        %v7310 = vshrl.u32 %v7309, 7
        %v7311 = vsub.s32 0, %v7310
        %v7312 = vrot.slane %v7307, %v7311
        %v7314 = vadd.f32 %v7299, %v7312
        %v7315 = vadd.f32 %v7300, %v7312
        %v7316 = vadd.f32 %v7301, %v7312
        %v7317 = vadd.f32 %v7302, %v7312
        %v7318 = vadd.f32 %v7303, %v7312
        %v7319 = vadd.f32 %v7304, %v7312
        %v7320 = vadd.f32 %v7305, %v7312
        %v7321 = vadd.f32 %v7306, %v7312
        %v7322 = vmax.f32 %v7314, 0.0
        %v7323 = vmax.f32 %v7315, 0.0
        %v7324 = vmax.f32 %v7316, 0.0
        %v7325 = vmax.f32 %v7317, 0.0
        %v7326 = vmax.f32 %v7318, 0.0
        %v7327 = vmax.f32 %v7319, 0.0
        %v7328 = vmax.f32 %v7320, 0.0
        %v7329 = vmax.f32 %v7321, 0.0
        %s7330 = scalar_lea.vmem [#allocation6], 24
        %7331 = vst.msk [vmem:[%s7330 + $0x8] sm:$0xff] %vm1242, %v7322
        %7332 = vst.msk [vmem:[%s7330 + $0x20] sm:$0xff] %vm1242, %v7323
        %7333 = vst.msk [vmem:[%s7330 + $0x38] sm:$0xff] %vm1242, %v7324
        %7334 = vst.msk [vmem:[%s7330 + $0x50] sm:$0xff] %vm1242, %v7325
        %7335 = vst.msk [vmem:[%s7330 + $0x68] sm:$0xff] %vm1242, %v7326
        %7336 = vst.msk [vmem:[%s7330 + $0x80] sm:$0xff] %vm1242, %v7327
        %7337 = vst.msk [vmem:[%s7330 + $0x98] sm:$0xff] %vm1242, %v7328
        %7338 = vst.msk [vmem:[%s7330 + $0xb0] sm:$0xff] %vm1242, %v7329
        %v7339 = vld [vmem:[#allocation6 + $0x7] sm:$0xff]
        %v7340 = vld [vmem:[#allocation6 + $0x1f] sm:$0xff]
        %v7341 = vld [vmem:[#allocation6 + $0x37] sm:$0xff]
        %v7342 = vld [vmem:[#allocation6 + $0x4f] sm:$0xff]
        %v7343 = vld [vmem:[#allocation6 + $0x67] sm:$0xff]
        %v7344 = vld [vmem:[#allocation6 + $0x7f] sm:$0xff]
        %v7345 = vld [vmem:[#allocation6 + $0x97] sm:$0xff]
        %v7346 = vld [vmem:[#allocation6 + $0xaf] sm:$0xff]
        %7347 = vst.msk [vmem:[#allocation7] sm:$0xff] %vm1242, %v7339
        %7348 = vst.msk [vmem:[#allocation7 + $0x10] sm:$0xff] %vm1242, %v7340
        %7349 = vst.msk [vmem:[#allocation7 + $0x20] sm:$0xff] %vm1242, %v7341
        %7350 = vst.msk [vmem:[#allocation7 + $0x30] sm:$0xff] %vm1242, %v7342
        %7351 = vst.msk [vmem:[#allocation7 + $0x40] sm:$0xff] %vm1242, %v7343
        %7352 = vst.msk [vmem:[#allocation7 + $0x50] sm:$0xff] %vm1242, %v7344
        %7353 = vst.msk [vmem:[#allocation7 + $0x60] sm:$0xff] %vm1242, %v7345
        %7354 = vst.msk [vmem:[#allocation7 + $0x70] sm:$0xff] %vm1242, %v7346
        %v7355 = vld [vmem:[#allocation6 + $0x8] sm:$0xff]
        %v7356 = vld [vmem:[#allocation6 + $0x20] sm:$0xff]
        %v7357 = vld [vmem:[#allocation6 + $0x38] sm:$0xff]
        %v7358 = vld [vmem:[#allocation6 + $0x50] sm:$0xff]
        %v7359 = vld [vmem:[#allocation6 + $0x68] sm:$0xff]
        %v7360 = vld [vmem:[#allocation6 + $0x80] sm:$0xff]
        %v7361 = vld [vmem:[#allocation6 + $0x98] sm:$0xff]
        %v7362 = vld [vmem:[#allocation6 + $0xb0] sm:$0xff]
        %7371 = vrot.lane.b32.xlu0 %v7355, 16
        %v7372 = vpop.permute.xlu0 %7371
        %7373 = vrot.lane.b32.xlu0 %v7356, 16
        %v7374 = vpop.permute.xlu0 %7373
        %7375 = vrot.lane.b32.xlu0 %v7357, 16
        %v7376 = vpop.permute.xlu0 %7375
        %7377 = vrot.lane.b32.xlu0 %v7358, 16
        %v7378 = vpop.permute.xlu0 %7377
        %7379 = vrot.lane.b32.xlu0 %v7359, 16
        %v7380 = vpop.permute.xlu0 %7379
        %7381 = vrot.lane.b32.xlu0 %v7360, 16
        %v7382 = vpop.permute.xlu0 %7381
        %7383 = vrot.lane.b32.xlu0 %v7361, 16
        %v7384 = vpop.permute.xlu0 %7383
        %7385 = vrot.lane.b32.xlu0 %v7362, 16
        %v7386 = vpop.permute.xlu0 %7385
        %7395 = vst.msk [vmem:[#allocation7] sm:$0xff] %vm2088, %v7372
        %7396 = vst.msk [vmem:[#allocation7 + $0x10] sm:$0xff] %vm2088, %v7374
        %7397 = vst.msk [vmem:[#allocation7 + $0x20] sm:$0xff] %vm2088, %v7376
        %7398 = vst.msk [vmem:[#allocation7 + $0x30] sm:$0xff] %vm2088, %v7378
        %7399 = vst.msk [vmem:[#allocation7 + $0x40] sm:$0xff] %vm2088, %v7380
        %7400 = vst.msk [vmem:[#allocation7 + $0x50] sm:$0xff] %vm2088, %v7382
        %7401 = vst.msk [vmem:[#allocation7 + $0x60] sm:$0xff] %vm2088, %v7384
        %7402 = vst.msk [vmem:[#allocation7 + $0x70] sm:$0xff] %vm2088, %v7386
        %v7403 = vld [vmem:[#allocation6 + $0x9] sm:$0xff]
        %v7404 = vld [vmem:[#allocation6 + $0x21] sm:$0xff]
        %v7405 = vld [vmem:[#allocation6 + $0x39] sm:$0xff]
        %v7406 = vld [vmem:[#allocation6 + $0x51] sm:$0xff]
        %v7407 = vld [vmem:[#allocation6 + $0x69] sm:$0xff]
        %v7408 = vld [vmem:[#allocation6 + $0x81] sm:$0xff]
        %v7409 = vld [vmem:[#allocation6 + $0x99] sm:$0xff]
        %v7410 = vld [vmem:[#allocation6 + $0xb1] sm:$0xff]
        %7419 = vrot.lane.b32.xlu0 %v7403, 32
        %v7420 = vpop.permute.xlu0 %7419
        %7421 = vrot.lane.b32.xlu0 %v7404, 32
        %v7422 = vpop.permute.xlu0 %7421
        %7423 = vrot.lane.b32.xlu0 %v7405, 32
        %v7424 = vpop.permute.xlu0 %7423
        %7425 = vrot.lane.b32.xlu0 %v7406, 32
        %v7426 = vpop.permute.xlu0 %7425
        %7427 = vrot.lane.b32.xlu0 %v7407, 32
        %v7428 = vpop.permute.xlu0 %7427
        %7429 = vrot.lane.b32.xlu0 %v7408, 32
        %v7430 = vpop.permute.xlu0 %7429
        %7431 = vrot.lane.b32.xlu0 %v7409, 32
        %v7432 = vpop.permute.xlu0 %7431
        %7433 = vrot.lane.b32.xlu0 %v7410, 32
        %v7434 = vpop.permute.xlu0 %7433
        %7443 = vst.msk [vmem:[#allocation7] sm:$0xff] %vm2281, %v7420
        %7444 = vst.msk [vmem:[#allocation7 + $0x10] sm:$0xff] %vm2281, %v7422
        %7445 = vst.msk [vmem:[#allocation7 + $0x20] sm:$0xff] %vm2281, %v7424
        %7446 = vst.msk [vmem:[#allocation7 + $0x30] sm:$0xff] %vm2281, %v7426
        %7447 = vst.msk [vmem:[#allocation7 + $0x40] sm:$0xff] %vm2281, %v7428
        %7448 = vst.msk [vmem:[#allocation7 + $0x50] sm:$0xff] %vm2281, %v7430
        %7449 = vst.msk [vmem:[#allocation7 + $0x60] sm:$0xff] %vm2281, %v7432
        %7450 = vst.msk [vmem:[#allocation7 + $0x70] sm:$0xff] %vm2281, %v7434
        %v7451 = vld [vmem:[%s7330 + $0x7] sm:$0xff]
        %v7452 = vld [vmem:[%s7330 + $0x1f] sm:$0xff]
        %v7453 = vld [vmem:[%s7330 + $0x37] sm:$0xff]
        %v7454 = vld [vmem:[%s7330 + $0x4f] sm:$0xff]
        %v7455 = vld [vmem:[%s7330 + $0x67] sm:$0xff]
        %v7456 = vld [vmem:[%s7330 + $0x7f] sm:$0xff]
        %v7457 = vld [vmem:[%s7330 + $0x97] sm:$0xff]
        %v7458 = vld [vmem:[%s7330 + $0xaf] sm:$0xff]
        %7467 = vrot.lane.b32.xlu0 %v7451, 48
        %v7468 = vpop.permute.xlu0 %7467
        %7469 = vrot.lane.b32.xlu0 %v7452, 48
        %v7470 = vpop.permute.xlu0 %7469
        %7471 = vrot.lane.b32.xlu0 %v7453, 48
        %v7472 = vpop.permute.xlu0 %7471
        %7473 = vrot.lane.b32.xlu0 %v7454, 48
        %v7474 = vpop.permute.xlu0 %7473
        %7475 = vrot.lane.b32.xlu0 %v7455, 48
        %v7476 = vpop.permute.xlu0 %7475
        %7477 = vrot.lane.b32.xlu0 %v7456, 48
        %v7478 = vpop.permute.xlu0 %7477
        %7479 = vrot.lane.b32.xlu0 %v7457, 48
        %v7480 = vpop.permute.xlu0 %7479
        %7481 = vrot.lane.b32.xlu0 %v7458, 48
        %v7482 = vpop.permute.xlu0 %7481
        %7491 = vst.msk [vmem:[#allocation7] sm:$0xff] %vm2474, %v7468
        %7492 = vst.msk [vmem:[#allocation7 + $0x10] sm:$0xff] %vm2474, %v7470
        %7493 = vst.msk [vmem:[#allocation7 + $0x20] sm:$0xff] %vm2474, %v7472
        %7494 = vst.msk [vmem:[#allocation7 + $0x30] sm:$0xff] %vm2474, %v7474
        %7495 = vst.msk [vmem:[#allocation7 + $0x40] sm:$0xff] %vm2474, %v7476
        %7496 = vst.msk [vmem:[#allocation7 + $0x50] sm:$0xff] %vm2474, %v7478
        %7497 = vst.msk [vmem:[#allocation7 + $0x60] sm:$0xff] %vm2474, %v7480
        %7498 = vst.msk [vmem:[#allocation7 + $0x70] sm:$0xff] %vm2474, %v7482
        %v7499 = vld [vmem:[%s7330 + $0x8] sm:$0xff]
        %v7500 = vld [vmem:[%s7330 + $0x20] sm:$0xff]
        %v7501 = vld [vmem:[%s7330 + $0x38] sm:$0xff]
        %v7502 = vld [vmem:[%s7330 + $0x50] sm:$0xff]
        %v7503 = vld [vmem:[%s7330 + $0x68] sm:$0xff]
        %v7504 = vld [vmem:[%s7330 + $0x80] sm:$0xff]
        %v7505 = vld [vmem:[%s7330 + $0x98] sm:$0xff]
        %v7506 = vld [vmem:[%s7330 + $0xb0] sm:$0xff]
        %7515 = vrot.lane.b32.xlu0 %v7499, 64
        %v7516 = vpop.permute.xlu0 %7515
        %7517 = vrot.lane.b32.xlu0 %v7500, 64
        %v7518 = vpop.permute.xlu0 %7517
        %7519 = vrot.lane.b32.xlu0 %v7501, 64
        %v7520 = vpop.permute.xlu0 %7519
        %7521 = vrot.lane.b32.xlu0 %v7502, 64
        %v7522 = vpop.permute.xlu0 %7521
        %7523 = vrot.lane.b32.xlu0 %v7503, 64
        %v7524 = vpop.permute.xlu0 %7523
        %7525 = vrot.lane.b32.xlu0 %v7504, 64
        %v7526 = vpop.permute.xlu0 %7525
        %7527 = vrot.lane.b32.xlu0 %v7505, 64
        %v7528 = vpop.permute.xlu0 %7527
        %7529 = vrot.lane.b32.xlu0 %v7506, 64
        %v7530 = vpop.permute.xlu0 %7529
        %7539 = vst.msk [vmem:[#allocation7] sm:$0xff] %vm2667, %v7516
        %7540 = vst.msk [vmem:[#allocation7 + $0x10] sm:$0xff] %vm2667, %v7518
        %7541 = vst.msk [vmem:[#allocation7 + $0x20] sm:$0xff] %vm2667, %v7520
        %7542 = vst.msk [vmem:[#allocation7 + $0x30] sm:$0xff] %vm2667, %v7522
        %7543 = vst.msk [vmem:[#allocation7 + $0x40] sm:$0xff] %vm2667, %v7524
        %7544 = vst.msk [vmem:[#allocation7 + $0x50] sm:$0xff] %vm2667, %v7526
        %7545 = vst.msk [vmem:[#allocation7 + $0x60] sm:$0xff] %vm2667, %v7528
        %7546 = vst.msk [vmem:[#allocation7 + $0x70] sm:$0xff] %vm2667, %v7530
        %v7547 = vld [vmem:[%s7330 + $0x9] sm:$0xff]
        %v7548 = vld [vmem:[%s7330 + $0x21] sm:$0xff]
        %v7549 = vld [vmem:[%s7330 + $0x39] sm:$0xff]
        %v7550 = vld [vmem:[%s7330 + $0x51] sm:$0xff]
        %v7551 = vld [vmem:[%s7330 + $0x69] sm:$0xff]
        %v7552 = vld [vmem:[%s7330 + $0x81] sm:$0xff]
        %v7553 = vld [vmem:[%s7330 + $0x99] sm:$0xff]
        %v7554 = vld [vmem:[%s7330 + $0xb1] sm:$0xff]
        %7563 = vrot.lane.b32.xlu0 %v7547, 80
        %v7564 = vpop.permute.xlu0 %7563
        %7565 = vrot.lane.b32.xlu0 %v7548, 80
        %v7566 = vpop.permute.xlu0 %7565
        %7567 = vrot.lane.b32.xlu0 %v7549, 80
        %v7568 = vpop.permute.xlu0 %7567
        %7569 = vrot.lane.b32.xlu0 %v7550, 80
        %v7570 = vpop.permute.xlu0 %7569
        %7571 = vrot.lane.b32.xlu0 %v7551, 80
        %v7572 = vpop.permute.xlu0 %7571
        %7573 = vrot.lane.b32.xlu0 %v7552, 80
        %v7574 = vpop.permute.xlu0 %7573
        %7575 = vrot.lane.b32.xlu0 %v7553, 80
        %v7576 = vpop.permute.xlu0 %7575
        %7577 = vrot.lane.b32.xlu0 %v7554, 80
        %v7578 = vpop.permute.xlu0 %7577
        %7587 = vst.msk [vmem:[#allocation7] sm:$0xff] %vm2860, %v7564
        %7588 = vst.msk [vmem:[#allocation7 + $0x10] sm:$0xff] %vm2860, %v7566
        %7589 = vst.msk [vmem:[#allocation7 + $0x20] sm:$0xff] %vm2860, %v7568
        %7590 = vst.msk [vmem:[#allocation7 + $0x30] sm:$0xff] %vm2860, %v7570
        %7591 = vst.msk [vmem:[#allocation7 + $0x40] sm:$0xff] %vm2860, %v7572
        %7592 = vst.msk [vmem:[#allocation7 + $0x50] sm:$0xff] %vm2860, %v7574
        %7593 = vst.msk [vmem:[#allocation7 + $0x60] sm:$0xff] %vm2860, %v7576
        %7594 = vst.msk [vmem:[#allocation7 + $0x70] sm:$0xff] %vm2860, %v7578
        %s7595 = scalar_lea.vmem [#allocation6], 48
        %v7596 = vld [vmem:[%s7595 + $0x7] sm:$0xff]
        %v7597 = vld [vmem:[%s7595 + $0x1f] sm:$0xff]
        %v7598 = vld [vmem:[%s7595 + $0x37] sm:$0xff]
        %v7599 = vld [vmem:[%s7595 + $0x4f] sm:$0xff]
        %v7600 = vld [vmem:[%s7595 + $0x67] sm:$0xff]
        %v7601 = vld [vmem:[%s7595 + $0x7f] sm:$0xff]
        %v7602 = vld [vmem:[%s7595 + $0x97] sm:$0xff]
        %v7603 = vld [vmem:[%s7595 + $0xaf] sm:$0xff]
        %7612 = vrot.lane.b32.xlu0 %v7596, 96
        %v7613 = vpop.permute.xlu0 %7612
        %7614 = vrot.lane.b32.xlu0 %v7597, 96
        %v7615 = vpop.permute.xlu0 %7614
        %7616 = vrot.lane.b32.xlu0 %v7598, 96
        %v7617 = vpop.permute.xlu0 %7616
        %7618 = vrot.lane.b32.xlu0 %v7599, 96
        %v7619 = vpop.permute.xlu0 %7618
        %7620 = vrot.lane.b32.xlu0 %v7600, 96
        %v7621 = vpop.permute.xlu0 %7620
        %7622 = vrot.lane.b32.xlu0 %v7601, 96
        %v7623 = vpop.permute.xlu0 %7622
        %7624 = vrot.lane.b32.xlu0 %v7602, 96
        %v7625 = vpop.permute.xlu0 %7624
        %7626 = vrot.lane.b32.xlu0 %v7603, 96
        %v7627 = vpop.permute.xlu0 %7626
        %7636 = vst.msk [vmem:[#allocation7] sm:$0xff] %vm3054, %v7613
        %7637 = vst.msk [vmem:[#allocation7 + $0x10] sm:$0xff] %vm3054, %v7615
        %7638 = vst.msk [vmem:[#allocation7 + $0x20] sm:$0xff] %vm3054, %v7617
        %7639 = vst.msk [vmem:[#allocation7 + $0x30] sm:$0xff] %vm3054, %v7619
        %7640 = vst.msk [vmem:[#allocation7 + $0x40] sm:$0xff] %vm3054, %v7621
        %7641 = vst.msk [vmem:[#allocation7 + $0x50] sm:$0xff] %vm3054, %v7623
        %7642 = vst.msk [vmem:[#allocation7 + $0x60] sm:$0xff] %vm3054, %v7625
        %7643 = vst.msk [vmem:[#allocation7 + $0x70] sm:$0xff] %vm3054, %v7627
        %v7644 = vld [vmem:[%s7595 + $0x8] sm:$0xff]
        %v7645 = vld [vmem:[%s7595 + $0x20] sm:$0xff]
        %v7646 = vld [vmem:[%s7595 + $0x38] sm:$0xff]
        %v7647 = vld [vmem:[%s7595 + $0x50] sm:$0xff]
        %v7648 = vld [vmem:[%s7595 + $0x68] sm:$0xff]
        %v7649 = vld [vmem:[%s7595 + $0x80] sm:$0xff]
        %v7650 = vld [vmem:[%s7595 + $0x98] sm:$0xff]
        %v7651 = vld [vmem:[%s7595 + $0xb0] sm:$0xff]
        %7660 = vrot.lane.b32.xlu0 %v7644, 112
        %v7661 = vpop.permute.xlu0 %7660
        %7662 = vrot.lane.b32.xlu0 %v7645, 112
        %v7663 = vpop.permute.xlu0 %7662
        %7664 = vrot.lane.b32.xlu0 %v7646, 112
        %v7665 = vpop.permute.xlu0 %7664
        %7666 = vrot.lane.b32.xlu0 %v7647, 112
        %v7667 = vpop.permute.xlu0 %7666
        %7668 = vrot.lane.b32.xlu0 %v7648, 112
        %v7669 = vpop.permute.xlu0 %7668
        %7670 = vrot.lane.b32.xlu0 %v7649, 112
        %v7671 = vpop.permute.xlu0 %7670
        %7672 = vrot.lane.b32.xlu0 %v7650, 112
        %v7673 = vpop.permute.xlu0 %7672
        %7674 = vrot.lane.b32.xlu0 %v7651, 112
        %v7675 = vpop.permute.xlu0 %7674
        %7684 = vst.msk [vmem:[#allocation7] sm:$0xff] %vm3247, %v7661
        %7685 = vst.msk [vmem:[#allocation7 + $0x10] sm:$0xff] %vm3247, %v7663
        %7686 = vst.msk [vmem:[#allocation7 + $0x20] sm:$0xff] %vm3247, %v7665
        %7687 = vst.msk [vmem:[#allocation7 + $0x30] sm:$0xff] %vm3247, %v7667
        %7688 = vst.msk [vmem:[#allocation7 + $0x40] sm:$0xff] %vm3247, %v7669
        %7689 = vst.msk [vmem:[#allocation7 + $0x50] sm:$0xff] %vm3247, %v7671
        %7690 = vst.msk [vmem:[#allocation7 + $0x60] sm:$0xff] %vm3247, %v7673
        %7691 = vst.msk [vmem:[#allocation7 + $0x70] sm:$0xff] %vm3247, %v7675
        %v7692 = vld [vmem:[%s7595 + $0x9] sm:$0xff]
        %v7693 = vld [vmem:[%s7595 + $0x21] sm:$0xff]
        %v7694 = vld [vmem:[%s7595 + $0x39] sm:$0xff]
        %v7695 = vld [vmem:[%s7595 + $0x51] sm:$0xff]
        %v7696 = vld [vmem:[%s7595 + $0x69] sm:$0xff]
        %v7697 = vld [vmem:[%s7595 + $0x81] sm:$0xff]
        %v7698 = vld [vmem:[%s7595 + $0x99] sm:$0xff]
        %v7699 = vld [vmem:[%s7595 + $0xb1] sm:$0xff]
        %7700 = vst.msk [vmem:[#allocation7 + $0x8] sm:$0xff] %vm1242, %v7692
        %7701 = vst.msk [vmem:[#allocation7 + $0x18] sm:$0xff] %vm1242, %v7693
        %7702 = vst.msk [vmem:[#allocation7 + $0x28] sm:$0xff] %vm1242, %v7694
        %7703 = vst.msk [vmem:[#allocation7 + $0x38] sm:$0xff] %vm1242, %v7695
        %7704 = vst.msk [vmem:[#allocation7 + $0x48] sm:$0xff] %vm1242, %v7696
        %7705 = vst.msk [vmem:[#allocation7 + $0x58] sm:$0xff] %vm1242, %v7697
        %7706 = vst.msk [vmem:[#allocation7 + $0x68] sm:$0xff] %vm1242, %v7698
        %7707 = vst.msk [vmem:[#allocation7 + $0x78] sm:$0xff] %vm1242, %v7699
        %v7708 = vld [vmem:[#allocation7] sm:$0xff]
        %v7709 = vld [vmem:[#allocation7 + $0x8] sm:$0xff]
        %v7710 = vld [vmem:[#allocation7 + $0x10] sm:$0xff]
        %v7711 = vld [vmem:[#allocation7 + $0x18] sm:$0xff]
        %v7712 = vld [vmem:[#allocation7 + $0x20] sm:$0xff]
        %v7713 = vld [vmem:[#allocation7 + $0x28] sm:$0xff]
        %v7714 = vld [vmem:[#allocation7 + $0x30] sm:$0xff]
        %v7715 = vld [vmem:[#allocation7 + $0x38] sm:$0xff]
        %v7716 = vld [vmem:[#allocation7 + $0x40] sm:$0xff]
        %v7717 = vld [vmem:[#allocation7 + $0x48] sm:$0xff]
        %v7718 = vld [vmem:[#allocation7 + $0x50] sm:$0xff]
        %v7719 = vld [vmem:[#allocation7 + $0x58] sm:$0xff]
        %v7720 = vld [vmem:[#allocation7 + $0x60] sm:$0xff]
        %v7721 = vld [vmem:[#allocation7 + $0x68] sm:$0xff]
        %v7722 = vld [vmem:[#allocation7 + $0x70] sm:$0xff]
        %v7723 = vld [vmem:[#allocation7 + $0x78] sm:$0xff]
        %v7724 = vpack.c.bf16 %v7710, %v7708
        %v7725 = vpack.c.bf16 %v7711, %v7709
        %v7726 = vpack.c.bf16 %v7714, %v7712
        %v7727 = vpack.c.bf16 %v7715, %v7713
        %v7728 = vpack.c.bf16 %v7718, %v7716
        %v7729 = vpack.c.bf16 %v7719, %v7717
        %v7730 = vpack.c.bf16 %v7722, %v7720
        %v7731 = vpack.c.bf16 %v7723, %v7721
        %v7732 = vld [vmem:[%s49] sm:$0xf]
        %v7733 = vld [vmem:[%s49 + $0x4] sm:$0xf]
        %v7734 = vld [vmem:[%s49 + $0x8] sm:$0xf]
        %v7735 = vld [vmem:[%s49 + $0xc] sm:$0xf]
        %v7736 = vld [vmem:[%s49 + $0x10] sm:$0xf]
        %v7737 = vld [vmem:[%s49 + $0x14] sm:$0xf]
        %v7738 = vld [vmem:[%s49 + $0x18] sm:$0xf]
        %v7739 = vld [vmem:[%s49 + $0x1c] sm:$0xf]
        %v7740 = vld [vmem:[%s49 + $0x20] sm:$0xf]
        %v7741 = vld [vmem:[%s49 + $0x24] sm:$0xf]
        %v7742 = vld [vmem:[%s49 + $0x28] sm:$0xf]
        %v7743 = vld [vmem:[%s49 + $0x2c] sm:$0xf]
        %v7744 = vld [vmem:[%s49 + $0x30] sm:$0xf]
        %v7745 = vld [vmem:[%s49 + $0x34] sm:$0xf]
        %v7746 = vld [vmem:[%s49 + $0x38] sm:$0xf]
        %v7747 = vld [vmem:[%s49 + $0x3c] sm:$0xf]
        %v7748 = vld [vmem:[%s49 + $0x40] sm:$0xf]
        %v7749 = vld [vmem:[%s49 + $0x44] sm:$0xf]
        %v7768 = vunpack.c.l.b16 %v7732
        %v7769 = vunpack.c.l.b16 %v7733
        %v7770 = vunpack.c.l.b16 %v7734
        %v7771 = vunpack.c.l.b16 %v7735
        %v7772 = vunpack.c.l.b16 %v7736
        %v7773 = vunpack.c.l.b16 %v7737
        %v7774 = vunpack.c.l.b16 %v7738
        %v7775 = vunpack.c.l.b16 %v7739
        %v7776 = vunpack.c.l.b16 %v7740
        %v7777 = vunpack.c.l.b16 %v7741
        %v7778 = vunpack.c.l.b16 %v7742
        %v7779 = vunpack.c.l.b16 %v7743
        %v7780 = vunpack.c.l.b16 %v7744
        %v7781 = vunpack.c.l.b16 %v7745
        %v7782 = vunpack.c.l.b16 %v7746
        %v7783 = vunpack.c.l.b16 %v7747
        %v7784 = vunpack.c.l.b16 %v7748
        %v7785 = vunpack.c.l.b16 %v7749
        %v7786 = vpack.c.b16 %v7769, %v7768
        %v7787 = vpack.c.b16 %v7771, %v7770
        %v7788 = vpack.c.b16 %v7773, %v7772
        %v7789 = vpack.c.b16 %v7775, %v7774
        %v7790 = vpack.c.b16 %v7777, %v7776
        %v7791 = vpack.c.b16 %v7779, %v7778
        %v7792 = vpack.c.b16 %v7781, %v7780
        %v7793 = vpack.c.b16 %v7783, %v7782
        %v7794 = vpack.c.b16 %v7785, %v7784
        %v7805 = vsel %vm1242, %v7725, 0
        %v7808 = vsel %vm1242, %v7727, 0
        %v7811 = vsel %vm1242, %v7729, 0
        %v7814 = vsel %vm1242, %v7731, 0
        %7816 = vmatprep.subr.bf16.mxu0 0
        %7817 = vmatpush1.bf16.msra.mxu0 %v7786
        %7818 = vmatprep.subr.bf16.mxu0 0
        %7819 = vmatpush1.bf16.msra.mxu0 %v7787
        %7820 = vmatprep.subr.bf16.mxu0 0
        %7821 = vmatpush1.bf16.msra.mxu0 %v7788
        %7822 = vmatprep.subr.bf16.mxu0 0
        %7823 = vmatpush1.bf16.msra.mxu0 %v7789
        %7824 = vmatprep.subr.bf16.mxu0 0
        %7825 = vmatpush1.bf16.msra.mxu0 %v7790
        %7826 = vmatprep.subr.bf16.mxu0 0
        %7827 = vmatpush1.bf16.msra.mxu0 %v7791
        %7828 = vmatprep.subr.bf16.mxu0 0
        %7829 = vmatpush1.bf16.msra.mxu0 %v7792
        %7830 = vmatprep.subr.bf16.mxu0 0
        %7831 = vmatpush1.bf16.msra.mxu0 %v7793
        %7832 = vmatprep.subr.bf16.mxu0 0
        %7833 = vmatpush1.bf16.msra.mxu0 %v7794
        %7834 = vmatprep.subr.bf16.mxu0 0
        %7835 = vmatpush1.bf16.msra.mxu0 0
        %7836 = vmatprep.subr.bf16.mxu0 0
        %7837 = vmatpush1.bf16.msra.mxu0 0
        %7838 = vmatprep.subr.bf16.mxu0 0
        %7839 = vmatpush1.bf16.msra.mxu0 0
        %7840 = vmatprep.subr.bf16.mxu0 0
        %7841 = vmatpush1.bf16.msra.mxu0 0
        %7842 = vmatprep.subr.bf16.mxu0 0
        %7843 = vmatpush1.bf16.msra.mxu0 0
        %7844 = vmatprep.subr.bf16.mxu0 0
        %7845 = vmatpush1.bf16.msra.mxu0 0
        %7846 = vmatprep.subr.bf16.mxu0 0
        %7847 = vmatpush1.bf16.msra.mxu0 0
        %7848 = vmatprep.mubr.bf16.mxu0 %v7805
        %7849 = vmatmul.mubr.bf16.gmra.mrb[0].mxu0 %v7724
        %v7850 = vpop.f32.mrb[0].mxu0
        %v7851 = vadd.f32 0.0, %v7850
        %v7852 = vpop.f32.mrb[0].mxu0
        %v7853 = vpop.f32.mrb[0].mxu0
        %v7854 = vadd.f32 0.0, %v7853
        %v7855 = vpop.f32.mrb[0].mxu0
        %7856 = vmatprep.mubr.bf16.mxu0 %v7808
        %7857 = vmatmul.mubr.bf16.gmra.mrb[0].mxu0 %v7726
        %v7858 = vpop.f32.mrb[0].mxu0
        %v7859 = vadd.f32 0.0, %v7858
        %v7860 = vpop.f32.mrb[0].mxu0
        %v7861 = vpop.f32.mrb[0].mxu0
        %v7862 = vadd.f32 0.0, %v7861
        %v7863 = vpop.f32.mrb[0].mxu0
        %7864 = vmatprep.mubr.bf16.mxu0 %v7811
        %7865 = vmatmul.mubr.bf16.gmra.mrb[0].mxu0 %v7728
        %v7866 = vpop.f32.mrb[0].mxu0
        %v7867 = vadd.f32 0.0, %v7866
        %v7868 = vpop.f32.mrb[0].mxu0
        %v7869 = vpop.f32.mrb[0].mxu0
        %v7870 = vadd.f32 0.0, %v7869
        %v7871 = vpop.f32.mrb[0].mxu0
        %7872 = vmatprep.mubr.bf16.mxu0 %v7814
        %7873 = vmatmul.mubr.bf16.gmra.mrb[0].mxu0 %v7730
        %v7874 = vpop.f32.mrb[0].mxu0
        %v7875 = vadd.f32 0.0, %v7874
        %v7876 = vpop.f32.mrb[0].mxu0
        %v7877 = vpop.f32.mrb[0].mxu0
        %v7878 = vadd.f32 0.0, %v7877
        %v7879 = vpop.f32.mrb[0].mxu0
        %7880 = vdwg.mxu0
        %7889 = vrot.lane.b32.xlu0 %v7851, 6
        %v7890 = vpop.permute.xlu0 %7889
        %7891 = vrot.lane.b32.xlu0 %v7854, 6
        %v7892 = vpop.permute.xlu0 %7891
        %7893 = vrot.lane.b32.xlu0 %v7859, 6
        %v7894 = vpop.permute.xlu0 %7893
        %7895 = vrot.lane.b32.xlu0 %v7862, 6
        %v7896 = vpop.permute.xlu0 %7895
        %7897 = vrot.lane.b32.xlu0 %v7867, 6
        %v7898 = vpop.permute.xlu0 %7897
        %7899 = vrot.lane.b32.xlu0 %v7870, 6
        %v7900 = vpop.permute.xlu0 %7899
        %7901 = vrot.lane.b32.xlu0 %v7875, 6
        %v7902 = vpop.permute.xlu0 %7901
        %7903 = vrot.lane.b32.xlu0 %v7878, 6
        %v7904 = vpop.permute.xlu0 %7903
        %vm7913 = vcmask 80944
        %7914 = vst.msk [vmem:[#allocation5] sm:$0xff] %vm7913, %v7890
        %7915 = vst.msk [vmem:[#allocation5 + $0x8] sm:$0xff] %vm7913, %v7892
        %7916 = vst.msk [vmem:[#allocation5 + $0x10] sm:$0xff] %vm7913, %v7894
        %7917 = vst.msk [vmem:[#allocation5 + $0x18] sm:$0xff] %vm7913, %v7896
        %7918 = vst.msk [vmem:[#allocation5 + $0x20] sm:$0xff] %vm7913, %v7898
        %7919 = vst.msk [vmem:[#allocation5 + $0x28] sm:$0xff] %vm7913, %v7900
        %7920 = vst.msk [vmem:[#allocation5 + $0x30] sm:$0xff] %vm7913, %v7902
        %7921 = vst.msk [vmem:[#allocation5 + $0x38] sm:$0xff] %vm7913, %v7904
        %v7922 = vld [vmem:[#allocation5] sm:$0xff]
        %v7923 = vld [vmem:[#allocation5 + $0x8] sm:$0xff]
        %v7924 = vld [vmem:[#allocation5 + $0x10] sm:$0xff]
        %v7925 = vld [vmem:[#allocation5 + $0x18] sm:$0xff]
        %v7926 = vld [vmem:[#allocation5 + $0x20] sm:$0xff]
        %v7927 = vld [vmem:[#allocation5 + $0x28] sm:$0xff]
        %v7928 = vld [vmem:[#allocation5 + $0x30] sm:$0xff]
        %v7929 = vld [vmem:[#allocation5 + $0x38] sm:$0xff]
        %v7930 = vld [vmem:[%s51] sm:$0x1]
        %v7932 = vlaneseq
        %v7933 = vshrl.u32 %v7932, 7
        %v7934 = vsub.s32 0, %v7933
        %v7935 = vrot.slane %v7930, %v7934
        %v7937 = vmul.f32 %v7922, %v7935
        %v7938 = vmul.f32 %v7923, %v7935
        %v7939 = vmul.f32 %v7924, %v7935
        %v7940 = vmul.f32 %v7925, %v7935
        %v7941 = vmul.f32 %v7926, %v7935
        %v7942 = vmul.f32 %v7927, %v7935
        %v7943 = vmul.f32 %v7928, %v7935
        %v7944 = vmul.f32 %v7929, %v7935
        %v7945 = vld [vmem:[%s53] sm:$0x1]
        %v7947 = vlaneseq
        %v7948 = vshrl.u32 %v7947, 7
        %v7949 = vsub.s32 0, %v7948
        %v7950 = vrot.slane %v7945, %v7949
        %v7952 = vadd.f32 %v7937, %v7950
        %v7953 = vadd.f32 %v7938, %v7950
        %v7954 = vadd.f32 %v7939, %v7950
        %v7955 = vadd.f32 %v7940, %v7950
        %v7956 = vadd.f32 %v7941, %v7950
        %v7957 = vadd.f32 %v7942, %v7950
        %v7958 = vadd.f32 %v7943, %v7950
        %v7959 = vadd.f32 %v7944, %v7950
        %v7960 = vmax.f32 %v7952, 0.0
        %v7961 = vmax.f32 %v7953, 0.0
        %v7962 = vmax.f32 %v7954, 0.0
        %v7963 = vmax.f32 %v7955, 0.0
        %v7964 = vmax.f32 %v7956, 0.0
        %v7965 = vmax.f32 %v7957, 0.0
        %v7966 = vmax.f32 %v7958, 0.0
        %v7967 = vmax.f32 %v7959, 0.0
        %v7968 = vpack.c.bf16 %v7961, %v7960
        %v7969 = vpack.c.bf16 %v7963, %v7962
        %v7970 = vpack.c.bf16 %v7965, %v7964
        %v7971 = vpack.c.bf16 %v7967, %v7966
        %v7972 = vld [vmem:[%s55] sm:$0xf]
        %v7973 = vld [vmem:[%s55 + $0x4] sm:$0x1]
        %v7976 = vunpack.c.l.b16 %v7972
        %v7977 = vunpack.c.l.b16 %v7973
        %v7978 = vpack.c.b16 %v7977, %v7976
        %vm7979 = vcmask 80896
        %v7981 = vsel %vm7979, %v7968, 0
        %v7984 = vsel %vm7979, %v7969, 0
        %v7987 = vsel %vm7979, %v7970, 0
        %v7990 = vsel %vm7979, %v7971, 0
        %vm7992 = vcmask 1044480
        %v7994 = vsel %vm7992, %v7978, 0
        %7996 = vmatprep.subr.bf16.mxu0 0
        %7997 = vmatpush1.bf16.msra.mxu0 %v7994
        %7998 = vmatprep.subr.bf16.mxu0 0
        %7999 = vmatpush1.bf16.msra.mxu0 0
        %8000 = vmatprep.subr.bf16.mxu0 0
        %8001 = vmatpush1.bf16.msra.mxu0 0
        %8002 = vmatprep.subr.bf16.mxu0 0
        %8003 = vmatpush1.bf16.msra.mxu0 0
        %8004 = vmatprep.subr.bf16.mxu0 0
        %8005 = vmatpush1.bf16.msra.mxu0 0
        %8006 = vmatprep.subr.bf16.mxu0 0
        %8007 = vmatpush1.bf16.msra.mxu0 0
        %8008 = vmatprep.subr.bf16.mxu0 0
        %8009 = vmatpush1.bf16.msra.mxu0 0
        %8010 = vmatprep.subr.bf16.mxu0 0
        %8011 = vmatpush1.bf16.msra.mxu0 0
        %8012 = vmatprep.subr.bf16.mxu0 0
        %8013 = vmatpush1.bf16.msra.mxu0 0
        %8014 = vmatprep.subr.bf16.mxu0 0
        %8015 = vmatpush1.bf16.msra.mxu0 0
        %8016 = vmatprep.subr.bf16.mxu0 0
        %8017 = vmatpush1.bf16.msra.mxu0 0
        %8018 = vmatprep.subr.bf16.mxu0 0
        %8019 = vmatpush1.bf16.msra.mxu0 0
        %8020 = vmatprep.subr.bf16.mxu0 0
        %8021 = vmatpush1.bf16.msra.mxu0 0
        %8022 = vmatprep.subr.bf16.mxu0 0
        %8023 = vmatpush1.bf16.msra.mxu0 0
        %8024 = vmatprep.subr.bf16.mxu0 0
        %8025 = vmatpush1.bf16.msra.mxu0 0
        %8026 = vmatprep.subr.bf16.mxu0 0
        %8027 = vmatpush1.bf16.msra.mxu0 0
        %8028 = vmatprep.mubr.bf16.mxu0 0
        %8029 = vmatmul.mubr.bf16.gmra.mrb[0].mxu0 %v7981
        %v8030 = vpop.f32.mrb[0].mxu0
        %v8031 = vadd.f32 0.0, %v8030
        %v8032 = vpop.f32.mrb[0].mxu0
        %v8033 = vpop.f32.mrb[0].mxu0
        %v8034 = vadd.f32 0.0, %v8033
        %v8035 = vpop.f32.mrb[0].mxu0
        %8036 = vmatprep.mubr.bf16.mxu0 0
        %8037 = vmatmul.mubr.bf16.gmra.mrb[0].mxu0 %v7984
        %v8038 = vpop.f32.mrb[0].mxu0
        %v8039 = vadd.f32 0.0, %v8038
        %v8040 = vpop.f32.mrb[0].mxu0
        %v8041 = vpop.f32.mrb[0].mxu0
        %v8042 = vadd.f32 0.0, %v8041
        %v8043 = vpop.f32.mrb[0].mxu0
        %8044 = vmatprep.mubr.bf16.mxu0 0
        %8045 = vmatmul.mubr.bf16.gmra.mrb[0].mxu0 %v7987
        %v8046 = vpop.f32.mrb[0].mxu0
        %v8047 = vadd.f32 0.0, %v8046
        %v8048 = vpop.f32.mrb[0].mxu0
        %v8049 = vpop.f32.mrb[0].mxu0
        %v8050 = vadd.f32 0.0, %v8049
        %v8051 = vpop.f32.mrb[0].mxu0
        %8052 = vmatprep.mubr.bf16.mxu0 0
        %8053 = vmatmul.mubr.bf16.gmra.mrb[0].mxu0 %v7990
        %v8054 = vpop.f32.mrb[0].mxu0
        %v8055 = vadd.f32 0.0, %v8054
        %v8056 = vpop.f32.mrb[0].mxu0
        %v8057 = vpop.f32.mrb[0].mxu0
        %v8058 = vadd.f32 0.0, %v8057
        %v8059 = vpop.f32.mrb[0].mxu0
        %8060 = vdwg.mxu0
        %v8061 = vld [vmem:[%s57] sm:$0x1]
        %v8063 = vlaneseq
        %v8064 = vshrl.u32 %v8063, 7
        %v8065 = vsub.s32 0, %v8064
        %v8066 = vrot.slane %v8061, %v8065
        %v8068 = vmul.f32 %v8031, %v8066
        %v8069 = vmul.f32 %v8034, %v8066
        %v8070 = vmul.f32 %v8039, %v8066
        %v8071 = vmul.f32 %v8042, %v8066
        %v8072 = vmul.f32 %v8047, %v8066
        %v8073 = vmul.f32 %v8050, %v8066
        %v8074 = vmul.f32 %v8055, %v8066
        %v8075 = vmul.f32 %v8058, %v8066
        %v8076 = vld [vmem:[%s59] sm:$0x1]
        %v8078 = vlaneseq
        %v8079 = vshrl.u32 %v8078, 7
        %v8080 = vsub.s32 0, %v8079
        %v8081 = vrot.slane %v8076, %v8080
        %v8083 = vadd.f32 %v8068, %v8081
        %v8084 = vadd.f32 %v8069, %v8081
        %v8085 = vadd.f32 %v8070, %v8081
        %v8086 = vadd.f32 %v8071, %v8081
        %v8087 = vadd.f32 %v8072, %v8081
        %v8088 = vadd.f32 %v8073, %v8081
        %v8089 = vadd.f32 %v8074, %v8081
        %v8090 = vadd.f32 %v8075, %v8081
        %v8091 = vmax.f32 %v8083, 0.0
        %v8092 = vmax.f32 %v8084, 0.0
        %v8093 = vmax.f32 %v8085, 0.0
        %v8094 = vmax.f32 %v8086, 0.0
        %v8095 = vmax.f32 %v8087, 0.0
        %v8096 = vmax.f32 %v8088, 0.0
        %v8097 = vmax.f32 %v8089, 0.0
        %v8098 = vmax.f32 %v8090, 0.0
        %8099 = vst.msk [vmem:[%s7330 + $0x8] sm:$0xff] %vm1242, %v8091
        %8100 = vst.msk [vmem:[%s7330 + $0x20] sm:$0xff] %vm1242, %v8092
        %8101 = vst.msk [vmem:[%s7330 + $0x38] sm:$0xff] %vm1242, %v8093
        %8102 = vst.msk [vmem:[%s7330 + $0x50] sm:$0xff] %vm1242, %v8094
        %8103 = vst.msk [vmem:[%s7330 + $0x68] sm:$0xff] %vm1242, %v8095
        %8104 = vst.msk [vmem:[%s7330 + $0x80] sm:$0xff] %vm1242, %v8096
        %8105 = vst.msk [vmem:[%s7330 + $0x98] sm:$0xff] %vm1242, %v8097
        %8106 = vst.msk [vmem:[%s7330 + $0xb0] sm:$0xff] %vm1242, %v8098
        %v8107 = vld [vmem:[#allocation6 + $0x7] sm:$0xff]
        %v8108 = vld [vmem:[#allocation6 + $0x1f] sm:$0xff]
        %v8109 = vld [vmem:[#allocation6 + $0x37] sm:$0xff]
        %v8110 = vld [vmem:[#allocation6 + $0x4f] sm:$0xff]
        %v8111 = vld [vmem:[#allocation6 + $0x67] sm:$0xff]
        %v8112 = vld [vmem:[#allocation6 + $0x7f] sm:$0xff]
        %v8113 = vld [vmem:[#allocation6 + $0x97] sm:$0xff]
        %v8114 = vld [vmem:[#allocation6 + $0xaf] sm:$0xff]
        %8115 = vst.msk [vmem:[#allocation7] sm:$0xff] %vm1242, %v8107
        %8116 = vst.msk [vmem:[#allocation7 + $0x10] sm:$0xff] %vm1242, %v8108
        %8117 = vst.msk [vmem:[#allocation7 + $0x20] sm:$0xff] %vm1242, %v8109
        %8118 = vst.msk [vmem:[#allocation7 + $0x30] sm:$0xff] %vm1242, %v8110
        %8119 = vst.msk [vmem:[#allocation7 + $0x40] sm:$0xff] %vm1242, %v8111
        %8120 = vst.msk [vmem:[#allocation7 + $0x50] sm:$0xff] %vm1242, %v8112
        %8121 = vst.msk [vmem:[#allocation7 + $0x60] sm:$0xff] %vm1242, %v8113
        %8122 = vst.msk [vmem:[#allocation7 + $0x70] sm:$0xff] %vm1242, %v8114
        %v8123 = vld [vmem:[#allocation6 + $0x8] sm:$0xff]
        %v8124 = vld [vmem:[#allocation6 + $0x20] sm:$0xff]
        %v8125 = vld [vmem:[#allocation6 + $0x38] sm:$0xff]
        %v8126 = vld [vmem:[#allocation6 + $0x50] sm:$0xff]
        %v8127 = vld [vmem:[#allocation6 + $0x68] sm:$0xff]
        %v8128 = vld [vmem:[#allocation6 + $0x80] sm:$0xff]
        %v8129 = vld [vmem:[#allocation6 + $0x98] sm:$0xff]
        %v8130 = vld [vmem:[#allocation6 + $0xb0] sm:$0xff]
        %8139 = vrot.lane.b32.xlu0 %v8123, 16
        %v8140 = vpop.permute.xlu0 %8139
        %8141 = vrot.lane.b32.xlu0 %v8124, 16
        %v8142 = vpop.permute.xlu0 %8141
        %8143 = vrot.lane.b32.xlu0 %v8125, 16
        %v8144 = vpop.permute.xlu0 %8143
        %8145 = vrot.lane.b32.xlu0 %v8126, 16
        %v8146 = vpop.permute.xlu0 %8145
        %8147 = vrot.lane.b32.xlu0 %v8127, 16
        %v8148 = vpop.permute.xlu0 %8147
        %8149 = vrot.lane.b32.xlu0 %v8128, 16
        %v8150 = vpop.permute.xlu0 %8149
        %8151 = vrot.lane.b32.xlu0 %v8129, 16
        %v8152 = vpop.permute.xlu0 %8151
        %8153 = vrot.lane.b32.xlu0 %v8130, 16
        %v8154 = vpop.permute.xlu0 %8153
        %8163 = vst.msk [vmem:[#allocation7] sm:$0xff] %vm2088, %v8140
        %8164 = vst.msk [vmem:[#allocation7 + $0x10] sm:$0xff] %vm2088, %v8142
        %8165 = vst.msk [vmem:[#allocation7 + $0x20] sm:$0xff] %vm2088, %v8144
        %8166 = vst.msk [vmem:[#allocation7 + $0x30] sm:$0xff] %vm2088, %v8146
        %8167 = vst.msk [vmem:[#allocation7 + $0x40] sm:$0xff] %vm2088, %v8148
        %8168 = vst.msk [vmem:[#allocation7 + $0x50] sm:$0xff] %vm2088, %v8150
        %8169 = vst.msk [vmem:[#allocation7 + $0x60] sm:$0xff] %vm2088, %v8152
        %8170 = vst.msk [vmem:[#allocation7 + $0x70] sm:$0xff] %vm2088, %v8154
        %v8171 = vld [vmem:[#allocation6 + $0x9] sm:$0xff]
        %v8172 = vld [vmem:[#allocation6 + $0x21] sm:$0xff]
        %v8173 = vld [vmem:[#allocation6 + $0x39] sm:$0xff]
        %v8174 = vld [vmem:[#allocation6 + $0x51] sm:$0xff]
        %v8175 = vld [vmem:[#allocation6 + $0x69] sm:$0xff]
        %v8176 = vld [vmem:[#allocation6 + $0x81] sm:$0xff]
        %v8177 = vld [vmem:[#allocation6 + $0x99] sm:$0xff]
        %v8178 = vld [vmem:[#allocation6 + $0xb1] sm:$0xff]
        %8187 = vrot.lane.b32.xlu0 %v8171, 32
        %v8188 = vpop.permute.xlu0 %8187
        %8189 = vrot.lane.b32.xlu0 %v8172, 32
        %v8190 = vpop.permute.xlu0 %8189
        %8191 = vrot.lane.b32.xlu0 %v8173, 32
        %v8192 = vpop.permute.xlu0 %8191
        %8193 = vrot.lane.b32.xlu0 %v8174, 32
        %v8194 = vpop.permute.xlu0 %8193
        %8195 = vrot.lane.b32.xlu0 %v8175, 32
        %v8196 = vpop.permute.xlu0 %8195
        %8197 = vrot.lane.b32.xlu0 %v8176, 32
        %v8198 = vpop.permute.xlu0 %8197
        %8199 = vrot.lane.b32.xlu0 %v8177, 32
        %v8200 = vpop.permute.xlu0 %8199
        %8201 = vrot.lane.b32.xlu0 %v8178, 32
        %v8202 = vpop.permute.xlu0 %8201
        %8211 = vst.msk [vmem:[#allocation7] sm:$0xff] %vm2281, %v8188
        %8212 = vst.msk [vmem:[#allocation7 + $0x10] sm:$0xff] %vm2281, %v8190
        %8213 = vst.msk [vmem:[#allocation7 + $0x20] sm:$0xff] %vm2281, %v8192
        %8214 = vst.msk [vmem:[#allocation7 + $0x30] sm:$0xff] %vm2281, %v8194
        %8215 = vst.msk [vmem:[#allocation7 + $0x40] sm:$0xff] %vm2281, %v8196
        %8216 = vst.msk [vmem:[#allocation7 + $0x50] sm:$0xff] %vm2281, %v8198
        %8217 = vst.msk [vmem:[#allocation7 + $0x60] sm:$0xff] %vm2281, %v8200
        %8218 = vst.msk [vmem:[#allocation7 + $0x70] sm:$0xff] %vm2281, %v8202
        %v8219 = vld [vmem:[%s7330 + $0x7] sm:$0xff]
        %v8220 = vld [vmem:[%s7330 + $0x1f] sm:$0xff]
        %v8221 = vld [vmem:[%s7330 + $0x37] sm:$0xff]
        %v8222 = vld [vmem:[%s7330 + $0x4f] sm:$0xff]
        %v8223 = vld [vmem:[%s7330 + $0x67] sm:$0xff]
        %v8224 = vld [vmem:[%s7330 + $0x7f] sm:$0xff]
        %v8225 = vld [vmem:[%s7330 + $0x97] sm:$0xff]
        %v8226 = vld [vmem:[%s7330 + $0xaf] sm:$0xff]
        %8235 = vrot.lane.b32.xlu0 %v8219, 48
        %v8236 = vpop.permute.xlu0 %8235
        %8237 = vrot.lane.b32.xlu0 %v8220, 48
        %v8238 = vpop.permute.xlu0 %8237
        %8239 = vrot.lane.b32.xlu0 %v8221, 48
        %v8240 = vpop.permute.xlu0 %8239
        %8241 = vrot.lane.b32.xlu0 %v8222, 48
        %v8242 = vpop.permute.xlu0 %8241
        %8243 = vrot.lane.b32.xlu0 %v8223, 48
        %v8244 = vpop.permute.xlu0 %8243
        %8245 = vrot.lane.b32.xlu0 %v8224, 48
        %v8246 = vpop.permute.xlu0 %8245
        %8247 = vrot.lane.b32.xlu0 %v8225, 48
        %v8248 = vpop.permute.xlu0 %8247
        %8249 = vrot.lane.b32.xlu0 %v8226, 48
        %v8250 = vpop.permute.xlu0 %8249
        %8259 = vst.msk [vmem:[#allocation7] sm:$0xff] %vm2474, %v8236
        %8260 = vst.msk [vmem:[#allocation7 + $0x10] sm:$0xff] %vm2474, %v8238
        %8261 = vst.msk [vmem:[#allocation7 + $0x20] sm:$0xff] %vm2474, %v8240
        %8262 = vst.msk [vmem:[#allocation7 + $0x30] sm:$0xff] %vm2474, %v8242
        %8263 = vst.msk [vmem:[#allocation7 + $0x40] sm:$0xff] %vm2474, %v8244
        %8264 = vst.msk [vmem:[#allocation7 + $0x50] sm:$0xff] %vm2474, %v8246
        %8265 = vst.msk [vmem:[#allocation7 + $0x60] sm:$0xff] %vm2474, %v8248
        %8266 = vst.msk [vmem:[#allocation7 + $0x70] sm:$0xff] %vm2474, %v8250
        %v8267 = vld [vmem:[%s7330 + $0x8] sm:$0xff]
        %v8268 = vld [vmem:[%s7330 + $0x20] sm:$0xff]
        %v8269 = vld [vmem:[%s7330 + $0x38] sm:$0xff]
        %v8270 = vld [vmem:[%s7330 + $0x50] sm:$0xff]
        %v8271 = vld [vmem:[%s7330 + $0x68] sm:$0xff]
        %v8272 = vld [vmem:[%s7330 + $0x80] sm:$0xff]
        %v8273 = vld [vmem:[%s7330 + $0x98] sm:$0xff]
        %v8274 = vld [vmem:[%s7330 + $0xb0] sm:$0xff]
        %8283 = vrot.lane.b32.xlu0 %v8267, 64
        %v8284 = vpop.permute.xlu0 %8283
        %8285 = vrot.lane.b32.xlu0 %v8268, 64
        %v8286 = vpop.permute.xlu0 %8285
        %8287 = vrot.lane.b32.xlu0 %v8269, 64
        %v8288 = vpop.permute.xlu0 %8287
        %8289 = vrot.lane.b32.xlu0 %v8270, 64
        %v8290 = vpop.permute.xlu0 %8289
        %8291 = vrot.lane.b32.xlu0 %v8271, 64
        %v8292 = vpop.permute.xlu0 %8291
        %8293 = vrot.lane.b32.xlu0 %v8272, 64
        %v8294 = vpop.permute.xlu0 %8293
        %8295 = vrot.lane.b32.xlu0 %v8273, 64
        %v8296 = vpop.permute.xlu0 %8295
        %8297 = vrot.lane.b32.xlu0 %v8274, 64
        %v8298 = vpop.permute.xlu0 %8297
        %8307 = vst.msk [vmem:[#allocation7] sm:$0xff] %vm2667, %v8284
        %8308 = vst.msk [vmem:[#allocation7 + $0x10] sm:$0xff] %vm2667, %v8286
        %8309 = vst.msk [vmem:[#allocation7 + $0x20] sm:$0xff] %vm2667, %v8288
        %8310 = vst.msk [vmem:[#allocation7 + $0x30] sm:$0xff] %vm2667, %v8290
        %8311 = vst.msk [vmem:[#allocation7 + $0x40] sm:$0xff] %vm2667, %v8292
        %8312 = vst.msk [vmem:[#allocation7 + $0x50] sm:$0xff] %vm2667, %v8294
        %8313 = vst.msk [vmem:[#allocation7 + $0x60] sm:$0xff] %vm2667, %v8296
        %8314 = vst.msk [vmem:[#allocation7 + $0x70] sm:$0xff] %vm2667, %v8298
        %v8315 = vld [vmem:[%s7330 + $0x9] sm:$0xff]
        %v8316 = vld [vmem:[%s7330 + $0x21] sm:$0xff]
        %v8317 = vld [vmem:[%s7330 + $0x39] sm:$0xff]
        %v8318 = vld [vmem:[%s7330 + $0x51] sm:$0xff]
        %v8319 = vld [vmem:[%s7330 + $0x69] sm:$0xff]
        %v8320 = vld [vmem:[%s7330 + $0x81] sm:$0xff]
        %v8321 = vld [vmem:[%s7330 + $0x99] sm:$0xff]
        %v8322 = vld [vmem:[%s7330 + $0xb1] sm:$0xff]
        %8331 = vrot.lane.b32.xlu0 %v8315, 80
        %v8332 = vpop.permute.xlu0 %8331
        %8333 = vrot.lane.b32.xlu0 %v8316, 80
        %v8334 = vpop.permute.xlu0 %8333
        %8335 = vrot.lane.b32.xlu0 %v8317, 80
        %v8336 = vpop.permute.xlu0 %8335
        %8337 = vrot.lane.b32.xlu0 %v8318, 80
        %v8338 = vpop.permute.xlu0 %8337
        %8339 = vrot.lane.b32.xlu0 %v8319, 80
        %v8340 = vpop.permute.xlu0 %8339
        %8341 = vrot.lane.b32.xlu0 %v8320, 80
        %v8342 = vpop.permute.xlu0 %8341
        %8343 = vrot.lane.b32.xlu0 %v8321, 80
        %v8344 = vpop.permute.xlu0 %8343
        %8345 = vrot.lane.b32.xlu0 %v8322, 80
        %v8346 = vpop.permute.xlu0 %8345
        %8355 = vst.msk [vmem:[#allocation7] sm:$0xff] %vm2860, %v8332
        %8356 = vst.msk [vmem:[#allocation7 + $0x10] sm:$0xff] %vm2860, %v8334
        %8357 = vst.msk [vmem:[#allocation7 + $0x20] sm:$0xff] %vm2860, %v8336
        %8358 = vst.msk [vmem:[#allocation7 + $0x30] sm:$0xff] %vm2860, %v8338
        %8359 = vst.msk [vmem:[#allocation7 + $0x40] sm:$0xff] %vm2860, %v8340
        %8360 = vst.msk [vmem:[#allocation7 + $0x50] sm:$0xff] %vm2860, %v8342
        %8361 = vst.msk [vmem:[#allocation7 + $0x60] sm:$0xff] %vm2860, %v8344
        %8362 = vst.msk [vmem:[#allocation7 + $0x70] sm:$0xff] %vm2860, %v8346
        %v8363 = vld [vmem:[%s7595 + $0x7] sm:$0xff]
        %v8364 = vld [vmem:[%s7595 + $0x1f] sm:$0xff]
        %v8365 = vld [vmem:[%s7595 + $0x37] sm:$0xff]
        %v8366 = vld [vmem:[%s7595 + $0x4f] sm:$0xff]
        %v8367 = vld [vmem:[%s7595 + $0x67] sm:$0xff]
        %v8368 = vld [vmem:[%s7595 + $0x7f] sm:$0xff]
        %v8369 = vld [vmem:[%s7595 + $0x97] sm:$0xff]
        %v8370 = vld [vmem:[%s7595 + $0xaf] sm:$0xff]
        %8379 = vrot.lane.b32.xlu0 %v8363, 96
        %v8380 = vpop.permute.xlu0 %8379
        %8381 = vrot.lane.b32.xlu0 %v8364, 96
        %v8382 = vpop.permute.xlu0 %8381
        %8383 = vrot.lane.b32.xlu0 %v8365, 96
        %v8384 = vpop.permute.xlu0 %8383
        %8385 = vrot.lane.b32.xlu0 %v8366, 96
        %v8386 = vpop.permute.xlu0 %8385
        %8387 = vrot.lane.b32.xlu0 %v8367, 96
        %v8388 = vpop.permute.xlu0 %8387
        %8389 = vrot.lane.b32.xlu0 %v8368, 96
        %v8390 = vpop.permute.xlu0 %8389
        %8391 = vrot.lane.b32.xlu0 %v8369, 96
        %v8392 = vpop.permute.xlu0 %8391
        %8393 = vrot.lane.b32.xlu0 %v8370, 96
        %v8394 = vpop.permute.xlu0 %8393
        %8403 = vst.msk [vmem:[#allocation7] sm:$0xff] %vm3054, %v8380
        %8404 = vst.msk [vmem:[#allocation7 + $0x10] sm:$0xff] %vm3054, %v8382
        %8405 = vst.msk [vmem:[#allocation7 + $0x20] sm:$0xff] %vm3054, %v8384
        %8406 = vst.msk [vmem:[#allocation7 + $0x30] sm:$0xff] %vm3054, %v8386
        %8407 = vst.msk [vmem:[#allocation7 + $0x40] sm:$0xff] %vm3054, %v8388
        %8408 = vst.msk [vmem:[#allocation7 + $0x50] sm:$0xff] %vm3054, %v8390
        %8409 = vst.msk [vmem:[#allocation7 + $0x60] sm:$0xff] %vm3054, %v8392
        %8410 = vst.msk [vmem:[#allocation7 + $0x70] sm:$0xff] %vm3054, %v8394
        %v8411 = vld [vmem:[%s7595 + $0x8] sm:$0xff]
        %v8412 = vld [vmem:[%s7595 + $0x20] sm:$0xff]
        %v8413 = vld [vmem:[%s7595 + $0x38] sm:$0xff]
        %v8414 = vld [vmem:[%s7595 + $0x50] sm:$0xff]
        %v8415 = vld [vmem:[%s7595 + $0x68] sm:$0xff]
        %v8416 = vld [vmem:[%s7595 + $0x80] sm:$0xff]
        %v8417 = vld [vmem:[%s7595 + $0x98] sm:$0xff]
        %v8418 = vld [vmem:[%s7595 + $0xb0] sm:$0xff]
        %8427 = vrot.lane.b32.xlu0 %v8411, 112
        %v8428 = vpop.permute.xlu0 %8427
        %8429 = vrot.lane.b32.xlu0 %v8412, 112
        %v8430 = vpop.permute.xlu0 %8429
        %8431 = vrot.lane.b32.xlu0 %v8413, 112
        %v8432 = vpop.permute.xlu0 %8431
        %8433 = vrot.lane.b32.xlu0 %v8414, 112
        %v8434 = vpop.permute.xlu0 %8433
        %8435 = vrot.lane.b32.xlu0 %v8415, 112
        %v8436 = vpop.permute.xlu0 %8435
        %8437 = vrot.lane.b32.xlu0 %v8416, 112
        %v8438 = vpop.permute.xlu0 %8437
        %8439 = vrot.lane.b32.xlu0 %v8417, 112
        %v8440 = vpop.permute.xlu0 %8439
        %8441 = vrot.lane.b32.xlu0 %v8418, 112
        %v8442 = vpop.permute.xlu0 %8441
        %8451 = vst.msk [vmem:[#allocation7] sm:$0xff] %vm3247, %v8428
        %8452 = vst.msk [vmem:[#allocation7 + $0x10] sm:$0xff] %vm3247, %v8430
        %8453 = vst.msk [vmem:[#allocation7 + $0x20] sm:$0xff] %vm3247, %v8432
        %8454 = vst.msk [vmem:[#allocation7 + $0x30] sm:$0xff] %vm3247, %v8434
        %8455 = vst.msk [vmem:[#allocation7 + $0x40] sm:$0xff] %vm3247, %v8436
        %8456 = vst.msk [vmem:[#allocation7 + $0x50] sm:$0xff] %vm3247, %v8438
        %8457 = vst.msk [vmem:[#allocation7 + $0x60] sm:$0xff] %vm3247, %v8440
        %8458 = vst.msk [vmem:[#allocation7 + $0x70] sm:$0xff] %vm3247, %v8442
        %v8459 = vld [vmem:[%s7595 + $0x9] sm:$0xff]
        %v8460 = vld [vmem:[%s7595 + $0x21] sm:$0xff]
        %v8461 = vld [vmem:[%s7595 + $0x39] sm:$0xff]
        %v8462 = vld [vmem:[%s7595 + $0x51] sm:$0xff]
        %v8463 = vld [vmem:[%s7595 + $0x69] sm:$0xff]
        %v8464 = vld [vmem:[%s7595 + $0x81] sm:$0xff]
        %v8465 = vld [vmem:[%s7595 + $0x99] sm:$0xff]
        %v8466 = vld [vmem:[%s7595 + $0xb1] sm:$0xff]
        %8467 = vst.msk [vmem:[#allocation7 + $0x8] sm:$0xff] %vm1242, %v8459
        %8468 = vst.msk [vmem:[#allocation7 + $0x18] sm:$0xff] %vm1242, %v8460
        %8469 = vst.msk [vmem:[#allocation7 + $0x28] sm:$0xff] %vm1242, %v8461
        %8470 = vst.msk [vmem:[#allocation7 + $0x38] sm:$0xff] %vm1242, %v8462
        %8471 = vst.msk [vmem:[#allocation7 + $0x48] sm:$0xff] %vm1242, %v8463
        %8472 = vst.msk [vmem:[#allocation7 + $0x58] sm:$0xff] %vm1242, %v8464
        %8473 = vst.msk [vmem:[#allocation7 + $0x68] sm:$0xff] %vm1242, %v8465
        %8474 = vst.msk [vmem:[#allocation7 + $0x78] sm:$0xff] %vm1242, %v8466
        %v8475 = vld [vmem:[#allocation7] sm:$0xff]
        %v8476 = vld [vmem:[#allocation7 + $0x8] sm:$0xff]
        %v8477 = vld [vmem:[#allocation7 + $0x10] sm:$0xff]
        %v8478 = vld [vmem:[#allocation7 + $0x18] sm:$0xff]
        %v8479 = vld [vmem:[#allocation7 + $0x20] sm:$0xff]
        %v8480 = vld [vmem:[#allocation7 + $0x28] sm:$0xff]
        %v8481 = vld [vmem:[#allocation7 + $0x30] sm:$0xff]
        %v8482 = vld [vmem:[#allocation7 + $0x38] sm:$0xff]
        %v8483 = vld [vmem:[#allocation7 + $0x40] sm:$0xff]
        %v8484 = vld [vmem:[#allocation7 + $0x48] sm:$0xff]
        %v8485 = vld [vmem:[#allocation7 + $0x50] sm:$0xff]
        %v8486 = vld [vmem:[#allocation7 + $0x58] sm:$0xff]
        %v8487 = vld [vmem:[#allocation7 + $0x60] sm:$0xff]
        %v8488 = vld [vmem:[#allocation7 + $0x68] sm:$0xff]
        %v8489 = vld [vmem:[#allocation7 + $0x70] sm:$0xff]
        %v8490 = vld [vmem:[#allocation7 + $0x78] sm:$0xff]
        %v8491 = vpack.c.bf16 %v8477, %v8475
        %v8492 = vpack.c.bf16 %v8478, %v8476
        %v8493 = vpack.c.bf16 %v8481, %v8479
        %v8494 = vpack.c.bf16 %v8482, %v8480
        %v8495 = vpack.c.bf16 %v8485, %v8483
        %v8496 = vpack.c.bf16 %v8486, %v8484
        %v8497 = vpack.c.bf16 %v8489, %v8487
        %v8498 = vpack.c.bf16 %v8490, %v8488
        %v8499 = vld [vmem:[%s61] sm:$0xf]
        %v8500 = vld [vmem:[%s61 + $0x4] sm:$0xf]
        %v8501 = vld [vmem:[%s61 + $0x8] sm:$0xf]
        %v8502 = vld [vmem:[%s61 + $0xc] sm:$0xf]
        %v8503 = vld [vmem:[%s61 + $0x10] sm:$0xf]
        %v8504 = vld [vmem:[%s61 + $0x14] sm:$0xf]
        %v8505 = vld [vmem:[%s61 + $0x18] sm:$0xf]
        %v8506 = vld [vmem:[%s61 + $0x1c] sm:$0xf]
        %v8507 = vld [vmem:[%s61 + $0x20] sm:$0xf]
        %v8508 = vld [vmem:[%s61 + $0x24] sm:$0xf]
        %v8509 = vld [vmem:[%s61 + $0x28] sm:$0xf]
        %v8510 = vld [vmem:[%s61 + $0x2c] sm:$0xf]
        %v8511 = vld [vmem:[%s61 + $0x30] sm:$0xf]
        %v8512 = vld [vmem:[%s61 + $0x34] sm:$0xf]
        %v8513 = vld [vmem:[%s61 + $0x38] sm:$0xf]
        %v8514 = vld [vmem:[%s61 + $0x3c] sm:$0xf]
        %v8515 = vld [vmem:[%s61 + $0x40] sm:$0xf]
        %v8516 = vld [vmem:[%s61 + $0x44] sm:$0xf]
        %v8535 = vunpack.c.l.b16 %v8499
        %v8536 = vunpack.c.l.b16 %v8500
        %v8537 = vunpack.c.l.b16 %v8501
        %v8538 = vunpack.c.l.b16 %v8502
        %v8539 = vunpack.c.l.b16 %v8503
        %v8540 = vunpack.c.l.b16 %v8504
        %v8541 = vunpack.c.l.b16 %v8505
        %v8542 = vunpack.c.l.b16 %v8506
        %v8543 = vunpack.c.l.b16 %v8507
        %v8544 = vunpack.c.l.b16 %v8508
        %v8545 = vunpack.c.l.b16 %v8509
        %v8546 = vunpack.c.l.b16 %v8510
        %v8547 = vunpack.c.l.b16 %v8511
        %v8548 = vunpack.c.l.b16 %v8512
        %v8549 = vunpack.c.l.b16 %v8513
        %v8550 = vunpack.c.l.b16 %v8514
        %v8551 = vunpack.c.l.b16 %v8515
        %v8552 = vunpack.c.l.b16 %v8516
        %v8553 = vpack.c.b16 %v8536, %v8535
        %v8554 = vpack.c.b16 %v8538, %v8537
        %v8555 = vpack.c.b16 %v8540, %v8539
        %v8556 = vpack.c.b16 %v8542, %v8541
        %v8557 = vpack.c.b16 %v8544, %v8543
        %v8558 = vpack.c.b16 %v8546, %v8545
        %v8559 = vpack.c.b16 %v8548, %v8547
        %v8560 = vpack.c.b16 %v8550, %v8549
        %v8561 = vpack.c.b16 %v8552, %v8551
        %v8572 = vsel %vm1242, %v8492, 0
        %v8575 = vsel %vm1242, %v8494, 0
        %v8578 = vsel %vm1242, %v8496, 0
        %v8581 = vsel %vm1242, %v8498, 0
        %8583 = vmatprep.subr.bf16.mxu0 0
        %8584 = vmatpush1.bf16.msra.mxu0 %v8553
        %8585 = vmatprep.subr.bf16.mxu0 0
        %8586 = vmatpush1.bf16.msra.mxu0 %v8554
        %8587 = vmatprep.subr.bf16.mxu0 0
        %8588 = vmatpush1.bf16.msra.mxu0 %v8555
        %8589 = vmatprep.subr.bf16.mxu0 0
        %8590 = vmatpush1.bf16.msra.mxu0 %v8556
        %8591 = vmatprep.subr.bf16.mxu0 0
        %8592 = vmatpush1.bf16.msra.mxu0 %v8557
        %8593 = vmatprep.subr.bf16.mxu0 0
        %8594 = vmatpush1.bf16.msra.mxu0 %v8558
        %8595 = vmatprep.subr.bf16.mxu0 0
        %8596 = vmatpush1.bf16.msra.mxu0 %v8559
        %8597 = vmatprep.subr.bf16.mxu0 0
        %8598 = vmatpush1.bf16.msra.mxu0 %v8560
        %8599 = vmatprep.subr.bf16.mxu0 0
        %8600 = vmatpush1.bf16.msra.mxu0 %v8561
        %8601 = vmatprep.subr.bf16.mxu0 0
        %8602 = vmatpush1.bf16.msra.mxu0 0
        %8603 = vmatprep.subr.bf16.mxu0 0
        %8604 = vmatpush1.bf16.msra.mxu0 0
        %8605 = vmatprep.subr.bf16.mxu0 0
        %8606 = vmatpush1.bf16.msra.mxu0 0
        %8607 = vmatprep.subr.bf16.mxu0 0
        %8608 = vmatpush1.bf16.msra.mxu0 0
        %8609 = vmatprep.subr.bf16.mxu0 0
        %8610 = vmatpush1.bf16.msra.mxu0 0
        %8611 = vmatprep.subr.bf16.mxu0 0
        %8612 = vmatpush1.bf16.msra.mxu0 0
        %8613 = vmatprep.subr.bf16.mxu0 0
        %8614 = vmatpush1.bf16.msra.mxu0 0
        %8615 = vmatprep.mubr.bf16.mxu0 %v8572
        %8616 = vmatmul.mubr.bf16.gmra.mrb[0].mxu0 %v8491
        %v8617 = vpop.f32.mrb[0].mxu0
        %v8618 = vadd.f32 0.0, %v8617
        %v8619 = vpop.f32.mrb[0].mxu0
        %v8620 = vpop.f32.mrb[0].mxu0
        %v8621 = vadd.f32 0.0, %v8620
        %v8622 = vpop.f32.mrb[0].mxu0
        %8623 = vmatprep.mubr.bf16.mxu0 %v8575
        %8624 = vmatmul.mubr.bf16.gmra.mrb[0].mxu0 %v8493
        %v8625 = vpop.f32.mrb[0].mxu0
        %v8626 = vadd.f32 0.0, %v8625
        %v8627 = vpop.f32.mrb[0].mxu0
        %v8628 = vpop.f32.mrb[0].mxu0
        %v8629 = vadd.f32 0.0, %v8628
        %v8630 = vpop.f32.mrb[0].mxu0
        %8631 = vmatprep.mubr.bf16.mxu0 %v8578
        %8632 = vmatmul.mubr.bf16.gmra.mrb[0].mxu0 %v8495
        %v8633 = vpop.f32.mrb[0].mxu0
        %v8634 = vadd.f32 0.0, %v8633
        %v8635 = vpop.f32.mrb[0].mxu0
        %v8636 = vpop.f32.mrb[0].mxu0
        %v8637 = vadd.f32 0.0, %v8636
        %v8638 = vpop.f32.mrb[0].mxu0
        %8639 = vmatprep.mubr.bf16.mxu0 %v8581
        %8640 = vmatmul.mubr.bf16.gmra.mrb[0].mxu0 %v8497
        %v8641 = vpop.f32.mrb[0].mxu0
        %v8642 = vadd.f32 0.0, %v8641
        %v8643 = vpop.f32.mrb[0].mxu0
        %v8644 = vpop.f32.mrb[0].mxu0
        %v8645 = vadd.f32 0.0, %v8644
        %v8646 = vpop.f32.mrb[0].mxu0
        %8647 = vdwg.mxu0
        %8656 = vrot.lane.b32.xlu0 %v8618, 10
        %v8657 = vpop.permute.xlu0 %8656
        %8658 = vrot.lane.b32.xlu0 %v8621, 10
        %v8659 = vpop.permute.xlu0 %8658
        %8660 = vrot.lane.b32.xlu0 %v8626, 10
        %v8661 = vpop.permute.xlu0 %8660
        %8662 = vrot.lane.b32.xlu0 %v8629, 10
        %v8663 = vpop.permute.xlu0 %8662
        %8664 = vrot.lane.b32.xlu0 %v8634, 10
        %v8665 = vpop.permute.xlu0 %8664
        %8666 = vrot.lane.b32.xlu0 %v8637, 10
        %v8667 = vpop.permute.xlu0 %8666
        %8668 = vrot.lane.b32.xlu0 %v8642, 10
        %v8669 = vpop.permute.xlu0 %8668
        %8670 = vrot.lane.b32.xlu0 %v8645, 10
        %v8671 = vpop.permute.xlu0 %8670
        %vm8680 = vcmask 113744
        %8681 = vst.msk [vmem:[#allocation5] sm:$0xff] %vm8680, %v8657
        %8682 = vst.msk [vmem:[#allocation5 + $0x8] sm:$0xff] %vm8680, %v8659
        %8683 = vst.msk [vmem:[#allocation5 + $0x10] sm:$0xff] %vm8680, %v8661
        %8684 = vst.msk [vmem:[#allocation5 + $0x18] sm:$0xff] %vm8680, %v8663
        %8685 = vst.msk [vmem:[#allocation5 + $0x20] sm:$0xff] %vm8680, %v8665
        %8686 = vst.msk [vmem:[#allocation5 + $0x28] sm:$0xff] %vm8680, %v8667
        %8687 = vst.msk [vmem:[#allocation5 + $0x30] sm:$0xff] %vm8680, %v8669
        %8688 = vst.msk [vmem:[#allocation5 + $0x38] sm:$0xff] %vm8680, %v8671
        %v8689 = vld [vmem:[#allocation5] sm:$0xff]
        %v8690 = vld [vmem:[#allocation5 + $0x8] sm:$0xff]
        %v8691 = vld [vmem:[#allocation5 + $0x10] sm:$0xff]
        %v8692 = vld [vmem:[#allocation5 + $0x18] sm:$0xff]
        %v8693 = vld [vmem:[#allocation5 + $0x20] sm:$0xff]
        %v8694 = vld [vmem:[#allocation5 + $0x28] sm:$0xff]
        %v8695 = vld [vmem:[#allocation5 + $0x30] sm:$0xff]
        %v8696 = vld [vmem:[#allocation5 + $0x38] sm:$0xff]
        %v8697 = vld [vmem:[%s63] sm:$0x1]
        %v8699 = vlaneseq
        %v8700 = vshrl.u32 %v8699, 7
        %v8701 = vsub.s32 0, %v8700
        %v8702 = vrot.slane %v8697, %v8701
        %v8704 = vmul.f32 %v8689, %v8702
        %v8705 = vmul.f32 %v8690, %v8702
        %v8706 = vmul.f32 %v8691, %v8702
        %v8707 = vmul.f32 %v8692, %v8702
        %v8708 = vmul.f32 %v8693, %v8702
        %v8709 = vmul.f32 %v8694, %v8702
        %v8710 = vmul.f32 %v8695, %v8702
        %v8711 = vmul.f32 %v8696, %v8702
        %v8712 = vld [vmem:[%s65] sm:$0x1]
        %v8714 = vlaneseq
        %v8715 = vshrl.u32 %v8714, 7
        %v8716 = vsub.s32 0, %v8715
        %v8717 = vrot.slane %v8712, %v8716
        %v8719 = vadd.f32 %v8704, %v8717
        %v8720 = vadd.f32 %v8705, %v8717
        %v8721 = vadd.f32 %v8706, %v8717
        %v8722 = vadd.f32 %v8707, %v8717
        %v8723 = vadd.f32 %v8708, %v8717
        %v8724 = vadd.f32 %v8709, %v8717
        %v8725 = vadd.f32 %v8710, %v8717
        %v8726 = vadd.f32 %v8711, %v8717
        %v8727 = vmax.f32 %v8719, 0.0
        %v8728 = vmax.f32 %v8720, 0.0
        %v8729 = vmax.f32 %v8721, 0.0
        %v8730 = vmax.f32 %v8722, 0.0
        %v8731 = vmax.f32 %v8723, 0.0
        %v8732 = vmax.f32 %v8724, 0.0
        %v8733 = vmax.f32 %v8725, 0.0
        %v8734 = vmax.f32 %v8726, 0.0
        %v8735 = vpack.c.bf16 %v8728, %v8727
        %v8736 = vpack.c.bf16 %v8730, %v8729
        %v8737 = vpack.c.bf16 %v8732, %v8731
        %v8738 = vpack.c.bf16 %v8734, %v8733
        %v8739 = vld [vmem:[%s67] sm:$0xf]
        %v8740 = vld [vmem:[%s67 + $0x4] sm:$0x7]
        %v8743 = vunpack.c.l.b16 %v8739
        %v8744 = vunpack.c.l.b16 %v8740
        %v8745 = vpack.c.b16 %v8744, %v8743
        %vm8746 = vcmask 113664
        %v8748 = vsel %vm8746, %v8735, 0
        %v8751 = vsel %vm8746, %v8736, 0
        %v8754 = vsel %vm8746, %v8737, 0
        %v8757 = vsel %vm8746, %v8738, 0
        %vm8759 = vcmask 1046528
        %v8761 = vsel %vm8759, %v8745, 0
        %8763 = vmatprep.subr.bf16.mxu0 0
        %8764 = vmatpush1.bf16.msra.mxu0 %v8761
        %8765 = vmatprep.subr.bf16.mxu0 0
        %8766 = vmatpush1.bf16.msra.mxu0 0
        %8767 = vmatprep.subr.bf16.mxu0 0
        %8768 = vmatpush1.bf16.msra.mxu0 0
        %8769 = vmatprep.subr.bf16.mxu0 0
        %8770 = vmatpush1.bf16.msra.mxu0 0
        %8771 = vmatprep.subr.bf16.mxu0 0
        %8772 = vmatpush1.bf16.msra.mxu0 0
        %8773 = vmatprep.subr.bf16.mxu0 0
        %8774 = vmatpush1.bf16.msra.mxu0 0
        %8775 = vmatprep.subr.bf16.mxu0 0
        %8776 = vmatpush1.bf16.msra.mxu0 0
        %8777 = vmatprep.subr.bf16.mxu0 0
        %8778 = vmatpush1.bf16.msra.mxu0 0
        %8779 = vmatprep.subr.bf16.mxu0 0
        %8780 = vmatpush1.bf16.msra.mxu0 0
        %8781 = vmatprep.subr.bf16.mxu0 0
        %8782 = vmatpush1.bf16.msra.mxu0 0
        %8783 = vmatprep.subr.bf16.mxu0 0
        %8784 = vmatpush1.bf16.msra.mxu0 0
        %8785 = vmatprep.subr.bf16.mxu0 0
        %8786 = vmatpush1.bf16.msra.mxu0 0
        %8787 = vmatprep.subr.bf16.mxu0 0
        %8788 = vmatpush1.bf16.msra.mxu0 0
        %8789 = vmatprep.subr.bf16.mxu0 0
        %8790 = vmatpush1.bf16.msra.mxu0 0
        %8791 = vmatprep.subr.bf16.mxu0 0
        %8792 = vmatpush1.bf16.msra.mxu0 0
        %8793 = vmatprep.subr.bf16.mxu0 0
        %8794 = vmatpush1.bf16.msra.mxu0 0
        %8795 = vmatprep.mubr.bf16.mxu0 0
        %8796 = vmatmul.mubr.bf16.gmra.mrb[0].mxu0 %v8748
        %v8797 = vpop.f32.mrb[0].mxu0
        %v8798 = vadd.f32 0.0, %v8797
        %v8799 = vpop.f32.mrb[0].mxu0
        %v8800 = vpop.f32.mrb[0].mxu0
        %v8801 = vadd.f32 0.0, %v8800
        %v8802 = vpop.f32.mrb[0].mxu0
        %8803 = vmatprep.mubr.bf16.mxu0 0
        %8804 = vmatmul.mubr.bf16.gmra.mrb[0].mxu0 %v8751
        %v8805 = vpop.f32.mrb[0].mxu0
        %v8806 = vadd.f32 0.0, %v8805
        %v8807 = vpop.f32.mrb[0].mxu0
        %v8808 = vpop.f32.mrb[0].mxu0
        %v8809 = vadd.f32 0.0, %v8808
        %v8810 = vpop.f32.mrb[0].mxu0
        %8811 = vmatprep.mubr.bf16.mxu0 0
        %8812 = vmatmul.mubr.bf16.gmra.mrb[0].mxu0 %v8754
        %v8813 = vpop.f32.mrb[0].mxu0
        %v8814 = vadd.f32 0.0, %v8813
        %v8815 = vpop.f32.mrb[0].mxu0
        %v8816 = vpop.f32.mrb[0].mxu0
        %v8817 = vadd.f32 0.0, %v8816
        %v8818 = vpop.f32.mrb[0].mxu0
        %8819 = vmatprep.mubr.bf16.mxu0 0
        %8820 = vmatmul.mubr.bf16.gmra.mrb[0].mxu0 %v8757
        %v8821 = vpop.f32.mrb[0].mxu0
        %v8822 = vadd.f32 0.0, %v8821
        %v8823 = vpop.f32.mrb[0].mxu0
        %v8824 = vpop.f32.mrb[0].mxu0
        %v8825 = vadd.f32 0.0, %v8824
        %v8826 = vpop.f32.mrb[0].mxu0
        %8827 = vdwg.mxu0
        %v8828 = vld [vmem:[%s69] sm:$0xff]
        %v8829 = vld [vmem:[%s69 + $0x8] sm:$0xff]
        %v8830 = vld [vmem:[%s71] sm:$0xff]
        %v8831 = vld [vmem:[%s71 + $0x8] sm:$0xff]
        %vm8832 = vcmask 523264
        %v8834 = vsel %vm8832, %v8830, 0
        %v8837 = vsel %vm8832, %v8831, 0
        %8839 = vmatprep.subr.mxu0 0.0
        %8840 = vmatpush1.msra.mxu0 %v7113
        %8841 = vmatprep.subr.mxu0 0.0
        %8842 = vmatpush1.msra.mxu0 %v7114
        %8843 = vmatprep.subr.mxu0 0.0
        %8844 = vmatpush1.msra.mxu0 %v7115
        %8845 = vmatprep.subr.mxu0 0.0
        %8846 = vmatpush1.msra.mxu0 %v7116
        %8847 = vmatprep.subr.mxu0 0.0
        %8848 = vmatpush1.msra.mxu0 %v7117
        %8849 = vmatprep.subr.mxu0 0.0
        %8850 = vmatpush1.msra.mxu0 %v7118
        %8851 = vmatprep.subr.mxu0 0.0
        %8852 = vmatpush1.msra.mxu0 %v7119
        %8853 = vmatprep.subr.mxu0 0.0
        %8854 = vmatpush1.msra.mxu0 %v7120
        %8855 = vmatprep.subr.mxu0 0.0
        %8856 = vmatpush1.msra.mxu0 0.0
        %8857 = vmatprep.subr.mxu0 0.0
        %8858 = vmatpush1.msra.mxu0 0.0
        %8859 = vmatprep.subr.mxu0 0.0
        %8860 = vmatpush1.msra.mxu0 0.0
        %8861 = vmatprep.subr.mxu0 0.0
        %8862 = vmatpush1.msra.mxu0 0.0
        %8863 = vmatprep.subr.mxu0 0.0
        %8864 = vmatpush1.msra.mxu0 0.0
        %8865 = vmatprep.subr.mxu0 0.0
        %8866 = vmatpush1.msra.mxu0 0.0
        %8867 = vmatprep.subr.mxu0 0.0
        %8868 = vmatpush1.msra.mxu0 0.0
        %8869 = vmatprep.subr.mxu0 0.0
        %8870 = vmatpush1.msra.mxu0 0.0
        %8871 = vmatprep.subr.mxu0 0.0
        %8872 = vmatpush1.msra.mxu0 0.0
        %8873 = vmatprep.subr.mxu0 0.0
        %8874 = vmatpush1.msra.mxu0 0.0
        %8875 = vmatprep.subr.mxu0 0.0
        %8876 = vmatpush1.msra.mxu0 0.0
        %8877 = vmatprep.subr.mxu0 0.0
        %8878 = vmatpush1.msra.mxu0 0.0
        %8879 = vmatprep.subr.mxu0 0.0
        %8880 = vmatpush1.msra.mxu0 0.0
        %8881 = vmatprep.subr.mxu0 0.0
        %8882 = vmatpush1.msra.mxu0 0.0
        %8883 = vmatprep.subr.mxu0 0.0
        %8884 = vmatpush1.msra.mxu0 0.0
        %8885 = vmatprep.subr.mxu0 0.0
        %8886 = vmatpush1.msra.mxu0 0.0
        %8887 = vmatprep.subr.mxu0 0.0
        %8888 = vmatpush1.msra.mxu0 0.0
        %8889 = vmatprep.subr.mxu0 0.0
        %8890 = vmatpush1.msra.mxu0 0.0
        %8891 = vmatprep.subr.mxu0 0.0
        %8892 = vmatpush1.msra.mxu0 0.0
        %8893 = vmatprep.subr.mxu0 0.0
        %8894 = vmatpush1.msra.mxu0 0.0
        %8895 = vmatprep.subr.mxu0 0.0
        %8896 = vmatpush1.msra.mxu0 0.0
        %8897 = vmatprep.subr.mxu0 0.0
        %8898 = vmatpush1.msra.mxu0 0.0
        %8899 = vmatprep.subr.mxu0 0.0
        %8900 = vmatpush1.msra.mxu0 0.0
        %8901 = vmatprep.subr.mxu0 0.0
        %8902 = vmatpush1.msra.mxu0 0.0
        %8903 = vmatprep.mubr.f32.mxu0 0.0
        %8904 = vmatmul.mubr.f32.gmra.mrb[0].mxu0 %v8834
        %v8905 = vpop.f32.mrb[0].mxu0
        %v8906 = vadd.f32 0.0, %v8905
        %v8907 = vpop.f32.mrb[0].mxu0
        %8908 = vmatprep.mubr.f32.mxu0 0.0
        %8909 = vmatmul.mubr.f32.gmra.mrb[0].mxu0 %v8837
        %v8910 = vpop.f32.mrb[0].mxu0
        %v8911 = vadd.f32 0.0, %v8910
        %v8912 = vpop.f32.mrb[0].mxu0
        %8913 = vdwg.mxu0
        %v8914 = vpack.c.bf16 %v8911, %v8906
        %v8915 = vld [vmem:[%s73] sm:$0x7]
        %v8917 = vsel %vm7151, %v8914, 0
        %v8920 = vsel %vm7223, %v8915, 0
        %8922 = vmatprep.subr.bf16.mxu0 0
        %8923 = vmatpush1.bf16.msra.mxu0 %v8920
        %8924 = vmatprep.subr.bf16.mxu0 0
        %8925 = vmatpush1.bf16.msra.mxu0 0
        %8926 = vmatprep.subr.bf16.mxu0 0
        %8927 = vmatpush1.bf16.msra.mxu0 0
        %8928 = vmatprep.subr.bf16.mxu0 0
        %8929 = vmatpush1.bf16.msra.mxu0 0
        %8930 = vmatprep.subr.bf16.mxu0 0
        %8931 = vmatpush1.bf16.msra.mxu0 0
        %8932 = vmatprep.subr.bf16.mxu0 0
        %8933 = vmatpush1.bf16.msra.mxu0 0
        %8934 = vmatprep.subr.bf16.mxu0 0
        %8935 = vmatpush1.bf16.msra.mxu0 0
        %8936 = vmatprep.subr.bf16.mxu0 0
        %8937 = vmatpush1.bf16.msra.mxu0 0
        %8938 = vmatprep.subr.bf16.mxu0 0
        %8939 = vmatpush1.bf16.msra.mxu0 0
        %8940 = vmatprep.subr.bf16.mxu0 0
        %8941 = vmatpush1.bf16.msra.mxu0 0
        %8942 = vmatprep.subr.bf16.mxu0 0
        %8943 = vmatpush1.bf16.msra.mxu0 0
        %8944 = vmatprep.subr.bf16.mxu0 0
        %8945 = vmatpush1.bf16.msra.mxu0 0
        %8946 = vmatprep.subr.bf16.mxu0 0
        %8947 = vmatpush1.bf16.msra.mxu0 0
        %8948 = vmatprep.subr.bf16.mxu0 0
        %8949 = vmatpush1.bf16.msra.mxu0 0
        %8950 = vmatprep.subr.bf16.mxu0 0
        %8951 = vmatpush1.bf16.msra.mxu0 0
        %8952 = vmatprep.subr.bf16.mxu0 0
        %8953 = vmatpush1.bf16.msra.mxu0 0
        %8954 = vmatprep.mubr.bf16.mxu0 0
        %8955 = vmatmul.mubr.bf16.gmra.mrb[0].mxu0 %v8917
        %v8956 = vpop.f32.mrb[0].mxu0
        %v8957 = vadd.f32 0.0, %v8956
        %v8958 = vpop.f32.mrb[0].mxu0
        %v8959 = vpop.f32.mrb[0].mxu0
        %v8960 = vadd.f32 0.0, %v8959
        %v8961 = vpop.f32.mrb[0].mxu0
        %8962 = vdwg.mxu0
        %v8964 = vsel %vm8832, %v8828, 0
        %v8967 = vsel %vm8832, %v8829, 0
        %8969 = vmatprep.subr.mxu0 0.0
        %8970 = vmatpush1.msra.mxu0 %v8798
        %8971 = vmatprep.subr.mxu0 0.0
        %8972 = vmatpush1.msra.mxu0 %v8801
        %8973 = vmatprep.subr.mxu0 0.0
        %8974 = vmatpush1.msra.mxu0 %v8806
        %8975 = vmatprep.subr.mxu0 0.0
        %8976 = vmatpush1.msra.mxu0 %v8809
        %8977 = vmatprep.subr.mxu0 0.0
        %8978 = vmatpush1.msra.mxu0 %v8814
        %8979 = vmatprep.subr.mxu0 0.0
        %8980 = vmatpush1.msra.mxu0 %v8817
        %8981 = vmatprep.subr.mxu0 0.0
        %8982 = vmatpush1.msra.mxu0 %v8822
        %8983 = vmatprep.subr.mxu0 0.0
        %8984 = vmatpush1.msra.mxu0 %v8825
        %8985 = vmatprep.subr.mxu0 0.0
        %8986 = vmatpush1.msra.mxu0 0.0
        %8987 = vmatprep.subr.mxu0 0.0
        %8988 = vmatpush1.msra.mxu0 0.0
        %8989 = vmatprep.subr.mxu0 0.0
        %8990 = vmatpush1.msra.mxu0 0.0
        %8991 = vmatprep.subr.mxu0 0.0
        %8992 = vmatpush1.msra.mxu0 0.0
        %8993 = vmatprep.subr.mxu0 0.0
        %8994 = vmatpush1.msra.mxu0 0.0
        %8995 = vmatprep.subr.mxu0 0.0
        %8996 = vmatpush1.msra.mxu0 0.0
        %8997 = vmatprep.subr.mxu0 0.0
        %8998 = vmatpush1.msra.mxu0 0.0
        %8999 = vmatprep.subr.mxu0 0.0
        %9000 = vmatpush1.msra.mxu0 0.0
        %9001 = vmatprep.subr.mxu0 0.0
        %9002 = vmatpush1.msra.mxu0 0.0
        %9003 = vmatprep.subr.mxu0 0.0
        %9004 = vmatpush1.msra.mxu0 0.0
        %9005 = vmatprep.subr.mxu0 0.0
        %9006 = vmatpush1.msra.mxu0 0.0
        %9007 = vmatprep.subr.mxu0 0.0
        %9008 = vmatpush1.msra.mxu0 0.0
        %9009 = vmatprep.subr.mxu0 0.0
        %9010 = vmatpush1.msra.mxu0 0.0
        %9011 = vmatprep.subr.mxu0 0.0
        %9012 = vmatpush1.msra.mxu0 0.0
        %9013 = vmatprep.subr.mxu0 0.0
        %9014 = vmatpush1.msra.mxu0 0.0
        %9015 = vmatprep.subr.mxu0 0.0
        %9016 = vmatpush1.msra.mxu0 0.0
        %9017 = vmatprep.subr.mxu0 0.0
        %9018 = vmatpush1.msra.mxu0 0.0
        %9019 = vmatprep.subr.mxu0 0.0
        %9020 = vmatpush1.msra.mxu0 0.0
        %9021 = vmatprep.subr.mxu0 0.0
        %9022 = vmatpush1.msra.mxu0 0.0
        %9023 = vmatprep.subr.mxu0 0.0
        %9024 = vmatpush1.msra.mxu0 0.0
        %9025 = vmatprep.subr.mxu0 0.0
        %9026 = vmatpush1.msra.mxu0 0.0
        %9027 = vmatprep.subr.mxu0 0.0
        %9028 = vmatpush1.msra.mxu0 0.0
        %9029 = vmatprep.subr.mxu0 0.0
        %9030 = vmatpush1.msra.mxu0 0.0
        %9031 = vmatprep.subr.mxu0 0.0
        %9032 = vmatpush1.msra.mxu0 0.0
        %9033 = vmatprep.mubr.f32.mxu0 0.0
        %9034 = vmatmul.mubr.f32.gmra.mrb[0].mxu0 %v8964
        %v9035 = vpop.f32.mrb[0].mxu0
        %v9036 = vadd.f32 %v8957, %v9035
        %v9037 = vpop.f32.mrb[0].mxu0
        %9038 = vmatprep.mubr.f32.mxu0 0.0
        %9039 = vmatmul.mubr.f32.gmra.mrb[0].mxu0 %v8967
        %v9040 = vpop.f32.mrb[0].mxu0
        %v9041 = vadd.f32 %v8960, %v9040
        %v9042 = vpop.f32.mrb[0].mxu0
        %9043 = vdwg.mxu0
        %v9044 = vmax.f32 %v9036, 0.0
        %v9045 = vmax.f32 %v9041, 0.0
        %v9046 = vpack.c.bf16 %v9045, %v9044
        %v9047 = vld [vmem:[%s75] sm:$0xf]
        %v9048 = vld [vmem:[%s77] sm:$0x1]
        %v9050 = vlaneseq
        %v9051 = vshrl.u32 %v9050, 7
        %v9052 = vsub.s32 0, %v9051
        %v9053 = vrot.slane %v9048, %v9052
        %vm9055 = vcmask 56320
        %v9057 = vsel %vm9055, %v9046, 0
        %v9059 = vsel %vm7223, 4294967295, 65535
        %v9060 = vsel %vm4090, %v9059, 0
        %v9062 = vand.u32 %v9047, %v9060
        %9064 = vmatprep.subr.bf16.mxu0 0
        %9065 = vmatpush1.bf16.msra.mxu0 %v9062
        %9066 = vmatprep.subr.bf16.mxu0 0
        %9067 = vmatpush1.bf16.msra.mxu0 0
        %9068 = vmatprep.subr.bf16.mxu0 0
        %9069 = vmatpush1.bf16.msra.mxu0 0
        %9070 = vmatprep.subr.bf16.mxu0 0
        %9071 = vmatpush1.bf16.msra.mxu0 0
        %9072 = vmatprep.subr.bf16.mxu0 0
        %9073 = vmatpush1.bf16.msra.mxu0 0
        %9074 = vmatprep.subr.bf16.mxu0 0
        %9075 = vmatpush1.bf16.msra.mxu0 0
        %9076 = vmatprep.subr.bf16.mxu0 0
        %9077 = vmatpush1.bf16.msra.mxu0 0
        %9078 = vmatprep.subr.bf16.mxu0 0
        %9079 = vmatpush1.bf16.msra.mxu0 0
        %9080 = vmatprep.subr.bf16.mxu0 0
        %9081 = vmatpush1.bf16.msra.mxu0 0
        %9082 = vmatprep.subr.bf16.mxu0 0
        %9083 = vmatpush1.bf16.msra.mxu0 0
        %9084 = vmatprep.subr.bf16.mxu0 0
        %9085 = vmatpush1.bf16.msra.mxu0 0
        %9086 = vmatprep.subr.bf16.mxu0 0
        %9087 = vmatpush1.bf16.msra.mxu0 0
        %9088 = vmatprep.subr.bf16.mxu0 0
        %9089 = vmatpush1.bf16.msra.mxu0 0
        %9090 = vmatprep.subr.bf16.mxu0 0
        %9091 = vmatpush1.bf16.msra.mxu0 0
        %9092 = vmatprep.subr.bf16.mxu0 0
        %9093 = vmatpush1.bf16.msra.mxu0 0
        %9094 = vmatprep.subr.bf16.mxu0 0
        %9095 = vmatpush1.bf16.msra.mxu0 0
        %9096 = vmatprep.mubr.bf16.mxu0 0
        %9097 = vmatmul.mubr.bf16.gmra.mrb[0].mxu0 %v9057
        %v9098 = vpop.f32.mrb[0].mxu0
        %v9099 = vadd.f32 %v9053, %v9098
        %v9100 = vpop.f32.mrb[0].mxu0
        %v9101 = vpop.f32.mrb[0].mxu0
        %v9102 = vadd.f32 %v9053, %v9101
        %v9103 = vpop.f32.mrb[0].mxu0
        %9104 = vdwg.mxu0
        %v9105 = vld [vmem:[%s79] sm:$0xff]
        %v9106 = vld [vmem:[%s79 + $0x8] sm:$0xff]
        %v9107 = vadd.f32 %v9099, %v9105
        %v9108 = vadd.f32 %v9102, %v9106
        %vm9109 = vcmask 261120
        %9110 = vst.msk [vmem:[%s1203] sm:$0xff] %vm9109, %v9107
        %9111 = vst.msk [vmem:[%s1203 + $0x8] sm:$0xff] %vm9109, %v9108
        %s9112 = sand.u32 %s948, 1
        %s9113 = scalar_lea.sflag [#allocation9], %s9112
        %s9114 = sand.u32 %s948, 1
        %s9115 = smul.addr %s9114, 16
        %s9116 = scalar_lea.vmem [#allocation8], %s9115
        // Predicated region
        $region181: #{forward.1} parent=179 // pred_check
          %p9117 = pneg %p958
        $region182: #{forward.1} parent=179 // pred_check_branch
          %9119 = sbr.rel (%p9117) target = $region184
        $region183: #{forward.1} parent=179 // pred_region
          %s9121 = ssub.s32 256, 256
          %9122 = vsyncadd %s9113, %s9121
          %s9123 = smul.addr %s95, 2
          %s9124 = smul.addr %s9123, 128
          %s9125 = scalar_lea.hbm %s81, %s9124
          %s9126 = sshll.u32 %s9116, 4
          %s9127 = int_to_ptr.vmem [resolvable:$true] %s9126
          %9132 = dma.vmem_to_hbm [thread:$0]  %s9127, 256, %s9125, %s9113, 128, 128, 8
        $region184: #{forward.1} parent=179 // pred_fallthru
          _
      $region180: #{forward.1} parent=5 // pred_fallthru
        _
      %p9133 = scmp.le.s32.totalorder 2, %s90
      // Predicated region
      $region185: #{forward.1} parent=5 // pred_check
        %p9134 = pneg %p9133
      $region186: #{forward.1} parent=5 // pred_check_branch
        %9136 = sbr.rel (%p9134) target = $region188
      $region187: #{forward.1} parent=5 // pred_region
        %s9137 = ssub.s32 %s90, 2
        // Predicated region
        $region189: #{forward.1} parent=187 // pred_check
          %p9138 = pneg %p964
        $region190: #{forward.1} parent=187 // pred_check_branch
          %9140 = sbr.rel (%p9138) target = $region192
        $region191: #{forward.1} parent=187 // pred_region
          %s9141 = sand.u32 %s949, 1
          %s9142 = scalar_lea.sflag [#allocation9], %s9141
          %s9143 = sand.u32 %s949, 1
          %s9144 = smul.addr %s9143, 16
          %s9145 = scalar_lea.vmem [#allocation8], %s9144
          %9146 = dma.done %s9142, 256
        $region192: #{forward.1} parent=187 // pred_fallthru
          _
      $region188: #{forward.1} parent=5 // pred_fallthru
        _
    $region6: #{forward.1} parent=1 // loop_footer
      %s94 = sadd.s32 1, %s90
    $region7: #{forward.1} parent=1 // loop_footer_branch
      %89 = sbr.rel target = $region3
    $region8: #{forward.1} parent=1 // loop_exit
      _
    %9147 = vsyncpa [#allocation9], 1
    %s9148 = scalar_lea.sflag [#allocation9], 1
    %9149 = vsyncpa %s9148, 1

</llo_original>
